<compile_context>
chip_gen: v7x
topology: tpu7x:2x2x1
jax: 0.10.0
libtpu: 0.0.40
codegen_flags: <defaults>
</compile_context>

<pallas_src>
import functools

import jax
import jax.numpy as jnp
from jax.experimental import pallas as pl
from jax.experimental.pallas import tpu as pltpu


def _conv3x3_stats_kernel(x_ref, w_ref, scale_ref, shift_ref,
                          conv_ref, mean_ref, m2_ref,
                          pad_ref, col_ref,
                          *, H, W, fuse_input_bn_relu):
    """3x3 conv (stride 1, pad 1) over one batch tile as a single MXU matmul.

    Optionally fuses a preceding per-channel affine (a folded BatchNorm) + ReLU
    onto the input.  Emits the conv output plus per-tile *centered* BN
    statistics (mean, sum of squared deviations) for an exact cross-tile
    combination in the wrapper.
    """
    BT, _, _, Cin = x_ref.shape
    Cout = w_ref.shape[-1]
    N = BT * H * W
    cdt = pad_ref.dtype                       # conv compute dtype (bf16 or f32)

    x = x_ref[...].astype(jnp.float32)
    if fuse_input_bn_relu:
        # previous BN folded into one per-channel FMA (scale/shift precomputed)
        x = jnp.maximum(x * scale_ref[...] + shift_ref[...], 0.0)
    xc = x.astype(cdt)

    # Build the zero-padded activation in VMEM: write the interior once and
    # zero only the 4 halo strips (top/bottom rows, left/right columns).
    pad_ref[:, 1:H + 1, 1:W + 1, :] = xc
    zrow = jnp.zeros((BT, 1, W + 2, Cin), cdt)
    zcol = jnp.zeros((BT, H, 1, Cin), cdt)
    pad_ref[:, 0:1, :, :] = zrow
    pad_ref[:, H + 1:H + 2, :, :] = zrow
    pad_ref[:, 1:H + 1, 0:1, :] = zcol
    pad_ref[:, 1:H + 1, W + 1:W + 2, :] = zcol

    # One im2col pass: gather the 9 taps into the K (lane) dimension.
    for k in range(9):
        dy, dx = divmod(k, 3)
        col_ref[:, :, :, k * Cin:(k + 1) * Cin] = pad_ref[:, dy:dy + H, dx:dx + W, :]

    # Single matmul with K = 9*Cin, f32 accumulation on the MXU.
    acc = jnp.dot(col_ref[...].reshape(N, 9 * Cin), w_ref[...],
                  preferred_element_type=jnp.float32)            # (N, Cout) f32

    conv_ref[...] = acc.reshape(BT, H, W, Cout).astype(conv_ref.dtype)

    # Per-tile centered statistics (combined exactly across tiles in wrapper).
    m = jnp.mean(acc, axis=0, keepdims=True)                     # (1, Cout)
    d = acc - m
    mean_ref[...] = m.reshape(1, 1, Cout)
    m2_ref[...] = jnp.sum(d * d, axis=0, keepdims=True).reshape(1, 1, Cout)


def _bn_residual_relu_kernel(conv_ref, id_ref, scale_ref, shift_ref, out_ref):
    """out = relu(conv * scale + shift + identity) for one batch tile."""
    y = conv_ref[...].astype(jnp.float32) * scale_ref[...] + shift_ref[...]
    y = y + id_ref[...].astype(jnp.float32)
    out_ref[...] = jnp.maximum(y, 0.0).astype(out_ref.dtype)


def _vmem_limit_bytes(est_bytes):
    # Size the scoped VMEM limit to the actual residency (with double-buffer
    # headroom), capped below v7x's 64 MiB physical VMEM per TensorCore.
    return int(max(32 * 1024 * 1024, min(64 * 1024 * 1024, 3 * est_bytes)))


@functools.partial(jax.jit, static_argnames=("eps", "compute_dtype", "batch_tile"))
def basic_block_forward(x_nchw, params, eps=1e-5,
                        compute_dtype=jnp.bfloat16, batch_tile=1):
    """BasicBlock forward (NCHW in / NCHW out) using Pallas TPU kernels."""
    w1, g1, b1, w2, g2, b2 = params
    x = jnp.transpose(x_nchw, (0, 2, 3, 1)).astype(jnp.float32)   # NCHW -> NHWC
    B, H, W, Cin = x.shape
    Cout = w1.shape[0]
    assert Cin == Cout, "identity path requires inplanes == planes (downsample=None)"
    assert B % batch_tile == 0
    T = B // batch_tile
    n_tile = batch_tile * H * W
    n_total = B * H * W
    csize = jnp.dtype(compute_dtype).itemsize

    # OIHW -> (9*Cin, Cout), matching the im2col K ordering (tap-major, ch-minor).
    w1_k = jnp.transpose(w1, (2, 3, 1, 0)).reshape(9 * Cin, Cout).astype(compute_dtype)
    w2_k = jnp.transpose(w2, (2, 3, 1, 0)).reshape(9 * Cout, Cout).astype(compute_dtype)

    def conv_stats(inp, w_k, scale, shift, fuse):
        cin = inp.shape[-1]
        cout = w_k.shape[-1]
        isize = jnp.dtype(inp.dtype).itemsize
        est = (2 * batch_tile * H * W * (cin * isize + cout * csize)   # in/out blocks (dbuf)
               + batch_tile * (H + 2) * (W + 2) * cin * csize          # pad scratch
               + batch_tile * H * W * 9 * cin * csize                  # im2col scratch
               + batch_tile * H * W * cout * 4                         # f32 accumulator
               + 9 * cin * cout * csize)                               # weights
        kern = functools.partial(_conv3x3_stats_kernel, H=H, W=W,
                                 fuse_input_bn_relu=fuse)
        return pl.pallas_call(
            kern,
            grid=(T,),
            in_specs=[
                pl.BlockSpec((batch_tile, H, W, cin), lambda i: (i, 0, 0, 0)),
                pl.BlockSpec((9 * cin, cout), lambda i: (0, 0)),
                pl.BlockSpec((1, cin), lambda i: (0, 0)),
                pl.BlockSpec((1, cin), lambda i: (0, 0)),
            ],
            out_specs=[
                pl.BlockSpec((batch_tile, H, W, cout), lambda i: (i, 0, 0, 0)),
                pl.BlockSpec((1, 1, cout), lambda i: (i, 0, 0)),
                pl.BlockSpec((1, 1, cout), lambda i: (i, 0, 0)),
            ],
            out_shape=[
                jax.ShapeDtypeStruct((B, H, W, cout), compute_dtype),
                jax.ShapeDtypeStruct((T, 1, cout), jnp.float32),
                jax.ShapeDtypeStruct((T, 1, cout), jnp.float32),
            ],
            scratch_shapes=[
                pltpu.VMEM((batch_tile, H + 2, W + 2, cin), compute_dtype),
                pltpu.VMEM((batch_tile, H, W, 9 * cin), compute_dtype),
            ],
            compiler_params=pltpu.CompilerParams(
                dimension_semantics=("parallel",),
                vmem_limit_bytes=_vmem_limit_bytes(est)),
        )(inp, w_k, scale, shift)

    def finalize_bn(tile_mean, tile_m2, gamma, beta):
        # Exact combination of per-tile centered stats (equal-size tiles).
        tm = tile_mean[:, 0, :]                                    # (T, C)
        m2 = tile_m2[:, 0, :]                                      # (T, C)
        mean = jnp.mean(tm, axis=0)
        m2_tot = jnp.sum(m2, axis=0) + n_tile * jnp.sum((tm - mean) ** 2, axis=0)
        var = m2_tot / n_total                                     # biased var (BN train mode)
        scale = gamma.astype(jnp.float32) * jax.lax.rsqrt(var + eps)
        shift = beta.astype(jnp.float32) - mean * scale
        return scale.reshape(1, -1), shift.reshape(1, -1)

    ones = jnp.ones((1, Cin), jnp.float32)
    zeros = jnp.zeros((1, Cin), jnp.float32)

    # Pass 1: conv1 + per-tile stats.
    conv1_raw, mean1, m2_1 = conv_stats(x, w1_k, ones, zeros, fuse=False)
    scale1, shift1 = finalize_bn(mean1, m2_1, g1, b1)

    # Pass 2: bn1 + relu fused onto the conv2 input, conv2 + per-tile stats.
    conv2_raw, mean2, m2_2 = conv_stats(conv1_raw, w2_k, scale1, shift1, fuse=True)
    scale2, shift2 = finalize_bn(mean2, m2_2, g2, b2)

    # Pass 3: bn2 + residual add + relu (elementwise, tiled, parallel).
    est_final = 3 * 2 * batch_tile * H * W * Cout * 4
    out_nhwc = pl.pallas_call(
        _bn_residual_relu_kernel,
        grid=(T,),
        in_specs=[
            pl.BlockSpec((batch_tile, H, W, Cout), lambda i: (i, 0, 0, 0)),
            pl.BlockSpec((batch_tile, H, W, Cout), lambda i: (i, 0, 0, 0)),
            pl.BlockSpec((1, Cout), lambda i: (0, 0)),
            pl.BlockSpec((1, Cout), lambda i: (0, 0)),
        ],
        out_specs=pl.BlockSpec((batch_tile, H, W, Cout), lambda i: (i, 0, 0, 0)),
        out_shape=jax.ShapeDtypeStruct((B, H, W, Cout), x_nchw.dtype),
        compiler_params=pltpu.CompilerParams(
            dimension_semantics=("parallel",),
            vmem_limit_bytes=_vmem_limit_bytes(est_final)),
    )(conv2_raw, x, scale2, shift2)

    return jnp.transpose(out_nhwc, (0, 3, 1, 2))                   # NHWC -> NCHW


def reference_forward(x, params, eps=1e-5):
    """Pure-JAX reference (NCHW, same semantics) for verification."""
    w1, g1, b1, w2, g2, b2 = params

    def conv(a, w):
        return jax.lax.conv_general_dilated(
            a, w, window_strides=(1, 1), padding=((1, 1), (1, 1)),
            dimension_numbers=("NCHW", "OIHW", "NCHW"))

    def bn(a, g, b):
        m = jnp.mean(a, axis=(0, 2, 3), keepdims=True)
        v = jnp.mean((a - m) ** 2, axis=(0, 2, 3), keepdims=True)
        return (a - m) / jnp.sqrt(v + eps) * g.reshape(1, -1, 1, 1) + b.reshape(1, -1, 1, 1)

    out = jnp.maximum(bn(conv(x, w1), g1, b1), 0.0)
    out = bn(conv(out, w2), g2, b2) + x
    return jnp.maximum(out, 0.0)


if __name__ == "__main__":
    B, C, Hs, Ws = 2, 4, 16, 16          # inplanes = planes = 4, stride = 1
    key = jax.random.PRNGKey(0)
    kx, k1, k2, k3, k4, k5, k6 = jax.random.split(key, 7)

    x = jax.random.normal(kx, (B, C, Hs, Ws), jnp.float32)
    params = (
        0.1 * jax.random.normal(k1, (C, C, 3, 3), jnp.float32),   # conv1 weight (OIHW)
        1.0 + 0.1 * jax.random.normal(k2, (C,), jnp.float32),     # bn1 gamma
        0.1 * jax.random.normal(k3, (C,), jnp.float32),           # bn1 beta
        0.1 * jax.random.normal(k4, (C, C, 3, 3), jnp.float32),   # conv2 weight (OIHW)
        1.0 + 0.1 * jax.random.normal(k5, (C,), jnp.float32),     # bn2 gamma
        0.1 * jax.random.normal(k6, (C,), jnp.float32),           # bn2 beta
    )

    ref = jax.block_until_ready(reference_forward(x, params))

    # f32 conv operands: tight semantics check against the reference.
    out_f32 = jax.block_until_ready(
        basic_block_forward(x, params, compute_dtype=jnp.float32))
    assert out_f32.shape == (B, C, Hs, Ws)
    err_f32 = float(jnp.max(jnp.abs(out_f32 - ref)))
    assert jnp.allclose(out_f32, ref, rtol=2e-4, atol=2e-4), err_f32

    # Default fast path: bf16 conv operands with f32 MXU accumulation.
    out_bf16 = jax.block_until_ready(basic_block_forward(x, params))
    assert out_bf16.shape == (B, C, Hs, Ws)
    err_bf16 = float(jnp.max(jnp.abs(out_bf16 - ref)))
    assert jnp.allclose(out_bf16, ref, rtol=1e-1, atol=1e-1), err_bf16

    print("KERNEL_OK")
</pallas_src>

<mosaic_0001>
module attributes {stable_mosaic.version = 11 : i64} {
  func.func @_conv3x3_stats_kernel(%arg0: i32, %arg1: memref<1x16x16x4xf32, #tpu.memory_space<vmem>>, %arg2: memref<36x4xf32, #tpu.memory_space<vmem>>, %arg3: memref<1x4xf32, #tpu.memory_space<vmem>>, %arg4: memref<1x4xf32, #tpu.memory_space<vmem>>, %arg5: memref<1x16x16x4xf32, #tpu.memory_space<vmem>>, %arg6: memref<1x1x4xf32, #tpu.memory_space<vmem>>, %arg7: memref<1x1x4xf32, #tpu.memory_space<vmem>>, %arg8: memref<1x18x18x4xf32, #tpu.memory_space<vmem>>, %arg9: memref<1x16x16x36xf32, #tpu.memory_space<vmem>>) attributes {dimension_semantics = [#tpu.dimension_semantics<parallel>], iteration_bounds = array<i64: 2>, scalar_prefetch = 0 : i64, scratch_operands = 2 : i64, tpu.core_type = #tpu.core_type<tc>, window_params = [{transform_indices = @transform_0, window_bounds = array<i64: 1, 16, 16, 4>}, {pipeline_mode = #tpu.pipeline_mode<synchronous>, transform_indices = @transform_1, window_bounds = array<i64: 36, 4>}, {pipeline_mode = #tpu.pipeline_mode<synchronous>, transform_indices = @transform_2, window_bounds = array<i64: 1, 4>}, {pipeline_mode = #tpu.pipeline_mode<synchronous>, transform_indices = @transform_3, window_bounds = array<i64: 1, 4>}, {transform_indices = @transform_4, window_bounds = array<i64: 1, 16, 16, 4>}, {transform_indices = @transform_5, window_bounds = array<i64: 1, 1, 4>}, {transform_indices = @transform_6, window_bounds = array<i64: 1, 1, 4>}]} {
    %c0 = arith.constant 0 : index
    %c0_0 = arith.constant 0 : index
    %c0_1 = arith.constant 0 : index
    %c0_2 = arith.constant 0 : index
    %0 = vector.load %arg1[%c0, %c0_0, %c0_1, %c0_2] : memref<1x16x16x4xf32, #tpu.memory_space<vmem>>, vector<1x16x16x4xf32>
    %c0_3 = arith.constant 0 : index
    %c1 = arith.constant 1 : index
    %c1_4 = arith.constant 1 : index
    %c0_5 = arith.constant 0 : index
    %1 = vector.load %arg8[%c0_3, %c1, %c1_4, %c0_5] : memref<1x18x18x4xf32, #tpu.memory_space<vmem>>, vector<1x16x16x4xf32>
    tpu.vector_store %arg8[%c0_3, %c1, %c1_4, %c0_5], %0 {strides = array<i32>} : memref<1x18x18x4xf32, #tpu.memory_space<vmem>>, vector<1x16x16x4xf32>,
    %cst = arith.constant 0.000000e+00 : f32
    %2 = vector.broadcast %cst : f32 to vector<1x1x18x4xf32>
    %cst_6 = arith.constant 0.000000e+00 : f32
    %3 = vector.broadcast %cst_6 : f32 to vector<1x16x1x4xf32>
    %c0_7 = arith.constant 0 : index
    %c0_8 = arith.constant 0 : index
    %c0_9 = arith.constant 0 : index
    %c0_10 = arith.constant 0 : index
    %4 = vector.load %arg8[%c0_7, %c0_8, %c0_9, %c0_10] : memref<1x18x18x4xf32, #tpu.memory_space<vmem>>, vector<1x1x18x4xf32>
    tpu.vector_store %arg8[%c0_7, %c0_8, %c0_9, %c0_10], %2 {strides = array<i32>} : memref<1x18x18x4xf32, #tpu.memory_space<vmem>>, vector<1x1x18x4xf32>,
    %c0_11 = arith.constant 0 : index
    %c17 = arith.constant 17 : index
    %c0_12 = arith.constant 0 : index
    %c0_13 = arith.constant 0 : index
    %5 = vector.load %arg8[%c0_11, %c17, %c0_12, %c0_13] : memref<1x18x18x4xf32, #tpu.memory_space<vmem>>, vector<1x1x18x4xf32>
    tpu.vector_store %arg8[%c0_11, %c17, %c0_12, %c0_13], %2 {strides = array<i32>} : memref<1x18x18x4xf32, #tpu.memory_space<vmem>>, vector<1x1x18x4xf32>,
    %c0_14 = arith.constant 0 : index
    %c1_15 = arith.constant 1 : index
    %c0_16 = arith.constant 0 : index
    %c0_17 = arith.constant 0 : index
    %6 = vector.load %arg8[%c0_14, %c1_15, %c0_16, %c0_17] : memref<1x18x18x4xf32, #tpu.memory_space<vmem>>, vector<1x16x1x4xf32>
    tpu.vector_store %arg8[%c0_14, %c1_15, %c0_16, %c0_17], %3 {strides = array<i32>} : memref<1x18x18x4xf32, #tpu.memory_space<vmem>>, vector<1x16x1x4xf32>,
    %c0_18 = arith.constant 0 : index
    %c1_19 = arith.constant 1 : index
    %c17_20 = arith.constant 17 : index
    %c0_21 = arith.constant 0 : index
    %7 = vector.load %arg8[%c0_18, %c1_19, %c17_20, %c0_21] : memref<1x18x18x4xf32, #tpu.memory_space<vmem>>, vector<1x16x1x4xf32>
    tpu.vector_store %arg8[%c0_18, %c1_19, %c17_20, %c0_21], %3 {strides = array<i32>} : memref<1x18x18x4xf32, #tpu.memory_space<vmem>>, vector<1x16x1x4xf32>,
    %c0_22 = arith.constant 0 : index
    %c0_23 = arith.constant 0 : index
    %c0_24 = arith.constant 0 : index
    %c0_25 = arith.constant 0 : index
    %8 = vector.load %arg8[%c0_22, %c0_23, %c0_24, %c0_25] : memref<1x18x18x4xf32, #tpu.memory_space<vmem>>, vector<1x16x16x4xf32>
    %c0_26 = arith.constant 0 : index
    %c0_27 = arith.constant 0 : index
    %c0_28 = arith.constant 0 : index
    %c0_29 = arith.constant 0 : index
    %9 = vector.load %arg9[%c0_26, %c0_27, %c0_28, %c0_29] : memref<1x16x16x36xf32, #tpu.memory_space<vmem>>, vector<1x16x16x4xf32>
    tpu.vector_store %arg9[%c0_26, %c0_27, %c0_28, %c0_29], %8 {strides = array<i32>} : memref<1x16x16x36xf32, #tpu.memory_space<vmem>>, vector<1x16x16x4xf32>,
    %c0_30 = arith.constant 0 : index
    %c0_31 = arith.constant 0 : index
    %c1_32 = arith.constant 1 : index
    %c0_33 = arith.constant 0 : index
    %10 = vector.load %arg8[%c0_30, %c0_31, %c1_32, %c0_33] : memref<1x18x18x4xf32, #tpu.memory_space<vmem>>, vector<1x16x16x4xf32>
    %c0_34 = arith.constant 0 : index
    %c0_35 = arith.constant 0 : index
    %c0_36 = arith.constant 0 : index
    %c4 = arith.constant 4 : index
    %11 = vector.load %arg9[%c0_34, %c0_35, %c0_36, %c4] : memref<1x16x16x36xf32, #tpu.memory_space<vmem>>, vector<1x16x16x4xf32>
    tpu.vector_store %arg9[%c0_34, %c0_35, %c0_36, %c4], %10 {strides = array<i32>} : memref<1x16x16x36xf32, #tpu.memory_space<vmem>>, vector<1x16x16x4xf32>,
    %c0_37 = arith.constant 0 : index
    %c0_38 = arith.constant 0 : index
    %c2 = arith.constant 2 : index
    %c0_39 = arith.constant 0 : index
    %12 = vector.load %arg8[%c0_37, %c0_38, %c2, %c0_39] : memref<1x18x18x4xf32, #tpu.memory_space<vmem>>, vector<1x16x16x4xf32>
    %c0_40 = arith.constant 0 : index
    %c0_41 = arith.constant 0 : index
    %c0_42 = arith.constant 0 : index
    %c8 = arith.constant 8 : index
    %13 = vector.load %arg9[%c0_40, %c0_41, %c0_42, %c8] : memref<1x16x16x36xf32, #tpu.memory_space<vmem>>, vector<1x16x16x4xf32>
    tpu.vector_store %arg9[%c0_40, %c0_41, %c0_42, %c8], %12 {strides = array<i32>} : memref<1x16x16x36xf32, #tpu.memory_space<vmem>>, vector<1x16x16x4xf32>,
    %c0_43 = arith.constant 0 : index
    %c1_44 = arith.constant 1 : index
    %c0_45 = arith.constant 0 : index
    %c0_46 = arith.constant 0 : index
    %14 = vector.load %arg8[%c0_43, %c1_44, %c0_45, %c0_46] : memref<1x18x18x4xf32, #tpu.memory_space<vmem>>, vector<1x16x16x4xf32>
    %c0_47 = arith.constant 0 : index
    %c0_48 = arith.constant 0 : index
    %c0_49 = arith.constant 0 : index
    %c12 = arith.constant 12 : index
    %15 = vector.load %arg9[%c0_47, %c0_48, %c0_49, %c12] : memref<1x16x16x36xf32, #tpu.memory_space<vmem>>, vector<1x16x16x4xf32>
    tpu.vector_store %arg9[%c0_47, %c0_48, %c0_49, %c12], %14 {strides = array<i32>} : memref<1x16x16x36xf32, #tpu.memory_space<vmem>>, vector<1x16x16x4xf32>,
    %c0_50 = arith.constant 0 : index
    %c1_51 = arith.constant 1 : index
    %c1_52 = arith.constant 1 : index
    %c0_53 = arith.constant 0 : index
    %16 = vector.load %arg8[%c0_50, %c1_51, %c1_52, %c0_53] : memref<1x18x18x4xf32, #tpu.memory_space<vmem>>, vector<1x16x16x4xf32>
    %c0_54 = arith.constant 0 : index
    %c0_55 = arith.constant 0 : index
    %c0_56 = arith.constant 0 : index
    %c16 = arith.constant 16 : index
    %17 = vector.load %arg9[%c0_54, %c0_55, %c0_56, %c16] : memref<1x16x16x36xf32, #tpu.memory_space<vmem>>, vector<1x16x16x4xf32>
    tpu.vector_store %arg9[%c0_54, %c0_55, %c0_56, %c16], %16 {strides = array<i32>} : memref<1x16x16x36xf32, #tpu.memory_space<vmem>>, vector<1x16x16x4xf32>,
    %c0_57 = arith.constant 0 : index
    %c1_58 = arith.constant 1 : index
    %c2_59 = arith.constant 2 : index
    %c0_60 = arith.constant 0 : index
    %18 = vector.load %arg8[%c0_57, %c1_58, %c2_59, %c0_60] : memref<1x18x18x4xf32, #tpu.memory_space<vmem>>, vector<1x16x16x4xf32>
    %c0_61 = arith.constant 0 : index
    %c0_62 = arith.constant 0 : index
    %c0_63 = arith.constant 0 : index
    %c20 = arith.constant 20 : index
    %19 = vector.load %arg9[%c0_61, %c0_62, %c0_63, %c20] : memref<1x16x16x36xf32, #tpu.memory_space<vmem>>, vector<1x16x16x4xf32>
    tpu.vector_store %arg9[%c0_61, %c0_62, %c0_63, %c20], %18 {strides = array<i32>} : memref<1x16x16x36xf32, #tpu.memory_space<vmem>>, vector<1x16x16x4xf32>,
    %c0_64 = arith.constant 0 : index
    %c2_65 = arith.constant 2 : index
    %c0_66 = arith.constant 0 : index
    %c0_67 = arith.constant 0 : index
    %20 = vector.load %arg8[%c0_64, %c2_65, %c0_66, %c0_67] : memref<1x18x18x4xf32, #tpu.memory_space<vmem>>, vector<1x16x16x4xf32>
    %c0_68 = arith.constant 0 : index
    %c0_69 = arith.constant 0 : index
    %c0_70 = arith.constant 0 : index
    %c24 = arith.constant 24 : index
    %21 = vector.load %arg9[%c0_68, %c0_69, %c0_70, %c24] : memref<1x16x16x36xf32, #tpu.memory_space<vmem>>, vector<1x16x16x4xf32>
    tpu.vector_store %arg9[%c0_68, %c0_69, %c0_70, %c24], %20 {strides = array<i32>} : memref<1x16x16x36xf32, #tpu.memory_space<vmem>>, vector<1x16x16x4xf32>,
    %c0_71 = arith.constant 0 : index
    %c2_72 = arith.constant 2 : index
    %c1_73 = arith.constant 1 : index
    %c0_74 = arith.constant 0 : index
    %22 = vector.load %arg8[%c0_71, %c2_72, %c1_73, %c0_74] : memref<1x18x18x4xf32, #tpu.memory_space<vmem>>, vector<1x16x16x4xf32>
    %c0_75 = arith.constant 0 : index
    %c0_76 = arith.constant 0 : index
    %c0_77 = arith.constant 0 : index
    %c28 = arith.constant 28 : index
    %23 = vector.load %arg9[%c0_75, %c0_76, %c0_77, %c28] : memref<1x16x16x36xf32, #tpu.memory_space<vmem>>, vector<1x16x16x4xf32>
    tpu.vector_store %arg9[%c0_75, %c0_76, %c0_77, %c28], %22 {strides = array<i32>} : memref<1x16x16x36xf32, #tpu.memory_space<vmem>>, vector<1x16x16x4xf32>,
    %c0_78 = arith.constant 0 : index
    %c2_79 = arith.constant 2 : index
    %c2_80 = arith.constant 2 : index
    %c0_81 = arith.constant 0 : index
    %24 = vector.load %arg8[%c0_78, %c2_79, %c2_80, %c0_81] : memref<1x18x18x4xf32, #tpu.memory_space<vmem>>, vector<1x16x16x4xf32>
    %c0_82 = arith.constant 0 : index
    %c0_83 = arith.constant 0 : index
    %c0_84 = arith.constant 0 : index
    %c32 = arith.constant 32 : index
    %25 = vector.load %arg9[%c0_82, %c0_83, %c0_84, %c32] : memref<1x16x16x36xf32, #tpu.memory_space<vmem>>, vector<1x16x16x4xf32>
    tpu.vector_store %arg9[%c0_82, %c0_83, %c0_84, %c32], %24 {strides = array<i32>} : memref<1x16x16x36xf32, #tpu.memory_space<vmem>>, vector<1x16x16x4xf32>,
    %c0_85 = arith.constant 0 : index
    %c0_86 = arith.constant 0 : index
    %c0_87 = arith.constant 0 : index
    %c0_88 = arith.constant 0 : index
    %26 = vector.load %arg9[%c0_85, %c0_86, %c0_87, %c0_88] : memref<1x16x16x36xf32, #tpu.memory_space<vmem>>, vector<1x16x16x36xf32>
    %27 = vector.shape_cast %26 : vector<1x16x16x36xf32> to vector<256x36xf32>
    %c0_89 = arith.constant 0 : index
    %c0_90 = arith.constant 0 : index
    %28 = vector.load %arg2[%c0_89, %c0_90] : memref<36x4xf32, #tpu.memory_space<vmem>>, vector<36x4xf32>
    %cst_91 = arith.constant dense<0.000000e+00> : vector<256x4xf32>
    %29 = tpu.matmul %27, %28, %cst_91 {dimension_numbers = #tpu.dot_dimension_numbers<[1], [0], [0], [1], [0, 0, 1, 1], [], []>} : vector<256x36xf32>, vector<36x4xf32>, vector<256x4xf32> -> vector<256x4xf32>
    %30 = vector.shape_cast %29 : vector<256x4xf32> to vector<1x16x16x4xf32>
    %c0_92 = arith.constant 0 : index
    %c0_93 = arith.constant 0 : index
    %c0_94 = arith.constant 0 : index
    %c0_95 = arith.constant 0 : index
    %31 = vector.load %arg5[%c0_92, %c0_93, %c0_94, %c0_95] : memref<1x16x16x4xf32, #tpu.memory_space<vmem>>, vector<1x16x16x4xf32>
    tpu.vector_store %arg5[%c0_92, %c0_93, %c0_94, %c0_95], %30 {strides = array<i32>} : memref<1x16x16x4xf32, #tpu.memory_space<vmem>>, vector<1x16x16x4xf32>,
    %cst_96 = arith.constant dense<0.000000e+00> : vector<4xf32>
    %32 = vector.multi_reduction <add>, %29, %cst_96 [0] : vector<256x4xf32> to vector<4xf32>
    %33 = vector.shape_cast %32 : vector<4xf32> to vector<1x4xf32>
    %cst_97 = arith.constant 2.560000e+02 : f32
    %34 = vector.broadcast %cst_97 : f32 to vector<1x4xf32>
    %35 = arith.divf %33, %34 : vector<1x4xf32>
    %36 = vector.broadcast %35 : vector<1x4xf32> to vector<256x4xf32>
    %37 = arith.subf %29, %36 : vector<256x4xf32>
    %38 = vector.shape_cast %35 : vector<1x4xf32> to vector<1x1x4xf32>
    %c0_98 = arith.constant 0 : index
    %c0_99 = arith.constant 0 : index
    %c0_100 = arith.constant 0 : index
    %39 = vector.load %arg6[%c0_98, %c0_99, %c0_100] : memref<1x1x4xf32, #tpu.memory_space<vmem>>, vector<1x1x4xf32>
    tpu.vector_store %arg6[%c0_98, %c0_99, %c0_100], %38 {strides = array<i32>} : memref<1x1x4xf32, #tpu.memory_space<vmem>>, vector<1x1x4xf32>,
    %40 = arith.mulf %37, %37 : vector<256x4xf32>
    %cst_101 = arith.constant dense<0.000000e+00> : vector<4xf32>
    %41 = vector.multi_reduction <add>, %40, %cst_101 [0] : vector<256x4xf32> to vector<4xf32>
    %42 = vector.shape_cast %41 : vector<4xf32> to vector<1x4xf32>
    %43 = vector.shape_cast %42 : vector<1x4xf32> to vector<1x1x4xf32>
    %c0_102 = arith.constant 0 : index
    %c0_103 = arith.constant 0 : index
    %c0_104 = arith.constant 0 : index
    %44 = vector.load %arg7[%c0_102, %c0_103, %c0_104] : memref<1x1x4xf32, #tpu.memory_space<vmem>>, vector<1x1x4xf32>
    tpu.vector_store %arg7[%c0_102, %c0_103, %c0_104], %43 {strides = array<i32>} : memref<1x1x4xf32, #tpu.memory_space<vmem>>, vector<1x1x4xf32>,
    return
  }
  func.func @transform_0(%arg0: i32) -> (i32, i32, i32, i32) {
    %c0_i32 = arith.constant 0 : i32
    %c0_i32_0 = arith.constant 0 : i32
    %c0_i32_1 = arith.constant 0 : i32
    %c0_i32_2 = arith.constant 0 : i32
    return %arg0, %c0_i32, %c0_i32_0, %c0_i32_1 : i32, i32, i32, i32
  }
  func.func @transform_1(%arg0: i32) -> (i32, i32) {
    %c0_i32 = arith.constant 0 : i32
    %c0_i32_0 = arith.constant 0 : i32
    %c0_i32_1 = arith.constant 0 : i32
    return %c0_i32, %c0_i32_0 : i32, i32
  }
  func.func @transform_2(%arg0: i32) -> (i32, i32) {
    %c0_i32 = arith.constant 0 : i32
    %c0_i32_0 = arith.constant 0 : i32
    %c0_i32_1 = arith.constant 0 : i32
    return %c0_i32, %c0_i32_0 : i32, i32
  }
  func.func @transform_3(%arg0: i32) -> (i32, i32) {
    %c0_i32 = arith.constant 0 : i32
    %c0_i32_0 = arith.constant 0 : i32
    %c0_i32_1 = arith.constant 0 : i32
    return %c0_i32, %c0_i32_0 : i32, i32
  }
  func.func @transform_4(%arg0: i32) -> (i32, i32, i32, i32) {
    %c0_i32 = arith.constant 0 : i32
    %c0_i32_0 = arith.constant 0 : i32
    %c0_i32_1 = arith.constant 0 : i32
    %c0_i32_2 = arith.constant 0 : i32
    return %arg0, %c0_i32, %c0_i32_0, %c0_i32_1 : i32, i32, i32, i32
  }
  func.func @transform_5(%arg0: i32) -> (i32, i32, i32) {
    %c0_i32 = arith.constant 0 : i32
    %c0_i32_0 = arith.constant 0 : i32
    %c0_i32_1 = arith.constant 0 : i32
    return %arg0, %c0_i32, %c0_i32_0 : i32, i32, i32
  }
  func.func @transform_6(%arg0: i32) -> (i32, i32, i32) {
    %c0_i32 = arith.constant 0 : i32
    %c0_i32_0 = arith.constant 0 : i32
    %c0_i32_1 = arith.constant 0 : i32
    return %arg0, %c0_i32, %c0_i32_0 : i32, i32, i32
  }
}

module attributes {stable_mosaic.version = 11 : i64} {
  func.func @_conv3x3_stats_kernel(%arg0: i32, %arg1: memref<1x16x16x4xf32, #tpu.memory_space<vmem>>, %arg2: memref<36x4xf32, #tpu.memory_space<vmem>>, %arg3: memref<1x4xf32, #tpu.memory_space<vmem>>, %arg4: memref<1x4xf32, #tpu.memory_space<vmem>>, %arg5: memref<1x16x16x4xf32, #tpu.memory_space<vmem>>, %arg6: memref<1x1x4xf32, #tpu.memory_space<vmem>>, %arg7: memref<1x1x4xf32, #tpu.memory_space<vmem>>, %arg8: memref<1x18x18x4xf32, #tpu.memory_space<vmem>>, %arg9: memref<1x16x16x36xf32, #tpu.memory_space<vmem>>) attributes {dimension_semantics = [#tpu.dimension_semantics<parallel>], iteration_bounds = array<i64: 2>, scalar_prefetch = 0 : i64, scratch_operands = 2 : i64, tpu.core_type = #tpu.core_type<tc>, window_params = [{transform_indices = @transform_0, window_bounds = array<i64: 1, 16, 16, 4>}, {pipeline_mode = #tpu.pipeline_mode<synchronous>, transform_indices = @transform_1, window_bounds = array<i64: 36, 4>}, {pipeline_mode = #tpu.pipeline_mode<synchronous>, transform_indices = @transform_2, window_bounds = array<i64: 1, 4>}, {pipeline_mode = #tpu.pipeline_mode<synchronous>, transform_indices = @transform_3, window_bounds = array<i64: 1, 4>}, {transform_indices = @transform_4, window_bounds = array<i64: 1, 16, 16, 4>}, {transform_indices = @transform_5, window_bounds = array<i64: 1, 1, 4>}, {transform_indices = @transform_6, window_bounds = array<i64: 1, 1, 4>}]} {
    %c0 = arith.constant 0 : index
    %c0_0 = arith.constant 0 : index
    %c0_1 = arith.constant 0 : index
    %c0_2 = arith.constant 0 : index
    %0 = vector.load %arg1[%c0, %c0_0, %c0_1, %c0_2] : memref<1x16x16x4xf32, #tpu.memory_space<vmem>>, vector<1x16x16x4xf32>
    %c0_3 = arith.constant 0 : index
    %c0_4 = arith.constant 0 : index
    %1 = vector.load %arg3[%c0_3, %c0_4] : memref<1x4xf32, #tpu.memory_space<vmem>>, vector<1x4xf32>
    %2 = vector.shape_cast %1 : vector<1x4xf32> to vector<1x1x1x4xf32>
    %3 = vector.broadcast %2 : vector<1x1x1x4xf32> to vector<1x16x16x4xf32>
    %4 = arith.mulf %0, %3 : vector<1x16x16x4xf32>
    %c0_5 = arith.constant 0 : index
    %c0_6 = arith.constant 0 : index
    %5 = vector.load %arg4[%c0_5, %c0_6] : memref<1x4xf32, #tpu.memory_space<vmem>>, vector<1x4xf32>
    %6 = vector.shape_cast %5 : vector<1x4xf32> to vector<1x1x1x4xf32>
    %7 = vector.broadcast %6 : vector<1x1x1x4xf32> to vector<1x16x16x4xf32>
    %8 = arith.addf %4, %7 : vector<1x16x16x4xf32>
    %cst = arith.constant 0.000000e+00 : f32
    %9 = vector.broadcast %cst : f32 to vector<1x16x16x4xf32>
    %10 = arith.maximumf %8, %9 : vector<1x16x16x4xf32>
    %c0_7 = arith.constant 0 : index
    %c1 = arith.constant 1 : index
    %c1_8 = arith.constant 1 : index
    %c0_9 = arith.constant 0 : index
    %11 = vector.load %arg8[%c0_7, %c1, %c1_8, %c0_9] : memref<1x18x18x4xf32, #tpu.memory_space<vmem>>, vector<1x16x16x4xf32>
    tpu.vector_store %arg8[%c0_7, %c1, %c1_8, %c0_9], %10 {strides = array<i32>} : memref<1x18x18x4xf32, #tpu.memory_space<vmem>>, vector<1x16x16x4xf32>,
    %cst_10 = arith.constant 0.000000e+00 : f32
    %12 = vector.broadcast %cst_10 : f32 to vector<1x1x18x4xf32>
    %cst_11 = arith.constant 0.000000e+00 : f32
    %13 = vector.broadcast %cst_11 : f32 to vector<1x16x1x4xf32>
    %c0_12 = arith.constant 0 : index
    %c0_13 = arith.constant 0 : index
    %c0_14 = arith.constant 0 : index
    %c0_15 = arith.constant 0 : index
    %14 = vector.load %arg8[%c0_12, %c0_13, %c0_14, %c0_15] : memref<1x18x18x4xf32, #tpu.memory_space<vmem>>, vector<1x1x18x4xf32>
    tpu.vector_store %arg8[%c0_12, %c0_13, %c0_14, %c0_15], %12 {strides = array<i32>} : memref<1x18x18x4xf32, #tpu.memory_space<vmem>>, vector<1x1x18x4xf32>,
    %c0_16 = arith.constant 0 : index
    %c17 = arith.constant 17 : index
    %c0_17 = arith.constant 0 : index
    %c0_18 = arith.constant 0 : index
    %15 = vector.load %arg8[%c0_16, %c17, %c0_17, %c0_18] : memref<1x18x18x4xf32, #tpu.memory_space<vmem>>, vector<1x1x18x4xf32>
    tpu.vector_store %arg8[%c0_16, %c17, %c0_17, %c0_18], %12 {strides = array<i32>} : memref<1x18x18x4xf32, #tpu.memory_space<vmem>>, vector<1x1x18x4xf32>,
    %c0_19 = arith.constant 0 : index
    %c1_20 = arith.constant 1 : index
    %c0_21 = arith.constant 0 : index
    %c0_22 = arith.constant 0 : index
    %16 = vector.load %arg8[%c0_19, %c1_20, %c0_21, %c0_22] : memref<1x18x18x4xf32, #tpu.memory_space<vmem>>, vector<1x16x1x4xf32>
    tpu.vector_store %arg8[%c0_19, %c1_20, %c0_21, %c0_22], %13 {strides = array<i32>} : memref<1x18x18x4xf32, #tpu.memory_space<vmem>>, vector<1x16x1x4xf32>,
    %c0_23 = arith.constant 0 : index
    %c1_24 = arith.constant 1 : index
    %c17_25 = arith.constant 17 : index
    %c0_26 = arith.constant 0 : index
    %17 = vector.load %arg8[%c0_23, %c1_24, %c17_25, %c0_26] : memref<1x18x18x4xf32, #tpu.memory_space<vmem>>, vector<1x16x1x4xf32>
    tpu.vector_store %arg8[%c0_23, %c1_24, %c17_25, %c0_26], %13 {strides = array<i32>} : memref<1x18x18x4xf32, #tpu.memory_space<vmem>>, vector<1x16x1x4xf32>,
    %c0_27 = arith.constant 0 : index
    %c0_28 = arith.constant 0 : index
    %c0_29 = arith.constant 0 : index
    %c0_30 = arith.constant 0 : index
    %18 = vector.load %arg8[%c0_27, %c0_28, %c0_29, %c0_30] : memref<1x18x18x4xf32, #tpu.memory_space<vmem>>, vector<1x16x16x4xf32>
    %c0_31 = arith.constant 0 : index
    %c0_32 = arith.constant 0 : index
    %c0_33 = arith.constant 0 : index
    %c0_34 = arith.constant 0 : index
    %19 = vector.load %arg9[%c0_31, %c0_32, %c0_33, %c0_34] : memref<1x16x16x36xf32, #tpu.memory_space<vmem>>, vector<1x16x16x4xf32>
    tpu.vector_store %arg9[%c0_31, %c0_32, %c0_33, %c0_34], %18 {strides = array<i32>} : memref<1x16x16x36xf32, #tpu.memory_space<vmem>>, vector<1x16x16x4xf32>,
    %c0_35 = arith.constant 0 : index
    %c0_36 = arith.constant 0 : index
    %c1_37 = arith.constant 1 : index
    %c0_38 = arith.constant 0 : index
    %20 = vector.load %arg8[%c0_35, %c0_36, %c1_37, %c0_38] : memref<1x18x18x4xf32, #tpu.memory_space<vmem>>, vector<1x16x16x4xf32>
    %c0_39 = arith.constant 0 : index
    %c0_40 = arith.constant 0 : index
    %c0_41 = arith.constant 0 : index
    %c4 = arith.constant 4 : index
    %21 = vector.load %arg9[%c0_39, %c0_40, %c0_41, %c4] : memref<1x16x16x36xf32, #tpu.memory_space<vmem>>, vector<1x16x16x4xf32>
    tpu.vector_store %arg9[%c0_39, %c0_40, %c0_41, %c4], %20 {strides = array<i32>} : memref<1x16x16x36xf32, #tpu.memory_space<vmem>>, vector<1x16x16x4xf32>,
    %c0_42 = arith.constant 0 : index
    %c0_43 = arith.constant 0 : index
    %c2 = arith.constant 2 : index
    %c0_44 = arith.constant 0 : index
    %22 = vector.load %arg8[%c0_42, %c0_43, %c2, %c0_44] : memref<1x18x18x4xf32, #tpu.memory_space<vmem>>, vector<1x16x16x4xf32>
    %c0_45 = arith.constant 0 : index
    %c0_46 = arith.constant 0 : index
    %c0_47 = arith.constant 0 : index
    %c8 = arith.constant 8 : index
    %23 = vector.load %arg9[%c0_45, %c0_46, %c0_47, %c8] : memref<1x16x16x36xf32, #tpu.memory_space<vmem>>, vector<1x16x16x4xf32>
    tpu.vector_store %arg9[%c0_45, %c0_46, %c0_47, %c8], %22 {strides = array<i32>} : memref<1x16x16x36xf32, #tpu.memory_space<vmem>>, vector<1x16x16x4xf32>,
    %c0_48 = arith.constant 0 : index
    %c1_49 = arith.constant 1 : index
    %c0_50 = arith.constant 0 : index
    %c0_51 = arith.constant 0 : index
    %24 = vector.load %arg8[%c0_48, %c1_49, %c0_50, %c0_51] : memref<1x18x18x4xf32, #tpu.memory_space<vmem>>, vector<1x16x16x4xf32>
    %c0_52 = arith.constant 0 : index
    %c0_53 = arith.constant 0 : index
    %c0_54 = arith.constant 0 : index
    %c12 = arith.constant 12 : index
    %25 = vector.load %arg9[%c0_52, %c0_53, %c0_54, %c12] : memref<1x16x16x36xf32, #tpu.memory_space<vmem>>, vector<1x16x16x4xf32>
    tpu.vector_store %arg9[%c0_52, %c0_53, %c0_54, %c12], %24 {strides = array<i32>} : memref<1x16x16x36xf32, #tpu.memory_space<vmem>>, vector<1x16x16x4xf32>,
    %c0_55 = arith.constant 0 : index
    %c1_56 = arith.constant 1 : index
    %c1_57 = arith.constant 1 : index
    %c0_58 = arith.constant 0 : index
    %26 = vector.load %arg8[%c0_55, %c1_56, %c1_57, %c0_58] : memref<1x18x18x4xf32, #tpu.memory_space<vmem>>, vector<1x16x16x4xf32>
    %c0_59 = arith.constant 0 : index
    %c0_60 = arith.constant 0 : index
    %c0_61 = arith.constant 0 : index
    %c16 = arith.constant 16 : index
    %27 = vector.load %arg9[%c0_59, %c0_60, %c0_61, %c16] : memref<1x16x16x36xf32, #tpu.memory_space<vmem>>, vector<1x16x16x4xf32>
    tpu.vector_store %arg9[%c0_59, %c0_60, %c0_61, %c16], %26 {strides = array<i32>} : memref<1x16x16x36xf32, #tpu.memory_space<vmem>>, vector<1x16x16x4xf32>,
    %c0_62 = arith.constant 0 : index
    %c1_63 = arith.constant 1 : index
    %c2_64 = arith.constant 2 : index
    %c0_65 = arith.constant 0 : index
    %28 = vector.load %arg8[%c0_62, %c1_63, %c2_64, %c0_65] : memref<1x18x18x4xf32, #tpu.memory_space<vmem>>, vector<1x16x16x4xf32>
    %c0_66 = arith.constant 0 : index
    %c0_67 = arith.constant 0 : index
    %c0_68 = arith.constant 0 : index
    %c20 = arith.constant 20 : index
    %29 = vector.load %arg9[%c0_66, %c0_67, %c0_68, %c20] : memref<1x16x16x36xf32, #tpu.memory_space<vmem>>, vector<1x16x16x4xf32>
    tpu.vector_store %arg9[%c0_66, %c0_67, %c0_68, %c20], %28 {strides = array<i32>} : memref<1x16x16x36xf32, #tpu.memory_space<vmem>>, vector<1x16x16x4xf32>,
    %c0_69 = arith.constant 0 : index
    %c2_70 = arith.constant 2 : index
    %c0_71 = arith.constant 0 : index
    %c0_72 = arith.constant 0 : index
    %30 = vector.load %arg8[%c0_69, %c2_70, %c0_71, %c0_72] : memref<1x18x18x4xf32, #tpu.memory_space<vmem>>, vector<1x16x16x4xf32>
    %c0_73 = arith.constant 0 : index
    %c0_74 = arith.constant 0 : index
    %c0_75 = arith.constant 0 : index
    %c24 = arith.constant 24 : index
    %31 = vector.load %arg9[%c0_73, %c0_74, %c0_75, %c24] : memref<1x16x16x36xf32, #tpu.memory_space<vmem>>, vector<1x16x16x4xf32>
    tpu.vector_store %arg9[%c0_73, %c0_74, %c0_75, %c24], %30 {strides = array<i32>} : memref<1x16x16x36xf32, #tpu.memory_space<vmem>>, vector<1x16x16x4xf32>,
    %c0_76 = arith.constant 0 : index
    %c2_77 = arith.constant 2 : index
    %c1_78 = arith.constant 1 : index
    %c0_79 = arith.constant 0 : index
    %32 = vector.load %arg8[%c0_76, %c2_77, %c1_78, %c0_79] : memref<1x18x18x4xf32, #tpu.memory_space<vmem>>, vector<1x16x16x4xf32>
    %c0_80 = arith.constant 0 : index
    %c0_81 = arith.constant 0 : index
    %c0_82 = arith.constant 0 : index
    %c28 = arith.constant 28 : index
    %33 = vector.load %arg9[%c0_80, %c0_81, %c0_82, %c28] : memref<1x16x16x36xf32, #tpu.memory_space<vmem>>, vector<1x16x16x4xf32>
    tpu.vector_store %arg9[%c0_80, %c0_81, %c0_82, %c28], %32 {strides = array<i32>} : memref<1x16x16x36xf32, #tpu.memory_space<vmem>>, vector<1x16x16x4xf32>,
    %c0_83 = arith.constant 0 : index
    %c2_84 = arith.constant 2 : index
    %c2_85 = arith.constant 2 : index
    %c0_86 = arith.constant 0 : index
    %34 = vector.load %arg8[%c0_83, %c2_84, %c2_85, %c0_86] : memref<1x18x18x4xf32, #tpu.memory_space<vmem>>, vector<1x16x16x4xf32>
    %c0_87 = arith.constant 0 : index
    %c0_88 = arith.constant 0 : index
    %c0_89 = arith.constant 0 : index
    %c32 = arith.constant 32 : index
    %35 = vector.load %arg9[%c0_87, %c0_88, %c0_89, %c32] : memref<1x16x16x36xf32, #tpu.memory_space<vmem>>, vector<1x16x16x4xf32>
    tpu.vector_store %arg9[%c0_87, %c0_88, %c0_89, %c32], %34 {strides = array<i32>} : memref<1x16x16x36xf32, #tpu.memory_space<vmem>>, vector<1x16x16x4xf32>,
    %c0_90 = arith.constant 0 : index
    %c0_91 = arith.constant 0 : index
    %c0_92 = arith.constant 0 : index
    %c0_93 = arith.constant 0 : index
    %36 = vector.load %arg9[%c0_90, %c0_91, %c0_92, %c0_93] : memref<1x16x16x36xf32, #tpu.memory_space<vmem>>, vector<1x16x16x36xf32>
    %37 = vector.shape_cast %36 : vector<1x16x16x36xf32> to vector<256x36xf32>
    %c0_94 = arith.constant 0 : index
    %c0_95 = arith.constant 0 : index
    %38 = vector.load %arg2[%c0_94, %c0_95] : memref<36x4xf32, #tpu.memory_space<vmem>>, vector<36x4xf32>
    %cst_96 = arith.constant dense<0.000000e+00> : vector<256x4xf32>
    %39 = tpu.matmul %37, %38, %cst_96 {dimension_numbers = #tpu.dot_dimension_numbers<[1], [0], [0], [1], [0, 0, 1, 1], [], []>} : vector<256x36xf32>, vector<36x4xf32>, vector<256x4xf32> -> vector<256x4xf32>
    %40 = vector.shape_cast %39 : vector<256x4xf32> to vector<1x16x16x4xf32>
    %c0_97 = arith.constant 0 : index
    %c0_98 = arith.constant 0 : index
    %c0_99 = arith.constant 0 : index
    %c0_100 = arith.constant 0 : index
    %41 = vector.load %arg5[%c0_97, %c0_98, %c0_99, %c0_100] : memref<1x16x16x4xf32, #tpu.memory_space<vmem>>, vector<1x16x16x4xf32>
    tpu.vector_store %arg5[%c0_97, %c0_98, %c0_99, %c0_100], %40 {strides = array<i32>} : memref<1x16x16x4xf32, #tpu.memory_space<vmem>>, vector<1x16x16x4xf32>,
    %cst_101 = arith.constant dense<0.000000e+00> : vector<4xf32>
    %42 = vector.multi_reduction <add>, %39, %cst_101 [0] : vector<256x4xf32> to vector<4xf32>
    %43 = vector.shape_cast %42 : vector<4xf32> to vector<1x4xf32>
    %cst_102 = arith.constant 2.560000e+02 : f32
    %44 = vector.broadcast %cst_102 : f32 to vector<1x4xf32>
    %45 = arith.divf %43, %44 : vector<1x4xf32>
    %46 = vector.broadcast %45 : vector<1x4xf32> to vector<256x4xf32>
    %47 = arith.subf %39, %46 : vector<256x4xf32>
    %48 = vector.shape_cast %45 : vector<1x4xf32> to vector<1x1x4xf32>
    %c0_103 = arith.constant 0 : index
    %c0_104 = arith.constant 0 : index
    %c0_105 = arith.constant 0 : index
    %49 = vector.load %arg6[%c0_103, %c0_104, %c0_105] : memref<1x1x4xf32, #tpu.memory_space<vmem>>, vector<1x1x4xf32>
    tpu.vector_store %arg6[%c0_103, %c0_104, %c0_105], %48 {strides = array<i32>} : memref<1x1x4xf32, #tpu.memory_space<vmem>>, vector<1x1x4xf32>,
    %50 = arith.mulf %47, %47 : vector<256x4xf32>
    %cst_106 = arith.constant dense<0.000000e+00> : vector<4xf32>
    %51 = vector.multi_reduction <add>, %50, %cst_106 [0] : vector<256x4xf32> to vector<4xf32>
    %52 = vector.shape_cast %51 : vector<4xf32> to vector<1x4xf32>
    %53 = vector.shape_cast %52 : vector<1x4xf32> to vector<1x1x4xf32>
    %c0_107 = arith.constant 0 : index
    %c0_108 = arith.constant 0 : index
    %c0_109 = arith.constant 0 : index
    %54 = vector.load %arg7[%c0_107, %c0_108, %c0_109] : memref<1x1x4xf32, #tpu.memory_space<vmem>>, vector<1x1x4xf32>
    tpu.vector_store %arg7[%c0_107, %c0_108, %c0_109], %53 {strides = array<i32>} : memref<1x1x4xf32, #tpu.memory_space<vmem>>, vector<1x1x4xf32>,
    return
  }
  func.func @transform_0(%arg0: i32) -> (i32, i32, i32, i32) {
    %c0_i32 = arith.constant 0 : i32
    %c0_i32_0 = arith.constant 0 : i32
    %c0_i32_1 = arith.constant 0 : i32
    %c0_i32_2 = arith.constant 0 : i32
    return %arg0, %c0_i32, %c0_i32_0, %c0_i32_1 : i32, i32, i32, i32
  }
  func.func @transform_1(%arg0: i32) -> (i32, i32) {
    %c0_i32 = arith.constant 0 : i32
    %c0_i32_0 = arith.constant 0 : i32
    %c0_i32_1 = arith.constant 0 : i32
    return %c0_i32, %c0_i32_0 : i32, i32
  }
  func.func @transform_2(%arg0: i32) -> (i32, i32) {
    %c0_i32 = arith.constant 0 : i32
    %c0_i32_0 = arith.constant 0 : i32
    %c0_i32_1 = arith.constant 0 : i32
    return %c0_i32, %c0_i32_0 : i32, i32
  }
  func.func @transform_3(%arg0: i32) -> (i32, i32) {
    %c0_i32 = arith.constant 0 : i32
    %c0_i32_0 = arith.constant 0 : i32
    %c0_i32_1 = arith.constant 0 : i32
    return %c0_i32, %c0_i32_0 : i32, i32
  }
  func.func @transform_4(%arg0: i32) -> (i32, i32, i32, i32) {
    %c0_i32 = arith.constant 0 : i32
    %c0_i32_0 = arith.constant 0 : i32
    %c0_i32_1 = arith.constant 0 : i32
    %c0_i32_2 = arith.constant 0 : i32
    return %arg0, %c0_i32, %c0_i32_0, %c0_i32_1 : i32, i32, i32, i32
  }
  func.func @transform_5(%arg0: i32) -> (i32, i32, i32) {
    %c0_i32 = arith.constant 0 : i32
    %c0_i32_0 = arith.constant 0 : i32
    %c0_i32_1 = arith.constant 0 : i32
    return %arg0, %c0_i32, %c0_i32_0 : i32, i32, i32
  }
  func.func @transform_6(%arg0: i32) -> (i32, i32, i32) {
    %c0_i32 = arith.constant 0 : i32
    %c0_i32_0 = arith.constant 0 : i32
    %c0_i32_1 = arith.constant 0 : i32
    return %arg0, %c0_i32, %c0_i32_0 : i32, i32, i32
  }
}

module attributes {stable_mosaic.version = 11 : i64} {
  func.func @_bn_residual_relu_kernel(%arg0: i32, %arg1: memref<1x16x16x4xf32, #tpu.memory_space<vmem>>, %arg2: memref<1x16x16x4xf32, #tpu.memory_space<vmem>>, %arg3: memref<1x4xf32, #tpu.memory_space<vmem>>, %arg4: memref<1x4xf32, #tpu.memory_space<vmem>>, %arg5: memref<1x16x16x4xf32, #tpu.memory_space<vmem>>) attributes {dimension_semantics = [#tpu.dimension_semantics<parallel>], iteration_bounds = array<i64: 2>, scalar_prefetch = 0 : i64, scratch_operands = 0 : i64, tpu.core_type = #tpu.core_type<tc>, window_params = [{transform_indices = @transform_0, window_bounds = array<i64: 1, 16, 16, 4>}, {transform_indices = @transform_1, window_bounds = array<i64: 1, 16, 16, 4>}, {pipeline_mode = #tpu.pipeline_mode<synchronous>, transform_indices = @transform_2, window_bounds = array<i64: 1, 4>}, {pipeline_mode = #tpu.pipeline_mode<synchronous>, transform_indices = @transform_3, window_bounds = array<i64: 1, 4>}, {transform_indices = @transform_4, window_bounds = array<i64: 1, 16, 16, 4>}]} {
    %c0 = arith.constant 0 : index
    %c0_0 = arith.constant 0 : index
    %c0_1 = arith.constant 0 : index
    %c0_2 = arith.constant 0 : index
    %0 = vector.load %arg1[%c0, %c0_0, %c0_1, %c0_2] : memref<1x16x16x4xf32, #tpu.memory_space<vmem>>, vector<1x16x16x4xf32>
    %c0_3 = arith.constant 0 : index
    %c0_4 = arith.constant 0 : index
    %1 = vector.load %arg3[%c0_3, %c0_4] : memref<1x4xf32, #tpu.memory_space<vmem>>, vector<1x4xf32>
    %2 = vector.shape_cast %1 : vector<1x4xf32> to vector<1x1x1x4xf32>
    %3 = vector.broadcast %2 : vector<1x1x1x4xf32> to vector<1x16x16x4xf32>
    %4 = arith.mulf %0, %3 : vector<1x16x16x4xf32>
    %c0_5 = arith.constant 0 : index
    %c0_6 = arith.constant 0 : index
    %5 = vector.load %arg4[%c0_5, %c0_6] : memref<1x4xf32, #tpu.memory_space<vmem>>, vector<1x4xf32>
    %6 = vector.shape_cast %5 : vector<1x4xf32> to vector<1x1x1x4xf32>
    %7 = vector.broadcast %6 : vector<1x1x1x4xf32> to vector<1x16x16x4xf32>
    %8 = arith.addf %4, %7 : vector<1x16x16x4xf32>
    %c0_7 = arith.constant 0 : index
    %c0_8 = arith.constant 0 : index
    %c0_9 = arith.constant 0 : index
    %c0_10 = arith.constant 0 : index
    %9 = vector.load %arg2[%c0_7, %c0_8, %c0_9, %c0_10] : memref<1x16x16x4xf32, #tpu.memory_space<vmem>>, vector<1x16x16x4xf32>
    %10 = arith.addf %8, %9 : vector<1x16x16x4xf32>
    %cst = arith.constant 0.000000e+00 : f32
    %11 = vector.broadcast %cst : f32 to vector<1x16x16x4xf32>
    %12 = arith.maximumf %10, %11 : vector<1x16x16x4xf32>
    %c0_11 = arith.constant 0 : index
    %c0_12 = arith.constant 0 : index
    %c0_13 = arith.constant 0 : index
    %c0_14 = arith.constant 0 : index
    %13 = vector.load %arg5[%c0_11, %c0_12, %c0_13, %c0_14] : memref<1x16x16x4xf32, #tpu.memory_space<vmem>>, vector<1x16x16x4xf32>
    tpu.vector_store %arg5[%c0_11, %c0_12, %c0_13, %c0_14], %12 {strides = array<i32>} : memref<1x16x16x4xf32, #tpu.memory_space<vmem>>, vector<1x16x16x4xf32>,
    return
  }
  func.func @transform_0(%arg0: i32) -> (i32, i32, i32, i32) {
    %c0_i32 = arith.constant 0 : i32
    %c0_i32_0 = arith.constant 0 : i32
    %c0_i32_1 = arith.constant 0 : i32
    %c0_i32_2 = arith.constant 0 : i32
    return %arg0, %c0_i32, %c0_i32_0, %c0_i32_1 : i32, i32, i32, i32
  }
  func.func @transform_1(%arg0: i32) -> (i32, i32, i32, i32) {
    %c0_i32 = arith.constant 0 : i32
    %c0_i32_0 = arith.constant 0 : i32
    %c0_i32_1 = arith.constant 0 : i32
    %c0_i32_2 = arith.constant 0 : i32
    return %arg0, %c0_i32, %c0_i32_0, %c0_i32_1 : i32, i32, i32, i32
  }
  func.func @transform_2(%arg0: i32) -> (i32, i32) {
    %c0_i32 = arith.constant 0 : i32
    %c0_i32_0 = arith.constant 0 : i32
    %c0_i32_1 = arith.constant 0 : i32
    return %c0_i32, %c0_i32_0 : i32, i32
  }
  func.func @transform_3(%arg0: i32) -> (i32, i32) {
    %c0_i32 = arith.constant 0 : i32
    %c0_i32_0 = arith.constant 0 : i32
    %c0_i32_1 = arith.constant 0 : i32
    return %c0_i32, %c0_i32_0 : i32, i32
  }
  func.func @transform_4(%arg0: i32) -> (i32, i32, i32, i32) {
    %c0_i32 = arith.constant 0 : i32
    %c0_i32_0 = arith.constant 0 : i32
    %c0_i32_1 = arith.constant 0 : i32
    %c0_i32_2 = arith.constant 0 : i32
    return %arg0, %c0_i32, %c0_i32_0, %c0_i32_1 : i32, i32, i32, i32
  }
}

</mosaic_0001>

<llo_original>
// kernel: basic_block_forward.5
$region0: #{basic_block_forward.5}
  #allocation0 [shape = 'u32[]', space=smem, size = 0x4, offset = 0x4, fixed_abs, tag = 'smem constant byte address 0x4 - core index']
  #allocation1 [shape = 'u32[144,128]{1,0:T(1,128)}', space=vmem, size = 0x12000, scoped, tag = 'internal scratch']
  %s0 = inlined_call_operand.vmem [shape: f32[2,16,16,4], index: 0, kind: input, shape index: {}]
  %s1 = inlined_call_operand.vmem [shape: f32[2,16,16,4], index: 1, kind: input, shape index: {}]
  %s2 = inlined_call_operand.vmem [shape: f32[1,4], index: 2, kind: input, shape index: {}]
  %s3 = inlined_call_operand.vmem [shape: f32[1,4], index: 3, kind: input, shape index: {}]
  %s4 = inlined_call_operand.vmem [shape: f32[2,16,16,4], index: 4, kind: output, shape index: {}]
  %s5 = sld [smem:[#allocation0]]
  $region49: #{basic_block_forward.5} parent=0
    _
  %s7 = ssub.s32 1, %s5
  %s8 = scalar_select 0, %s7, %s5
  loop: start=0, step=1, limit=4
  $region2: #{basic_block_forward.5} parent=0 // loop_pre_header
    _
  $region3: #{basic_block_forward.5} parent=0 // loop_header
    %s10 = sphi 0, %s14
    %p11 = scmp.ge.s32.totalorder %s10, 4
    %s20 = sphi 0, %s22
    %s23 = sphi 0, %s20
    %s24 = sphi 0, %s23
    %s40 = sphi 0, %s24
    %s46 = sphi 0, %s48
    %s49 = sphi 0, %s46
    %s50 = sphi 0, %s49
    %s66 = sphi 0, %s50
    %s70 = sphi 0, %s70
    %s72 = sphi 0, %s70
    %s73 = sphi 0, %s72
    %s87 = sphi 0, %s73
    %s91 = sphi 0, %s91
    %s93 = sphi 0, %s91
    %s94 = sphi 0, %s93
    %s108 = sphi 0, %s94
    %s114 = sphi 0, %s116
    %s117 = sphi 0, %s114
    %s118 = sphi 0, %s117
    %s134 = sphi 0, %s118
  $region4: #{basic_block_forward.5} parent=0 // loop_header_branch
    %13 = sbr.rel (%p11) target = $region8
  $region5: #{basic_block_forward.5} parent=0 // loop_body
    %s15 = ssub.s32 %s10, 1
    %s16 = ssub.s32 %s10, 2
    %s17 = sadd.s32 %s10, 1
    %s18 = ssub.s32 %s10, %s17
    %p19 = scmp.eq.s32.totalorder %s18, 0
    %s21 = sadd.s32 %s20, 1
    %s22 = scalar_select %p19, %s20, %s21
    %p25 = pneg %p19
    %p26 = scmp.eq.s32.totalorder %s10, 1
    %p27 = por %p25, %p26
    %p28 = scmp.ne.s32.totalorder %s20, %s23
    %p29 = scmp.eq.s32.totalorder %s10, 0
    %p30 = por %p28, %p29
    %p31 = scmp.ne.s32.totalorder %s20, %s23
    %p32 = scmp.eq.s32.totalorder %s15, 1
    %p33 = por %p31, %p32
    %p34 = scmp.ne.s32.totalorder %s23, %s24
    %p35 = scmp.eq.s32.totalorder %s15, 0
    %p36 = por %p34, %p35
    %p37 = scmp.ne.s32.totalorder %s23, %s24
    %p38 = scmp.eq.s32.totalorder %s16, 1
    %p39 = por %p37, %p38
    %p41 = scmp.ne.s32.totalorder %s24, %s40
    %p42 = scmp.eq.s32.totalorder %s16, 0
    %p43 = por %p41, %p42
    %s44 = ssub.s32 %s10, %s17
    %p45 = scmp.eq.s32.totalorder %s44, 0
    %s47 = sadd.s32 %s46, 1
    %s48 = scalar_select %p45, %s46, %s47
    %p51 = pneg %p45
    %p52 = scmp.eq.s32.totalorder %s10, 1
    %p53 = por %p51, %p52
    %p54 = scmp.ne.s32.totalorder %s46, %s49
    %p55 = scmp.eq.s32.totalorder %s10, 0
    %p56 = por %p54, %p55
    %p57 = scmp.ne.s32.totalorder %s46, %s49
    %p58 = scmp.eq.s32.totalorder %s15, 1
    %p59 = por %p57, %p58
    %p60 = scmp.ne.s32.totalorder %s49, %s50
    %p61 = scmp.eq.s32.totalorder %s15, 0
    %p62 = por %p60, %p61
    %p63 = scmp.ne.s32.totalorder %s49, %s50
    %p64 = scmp.eq.s32.totalorder %s16, 1
    %p65 = por %p63, %p64
    %p67 = scmp.ne.s32.totalorder %s50, %s66
    %p68 = scmp.eq.s32.totalorder %s16, 0
    %p69 = por %p67, %p68
    %s71 = sadd.s32 %s70, 1
    %p74 = scmp.eq.s32.totalorder %s10, 1
    %p75 = scmp.ne.s32.totalorder %s70, %s72
    %p76 = scmp.eq.s32.totalorder %s10, 0
    %p77 = por %p75, %p76
    %p78 = scmp.ne.s32.totalorder %s70, %s72
    %p79 = scmp.eq.s32.totalorder %s15, 1
    %p80 = por %p78, %p79
    %p81 = scmp.ne.s32.totalorder %s72, %s73
    %p82 = scmp.eq.s32.totalorder %s15, 0
    %p83 = por %p81, %p82
    %p84 = scmp.ne.s32.totalorder %s72, %s73
    %p85 = scmp.eq.s32.totalorder %s16, 1
    %p86 = por %p84, %p85
    %p88 = scmp.ne.s32.totalorder %s73, %s87
    %p89 = scmp.eq.s32.totalorder %s16, 0
    %p90 = por %p88, %p89
    %s92 = sadd.s32 %s91, 1
    %p95 = scmp.eq.s32.totalorder %s10, 1
    %p96 = scmp.ne.s32.totalorder %s91, %s93
    %p97 = scmp.eq.s32.totalorder %s10, 0
    %p98 = por %p96, %p97
    %p99 = scmp.ne.s32.totalorder %s91, %s93
    %p100 = scmp.eq.s32.totalorder %s15, 1
    %p101 = por %p99, %p100
    %p102 = scmp.ne.s32.totalorder %s93, %s94
    %p103 = scmp.eq.s32.totalorder %s15, 0
    %p104 = por %p102, %p103
    %p105 = scmp.ne.s32.totalorder %s93, %s94
    %p106 = scmp.eq.s32.totalorder %s16, 1
    %p107 = por %p105, %p106
    %p109 = scmp.ne.s32.totalorder %s94, %s108
    %p110 = scmp.eq.s32.totalorder %s16, 0
    %p111 = por %p109, %p110
    %s112 = ssub.s32 %s10, %s17
    %p113 = scmp.eq.s32.totalorder %s112, 0
    %s115 = sadd.s32 %s114, 1
    %s116 = scalar_select %p113, %s114, %s115
    %p119 = pneg %p113
    %p120 = scmp.eq.s32.totalorder %s10, 1
    %p121 = por %p119, %p120
    %p122 = scmp.ne.s32.totalorder %s114, %s117
    %p123 = scmp.eq.s32.totalorder %s10, 0
    %p124 = por %p122, %p123
    %p125 = scmp.ne.s32.totalorder %s114, %s117
    %p126 = scmp.eq.s32.totalorder %s15, 1
    %p127 = por %p125, %p126
    %p128 = scmp.ne.s32.totalorder %s117, %s118
    %p129 = scmp.eq.s32.totalorder %s15, 0
    %p130 = por %p128, %p129
    %p131 = scmp.ne.s32.totalorder %s117, %s118
    %p132 = scmp.eq.s32.totalorder %s16, 1
    %p133 = por %p131, %p132
    %p135 = scmp.ne.s32.totalorder %s118, %s134
    %p136 = scmp.eq.s32.totalorder %s16, 0
    %p137 = por %p135, %p136
    %p138 = scmp.le.s32.totalorder 1, %s10
    %p139 = scmp.lt.s32.totalorder %s10, 3
    %p140 = pnand %p138, %p139
    %p141 = pneg %p140
    // Predicated region
    $region9: #{basic_block_forward.5} parent=5 // pred_check
      _
    $region10: #{basic_block_forward.5} parent=5 // pred_check_branch
      %143 = sbr.rel (%p140) target = $region12
    $region11: #{basic_block_forward.5} parent=5 // pred_region
      %s144 = ssub.s32 %s10, 1
      // Predicated region
      $region13: #{basic_block_forward.5} parent=11 // pred_check
        %p145 = pneg %p83
      $region14: #{basic_block_forward.5} parent=11 // pred_check_branch
        %147 = sbr.rel (%p145) target = $region16
      $region15: #{basic_block_forward.5} parent=11 // pred_region
        _
      $region16: #{basic_block_forward.5} parent=11 // pred_fallthru
        _
      // Predicated region
      $region17: #{basic_block_forward.5} parent=11 // pred_check
        %p148 = pneg %p104
      $region18: #{basic_block_forward.5} parent=11 // pred_check_branch
        %150 = sbr.rel (%p148) target = $region20
      $region19: #{basic_block_forward.5} parent=11 // pred_region
        _
      $region20: #{basic_block_forward.5} parent=11 // pred_fallthru
        _
    $region12: #{basic_block_forward.5} parent=5 // pred_fallthru
      _
    %p151 = scmp.lt.s32.totalorder %s10, 2
    // Predicated region
    $region21: #{basic_block_forward.5} parent=5 // pred_check
      %p152 = pneg %p151
    $region22: #{basic_block_forward.5} parent=5 // pred_check_branch
      %154 = sbr.rel (%p152) target = $region24
    $region23: #{basic_block_forward.5} parent=5 // pred_region
      // Predicated region
      $region25: #{basic_block_forward.5} parent=23 // pred_check
        %p155 = pneg %p30
      $region26: #{basic_block_forward.5} parent=23 // pred_check_branch
        %157 = sbr.rel (%p155) target = $region28
      $region27: #{basic_block_forward.5} parent=23 // pred_region
        %p158 = scmp.lt.s32.totalorder %s10, 1
        %s159 = scalar_select %p158, %s10, 1
        %s160 = smul.addr %s159, 32
        %s161 = smul.addr %s160, 8
        %s162 = scalar_lea.vmem %s0, %s161
      $region28: #{basic_block_forward.5} parent=23 // pred_fallthru
        _
      // Predicated region
      $region29: #{basic_block_forward.5} parent=23 // pred_check
        %p163 = pneg %p56
      $region30: #{basic_block_forward.5} parent=23 // pred_check_branch
        %165 = sbr.rel (%p163) target = $region32
      $region31: #{basic_block_forward.5} parent=23 // pred_region
        %p166 = scmp.lt.s32.totalorder %s10, 1
        %s167 = scalar_select %p166, %s10, 1
        %s168 = smul.addr %s167, 32
        %s169 = smul.addr %s168, 8
        %s170 = scalar_lea.vmem %s1, %s169
      $region32: #{basic_block_forward.5} parent=23 // pred_fallthru
        _
    $region24: #{basic_block_forward.5} parent=5 // pred_fallthru
      _
    %p171 = scmp.le.s32.totalorder 1, %s10
    %p172 = scmp.lt.s32.totalorder %s10, 3
    %p173 = pnand %p171, %p172
    %p174 = pneg %p173
    // Predicated region
    $region33: #{basic_block_forward.5} parent=5 // pred_check
      _
    $region34: #{basic_block_forward.5} parent=5 // pred_check_branch
      %176 = sbr.rel (%p173) target = $region36
    $region35: #{basic_block_forward.5} parent=5 // pred_region
      %s177 = ssub.s32 %s10, 1
      %p178 = scmp.lt.s32.totalorder %s15, 1
      %s179 = scalar_select %p178, %s15, 1
      %s180 = smul.addr %s179, 32
      %s181 = smul.addr %s180, 8
      %s182 = scalar_lea.vmem %s0, %s181
      %p183 = pneg %p36
      %p184 = pneg %p33
      %p185 = scmp.lt.s32.totalorder %s15, 1
      %s186 = scalar_select %p185, %s15, 1
      %s187 = smul.addr %s186, 32
      %s188 = smul.addr %s187, 8
      %s189 = scalar_lea.vmem %s1, %s188
      %p190 = pneg %p62
      %p191 = pneg %p59
      %p192 = pneg %p83
      %p193 = pneg %p80
      %p194 = pneg %p104
      %p195 = pneg %p101
      %p196 = pneg %p130
      %p197 = pneg %p127
      %p198 = scmp.lt.s32.totalorder %s15, 1
      %s199 = scalar_select %p198, %s15, 1
      %s200 = smul.addr %s199, 32
      %s201 = smul.addr %s200, 8
      %s202 = scalar_lea.vmem %s4, %s201
      %p203 = scmp.lt.s32.totalorder %s15, 1
      %s204 = scalar_select %p203, %s15, 1
      %s205 = smul.addr %s204, 32
      %s206 = smul.addr %s205, 8
      %s207 = scalar_lea.vmem %s0, %s206
      %p208 = scmp.lt.s32.totalorder %s15, 1
      %s209 = scalar_select %p208, %s15, 1
      %s210 = smul.addr %s209, 32
      %s211 = smul.addr %s210, 8
      %s212 = scalar_lea.vmem %s1, %s211
      %p213 = scmp.lt.s32.totalorder %s15, 1
      %s214 = scalar_select %p213, %s15, 1
      %s215 = smul.addr %s214, 32
      %s216 = smul.addr %s215, 8
      %s217 = scalar_lea.vmem %s4, %s216
      %v218 = vld [vmem:[%s207] sm:$0xff]
      %v219 = vld [vmem:[%s207 + $0x8] sm:$0xff]
      %v220 = vld [vmem:[%s207 + $0x10] sm:$0xff]
      %v221 = vld [vmem:[%s207 + $0x18] sm:$0xff]
      %v222 = vld [vmem:[%s207 + $0x20] sm:$0xff]
      %v223 = vld [vmem:[%s207 + $0x28] sm:$0xff]
      %v224 = vld [vmem:[%s207 + $0x30] sm:$0xff]
      %v225 = vld [vmem:[%s207 + $0x38] sm:$0xff]
      %v226 = vld [vmem:[%s207 + $0x40] sm:$0xff]
      %v227 = vld [vmem:[%s207 + $0x48] sm:$0xff]
      %v228 = vld [vmem:[%s207 + $0x50] sm:$0xff]
      %v229 = vld [vmem:[%s207 + $0x58] sm:$0xff]
      %v230 = vld [vmem:[%s207 + $0x60] sm:$0xff]
      %v231 = vld [vmem:[%s207 + $0x68] sm:$0xff]
      %v232 = vld [vmem:[%s207 + $0x70] sm:$0xff]
      %v233 = vld [vmem:[%s207 + $0x78] sm:$0xff]
      %v234 = vld [vmem:[%s207 + $0x80] sm:$0xff]
      %v235 = vld [vmem:[%s207 + $0x88] sm:$0xff]
      %v236 = vld [vmem:[%s207 + $0x90] sm:$0xff]
      %v237 = vld [vmem:[%s207 + $0x98] sm:$0xff]
      %v238 = vld [vmem:[%s207 + $0xa0] sm:$0xff]
      %v239 = vld [vmem:[%s207 + $0xa8] sm:$0xff]
      %v240 = vld [vmem:[%s207 + $0xb0] sm:$0xff]
      %v241 = vld [vmem:[%s207 + $0xb8] sm:$0xff]
      %v242 = vld [vmem:[%s207 + $0xc0] sm:$0xff]
      %v243 = vld [vmem:[%s207 + $0xc8] sm:$0xff]
      %v244 = vld [vmem:[%s207 + $0xd0] sm:$0xff]
      %v245 = vld [vmem:[%s207 + $0xd8] sm:$0xff]
      %v246 = vld [vmem:[%s207 + $0xe0] sm:$0xff]
      %v247 = vld [vmem:[%s207 + $0xe8] sm:$0xff]
      %v248 = vld [vmem:[%s207 + $0xf0] sm:$0xff]
      %v249 = vld [vmem:[%s207 + $0xf8] sm:$0xff]
      %v250 = vld [vmem:[%s2] sm:$0x1]
      %v252 = vlaneseq
      %v253 = vshrl.u32 %v252, 7
      %v254 = vsub.s32 0, %v253
      %v255 = vrot.slane %v250, %v254
      %v257 = vmul.f32 %v218, %v255
      %v258 = vmul.f32 %v219, %v255
      %v259 = vmul.f32 %v220, %v255
      %v260 = vmul.f32 %v221, %v255
      %v261 = vmul.f32 %v222, %v255
      %v262 = vmul.f32 %v223, %v255
      %v263 = vmul.f32 %v224, %v255
      %v264 = vmul.f32 %v225, %v255
      %v265 = vmul.f32 %v226, %v255
      %v266 = vmul.f32 %v227, %v255
      %v267 = vmul.f32 %v228, %v255
      %v268 = vmul.f32 %v229, %v255
      %v269 = vmul.f32 %v230, %v255
      %v270 = vmul.f32 %v231, %v255
      %v271 = vmul.f32 %v232, %v255
      %v272 = vmul.f32 %v233, %v255
      %v273 = vmul.f32 %v234, %v255
      %v274 = vmul.f32 %v235, %v255
      %v275 = vmul.f32 %v236, %v255
      %v276 = vmul.f32 %v237, %v255
      %v277 = vmul.f32 %v238, %v255
      %v278 = vmul.f32 %v239, %v255
      %v279 = vmul.f32 %v240, %v255
      %v280 = vmul.f32 %v241, %v255
      %v281 = vmul.f32 %v242, %v255
      %v282 = vmul.f32 %v243, %v255
      %v283 = vmul.f32 %v244, %v255
      %v284 = vmul.f32 %v245, %v255
      %v285 = vmul.f32 %v246, %v255
      %v286 = vmul.f32 %v247, %v255
      %v287 = vmul.f32 %v248, %v255
      %v288 = vmul.f32 %v249, %v255
      %v289 = vld [vmem:[%s3] sm:$0x1]
      %v291 = vlaneseq
      %v292 = vshrl.u32 %v291, 7
      %v293 = vsub.s32 0, %v292
      %v294 = vrot.slane %v289, %v293
      %v296 = vadd.f32 %v257, %v294
      %v297 = vadd.f32 %v258, %v294
      %v298 = vadd.f32 %v259, %v294
      %v299 = vadd.f32 %v260, %v294
      %v300 = vadd.f32 %v261, %v294
      %v301 = vadd.f32 %v262, %v294
      %v302 = vadd.f32 %v263, %v294
      %v303 = vadd.f32 %v264, %v294
      %v304 = vadd.f32 %v265, %v294
      %v305 = vadd.f32 %v266, %v294
      %v306 = vadd.f32 %v267, %v294
      %v307 = vadd.f32 %v268, %v294
      %v308 = vadd.f32 %v269, %v294
      %v309 = vadd.f32 %v270, %v294
      %v310 = vadd.f32 %v271, %v294
      %v311 = vadd.f32 %v272, %v294
      %v312 = vadd.f32 %v273, %v294
      %v313 = vadd.f32 %v274, %v294
      %v314 = vadd.f32 %v275, %v294
      %v315 = vadd.f32 %v276, %v294
      %v316 = vadd.f32 %v277, %v294
      %v317 = vadd.f32 %v278, %v294
      %v318 = vadd.f32 %v279, %v294
      %v319 = vadd.f32 %v280, %v294
      %v320 = vadd.f32 %v281, %v294
      %v321 = vadd.f32 %v282, %v294
      %v322 = vadd.f32 %v283, %v294
      %v323 = vadd.f32 %v284, %v294
      %v324 = vadd.f32 %v285, %v294
      %v325 = vadd.f32 %v286, %v294
      %v326 = vadd.f32 %v287, %v294
      %v327 = vadd.f32 %v288, %v294
      %v328 = vld [vmem:[%s212] sm:$0xff]
      %v329 = vld [vmem:[%s212 + $0x8] sm:$0xff]
      %v330 = vld [vmem:[%s212 + $0x10] sm:$0xff]
      %v331 = vld [vmem:[%s212 + $0x18] sm:$0xff]
      %v332 = vld [vmem:[%s212 + $0x20] sm:$0xff]
      %v333 = vld [vmem:[%s212 + $0x28] sm:$0xff]
      %v334 = vld [vmem:[%s212 + $0x30] sm:$0xff]
      %v335 = vld [vmem:[%s212 + $0x38] sm:$0xff]
      %v336 = vld [vmem:[%s212 + $0x40] sm:$0xff]
      %v337 = vld [vmem:[%s212 + $0x48] sm:$0xff]
      %v338 = vld [vmem:[%s212 + $0x50] sm:$0xff]
      %v339 = vld [vmem:[%s212 + $0x58] sm:$0xff]
      %v340 = vld [vmem:[%s212 + $0x60] sm:$0xff]
      %v341 = vld [vmem:[%s212 + $0x68] sm:$0xff]
      %v342 = vld [vmem:[%s212 + $0x70] sm:$0xff]
      %v343 = vld [vmem:[%s212 + $0x78] sm:$0xff]
      %v344 = vld [vmem:[%s212 + $0x80] sm:$0xff]
      %v345 = vld [vmem:[%s212 + $0x88] sm:$0xff]
      %v346 = vld [vmem:[%s212 + $0x90] sm:$0xff]
      %v347 = vld [vmem:[%s212 + $0x98] sm:$0xff]
      %v348 = vld [vmem:[%s212 + $0xa0] sm:$0xff]
      %v349 = vld [vmem:[%s212 + $0xa8] sm:$0xff]
      %v350 = vld [vmem:[%s212 + $0xb0] sm:$0xff]
      %v351 = vld [vmem:[%s212 + $0xb8] sm:$0xff]
      %v352 = vld [vmem:[%s212 + $0xc0] sm:$0xff]
      %v353 = vld [vmem:[%s212 + $0xc8] sm:$0xff]
      %v354 = vld [vmem:[%s212 + $0xd0] sm:$0xff]
      %v355 = vld [vmem:[%s212 + $0xd8] sm:$0xff]
      %v356 = vld [vmem:[%s212 + $0xe0] sm:$0xff]
      %v357 = vld [vmem:[%s212 + $0xe8] sm:$0xff]
      %v358 = vld [vmem:[%s212 + $0xf0] sm:$0xff]
      %v359 = vld [vmem:[%s212 + $0xf8] sm:$0xff]
      %v360 = vadd.f32 %v296, %v328
      %v361 = vadd.f32 %v297, %v329
      %v362 = vadd.f32 %v298, %v330
      %v363 = vadd.f32 %v299, %v331
      %v364 = vadd.f32 %v300, %v332
      %v365 = vadd.f32 %v301, %v333
      %v366 = vadd.f32 %v302, %v334
      %v367 = vadd.f32 %v303, %v335
      %v368 = vadd.f32 %v304, %v336
      %v369 = vadd.f32 %v305, %v337
      %v370 = vadd.f32 %v306, %v338
      %v371 = vadd.f32 %v307, %v339
      %v372 = vadd.f32 %v308, %v340
      %v373 = vadd.f32 %v309, %v341
      %v374 = vadd.f32 %v310, %v342
      %v375 = vadd.f32 %v311, %v343
      %v376 = vadd.f32 %v312, %v344
      %v377 = vadd.f32 %v313, %v345
      %v378 = vadd.f32 %v314, %v346
      %v379 = vadd.f32 %v315, %v347
      %v380 = vadd.f32 %v316, %v348
      %v381 = vadd.f32 %v317, %v349
      %v382 = vadd.f32 %v318, %v350
      %v383 = vadd.f32 %v319, %v351
      %v384 = vadd.f32 %v320, %v352
      %v385 = vadd.f32 %v321, %v353
      %v386 = vadd.f32 %v322, %v354
      %v387 = vadd.f32 %v323, %v355
      %v388 = vadd.f32 %v324, %v356
      %v389 = vadd.f32 %v325, %v357
      %v390 = vadd.f32 %v326, %v358
      %v391 = vadd.f32 %v327, %v359
      %v392 = vmax.f32 %v360, 0.0
      %v393 = vmax.f32 %v361, 0.0
      %v394 = vmax.f32 %v362, 0.0
      %v395 = vmax.f32 %v363, 0.0
      %v396 = vmax.f32 %v364, 0.0
      %v397 = vmax.f32 %v365, 0.0
      %v398 = vmax.f32 %v366, 0.0
      %v399 = vmax.f32 %v367, 0.0
      %v400 = vmax.f32 %v368, 0.0
      %v401 = vmax.f32 %v369, 0.0
      %v402 = vmax.f32 %v370, 0.0
      %v403 = vmax.f32 %v371, 0.0
      %v404 = vmax.f32 %v372, 0.0
      %v405 = vmax.f32 %v373, 0.0
      %v406 = vmax.f32 %v374, 0.0
      %v407 = vmax.f32 %v375, 0.0
      %v408 = vmax.f32 %v376, 0.0
      %v409 = vmax.f32 %v377, 0.0
      %v410 = vmax.f32 %v378, 0.0
      %v411 = vmax.f32 %v379, 0.0
      %v412 = vmax.f32 %v380, 0.0
      %v413 = vmax.f32 %v381, 0.0
      %v414 = vmax.f32 %v382, 0.0
      %v415 = vmax.f32 %v383, 0.0
      %v416 = vmax.f32 %v384, 0.0
      %v417 = vmax.f32 %v385, 0.0
      %v418 = vmax.f32 %v386, 0.0
      %v419 = vmax.f32 %v387, 0.0
      %v420 = vmax.f32 %v388, 0.0
      %v421 = vmax.f32 %v389, 0.0
      %v422 = vmax.f32 %v390, 0.0
      %v423 = vmax.f32 %v391, 0.0
      %vm424 = vcmask 31744
      %425 = vst.msk [vmem:[%s217] sm:$0xff] %vm424, %v392
      %426 = vst.msk [vmem:[%s217 + $0x8] sm:$0xff] %vm424, %v393
      %427 = vst.msk [vmem:[%s217 + $0x10] sm:$0xff] %vm424, %v394
      %428 = vst.msk [vmem:[%s217 + $0x18] sm:$0xff] %vm424, %v395
      %429 = vst.msk [vmem:[%s217 + $0x20] sm:$0xff] %vm424, %v396
      %430 = vst.msk [vmem:[%s217 + $0x28] sm:$0xff] %vm424, %v397
      %431 = vst.msk [vmem:[%s217 + $0x30] sm:$0xff] %vm424, %v398
      %432 = vst.msk [vmem:[%s217 + $0x38] sm:$0xff] %vm424, %v399
      %433 = vst.msk [vmem:[%s217 + $0x40] sm:$0xff] %vm424, %v400
      %434 = vst.msk [vmem:[%s217 + $0x48] sm:$0xff] %vm424, %v401
      %435 = vst.msk [vmem:[%s217 + $0x50] sm:$0xff] %vm424, %v402
      %436 = vst.msk [vmem:[%s217 + $0x58] sm:$0xff] %vm424, %v403
      %437 = vst.msk [vmem:[%s217 + $0x60] sm:$0xff] %vm424, %v404
      %438 = vst.msk [vmem:[%s217 + $0x68] sm:$0xff] %vm424, %v405
      %439 = vst.msk [vmem:[%s217 + $0x70] sm:$0xff] %vm424, %v406
      %440 = vst.msk [vmem:[%s217 + $0x78] sm:$0xff] %vm424, %v407
      %441 = vst.msk [vmem:[%s217 + $0x80] sm:$0xff] %vm424, %v408
      %442 = vst.msk [vmem:[%s217 + $0x88] sm:$0xff] %vm424, %v409
      %443 = vst.msk [vmem:[%s217 + $0x90] sm:$0xff] %vm424, %v410
      %444 = vst.msk [vmem:[%s217 + $0x98] sm:$0xff] %vm424, %v411
      %445 = vst.msk [vmem:[%s217 + $0xa0] sm:$0xff] %vm424, %v412
      %446 = vst.msk [vmem:[%s217 + $0xa8] sm:$0xff] %vm424, %v413
      %447 = vst.msk [vmem:[%s217 + $0xb0] sm:$0xff] %vm424, %v414
      %448 = vst.msk [vmem:[%s217 + $0xb8] sm:$0xff] %vm424, %v415
      %449 = vst.msk [vmem:[%s217 + $0xc0] sm:$0xff] %vm424, %v416
      %450 = vst.msk [vmem:[%s217 + $0xc8] sm:$0xff] %vm424, %v417
      %451 = vst.msk [vmem:[%s217 + $0xd0] sm:$0xff] %vm424, %v418
      %452 = vst.msk [vmem:[%s217 + $0xd8] sm:$0xff] %vm424, %v419
      %453 = vst.msk [vmem:[%s217 + $0xe0] sm:$0xff] %vm424, %v420
      %454 = vst.msk [vmem:[%s217 + $0xe8] sm:$0xff] %vm424, %v421
      %455 = vst.msk [vmem:[%s217 + $0xf0] sm:$0xff] %vm424, %v422
      %456 = vst.msk [vmem:[%s217 + $0xf8] sm:$0xff] %vm424, %v423
      %p457 = scmp.lt.s32.totalorder %s15, 1
      %s458 = scalar_select %p457, %s15, 1
      %s459 = smul.addr %s458, 32
      %s460 = smul.addr %s459, 8
      %s461 = scalar_lea.vmem %s4, %s460
      // Predicated region
      $region37: #{basic_block_forward.5} parent=35 // pred_check
        %p462 = pneg %p127
      $region38: #{basic_block_forward.5} parent=35 // pred_check_branch
        %464 = sbr.rel (%p462) target = $region40
      $region39: #{basic_block_forward.5} parent=35 // pred_region
        _
      $region40: #{basic_block_forward.5} parent=35 // pred_fallthru
        _
    $region36: #{basic_block_forward.5} parent=5 // pred_fallthru
      _
    %p465 = scmp.le.s32.totalorder 2, %s10
    // Predicated region
    $region41: #{basic_block_forward.5} parent=5 // pred_check
      %p466 = pneg %p465
    $region42: #{basic_block_forward.5} parent=5 // pred_check_branch
      %468 = sbr.rel (%p466) target = $region44
    $region43: #{basic_block_forward.5} parent=5 // pred_region
      %s469 = ssub.s32 %s10, 2
      // Predicated region
      $region45: #{basic_block_forward.5} parent=43 // pred_check
        %p470 = pneg %p133
      $region46: #{basic_block_forward.5} parent=43 // pred_check_branch
        %472 = sbr.rel (%p470) target = $region48
      $region47: #{basic_block_forward.5} parent=43 // pred_region
        %p473 = scmp.lt.s32.totalorder %s16, 1
        %s474 = scalar_select %p473, %s16, 1
        %s475 = smul.addr %s474, 32
        %s476 = smul.addr %s475, 8
        %s477 = scalar_lea.vmem %s4, %s476
      $region48: #{basic_block_forward.5} parent=43 // pred_fallthru
        _
    $region44: #{basic_block_forward.5} parent=5 // pred_fallthru
      _
  $region6: #{basic_block_forward.5} parent=0 // loop_footer
    %s14 = sadd.s32 1, %s10
  $region7: #{basic_block_forward.5} parent=0 // loop_footer_branch
    %9 = sbr.rel target = $region3
  $region8: #{basic_block_forward.5} parent=0 // loop_exit
    _

// kernel: basic_block_forward.3
$region0: #{basic_block_forward.3}
  #allocation0 [shape = 'u32[]', space=smem, size = 0x4, offset = 0x4, fixed_abs, tag = 'smem constant byte address 0x4 - core index']
  #allocation1 [shape = 'u32[144,128]{1,0:T(1,128)}', space=vmem, size = 0x12000, scoped, tag = 'internal scratch']
  #allocation2 [shape = 'f32[1,18,18,4]{3,2,1,0:T(8,128)}', space=vmem, size = 0x36000, scoped, tag = 'scratch operand']
  #allocation3 [shape = 'f32[1,16,16,36]{3,2,1,0:T(8,128)}', space=vmem, size = 0x20000, scoped, tag = 'scratch operand']
  %s0 = inlined_call_operand.vmem [shape: f32[2,16,16,4], index: 0, kind: input, shape index: {}]
  %s1 = inlined_call_operand.vmem [shape: f32[36,4], index: 1, kind: input, shape index: {}]
  %s2 = inlined_call_operand.vmem [shape: f32[1,4], index: 2, kind: input, shape index: {}]
  %s3 = inlined_call_operand.vmem [shape: f32[1,4], index: 3, kind: input, shape index: {}]
  %s4 = inlined_call_operand.vmem [shape: f32[2,16,16,4], index: 4, kind: output, shape index: {0}]
  %s5 = inlined_call_operand.vmem [shape: f32[2,1,4], index: 5, kind: output, shape index: {1}]
  %s6 = inlined_call_operand.vmem [shape: f32[2,1,4], index: 6, kind: output, shape index: {2}]
  %7 = xla_tuple %s4, %s5, %s6
  %s8 = sld [smem:[#allocation0]]
  $region65: #{basic_block_forward.3} parent=0
    _
  %s10 = ssub.s32 1, %s8
  %s11 = scalar_select 0, %s10, %s8
  loop: start=0, step=1, limit=4
  $region2: #{basic_block_forward.3} parent=0 // loop_pre_header
    _
  $region3: #{basic_block_forward.3} parent=0 // loop_header
    %s13 = sphi 0, %s17
    %p14 = scmp.ge.s32.totalorder %s13, 4
    %s23 = sphi 0, %s25
    %s26 = sphi 0, %s23
    %s27 = sphi 0, %s26
    %s43 = sphi 0, %s27
    %s47 = sphi 0, %s47
    %s49 = sphi 0, %s47
    %s50 = sphi 0, %s49
    %s64 = sphi 0, %s50
    %s68 = sphi 0, %s68
    %s70 = sphi 0, %s68
    %s71 = sphi 0, %s70
    %s85 = sphi 0, %s71
    %s89 = sphi 0, %s89
    %s91 = sphi 0, %s89
    %s92 = sphi 0, %s91
    %s106 = sphi 0, %s92
    %s112 = sphi 0, %s114
    %s115 = sphi 0, %s112
    %s116 = sphi 0, %s115
    %s132 = sphi 0, %s116
    %s138 = sphi 0, %s140
    %s141 = sphi 0, %s138
    %s142 = sphi 0, %s141
    %s158 = sphi 0, %s142
    %s164 = sphi 0, %s166
    %s167 = sphi 0, %s164
    %s168 = sphi 0, %s167
    %s184 = sphi 0, %s168
  $region4: #{basic_block_forward.3} parent=0 // loop_header_branch
    %16 = sbr.rel (%p14) target = $region8
  $region5: #{basic_block_forward.3} parent=0 // loop_body
    %s18 = ssub.s32 %s13, 1
    %s19 = ssub.s32 %s13, 2
    %s20 = sadd.s32 %s13, 1
    %s21 = ssub.s32 %s13, %s20
    %p22 = scmp.eq.s32.totalorder %s21, 0
    %s24 = sadd.s32 %s23, 1
    %s25 = scalar_select %p22, %s23, %s24
    %p28 = pneg %p22
    %p29 = scmp.eq.s32.totalorder %s13, 1
    %p30 = por %p28, %p29
    %p31 = scmp.ne.s32.totalorder %s23, %s26
    %p32 = scmp.eq.s32.totalorder %s13, 0
    %p33 = por %p31, %p32
    %p34 = scmp.ne.s32.totalorder %s23, %s26
    %p35 = scmp.eq.s32.totalorder %s18, 1
    %p36 = por %p34, %p35
    %p37 = scmp.ne.s32.totalorder %s26, %s27
    %p38 = scmp.eq.s32.totalorder %s18, 0
    %p39 = por %p37, %p38
    %p40 = scmp.ne.s32.totalorder %s26, %s27
    %p41 = scmp.eq.s32.totalorder %s19, 1
    %p42 = por %p40, %p41
    %p44 = scmp.ne.s32.totalorder %s27, %s43
    %p45 = scmp.eq.s32.totalorder %s19, 0
    %p46 = por %p44, %p45
    %s48 = sadd.s32 %s47, 1
    %p51 = scmp.eq.s32.totalorder %s13, 1
    %p52 = scmp.ne.s32.totalorder %s47, %s49
    %p53 = scmp.eq.s32.totalorder %s13, 0
    %p54 = por %p52, %p53
    %p55 = scmp.ne.s32.totalorder %s47, %s49
    %p56 = scmp.eq.s32.totalorder %s18, 1
    %p57 = por %p55, %p56
    %p58 = scmp.ne.s32.totalorder %s49, %s50
    %p59 = scmp.eq.s32.totalorder %s18, 0
    %p60 = por %p58, %p59
    %p61 = scmp.ne.s32.totalorder %s49, %s50
    %p62 = scmp.eq.s32.totalorder %s19, 1
    %p63 = por %p61, %p62
    %p65 = scmp.ne.s32.totalorder %s50, %s64
    %p66 = scmp.eq.s32.totalorder %s19, 0
    %p67 = por %p65, %p66
    %s69 = sadd.s32 %s68, 1
    %p72 = scmp.eq.s32.totalorder %s13, 1
    %p73 = scmp.ne.s32.totalorder %s68, %s70
    %p74 = scmp.eq.s32.totalorder %s13, 0
    %p75 = por %p73, %p74
    %p76 = scmp.ne.s32.totalorder %s68, %s70
    %p77 = scmp.eq.s32.totalorder %s18, 1
    %p78 = por %p76, %p77
    %p79 = scmp.ne.s32.totalorder %s70, %s71
    %p80 = scmp.eq.s32.totalorder %s18, 0
    %p81 = por %p79, %p80
    %p82 = scmp.ne.s32.totalorder %s70, %s71
    %p83 = scmp.eq.s32.totalorder %s19, 1
    %p84 = por %p82, %p83
    %p86 = scmp.ne.s32.totalorder %s71, %s85
    %p87 = scmp.eq.s32.totalorder %s19, 0
    %p88 = por %p86, %p87
    %s90 = sadd.s32 %s89, 1
    %p93 = scmp.eq.s32.totalorder %s13, 1
    %p94 = scmp.ne.s32.totalorder %s89, %s91
    %p95 = scmp.eq.s32.totalorder %s13, 0
    %p96 = por %p94, %p95
    %p97 = scmp.ne.s32.totalorder %s89, %s91
    %p98 = scmp.eq.s32.totalorder %s18, 1
    %p99 = por %p97, %p98
    %p100 = scmp.ne.s32.totalorder %s91, %s92
    %p101 = scmp.eq.s32.totalorder %s18, 0
    %p102 = por %p100, %p101
    %p103 = scmp.ne.s32.totalorder %s91, %s92
    %p104 = scmp.eq.s32.totalorder %s19, 1
    %p105 = por %p103, %p104
    %p107 = scmp.ne.s32.totalorder %s92, %s106
    %p108 = scmp.eq.s32.totalorder %s19, 0
    %p109 = por %p107, %p108
    %s110 = ssub.s32 %s13, %s20
    %p111 = scmp.eq.s32.totalorder %s110, 0
    %s113 = sadd.s32 %s112, 1
    %s114 = scalar_select %p111, %s112, %s113
    %p117 = pneg %p111
    %p118 = scmp.eq.s32.totalorder %s13, 1
    %p119 = por %p117, %p118
    %p120 = scmp.ne.s32.totalorder %s112, %s115
    %p121 = scmp.eq.s32.totalorder %s13, 0
    %p122 = por %p120, %p121
    %p123 = scmp.ne.s32.totalorder %s112, %s115
    %p124 = scmp.eq.s32.totalorder %s18, 1
    %p125 = por %p123, %p124
    %p126 = scmp.ne.s32.totalorder %s115, %s116
    %p127 = scmp.eq.s32.totalorder %s18, 0
    %p128 = por %p126, %p127
    %p129 = scmp.ne.s32.totalorder %s115, %s116
    %p130 = scmp.eq.s32.totalorder %s19, 1
    %p131 = por %p129, %p130
    %p133 = scmp.ne.s32.totalorder %s116, %s132
    %p134 = scmp.eq.s32.totalorder %s19, 0
    %p135 = por %p133, %p134
    %s136 = ssub.s32 %s13, %s20
    %p137 = scmp.eq.s32.totalorder %s136, 0
    %s139 = sadd.s32 %s138, 1
    %s140 = scalar_select %p137, %s138, %s139
    %p143 = pneg %p137
    %p144 = scmp.eq.s32.totalorder %s13, 1
    %p145 = por %p143, %p144
    %p146 = scmp.ne.s32.totalorder %s138, %s141
    %p147 = scmp.eq.s32.totalorder %s13, 0
    %p148 = por %p146, %p147
    %p149 = scmp.ne.s32.totalorder %s138, %s141
    %p150 = scmp.eq.s32.totalorder %s18, 1
    %p151 = por %p149, %p150
    %p152 = scmp.ne.s32.totalorder %s141, %s142
    %p153 = scmp.eq.s32.totalorder %s18, 0
    %p154 = por %p152, %p153
    %p155 = scmp.ne.s32.totalorder %s141, %s142
    %p156 = scmp.eq.s32.totalorder %s19, 1
    %p157 = por %p155, %p156
    %p159 = scmp.ne.s32.totalorder %s142, %s158
    %p160 = scmp.eq.s32.totalorder %s19, 0
    %p161 = por %p159, %p160
    %s162 = ssub.s32 %s13, %s20
    %p163 = scmp.eq.s32.totalorder %s162, 0
    %s165 = sadd.s32 %s164, 1
    %s166 = scalar_select %p163, %s164, %s165
    %p169 = pneg %p163
    %p170 = scmp.eq.s32.totalorder %s13, 1
    %p171 = por %p169, %p170
    %p172 = scmp.ne.s32.totalorder %s164, %s167
    %p173 = scmp.eq.s32.totalorder %s13, 0
    %p174 = por %p172, %p173
    %p175 = scmp.ne.s32.totalorder %s164, %s167
    %p176 = scmp.eq.s32.totalorder %s18, 1
    %p177 = por %p175, %p176
    %p178 = scmp.ne.s32.totalorder %s167, %s168
    %p179 = scmp.eq.s32.totalorder %s18, 0
    %p180 = por %p178, %p179
    %p181 = scmp.ne.s32.totalorder %s167, %s168
    %p182 = scmp.eq.s32.totalorder %s19, 1
    %p183 = por %p181, %p182
    %p185 = scmp.ne.s32.totalorder %s168, %s184
    %p186 = scmp.eq.s32.totalorder %s19, 0
    %p187 = por %p185, %p186
    %p188 = scmp.le.s32.totalorder 1, %s13
    %p189 = scmp.lt.s32.totalorder %s13, 3
    %p190 = pnand %p188, %p189
    %p191 = pneg %p190
    // Predicated region
    $region9: #{basic_block_forward.3} parent=5 // pred_check
      _
    $region10: #{basic_block_forward.3} parent=5 // pred_check_branch
      %193 = sbr.rel (%p190) target = $region12
    $region11: #{basic_block_forward.3} parent=5 // pred_region
      %s194 = ssub.s32 %s13, 1
      // Predicated region
      $region13: #{basic_block_forward.3} parent=11 // pred_check
        %p195 = pneg %p60
      $region14: #{basic_block_forward.3} parent=11 // pred_check_branch
        %197 = sbr.rel (%p195) target = $region16
      $region15: #{basic_block_forward.3} parent=11 // pred_region
        _
      $region16: #{basic_block_forward.3} parent=11 // pred_fallthru
        _
      // Predicated region
      $region17: #{basic_block_forward.3} parent=11 // pred_check
        %p198 = pneg %p81
      $region18: #{basic_block_forward.3} parent=11 // pred_check_branch
        %200 = sbr.rel (%p198) target = $region20
      $region19: #{basic_block_forward.3} parent=11 // pred_region
        _
      $region20: #{basic_block_forward.3} parent=11 // pred_fallthru
        _
      // Predicated region
      $region21: #{basic_block_forward.3} parent=11 // pred_check
        %p201 = pneg %p102
      $region22: #{basic_block_forward.3} parent=11 // pred_check_branch
        %203 = sbr.rel (%p201) target = $region24
      $region23: #{basic_block_forward.3} parent=11 // pred_region
        _
      $region24: #{basic_block_forward.3} parent=11 // pred_fallthru
        _
    $region12: #{basic_block_forward.3} parent=5 // pred_fallthru
      _
    %p204 = scmp.lt.s32.totalorder %s13, 2
    // Predicated region
    $region25: #{basic_block_forward.3} parent=5 // pred_check
      %p205 = pneg %p204
    $region26: #{basic_block_forward.3} parent=5 // pred_check_branch
      %207 = sbr.rel (%p205) target = $region28
    $region27: #{basic_block_forward.3} parent=5 // pred_region
      // Predicated region
      $region29: #{basic_block_forward.3} parent=27 // pred_check
        %p208 = pneg %p33
      $region30: #{basic_block_forward.3} parent=27 // pred_check_branch
        %210 = sbr.rel (%p208) target = $region32
      $region31: #{basic_block_forward.3} parent=27 // pred_region
        %p211 = scmp.lt.s32.totalorder %s13, 1
        %s212 = scalar_select %p211, %s13, 1
        %s213 = smul.addr %s212, 32
        %s214 = smul.addr %s213, 8
        %s215 = scalar_lea.vmem %s0, %s214
      $region32: #{basic_block_forward.3} parent=27 // pred_fallthru
        _
    $region28: #{basic_block_forward.3} parent=5 // pred_fallthru
      _
    %p216 = scmp.le.s32.totalorder 1, %s13
    %p217 = scmp.lt.s32.totalorder %s13, 3
    %p218 = pnand %p216, %p217
    %p219 = pneg %p218
    // Predicated region
    $region33: #{basic_block_forward.3} parent=5 // pred_check
      _
    $region34: #{basic_block_forward.3} parent=5 // pred_check_branch
      %221 = sbr.rel (%p218) target = $region36
    $region35: #{basic_block_forward.3} parent=5 // pred_region
      %s222 = ssub.s32 %s13, 1
      %p223 = scmp.lt.s32.totalorder %s18, 1
      %s224 = scalar_select %p223, %s18, 1
      %s225 = smul.addr %s224, 32
      %s226 = smul.addr %s225, 8
      %s227 = scalar_lea.vmem %s0, %s226
      %p228 = pneg %p39
      %p229 = pneg %p36
      %p230 = pneg %p60
      %p231 = pneg %p57
      %p232 = pneg %p81
      %p233 = pneg %p78
      %p234 = pneg %p102
      %p235 = pneg %p99
      %p236 = pneg %p128
      %p237 = pneg %p125
      %p238 = scmp.lt.s32.totalorder %s18, 1
      %s239 = scalar_select %p238, %s18, 1
      %s240 = smul.addr %s239, 32
      %s241 = smul.addr %s240, 8
      %s242 = scalar_lea.vmem %s4, %s241
      %p243 = pneg %p154
      %p244 = pneg %p151
      %p245 = scmp.lt.s32.totalorder %s18, 1
      %s246 = scalar_select %p245, %s18, 1
      %s247 = scalar_lea.vmem %s5, %s246
      %p248 = pneg %p180
      %p249 = pneg %p177
      %p250 = scmp.lt.s32.totalorder %s18, 1
      %s251 = scalar_select %p250, %s18, 1
      %s252 = scalar_lea.vmem %s6, %s251
      %p253 = scmp.lt.s32.totalorder %s18, 1
      %s254 = scalar_select %p253, %s18, 1
      %s255 = smul.addr %s254, 32
      %s256 = smul.addr %s255, 8
      %s257 = scalar_lea.vmem %s0, %s256
      %p258 = scmp.lt.s32.totalorder %s18, 1
      %s259 = scalar_select %p258, %s18, 1
      %s260 = smul.addr %s259, 32
      %s261 = smul.addr %s260, 8
      %s262 = scalar_lea.vmem %s4, %s261
      %p263 = scmp.lt.s32.totalorder %s18, 1
      %s264 = scalar_select %p263, %s18, 1
      %s265 = scalar_lea.vmem %s5, %s264
      %p266 = scmp.lt.s32.totalorder %s18, 1
      %s267 = scalar_select %p266, %s18, 1
      %s268 = scalar_lea.vmem %s6, %s267
      %v269 = vld [vmem:[%s257] sm:$0xff]
      %v270 = vld [vmem:[%s257 + $0x8] sm:$0xff]
      %v271 = vld [vmem:[%s257 + $0x10] sm:$0xff]
      %v272 = vld [vmem:[%s257 + $0x18] sm:$0xff]
      %v273 = vld [vmem:[%s257 + $0x20] sm:$0xff]
      %v274 = vld [vmem:[%s257 + $0x28] sm:$0xff]
      %v275 = vld [vmem:[%s257 + $0x30] sm:$0xff]
      %v276 = vld [vmem:[%s257 + $0x38] sm:$0xff]
      %v277 = vld [vmem:[%s257 + $0x40] sm:$0xff]
      %v278 = vld [vmem:[%s257 + $0x48] sm:$0xff]
      %v279 = vld [vmem:[%s257 + $0x50] sm:$0xff]
      %v280 = vld [vmem:[%s257 + $0x58] sm:$0xff]
      %v281 = vld [vmem:[%s257 + $0x60] sm:$0xff]
      %v282 = vld [vmem:[%s257 + $0x68] sm:$0xff]
      %v283 = vld [vmem:[%s257 + $0x70] sm:$0xff]
      %v284 = vld [vmem:[%s257 + $0x78] sm:$0xff]
      %v285 = vld [vmem:[%s257 + $0x80] sm:$0xff]
      %v286 = vld [vmem:[%s257 + $0x88] sm:$0xff]
      %v287 = vld [vmem:[%s257 + $0x90] sm:$0xff]
      %v288 = vld [vmem:[%s257 + $0x98] sm:$0xff]
      %v289 = vld [vmem:[%s257 + $0xa0] sm:$0xff]
      %v290 = vld [vmem:[%s257 + $0xa8] sm:$0xff]
      %v291 = vld [vmem:[%s257 + $0xb0] sm:$0xff]
      %v292 = vld [vmem:[%s257 + $0xb8] sm:$0xff]
      %v293 = vld [vmem:[%s257 + $0xc0] sm:$0xff]
      %v294 = vld [vmem:[%s257 + $0xc8] sm:$0xff]
      %v295 = vld [vmem:[%s257 + $0xd0] sm:$0xff]
      %v296 = vld [vmem:[%s257 + $0xd8] sm:$0xff]
      %v297 = vld [vmem:[%s257 + $0xe0] sm:$0xff]
      %v298 = vld [vmem:[%s257 + $0xe8] sm:$0xff]
      %v299 = vld [vmem:[%s257 + $0xf0] sm:$0xff]
      %v300 = vld [vmem:[%s257 + $0xf8] sm:$0xff]
      %s301 = scalar_lea.vmem [#allocation2], 24
      %vm302 = vcmask 31744
      %303 = vst.msk [vmem:[%s301 + $0x1] sm:$0xff] %vm302, %v269
      %304 = vst.msk [vmem:[%s301 + $0x9] sm:$0xff] %vm302, %v270
      %305 = vst.msk [vmem:[%s301 + $0x19] sm:$0xff] %vm302, %v271
      %306 = vst.msk [vmem:[%s301 + $0x21] sm:$0xff] %vm302, %v272
      %307 = vst.msk [vmem:[%s301 + $0x31] sm:$0xff] %vm302, %v273
      %308 = vst.msk [vmem:[%s301 + $0x39] sm:$0xff] %vm302, %v274
      %309 = vst.msk [vmem:[%s301 + $0x49] sm:$0xff] %vm302, %v275
      %310 = vst.msk [vmem:[%s301 + $0x51] sm:$0xff] %vm302, %v276
      %311 = vst.msk [vmem:[%s301 + $0x61] sm:$0xff] %vm302, %v277
      %312 = vst.msk [vmem:[%s301 + $0x69] sm:$0xff] %vm302, %v278
      %313 = vst.msk [vmem:[%s301 + $0x79] sm:$0xff] %vm302, %v279
      %314 = vst.msk [vmem:[%s301 + $0x81] sm:$0xff] %vm302, %v280
      %315 = vst.msk [vmem:[%s301 + $0x91] sm:$0xff] %vm302, %v281
      %316 = vst.msk [vmem:[%s301 + $0x99] sm:$0xff] %vm302, %v282
      %317 = vst.msk [vmem:[%s301 + $0xa9] sm:$0xff] %vm302, %v283
      %318 = vst.msk [vmem:[%s301 + $0xb1] sm:$0xff] %vm302, %v284
      %319 = vst.msk [vmem:[%s301 + $0xc1] sm:$0xff] %vm302, %v285
      %320 = vst.msk [vmem:[%s301 + $0xc9] sm:$0xff] %vm302, %v286
      %321 = vst.msk [vmem:[%s301 + $0xd9] sm:$0xff] %vm302, %v287
      %322 = vst.msk [vmem:[%s301 + $0xe1] sm:$0xff] %vm302, %v288
      %323 = vst.msk [vmem:[%s301 + $0xf1] sm:$0xff] %vm302, %v289
      %324 = vst.msk [vmem:[%s301 + $0xf9] sm:$0xff] %vm302, %v290
      %325 = vst.msk [vmem:[%s301 + $0x109] sm:$0xff] %vm302, %v291
      %326 = vst.msk [vmem:[%s301 + $0x111] sm:$0xff] %vm302, %v292
      %327 = vst.msk [vmem:[%s301 + $0x121] sm:$0xff] %vm302, %v293
      %328 = vst.msk [vmem:[%s301 + $0x129] sm:$0xff] %vm302, %v294
      %329 = vst.msk [vmem:[%s301 + $0x139] sm:$0xff] %vm302, %v295
      %330 = vst.msk [vmem:[%s301 + $0x141] sm:$0xff] %vm302, %v296
      %331 = vst.msk [vmem:[%s301 + $0x151] sm:$0xff] %vm302, %v297
      %332 = vst.msk [vmem:[%s301 + $0x159] sm:$0xff] %vm302, %v298
      %333 = vst.msk [vmem:[%s301 + $0x169] sm:$0xff] %vm302, %v299
      %334 = vst.msk [vmem:[%s301 + $0x171] sm:$0xff] %vm302, %v300
      %335 = vst.msk [vmem:[#allocation2] sm:$0xff] %vm302, 0.0
      %336 = vst.msk [vmem:[#allocation2 + $0x8] sm:$0xff] %vm302, 0.0
      %vm337 = vcmask 25600
      %338 = vst.msk [vmem:[#allocation2 + $0x10] sm:$0x3] %vm337, 0.0
      %s339 = scalar_lea.vmem [#allocation2], 408
      %340 = vst.msk [vmem:[%s339] sm:$0xff] %vm302, 0.0
      %341 = vst.msk [vmem:[%s339 + $0x8] sm:$0xff] %vm302, 0.0
      %342 = vst.msk [vmem:[%s339 + $0x10] sm:$0x3] %vm337, 0.0
      %vm343 = vcmask 24576
      %344 = vst.msk [vmem:[%s301] sm:$0x1] %vm343, 0.0
      %345 = vst.msk [vmem:[%s301 + $0x18] sm:$0x1] %vm343, 0.0
      %346 = vst.msk [vmem:[%s301 + $0x30] sm:$0x1] %vm343, 0.0
      %347 = vst.msk [vmem:[%s301 + $0x48] sm:$0x1] %vm343, 0.0
      %348 = vst.msk [vmem:[%s301 + $0x60] sm:$0x1] %vm343, 0.0
      %349 = vst.msk [vmem:[%s301 + $0x78] sm:$0x1] %vm343, 0.0
      %350 = vst.msk [vmem:[%s301 + $0x90] sm:$0x1] %vm343, 0.0
      %351 = vst.msk [vmem:[%s301 + $0xa8] sm:$0x1] %vm343, 0.0
      %352 = vst.msk [vmem:[%s301 + $0xc0] sm:$0x1] %vm343, 0.0
      %353 = vst.msk [vmem:[%s301 + $0xd8] sm:$0x1] %vm343, 0.0
      %354 = vst.msk [vmem:[%s301 + $0xf0] sm:$0x1] %vm343, 0.0
      %355 = vst.msk [vmem:[%s301 + $0x108] sm:$0x1] %vm343, 0.0
      %356 = vst.msk [vmem:[%s301 + $0x120] sm:$0x1] %vm343, 0.0
      %357 = vst.msk [vmem:[%s301 + $0x138] sm:$0x1] %vm343, 0.0
      %358 = vst.msk [vmem:[%s301 + $0x150] sm:$0x1] %vm343, 0.0
      %359 = vst.msk [vmem:[%s301 + $0x168] sm:$0x1] %vm343, 0.0
      %360 = vst.msk [vmem:[%s301 + $0x11] sm:$0x1] %vm343, 0.0
      %361 = vst.msk [vmem:[%s301 + $0x29] sm:$0x1] %vm343, 0.0
      %362 = vst.msk [vmem:[%s301 + $0x41] sm:$0x1] %vm343, 0.0
      %363 = vst.msk [vmem:[%s301 + $0x59] sm:$0x1] %vm343, 0.0
      %364 = vst.msk [vmem:[%s301 + $0x71] sm:$0x1] %vm343, 0.0
      %365 = vst.msk [vmem:[%s301 + $0x89] sm:$0x1] %vm343, 0.0
      %366 = vst.msk [vmem:[%s301 + $0xa1] sm:$0x1] %vm343, 0.0
      %367 = vst.msk [vmem:[%s301 + $0xb9] sm:$0x1] %vm343, 0.0
      %368 = vst.msk [vmem:[%s301 + $0xd1] sm:$0x1] %vm343, 0.0
      %369 = vst.msk [vmem:[%s301 + $0xe9] sm:$0x1] %vm343, 0.0
      %370 = vst.msk [vmem:[%s301 + $0x101] sm:$0x1] %vm343, 0.0
      %371 = vst.msk [vmem:[%s301 + $0x119] sm:$0x1] %vm343, 0.0
      %372 = vst.msk [vmem:[%s301 + $0x131] sm:$0x1] %vm343, 0.0
      %373 = vst.msk [vmem:[%s301 + $0x149] sm:$0x1] %vm343, 0.0
      %374 = vst.msk [vmem:[%s301 + $0x161] sm:$0x1] %vm343, 0.0
      %375 = vst.msk [vmem:[%s301 + $0x179] sm:$0x1] %vm343, 0.0
      %v376 = vld [vmem:[#allocation2] sm:$0xff]
      %v377 = vld [vmem:[#allocation2 + $0x8] sm:$0xff]
      %v378 = vld [vmem:[#allocation2 + $0x18] sm:$0xff]
      %v379 = vld [vmem:[#allocation2 + $0x20] sm:$0xff]
      %v380 = vld [vmem:[#allocation2 + $0x30] sm:$0xff]
      %v381 = vld [vmem:[#allocation2 + $0x38] sm:$0xff]
      %v382 = vld [vmem:[#allocation2 + $0x48] sm:$0xff]
      %v383 = vld [vmem:[#allocation2 + $0x50] sm:$0xff]
      %v384 = vld [vmem:[#allocation2 + $0x60] sm:$0xff]
      %v385 = vld [vmem:[#allocation2 + $0x68] sm:$0xff]
      %v386 = vld [vmem:[#allocation2 + $0x78] sm:$0xff]
      %v387 = vld [vmem:[#allocation2 + $0x80] sm:$0xff]
      %v388 = vld [vmem:[#allocation2 + $0x90] sm:$0xff]
      %v389 = vld [vmem:[#allocation2 + $0x98] sm:$0xff]
      %v390 = vld [vmem:[#allocation2 + $0xa8] sm:$0xff]
      %v391 = vld [vmem:[#allocation2 + $0xb0] sm:$0xff]
      %v392 = vld [vmem:[#allocation2 + $0xc0] sm:$0xff]
      %v393 = vld [vmem:[#allocation2 + $0xc8] sm:$0xff]
      %v394 = vld [vmem:[#allocation2 + $0xd8] sm:$0xff]
      %v395 = vld [vmem:[#allocation2 + $0xe0] sm:$0xff]
      %v396 = vld [vmem:[#allocation2 + $0xf0] sm:$0xff]
      %v397 = vld [vmem:[#allocation2 + $0xf8] sm:$0xff]
      %v398 = vld [vmem:[#allocation2 + $0x108] sm:$0xff]
      %v399 = vld [vmem:[#allocation2 + $0x110] sm:$0xff]
      %v400 = vld [vmem:[#allocation2 + $0x120] sm:$0xff]
      %v401 = vld [vmem:[#allocation2 + $0x128] sm:$0xff]
      %v402 = vld [vmem:[#allocation2 + $0x138] sm:$0xff]
      %v403 = vld [vmem:[#allocation2 + $0x140] sm:$0xff]
      %v404 = vld [vmem:[#allocation2 + $0x150] sm:$0xff]
      %v405 = vld [vmem:[#allocation2 + $0x158] sm:$0xff]
      %v406 = vld [vmem:[#allocation2 + $0x168] sm:$0xff]
      %v407 = vld [vmem:[#allocation2 + $0x170] sm:$0xff]
      %408 = vst.msk [vmem:[#allocation3] sm:$0xff] %vm302, %v376
      %409 = vst.msk [vmem:[#allocation3 + $0x8] sm:$0xff] %vm302, %v377
      %410 = vst.msk [vmem:[#allocation3 + $0x10] sm:$0xff] %vm302, %v378
      %411 = vst.msk [vmem:[#allocation3 + $0x18] sm:$0xff] %vm302, %v379
      %412 = vst.msk [vmem:[#allocation3 + $0x20] sm:$0xff] %vm302, %v380
      %413 = vst.msk [vmem:[#allocation3 + $0x28] sm:$0xff] %vm302, %v381
      %414 = vst.msk [vmem:[#allocation3 + $0x30] sm:$0xff] %vm302, %v382
      %415 = vst.msk [vmem:[#allocation3 + $0x38] sm:$0xff] %vm302, %v383
      %416 = vst.msk [vmem:[#allocation3 + $0x40] sm:$0xff] %vm302, %v384
      %417 = vst.msk [vmem:[#allocation3 + $0x48] sm:$0xff] %vm302, %v385
      %418 = vst.msk [vmem:[#allocation3 + $0x50] sm:$0xff] %vm302, %v386
      %419 = vst.msk [vmem:[#allocation3 + $0x58] sm:$0xff] %vm302, %v387
      %420 = vst.msk [vmem:[#allocation3 + $0x60] sm:$0xff] %vm302, %v388
      %421 = vst.msk [vmem:[#allocation3 + $0x68] sm:$0xff] %vm302, %v389
      %422 = vst.msk [vmem:[#allocation3 + $0x70] sm:$0xff] %vm302, %v390
      %423 = vst.msk [vmem:[#allocation3 + $0x78] sm:$0xff] %vm302, %v391
      %424 = vst.msk [vmem:[#allocation3 + $0x80] sm:$0xff] %vm302, %v392
      %425 = vst.msk [vmem:[#allocation3 + $0x88] sm:$0xff] %vm302, %v393
      %426 = vst.msk [vmem:[#allocation3 + $0x90] sm:$0xff] %vm302, %v394
      %427 = vst.msk [vmem:[#allocation3 + $0x98] sm:$0xff] %vm302, %v395
      %428 = vst.msk [vmem:[#allocation3 + $0xa0] sm:$0xff] %vm302, %v396
      %429 = vst.msk [vmem:[#allocation3 + $0xa8] sm:$0xff] %vm302, %v397
      %430 = vst.msk [vmem:[#allocation3 + $0xb0] sm:$0xff] %vm302, %v398
      %431 = vst.msk [vmem:[#allocation3 + $0xb8] sm:$0xff] %vm302, %v399
      %432 = vst.msk [vmem:[#allocation3 + $0xc0] sm:$0xff] %vm302, %v400
      %433 = vst.msk [vmem:[#allocation3 + $0xc8] sm:$0xff] %vm302, %v401
      %434 = vst.msk [vmem:[#allocation3 + $0xd0] sm:$0xff] %vm302, %v402
      %435 = vst.msk [vmem:[#allocation3 + $0xd8] sm:$0xff] %vm302, %v403
      %436 = vst.msk [vmem:[#allocation3 + $0xe0] sm:$0xff] %vm302, %v404
      %437 = vst.msk [vmem:[#allocation3 + $0xe8] sm:$0xff] %vm302, %v405
      %438 = vst.msk [vmem:[#allocation3 + $0xf0] sm:$0xff] %vm302, %v406
      %439 = vst.msk [vmem:[#allocation3 + $0xf8] sm:$0xff] %vm302, %v407
      %v440 = vld [vmem:[#allocation2 + $0x1] sm:$0xff]
      %v441 = vld [vmem:[#allocation2 + $0x9] sm:$0xff]
      %v442 = vld [vmem:[#allocation2 + $0x19] sm:$0xff]
      %v443 = vld [vmem:[#allocation2 + $0x21] sm:$0xff]
      %v444 = vld [vmem:[#allocation2 + $0x31] sm:$0xff]
      %v445 = vld [vmem:[#allocation2 + $0x39] sm:$0xff]
      %v446 = vld [vmem:[#allocation2 + $0x49] sm:$0xff]
      %v447 = vld [vmem:[#allocation2 + $0x51] sm:$0xff]
      %v448 = vld [vmem:[#allocation2 + $0x61] sm:$0xff]
      %v449 = vld [vmem:[#allocation2 + $0x69] sm:$0xff]
      %v450 = vld [vmem:[#allocation2 + $0x79] sm:$0xff]
      %v451 = vld [vmem:[#allocation2 + $0x81] sm:$0xff]
      %v452 = vld [vmem:[#allocation2 + $0x91] sm:$0xff]
      %v453 = vld [vmem:[#allocation2 + $0x99] sm:$0xff]
      %v454 = vld [vmem:[#allocation2 + $0xa9] sm:$0xff]
      %v455 = vld [vmem:[#allocation2 + $0xb1] sm:$0xff]
      %v456 = vld [vmem:[#allocation2 + $0xc1] sm:$0xff]
      %v457 = vld [vmem:[#allocation2 + $0xc9] sm:$0xff]
      %v458 = vld [vmem:[#allocation2 + $0xd9] sm:$0xff]
      %v459 = vld [vmem:[#allocation2 + $0xe1] sm:$0xff]
      %v460 = vld [vmem:[#allocation2 + $0xf1] sm:$0xff]
      %v461 = vld [vmem:[#allocation2 + $0xf9] sm:$0xff]
      %v462 = vld [vmem:[#allocation2 + $0x109] sm:$0xff]
      %v463 = vld [vmem:[#allocation2 + $0x111] sm:$0xff]
      %v464 = vld [vmem:[#allocation2 + $0x121] sm:$0xff]
      %v465 = vld [vmem:[#allocation2 + $0x129] sm:$0xff]
      %v466 = vld [vmem:[#allocation2 + $0x139] sm:$0xff]
      %v467 = vld [vmem:[#allocation2 + $0x141] sm:$0xff]
      %v468 = vld [vmem:[#allocation2 + $0x151] sm:$0xff]
      %v469 = vld [vmem:[#allocation2 + $0x159] sm:$0xff]
      %v470 = vld [vmem:[#allocation2 + $0x169] sm:$0xff]
      %v471 = vld [vmem:[#allocation2 + $0x171] sm:$0xff]
      %504 = vrot.lane.b32.xlu0 %v440, 4
      %v505 = vpop.permute.xlu0 %504
      %506 = vrot.lane.b32.xlu0 %v441, 4
      %v507 = vpop.permute.xlu0 %506
      %508 = vrot.lane.b32.xlu0 %v442, 4
      %v509 = vpop.permute.xlu0 %508
      %510 = vrot.lane.b32.xlu0 %v443, 4
      %v511 = vpop.permute.xlu0 %510
      %512 = vrot.lane.b32.xlu0 %v444, 4
      %v513 = vpop.permute.xlu0 %512
      %514 = vrot.lane.b32.xlu0 %v445, 4
      %v515 = vpop.permute.xlu0 %514
      %516 = vrot.lane.b32.xlu0 %v446, 4
      %v517 = vpop.permute.xlu0 %516
      %518 = vrot.lane.b32.xlu0 %v447, 4
      %v519 = vpop.permute.xlu0 %518
      %520 = vrot.lane.b32.xlu0 %v448, 4
      %v521 = vpop.permute.xlu0 %520
      %522 = vrot.lane.b32.xlu0 %v449, 4
      %v523 = vpop.permute.xlu0 %522
      %524 = vrot.lane.b32.xlu0 %v450, 4
      %v525 = vpop.permute.xlu0 %524
      %526 = vrot.lane.b32.xlu0 %v451, 4
      %v527 = vpop.permute.xlu0 %526
      %528 = vrot.lane.b32.xlu0 %v452, 4
      %v529 = vpop.permute.xlu0 %528
      %530 = vrot.lane.b32.xlu0 %v453, 4
      %v531 = vpop.permute.xlu0 %530
      %532 = vrot.lane.b32.xlu0 %v454, 4
      %v533 = vpop.permute.xlu0 %532
      %534 = vrot.lane.b32.xlu0 %v455, 4
      %v535 = vpop.permute.xlu0 %534
      %536 = vrot.lane.b32.xlu0 %v456, 4
      %v537 = vpop.permute.xlu0 %536
      %538 = vrot.lane.b32.xlu0 %v457, 4
      %v539 = vpop.permute.xlu0 %538
      %540 = vrot.lane.b32.xlu0 %v458, 4
      %v541 = vpop.permute.xlu0 %540
      %542 = vrot.lane.b32.xlu0 %v459, 4
      %v543 = vpop.permute.xlu0 %542
      %544 = vrot.lane.b32.xlu0 %v460, 4
      %v545 = vpop.permute.xlu0 %544
      %546 = vrot.lane.b32.xlu0 %v461, 4
      %v547 = vpop.permute.xlu0 %546
      %548 = vrot.lane.b32.xlu0 %v462, 4
      %v549 = vpop.permute.xlu0 %548
      %550 = vrot.lane.b32.xlu0 %v463, 4
      %v551 = vpop.permute.xlu0 %550
      %552 = vrot.lane.b32.xlu0 %v464, 4
      %v553 = vpop.permute.xlu0 %552
      %554 = vrot.lane.b32.xlu0 %v465, 4
      %v555 = vpop.permute.xlu0 %554
      %556 = vrot.lane.b32.xlu0 %v466, 4
      %v557 = vpop.permute.xlu0 %556
      %558 = vrot.lane.b32.xlu0 %v467, 4
      %v559 = vpop.permute.xlu0 %558
      %560 = vrot.lane.b32.xlu0 %v468, 4
      %v561 = vpop.permute.xlu0 %560
      %562 = vrot.lane.b32.xlu0 %v469, 4
      %v563 = vpop.permute.xlu0 %562
      %564 = vrot.lane.b32.xlu0 %v470, 4
      %v565 = vpop.permute.xlu0 %564
      %566 = vrot.lane.b32.xlu0 %v471, 4
      %v567 = vpop.permute.xlu0 %566
      %vm600 = vcmask 64544
      %601 = vst.msk [vmem:[#allocation3] sm:$0xff] %vm600, %v505
      %602 = vst.msk [vmem:[#allocation3 + $0x8] sm:$0xff] %vm600, %v507
      %603 = vst.msk [vmem:[#allocation3 + $0x10] sm:$0xff] %vm600, %v509
      %604 = vst.msk [vmem:[#allocation3 + $0x18] sm:$0xff] %vm600, %v511
      %605 = vst.msk [vmem:[#allocation3 + $0x20] sm:$0xff] %vm600, %v513
      %606 = vst.msk [vmem:[#allocation3 + $0x28] sm:$0xff] %vm600, %v515
      %607 = vst.msk [vmem:[#allocation3 + $0x30] sm:$0xff] %vm600, %v517
      %608 = vst.msk [vmem:[#allocation3 + $0x38] sm:$0xff] %vm600, %v519
      %609 = vst.msk [vmem:[#allocation3 + $0x40] sm:$0xff] %vm600, %v521
      %610 = vst.msk [vmem:[#allocation3 + $0x48] sm:$0xff] %vm600, %v523
      %611 = vst.msk [vmem:[#allocation3 + $0x50] sm:$0xff] %vm600, %v525
      %612 = vst.msk [vmem:[#allocation3 + $0x58] sm:$0xff] %vm600, %v527
      %613 = vst.msk [vmem:[#allocation3 + $0x60] sm:$0xff] %vm600, %v529
      %614 = vst.msk [vmem:[#allocation3 + $0x68] sm:$0xff] %vm600, %v531
      %615 = vst.msk [vmem:[#allocation3 + $0x70] sm:$0xff] %vm600, %v533
      %616 = vst.msk [vmem:[#allocation3 + $0x78] sm:$0xff] %vm600, %v535
      %617 = vst.msk [vmem:[#allocation3 + $0x80] sm:$0xff] %vm600, %v537
      %618 = vst.msk [vmem:[#allocation3 + $0x88] sm:$0xff] %vm600, %v539
      %619 = vst.msk [vmem:[#allocation3 + $0x90] sm:$0xff] %vm600, %v541
      %620 = vst.msk [vmem:[#allocation3 + $0x98] sm:$0xff] %vm600, %v543
      %621 = vst.msk [vmem:[#allocation3 + $0xa0] sm:$0xff] %vm600, %v545
      %622 = vst.msk [vmem:[#allocation3 + $0xa8] sm:$0xff] %vm600, %v547
      %623 = vst.msk [vmem:[#allocation3 + $0xb0] sm:$0xff] %vm600, %v549
      %624 = vst.msk [vmem:[#allocation3 + $0xb8] sm:$0xff] %vm600, %v551
      %625 = vst.msk [vmem:[#allocation3 + $0xc0] sm:$0xff] %vm600, %v553
      %626 = vst.msk [vmem:[#allocation3 + $0xc8] sm:$0xff] %vm600, %v555
      %627 = vst.msk [vmem:[#allocation3 + $0xd0] sm:$0xff] %vm600, %v557
      %628 = vst.msk [vmem:[#allocation3 + $0xd8] sm:$0xff] %vm600, %v559
      %629 = vst.msk [vmem:[#allocation3 + $0xe0] sm:$0xff] %vm600, %v561
      %630 = vst.msk [vmem:[#allocation3 + $0xe8] sm:$0xff] %vm600, %v563
      %631 = vst.msk [vmem:[#allocation3 + $0xf0] sm:$0xff] %vm600, %v565
      %632 = vst.msk [vmem:[#allocation3 + $0xf8] sm:$0xff] %vm600, %v567
      %v633 = vld [vmem:[#allocation2 + $0x2] sm:$0xff]
      %v634 = vld [vmem:[#allocation2 + $0xa] sm:$0xff]
      %v635 = vld [vmem:[#allocation2 + $0x1a] sm:$0xff]
      %v636 = vld [vmem:[#allocation2 + $0x22] sm:$0xff]
      %v637 = vld [vmem:[#allocation2 + $0x32] sm:$0xff]
      %v638 = vld [vmem:[#allocation2 + $0x3a] sm:$0xff]
      %v639 = vld [vmem:[#allocation2 + $0x4a] sm:$0xff]
      %v640 = vld [vmem:[#allocation2 + $0x52] sm:$0xff]
      %v641 = vld [vmem:[#allocation2 + $0x62] sm:$0xff]
      %v642 = vld [vmem:[#allocation2 + $0x6a] sm:$0xff]
      %v643 = vld [vmem:[#allocation2 + $0x7a] sm:$0xff]
      %v644 = vld [vmem:[#allocation2 + $0x82] sm:$0xff]
      %v645 = vld [vmem:[#allocation2 + $0x92] sm:$0xff]
      %v646 = vld [vmem:[#allocation2 + $0x9a] sm:$0xff]
      %v647 = vld [vmem:[#allocation2 + $0xaa] sm:$0xff]
      %v648 = vld [vmem:[#allocation2 + $0xb2] sm:$0xff]
      %v649 = vld [vmem:[#allocation2 + $0xc2] sm:$0xff]
      %v650 = vld [vmem:[#allocation2 + $0xca] sm:$0xff]
      %v651 = vld [vmem:[#allocation2 + $0xda] sm:$0xff]
      %v652 = vld [vmem:[#allocation2 + $0xe2] sm:$0xff]
      %v653 = vld [vmem:[#allocation2 + $0xf2] sm:$0xff]
      %v654 = vld [vmem:[#allocation2 + $0xfa] sm:$0xff]
      %v655 = vld [vmem:[#allocation2 + $0x10a] sm:$0xff]
      %v656 = vld [vmem:[#allocation2 + $0x112] sm:$0xff]
      %v657 = vld [vmem:[#allocation2 + $0x122] sm:$0xff]
      %v658 = vld [vmem:[#allocation2 + $0x12a] sm:$0xff]
      %v659 = vld [vmem:[#allocation2 + $0x13a] sm:$0xff]
      %v660 = vld [vmem:[#allocation2 + $0x142] sm:$0xff]
      %v661 = vld [vmem:[#allocation2 + $0x152] sm:$0xff]
      %v662 = vld [vmem:[#allocation2 + $0x15a] sm:$0xff]
      %v663 = vld [vmem:[#allocation2 + $0x16a] sm:$0xff]
      %v664 = vld [vmem:[#allocation2 + $0x172] sm:$0xff]
      %697 = vrot.lane.b32.xlu0 %v633, 8
      %v698 = vpop.permute.xlu0 %697
      %699 = vrot.lane.b32.xlu0 %v634, 8
      %v700 = vpop.permute.xlu0 %699
      %701 = vrot.lane.b32.xlu0 %v635, 8
      %v702 = vpop.permute.xlu0 %701
      %703 = vrot.lane.b32.xlu0 %v636, 8
      %v704 = vpop.permute.xlu0 %703
      %705 = vrot.lane.b32.xlu0 %v637, 8
      %v706 = vpop.permute.xlu0 %705
      %707 = vrot.lane.b32.xlu0 %v638, 8
      %v708 = vpop.permute.xlu0 %707
      %709 = vrot.lane.b32.xlu0 %v639, 8
      %v710 = vpop.permute.xlu0 %709
      %711 = vrot.lane.b32.xlu0 %v640, 8
      %v712 = vpop.permute.xlu0 %711
      %713 = vrot.lane.b32.xlu0 %v641, 8
      %v714 = vpop.permute.xlu0 %713
      %715 = vrot.lane.b32.xlu0 %v642, 8
      %v716 = vpop.permute.xlu0 %715
      %717 = vrot.lane.b32.xlu0 %v643, 8
      %v718 = vpop.permute.xlu0 %717
      %719 = vrot.lane.b32.xlu0 %v644, 8
      %v720 = vpop.permute.xlu0 %719
      %721 = vrot.lane.b32.xlu0 %v645, 8
      %v722 = vpop.permute.xlu0 %721
      %723 = vrot.lane.b32.xlu0 %v646, 8
      %v724 = vpop.permute.xlu0 %723
      %725 = vrot.lane.b32.xlu0 %v647, 8
      %v726 = vpop.permute.xlu0 %725
      %727 = vrot.lane.b32.xlu0 %v648, 8
      %v728 = vpop.permute.xlu0 %727
      %729 = vrot.lane.b32.xlu0 %v649, 8
      %v730 = vpop.permute.xlu0 %729
      %731 = vrot.lane.b32.xlu0 %v650, 8
      %v732 = vpop.permute.xlu0 %731
      %733 = vrot.lane.b32.xlu0 %v651, 8
      %v734 = vpop.permute.xlu0 %733
      %735 = vrot.lane.b32.xlu0 %v652, 8
      %v736 = vpop.permute.xlu0 %735
      %737 = vrot.lane.b32.xlu0 %v653, 8
      %v738 = vpop.permute.xlu0 %737
      %739 = vrot.lane.b32.xlu0 %v654, 8
      %v740 = vpop.permute.xlu0 %739
      %741 = vrot.lane.b32.xlu0 %v655, 8
      %v742 = vpop.permute.xlu0 %741
      %743 = vrot.lane.b32.xlu0 %v656, 8
      %v744 = vpop.permute.xlu0 %743
      %745 = vrot.lane.b32.xlu0 %v657, 8
      %v746 = vpop.permute.xlu0 %745
      %747 = vrot.lane.b32.xlu0 %v658, 8
      %v748 = vpop.permute.xlu0 %747
      %749 = vrot.lane.b32.xlu0 %v659, 8
      %v750 = vpop.permute.xlu0 %749
      %751 = vrot.lane.b32.xlu0 %v660, 8
      %v752 = vpop.permute.xlu0 %751
      %753 = vrot.lane.b32.xlu0 %v661, 8
      %v754 = vpop.permute.xlu0 %753
      %755 = vrot.lane.b32.xlu0 %v662, 8
      %v756 = vpop.permute.xlu0 %755
      %757 = vrot.lane.b32.xlu0 %v663, 8
      %v758 = vpop.permute.xlu0 %757
      %759 = vrot.lane.b32.xlu0 %v664, 8
      %v760 = vpop.permute.xlu0 %759
      %vm793 = vcmask 97344
      %794 = vst.msk [vmem:[#allocation3] sm:$0xff] %vm793, %v698
      %795 = vst.msk [vmem:[#allocation3 + $0x8] sm:$0xff] %vm793, %v700
      %796 = vst.msk [vmem:[#allocation3 + $0x10] sm:$0xff] %vm793, %v702
      %797 = vst.msk [vmem:[#allocation3 + $0x18] sm:$0xff] %vm793, %v704
      %798 = vst.msk [vmem:[#allocation3 + $0x20] sm:$0xff] %vm793, %v706
      %799 = vst.msk [vmem:[#allocation3 + $0x28] sm:$0xff] %vm793, %v708
      %800 = vst.msk [vmem:[#allocation3 + $0x30] sm:$0xff] %vm793, %v710
      %801 = vst.msk [vmem:[#allocation3 + $0x38] sm:$0xff] %vm793, %v712
      %802 = vst.msk [vmem:[#allocation3 + $0x40] sm:$0xff] %vm793, %v714
      %803 = vst.msk [vmem:[#allocation3 + $0x48] sm:$0xff] %vm793, %v716
      %804 = vst.msk [vmem:[#allocation3 + $0x50] sm:$0xff] %vm793, %v718
      %805 = vst.msk [vmem:[#allocation3 + $0x58] sm:$0xff] %vm793, %v720
      %806 = vst.msk [vmem:[#allocation3 + $0x60] sm:$0xff] %vm793, %v722
      %807 = vst.msk [vmem:[#allocation3 + $0x68] sm:$0xff] %vm793, %v724
      %808 = vst.msk [vmem:[#allocation3 + $0x70] sm:$0xff] %vm793, %v726
      %809 = vst.msk [vmem:[#allocation3 + $0x78] sm:$0xff] %vm793, %v728
      %810 = vst.msk [vmem:[#allocation3 + $0x80] sm:$0xff] %vm793, %v730
      %811 = vst.msk [vmem:[#allocation3 + $0x88] sm:$0xff] %vm793, %v732
      %812 = vst.msk [vmem:[#allocation3 + $0x90] sm:$0xff] %vm793, %v734
      %813 = vst.msk [vmem:[#allocation3 + $0x98] sm:$0xff] %vm793, %v736
      %814 = vst.msk [vmem:[#allocation3 + $0xa0] sm:$0xff] %vm793, %v738
      %815 = vst.msk [vmem:[#allocation3 + $0xa8] sm:$0xff] %vm793, %v740
      %816 = vst.msk [vmem:[#allocation3 + $0xb0] sm:$0xff] %vm793, %v742
      %817 = vst.msk [vmem:[#allocation3 + $0xb8] sm:$0xff] %vm793, %v744
      %818 = vst.msk [vmem:[#allocation3 + $0xc0] sm:$0xff] %vm793, %v746
      %819 = vst.msk [vmem:[#allocation3 + $0xc8] sm:$0xff] %vm793, %v748
      %820 = vst.msk [vmem:[#allocation3 + $0xd0] sm:$0xff] %vm793, %v750
      %821 = vst.msk [vmem:[#allocation3 + $0xd8] sm:$0xff] %vm793, %v752
      %822 = vst.msk [vmem:[#allocation3 + $0xe0] sm:$0xff] %vm793, %v754
      %823 = vst.msk [vmem:[#allocation3 + $0xe8] sm:$0xff] %vm793, %v756
      %824 = vst.msk [vmem:[#allocation3 + $0xf0] sm:$0xff] %vm793, %v758
      %825 = vst.msk [vmem:[#allocation3 + $0xf8] sm:$0xff] %vm793, %v760
      %v826 = vld [vmem:[%s301] sm:$0xff]
      %v827 = vld [vmem:[%s301 + $0x8] sm:$0xff]
      %v828 = vld [vmem:[%s301 + $0x18] sm:$0xff]
      %v829 = vld [vmem:[%s301 + $0x20] sm:$0xff]
      %v830 = vld [vmem:[%s301 + $0x30] sm:$0xff]
      %v831 = vld [vmem:[%s301 + $0x38] sm:$0xff]
      %v832 = vld [vmem:[%s301 + $0x48] sm:$0xff]
      %v833 = vld [vmem:[%s301 + $0x50] sm:$0xff]
      %v834 = vld [vmem:[%s301 + $0x60] sm:$0xff]
      %v835 = vld [vmem:[%s301 + $0x68] sm:$0xff]
      %v836 = vld [vmem:[%s301 + $0x78] sm:$0xff]
      %v837 = vld [vmem:[%s301 + $0x80] sm:$0xff]
      %v838 = vld [vmem:[%s301 + $0x90] sm:$0xff]
      %v839 = vld [vmem:[%s301 + $0x98] sm:$0xff]
      %v840 = vld [vmem:[%s301 + $0xa8] sm:$0xff]
      %v841 = vld [vmem:[%s301 + $0xb0] sm:$0xff]
      %v842 = vld [vmem:[%s301 + $0xc0] sm:$0xff]
      %v843 = vld [vmem:[%s301 + $0xc8] sm:$0xff]
      %v844 = vld [vmem:[%s301 + $0xd8] sm:$0xff]
      %v845 = vld [vmem:[%s301 + $0xe0] sm:$0xff]
      %v846 = vld [vmem:[%s301 + $0xf0] sm:$0xff]
      %v847 = vld [vmem:[%s301 + $0xf8] sm:$0xff]
      %v848 = vld [vmem:[%s301 + $0x108] sm:$0xff]
      %v849 = vld [vmem:[%s301 + $0x110] sm:$0xff]
      %v850 = vld [vmem:[%s301 + $0x120] sm:$0xff]
      %v851 = vld [vmem:[%s301 + $0x128] sm:$0xff]
      %v852 = vld [vmem:[%s301 + $0x138] sm:$0xff]
      %v853 = vld [vmem:[%s301 + $0x140] sm:$0xff]
      %v854 = vld [vmem:[%s301 + $0x150] sm:$0xff]
      %v855 = vld [vmem:[%s301 + $0x158] sm:$0xff]
      %v856 = vld [vmem:[%s301 + $0x168] sm:$0xff]
      %v857 = vld [vmem:[%s301 + $0x170] sm:$0xff]
      %890 = vrot.lane.b32.xlu0 %v826, 12
      %v891 = vpop.permute.xlu0 %890
      %892 = vrot.lane.b32.xlu0 %v827, 12
      %v893 = vpop.permute.xlu0 %892
      %894 = vrot.lane.b32.xlu0 %v828, 12
      %v895 = vpop.permute.xlu0 %894
      %896 = vrot.lane.b32.xlu0 %v829, 12
      %v897 = vpop.permute.xlu0 %896
      %898 = vrot.lane.b32.xlu0 %v830, 12
      %v899 = vpop.permute.xlu0 %898
      %900 = vrot.lane.b32.xlu0 %v831, 12
      %v901 = vpop.permute.xlu0 %900
      %902 = vrot.lane.b32.xlu0 %v832, 12
      %v903 = vpop.permute.xlu0 %902
      %904 = vrot.lane.b32.xlu0 %v833, 12
      %v905 = vpop.permute.xlu0 %904
      %906 = vrot.lane.b32.xlu0 %v834, 12
      %v907 = vpop.permute.xlu0 %906
      %908 = vrot.lane.b32.xlu0 %v835, 12
      %v909 = vpop.permute.xlu0 %908
      %910 = vrot.lane.b32.xlu0 %v836, 12
      %v911 = vpop.permute.xlu0 %910
      %912 = vrot.lane.b32.xlu0 %v837, 12
      %v913 = vpop.permute.xlu0 %912
      %914 = vrot.lane.b32.xlu0 %v838, 12
      %v915 = vpop.permute.xlu0 %914
      %916 = vrot.lane.b32.xlu0 %v839, 12
      %v917 = vpop.permute.xlu0 %916
      %918 = vrot.lane.b32.xlu0 %v840, 12
      %v919 = vpop.permute.xlu0 %918
      %920 = vrot.lane.b32.xlu0 %v841, 12
      %v921 = vpop.permute.xlu0 %920
      %922 = vrot.lane.b32.xlu0 %v842, 12
      %v923 = vpop.permute.xlu0 %922
      %924 = vrot.lane.b32.xlu0 %v843, 12
      %v925 = vpop.permute.xlu0 %924
      %926 = vrot.lane.b32.xlu0 %v844, 12
      %v927 = vpop.permute.xlu0 %926
      %928 = vrot.lane.b32.xlu0 %v845, 12
      %v929 = vpop.permute.xlu0 %928
      %930 = vrot.lane.b32.xlu0 %v846, 12
      %v931 = vpop.permute.xlu0 %930
      %932 = vrot.lane.b32.xlu0 %v847, 12
      %v933 = vpop.permute.xlu0 %932
      %934 = vrot.lane.b32.xlu0 %v848, 12
      %v935 = vpop.permute.xlu0 %934
      %936 = vrot.lane.b32.xlu0 %v849, 12
      %v937 = vpop.permute.xlu0 %936
      %938 = vrot.lane.b32.xlu0 %v850, 12
      %v939 = vpop.permute.xlu0 %938
      %940 = vrot.lane.b32.xlu0 %v851, 12
      %v941 = vpop.permute.xlu0 %940
      %942 = vrot.lane.b32.xlu0 %v852, 12
      %v943 = vpop.permute.xlu0 %942
      %944 = vrot.lane.b32.xlu0 %v853, 12
      %v945 = vpop.permute.xlu0 %944
      %946 = vrot.lane.b32.xlu0 %v854, 12
      %v947 = vpop.permute.xlu0 %946
      %948 = vrot.lane.b32.xlu0 %v855, 12
      %v949 = vpop.permute.xlu0 %948
      %950 = vrot.lane.b32.xlu0 %v856, 12
      %v951 = vpop.permute.xlu0 %950
      %952 = vrot.lane.b32.xlu0 %v857, 12
      %v953 = vpop.permute.xlu0 %952
      %vm986 = vcmask 130144
      %987 = vst.msk [vmem:[#allocation3] sm:$0xff] %vm986, %v891
      %988 = vst.msk [vmem:[#allocation3 + $0x8] sm:$0xff] %vm986, %v893
      %989 = vst.msk [vmem:[#allocation3 + $0x10] sm:$0xff] %vm986, %v895
      %990 = vst.msk [vmem:[#allocation3 + $0x18] sm:$0xff] %vm986, %v897
      %991 = vst.msk [vmem:[#allocation3 + $0x20] sm:$0xff] %vm986, %v899
      %992 = vst.msk [vmem:[#allocation3 + $0x28] sm:$0xff] %vm986, %v901
      %993 = vst.msk [vmem:[#allocation3 + $0x30] sm:$0xff] %vm986, %v903
      %994 = vst.msk [vmem:[#allocation3 + $0x38] sm:$0xff] %vm986, %v905
      %995 = vst.msk [vmem:[#allocation3 + $0x40] sm:$0xff] %vm986, %v907
      %996 = vst.msk [vmem:[#allocation3 + $0x48] sm:$0xff] %vm986, %v909
      %997 = vst.msk [vmem:[#allocation3 + $0x50] sm:$0xff] %vm986, %v911
      %998 = vst.msk [vmem:[#allocation3 + $0x58] sm:$0xff] %vm986, %v913
      %999 = vst.msk [vmem:[#allocation3 + $0x60] sm:$0xff] %vm986, %v915
      %1000 = vst.msk [vmem:[#allocation3 + $0x68] sm:$0xff] %vm986, %v917
      %1001 = vst.msk [vmem:[#allocation3 + $0x70] sm:$0xff] %vm986, %v919
      %1002 = vst.msk [vmem:[#allocation3 + $0x78] sm:$0xff] %vm986, %v921
      %1003 = vst.msk [vmem:[#allocation3 + $0x80] sm:$0xff] %vm986, %v923
      %1004 = vst.msk [vmem:[#allocation3 + $0x88] sm:$0xff] %vm986, %v925
      %1005 = vst.msk [vmem:[#allocation3 + $0x90] sm:$0xff] %vm986, %v927
      %1006 = vst.msk [vmem:[#allocation3 + $0x98] sm:$0xff] %vm986, %v929
      %1007 = vst.msk [vmem:[#allocation3 + $0xa0] sm:$0xff] %vm986, %v931
      %1008 = vst.msk [vmem:[#allocation3 + $0xa8] sm:$0xff] %vm986, %v933
      %1009 = vst.msk [vmem:[#allocation3 + $0xb0] sm:$0xff] %vm986, %v935
      %1010 = vst.msk [vmem:[#allocation3 + $0xb8] sm:$0xff] %vm986, %v937
      %1011 = vst.msk [vmem:[#allocation3 + $0xc0] sm:$0xff] %vm986, %v939
      %1012 = vst.msk [vmem:[#allocation3 + $0xc8] sm:$0xff] %vm986, %v941
      %1013 = vst.msk [vmem:[#allocation3 + $0xd0] sm:$0xff] %vm986, %v943
      %1014 = vst.msk [vmem:[#allocation3 + $0xd8] sm:$0xff] %vm986, %v945
      %1015 = vst.msk [vmem:[#allocation3 + $0xe0] sm:$0xff] %vm986, %v947
      %1016 = vst.msk [vmem:[#allocation3 + $0xe8] sm:$0xff] %vm986, %v949
      %1017 = vst.msk [vmem:[#allocation3 + $0xf0] sm:$0xff] %vm986, %v951
      %1018 = vst.msk [vmem:[#allocation3 + $0xf8] sm:$0xff] %vm986, %v953
      %v1019 = vld [vmem:[%s301 + $0x1] sm:$0xff]
      %v1020 = vld [vmem:[%s301 + $0x9] sm:$0xff]
      %v1021 = vld [vmem:[%s301 + $0x19] sm:$0xff]
      %v1022 = vld [vmem:[%s301 + $0x21] sm:$0xff]
      %v1023 = vld [vmem:[%s301 + $0x31] sm:$0xff]
      %v1024 = vld [vmem:[%s301 + $0x39] sm:$0xff]
      %v1025 = vld [vmem:[%s301 + $0x49] sm:$0xff]
      %v1026 = vld [vmem:[%s301 + $0x51] sm:$0xff]
      %v1027 = vld [vmem:[%s301 + $0x61] sm:$0xff]
      %v1028 = vld [vmem:[%s301 + $0x69] sm:$0xff]
      %v1029 = vld [vmem:[%s301 + $0x79] sm:$0xff]
      %v1030 = vld [vmem:[%s301 + $0x81] sm:$0xff]
      %v1031 = vld [vmem:[%s301 + $0x91] sm:$0xff]
      %v1032 = vld [vmem:[%s301 + $0x99] sm:$0xff]
      %v1033 = vld [vmem:[%s301 + $0xa9] sm:$0xff]
      %v1034 = vld [vmem:[%s301 + $0xb1] sm:$0xff]
      %v1035 = vld [vmem:[%s301 + $0xc1] sm:$0xff]
      %v1036 = vld [vmem:[%s301 + $0xc9] sm:$0xff]
      %v1037 = vld [vmem:[%s301 + $0xd9] sm:$0xff]
      %v1038 = vld [vmem:[%s301 + $0xe1] sm:$0xff]
      %v1039 = vld [vmem:[%s301 + $0xf1] sm:$0xff]
      %v1040 = vld [vmem:[%s301 + $0xf9] sm:$0xff]
      %v1041 = vld [vmem:[%s301 + $0x109] sm:$0xff]
      %v1042 = vld [vmem:[%s301 + $0x111] sm:$0xff]
      %v1043 = vld [vmem:[%s301 + $0x121] sm:$0xff]
      %v1044 = vld [vmem:[%s301 + $0x129] sm:$0xff]
      %v1045 = vld [vmem:[%s301 + $0x139] sm:$0xff]
      %v1046 = vld [vmem:[%s301 + $0x141] sm:$0xff]
      %v1047 = vld [vmem:[%s301 + $0x151] sm:$0xff]
      %v1048 = vld [vmem:[%s301 + $0x159] sm:$0xff]
      %v1049 = vld [vmem:[%s301 + $0x169] sm:$0xff]
      %v1050 = vld [vmem:[%s301 + $0x171] sm:$0xff]
      %1083 = vrot.lane.b32.xlu0 %v1019, 16
      %v1084 = vpop.permute.xlu0 %1083
      %1085 = vrot.lane.b32.xlu0 %v1020, 16
      %v1086 = vpop.permute.xlu0 %1085
      %1087 = vrot.lane.b32.xlu0 %v1021, 16
      %v1088 = vpop.permute.xlu0 %1087
      %1089 = vrot.lane.b32.xlu0 %v1022, 16
      %v1090 = vpop.permute.xlu0 %1089
      %1091 = vrot.lane.b32.xlu0 %v1023, 16
      %v1092 = vpop.permute.xlu0 %1091
      %1093 = vrot.lane.b32.xlu0 %v1024, 16
      %v1094 = vpop.permute.xlu0 %1093
      %1095 = vrot.lane.b32.xlu0 %v1025, 16
      %v1096 = vpop.permute.xlu0 %1095
      %1097 = vrot.lane.b32.xlu0 %v1026, 16
      %v1098 = vpop.permute.xlu0 %1097
      %1099 = vrot.lane.b32.xlu0 %v1027, 16
      %v1100 = vpop.permute.xlu0 %1099
      %1101 = vrot.lane.b32.xlu0 %v1028, 16
      %v1102 = vpop.permute.xlu0 %1101
      %1103 = vrot.lane.b32.xlu0 %v1029, 16
      %v1104 = vpop.permute.xlu0 %1103
      %1105 = vrot.lane.b32.xlu0 %v1030, 16
      %v1106 = vpop.permute.xlu0 %1105
      %1107 = vrot.lane.b32.xlu0 %v1031, 16
      %v1108 = vpop.permute.xlu0 %1107
      %1109 = vrot.lane.b32.xlu0 %v1032, 16
      %v1110 = vpop.permute.xlu0 %1109
      %1111 = vrot.lane.b32.xlu0 %v1033, 16
      %v1112 = vpop.permute.xlu0 %1111
      %1113 = vrot.lane.b32.xlu0 %v1034, 16
      %v1114 = vpop.permute.xlu0 %1113
      %1115 = vrot.lane.b32.xlu0 %v1035, 16
      %v1116 = vpop.permute.xlu0 %1115
      %1117 = vrot.lane.b32.xlu0 %v1036, 16
      %v1118 = vpop.permute.xlu0 %1117
      %1119 = vrot.lane.b32.xlu0 %v1037, 16
      %v1120 = vpop.permute.xlu0 %1119
      %1121 = vrot.lane.b32.xlu0 %v1038, 16
      %v1122 = vpop.permute.xlu0 %1121
      %1123 = vrot.lane.b32.xlu0 %v1039, 16
      %v1124 = vpop.permute.xlu0 %1123
      %1125 = vrot.lane.b32.xlu0 %v1040, 16
      %v1126 = vpop.permute.xlu0 %1125
      %1127 = vrot.lane.b32.xlu0 %v1041, 16
      %v1128 = vpop.permute.xlu0 %1127
      %1129 = vrot.lane.b32.xlu0 %v1042, 16
      %v1130 = vpop.permute.xlu0 %1129
      %1131 = vrot.lane.b32.xlu0 %v1043, 16
      %v1132 = vpop.permute.xlu0 %1131
      %1133 = vrot.lane.b32.xlu0 %v1044, 16
      %v1134 = vpop.permute.xlu0 %1133
      %1135 = vrot.lane.b32.xlu0 %v1045, 16
      %v1136 = vpop.permute.xlu0 %1135
      %1137 = vrot.lane.b32.xlu0 %v1046, 16
      %v1138 = vpop.permute.xlu0 %1137
      %1139 = vrot.lane.b32.xlu0 %v1047, 16
      %v1140 = vpop.permute.xlu0 %1139
      %1141 = vrot.lane.b32.xlu0 %v1048, 16
      %v1142 = vpop.permute.xlu0 %1141
      %1143 = vrot.lane.b32.xlu0 %v1049, 16
      %v1144 = vpop.permute.xlu0 %1143
      %1145 = vrot.lane.b32.xlu0 %v1050, 16
      %v1146 = vpop.permute.xlu0 %1145
      %vm1179 = vcmask 162944
      %1180 = vst.msk [vmem:[#allocation3] sm:$0xff] %vm1179, %v1084
      %1181 = vst.msk [vmem:[#allocation3 + $0x8] sm:$0xff] %vm1179, %v1086
      %1182 = vst.msk [vmem:[#allocation3 + $0x10] sm:$0xff] %vm1179, %v1088
      %1183 = vst.msk [vmem:[#allocation3 + $0x18] sm:$0xff] %vm1179, %v1090
      %1184 = vst.msk [vmem:[#allocation3 + $0x20] sm:$0xff] %vm1179, %v1092
      %1185 = vst.msk [vmem:[#allocation3 + $0x28] sm:$0xff] %vm1179, %v1094
      %1186 = vst.msk [vmem:[#allocation3 + $0x30] sm:$0xff] %vm1179, %v1096
      %1187 = vst.msk [vmem:[#allocation3 + $0x38] sm:$0xff] %vm1179, %v1098
      %1188 = vst.msk [vmem:[#allocation3 + $0x40] sm:$0xff] %vm1179, %v1100
      %1189 = vst.msk [vmem:[#allocation3 + $0x48] sm:$0xff] %vm1179, %v1102
      %1190 = vst.msk [vmem:[#allocation3 + $0x50] sm:$0xff] %vm1179, %v1104
      %1191 = vst.msk [vmem:[#allocation3 + $0x58] sm:$0xff] %vm1179, %v1106
      %1192 = vst.msk [vmem:[#allocation3 + $0x60] sm:$0xff] %vm1179, %v1108
      %1193 = vst.msk [vmem:[#allocation3 + $0x68] sm:$0xff] %vm1179, %v1110
      %1194 = vst.msk [vmem:[#allocation3 + $0x70] sm:$0xff] %vm1179, %v1112
      %1195 = vst.msk [vmem:[#allocation3 + $0x78] sm:$0xff] %vm1179, %v1114
      %1196 = vst.msk [vmem:[#allocation3 + $0x80] sm:$0xff] %vm1179, %v1116
      %1197 = vst.msk [vmem:[#allocation3 + $0x88] sm:$0xff] %vm1179, %v1118
      %1198 = vst.msk [vmem:[#allocation3 + $0x90] sm:$0xff] %vm1179, %v1120
      %1199 = vst.msk [vmem:[#allocation3 + $0x98] sm:$0xff] %vm1179, %v1122
      %1200 = vst.msk [vmem:[#allocation3 + $0xa0] sm:$0xff] %vm1179, %v1124
      %1201 = vst.msk [vmem:[#allocation3 + $0xa8] sm:$0xff] %vm1179, %v1126
      %1202 = vst.msk [vmem:[#allocation3 + $0xb0] sm:$0xff] %vm1179, %v1128
      %1203 = vst.msk [vmem:[#allocation3 + $0xb8] sm:$0xff] %vm1179, %v1130
      %1204 = vst.msk [vmem:[#allocation3 + $0xc0] sm:$0xff] %vm1179, %v1132
      %1205 = vst.msk [vmem:[#allocation3 + $0xc8] sm:$0xff] %vm1179, %v1134
      %1206 = vst.msk [vmem:[#allocation3 + $0xd0] sm:$0xff] %vm1179, %v1136
      %1207 = vst.msk [vmem:[#allocation3 + $0xd8] sm:$0xff] %vm1179, %v1138
      %1208 = vst.msk [vmem:[#allocation3 + $0xe0] sm:$0xff] %vm1179, %v1140
      %1209 = vst.msk [vmem:[#allocation3 + $0xe8] sm:$0xff] %vm1179, %v1142
      %1210 = vst.msk [vmem:[#allocation3 + $0xf0] sm:$0xff] %vm1179, %v1144
      %1211 = vst.msk [vmem:[#allocation3 + $0xf8] sm:$0xff] %vm1179, %v1146
      %v1212 = vld [vmem:[%s301 + $0x2] sm:$0xff]
      %v1213 = vld [vmem:[%s301 + $0xa] sm:$0xff]
      %v1214 = vld [vmem:[%s301 + $0x1a] sm:$0xff]
      %v1215 = vld [vmem:[%s301 + $0x22] sm:$0xff]
      %v1216 = vld [vmem:[%s301 + $0x32] sm:$0xff]
      %v1217 = vld [vmem:[%s301 + $0x3a] sm:$0xff]
      %v1218 = vld [vmem:[%s301 + $0x4a] sm:$0xff]
      %v1219 = vld [vmem:[%s301 + $0x52] sm:$0xff]
      %v1220 = vld [vmem:[%s301 + $0x62] sm:$0xff]
      %v1221 = vld [vmem:[%s301 + $0x6a] sm:$0xff]
      %v1222 = vld [vmem:[%s301 + $0x7a] sm:$0xff]
      %v1223 = vld [vmem:[%s301 + $0x82] sm:$0xff]
      %v1224 = vld [vmem:[%s301 + $0x92] sm:$0xff]
      %v1225 = vld [vmem:[%s301 + $0x9a] sm:$0xff]
      %v1226 = vld [vmem:[%s301 + $0xaa] sm:$0xff]
      %v1227 = vld [vmem:[%s301 + $0xb2] sm:$0xff]
      %v1228 = vld [vmem:[%s301 + $0xc2] sm:$0xff]
      %v1229 = vld [vmem:[%s301 + $0xca] sm:$0xff]
      %v1230 = vld [vmem:[%s301 + $0xda] sm:$0xff]
      %v1231 = vld [vmem:[%s301 + $0xe2] sm:$0xff]
      %v1232 = vld [vmem:[%s301 + $0xf2] sm:$0xff]
      %v1233 = vld [vmem:[%s301 + $0xfa] sm:$0xff]
      %v1234 = vld [vmem:[%s301 + $0x10a] sm:$0xff]
      %v1235 = vld [vmem:[%s301 + $0x112] sm:$0xff]
      %v1236 = vld [vmem:[%s301 + $0x122] sm:$0xff]
      %v1237 = vld [vmem:[%s301 + $0x12a] sm:$0xff]
      %v1238 = vld [vmem:[%s301 + $0x13a] sm:$0xff]
      %v1239 = vld [vmem:[%s301 + $0x142] sm:$0xff]
      %v1240 = vld [vmem:[%s301 + $0x152] sm:$0xff]
      %v1241 = vld [vmem:[%s301 + $0x15a] sm:$0xff]
      %v1242 = vld [vmem:[%s301 + $0x16a] sm:$0xff]
      %v1243 = vld [vmem:[%s301 + $0x172] sm:$0xff]
      %1276 = vrot.lane.b32.xlu0 %v1212, 20
      %v1277 = vpop.permute.xlu0 %1276
      %1278 = vrot.lane.b32.xlu0 %v1213, 20
      %v1279 = vpop.permute.xlu0 %1278
      %1280 = vrot.lane.b32.xlu0 %v1214, 20
      %v1281 = vpop.permute.xlu0 %1280
      %1282 = vrot.lane.b32.xlu0 %v1215, 20
      %v1283 = vpop.permute.xlu0 %1282
      %1284 = vrot.lane.b32.xlu0 %v1216, 20
      %v1285 = vpop.permute.xlu0 %1284
      %1286 = vrot.lane.b32.xlu0 %v1217, 20
      %v1287 = vpop.permute.xlu0 %1286
      %1288 = vrot.lane.b32.xlu0 %v1218, 20
      %v1289 = vpop.permute.xlu0 %1288
      %1290 = vrot.lane.b32.xlu0 %v1219, 20
      %v1291 = vpop.permute.xlu0 %1290
      %1292 = vrot.lane.b32.xlu0 %v1220, 20
      %v1293 = vpop.permute.xlu0 %1292
      %1294 = vrot.lane.b32.xlu0 %v1221, 20
      %v1295 = vpop.permute.xlu0 %1294
      %1296 = vrot.lane.b32.xlu0 %v1222, 20
      %v1297 = vpop.permute.xlu0 %1296
      %1298 = vrot.lane.b32.xlu0 %v1223, 20
      %v1299 = vpop.permute.xlu0 %1298
      %1300 = vrot.lane.b32.xlu0 %v1224, 20
      %v1301 = vpop.permute.xlu0 %1300
      %1302 = vrot.lane.b32.xlu0 %v1225, 20
      %v1303 = vpop.permute.xlu0 %1302
      %1304 = vrot.lane.b32.xlu0 %v1226, 20
      %v1305 = vpop.permute.xlu0 %1304
      %1306 = vrot.lane.b32.xlu0 %v1227, 20
      %v1307 = vpop.permute.xlu0 %1306
      %1308 = vrot.lane.b32.xlu0 %v1228, 20
      %v1309 = vpop.permute.xlu0 %1308
      %1310 = vrot.lane.b32.xlu0 %v1229, 20
      %v1311 = vpop.permute.xlu0 %1310
      %1312 = vrot.lane.b32.xlu0 %v1230, 20
      %v1313 = vpop.permute.xlu0 %1312
      %1314 = vrot.lane.b32.xlu0 %v1231, 20
      %v1315 = vpop.permute.xlu0 %1314
      %1316 = vrot.lane.b32.xlu0 %v1232, 20
      %v1317 = vpop.permute.xlu0 %1316
      %1318 = vrot.lane.b32.xlu0 %v1233, 20
      %v1319 = vpop.permute.xlu0 %1318
      %1320 = vrot.lane.b32.xlu0 %v1234, 20
      %v1321 = vpop.permute.xlu0 %1320
      %1322 = vrot.lane.b32.xlu0 %v1235, 20
      %v1323 = vpop.permute.xlu0 %1322
      %1324 = vrot.lane.b32.xlu0 %v1236, 20
      %v1325 = vpop.permute.xlu0 %1324
      %1326 = vrot.lane.b32.xlu0 %v1237, 20
      %v1327 = vpop.permute.xlu0 %1326
      %1328 = vrot.lane.b32.xlu0 %v1238, 20
      %v1329 = vpop.permute.xlu0 %1328
      %1330 = vrot.lane.b32.xlu0 %v1239, 20
      %v1331 = vpop.permute.xlu0 %1330
      %1332 = vrot.lane.b32.xlu0 %v1240, 20
      %v1333 = vpop.permute.xlu0 %1332
      %1334 = vrot.lane.b32.xlu0 %v1241, 20
      %v1335 = vpop.permute.xlu0 %1334
      %1336 = vrot.lane.b32.xlu0 %v1242, 20
      %v1337 = vpop.permute.xlu0 %1336
      %1338 = vrot.lane.b32.xlu0 %v1243, 20
      %v1339 = vpop.permute.xlu0 %1338
      %vm1372 = vcmask 195744
      %1373 = vst.msk [vmem:[#allocation3] sm:$0xff] %vm1372, %v1277
      %1374 = vst.msk [vmem:[#allocation3 + $0x8] sm:$0xff] %vm1372, %v1279
      %1375 = vst.msk [vmem:[#allocation3 + $0x10] sm:$0xff] %vm1372, %v1281
      %1376 = vst.msk [vmem:[#allocation3 + $0x18] sm:$0xff] %vm1372, %v1283
      %1377 = vst.msk [vmem:[#allocation3 + $0x20] sm:$0xff] %vm1372, %v1285
      %1378 = vst.msk [vmem:[#allocation3 + $0x28] sm:$0xff] %vm1372, %v1287
      %1379 = vst.msk [vmem:[#allocation3 + $0x30] sm:$0xff] %vm1372, %v1289
      %1380 = vst.msk [vmem:[#allocation3 + $0x38] sm:$0xff] %vm1372, %v1291
      %1381 = vst.msk [vmem:[#allocation3 + $0x40] sm:$0xff] %vm1372, %v1293
      %1382 = vst.msk [vmem:[#allocation3 + $0x48] sm:$0xff] %vm1372, %v1295
      %1383 = vst.msk [vmem:[#allocation3 + $0x50] sm:$0xff] %vm1372, %v1297
      %1384 = vst.msk [vmem:[#allocation3 + $0x58] sm:$0xff] %vm1372, %v1299
      %1385 = vst.msk [vmem:[#allocation3 + $0x60] sm:$0xff] %vm1372, %v1301
      %1386 = vst.msk [vmem:[#allocation3 + $0x68] sm:$0xff] %vm1372, %v1303
      %1387 = vst.msk [vmem:[#allocation3 + $0x70] sm:$0xff] %vm1372, %v1305
      %1388 = vst.msk [vmem:[#allocation3 + $0x78] sm:$0xff] %vm1372, %v1307
      %1389 = vst.msk [vmem:[#allocation3 + $0x80] sm:$0xff] %vm1372, %v1309
      %1390 = vst.msk [vmem:[#allocation3 + $0x88] sm:$0xff] %vm1372, %v1311
      %1391 = vst.msk [vmem:[#allocation3 + $0x90] sm:$0xff] %vm1372, %v1313
      %1392 = vst.msk [vmem:[#allocation3 + $0x98] sm:$0xff] %vm1372, %v1315
      %1393 = vst.msk [vmem:[#allocation3 + $0xa0] sm:$0xff] %vm1372, %v1317
      %1394 = vst.msk [vmem:[#allocation3 + $0xa8] sm:$0xff] %vm1372, %v1319
      %1395 = vst.msk [vmem:[#allocation3 + $0xb0] sm:$0xff] %vm1372, %v1321
      %1396 = vst.msk [vmem:[#allocation3 + $0xb8] sm:$0xff] %vm1372, %v1323
      %1397 = vst.msk [vmem:[#allocation3 + $0xc0] sm:$0xff] %vm1372, %v1325
      %1398 = vst.msk [vmem:[#allocation3 + $0xc8] sm:$0xff] %vm1372, %v1327
      %1399 = vst.msk [vmem:[#allocation3 + $0xd0] sm:$0xff] %vm1372, %v1329
      %1400 = vst.msk [vmem:[#allocation3 + $0xd8] sm:$0xff] %vm1372, %v1331
      %1401 = vst.msk [vmem:[#allocation3 + $0xe0] sm:$0xff] %vm1372, %v1333
      %1402 = vst.msk [vmem:[#allocation3 + $0xe8] sm:$0xff] %vm1372, %v1335
      %1403 = vst.msk [vmem:[#allocation3 + $0xf0] sm:$0xff] %vm1372, %v1337
      %1404 = vst.msk [vmem:[#allocation3 + $0xf8] sm:$0xff] %vm1372, %v1339
      %s1405 = scalar_lea.vmem [#allocation2], 48
      %v1406 = vld [vmem:[%s1405] sm:$0xff]
      %v1407 = vld [vmem:[%s1405 + $0x8] sm:$0xff]
      %v1408 = vld [vmem:[%s1405 + $0x18] sm:$0xff]
      %v1409 = vld [vmem:[%s1405 + $0x20] sm:$0xff]
      %v1410 = vld [vmem:[%s1405 + $0x30] sm:$0xff]
      %v1411 = vld [vmem:[%s1405 + $0x38] sm:$0xff]
      %v1412 = vld [vmem:[%s1405 + $0x48] sm:$0xff]
      %v1413 = vld [vmem:[%s1405 + $0x50] sm:$0xff]
      %v1414 = vld [vmem:[%s1405 + $0x60] sm:$0xff]
      %v1415 = vld [vmem:[%s1405 + $0x68] sm:$0xff]
      %v1416 = vld [vmem:[%s1405 + $0x78] sm:$0xff]
      %v1417 = vld [vmem:[%s1405 + $0x80] sm:$0xff]
      %v1418 = vld [vmem:[%s1405 + $0x90] sm:$0xff]
      %v1419 = vld [vmem:[%s1405 + $0x98] sm:$0xff]
      %v1420 = vld [vmem:[%s1405 + $0xa8] sm:$0xff]
      %v1421 = vld [vmem:[%s1405 + $0xb0] sm:$0xff]
      %v1422 = vld [vmem:[%s1405 + $0xc0] sm:$0xff]
      %v1423 = vld [vmem:[%s1405 + $0xc8] sm:$0xff]
      %v1424 = vld [vmem:[%s1405 + $0xd8] sm:$0xff]
      %v1425 = vld [vmem:[%s1405 + $0xe0] sm:$0xff]
      %v1426 = vld [vmem:[%s1405 + $0xf0] sm:$0xff]
      %v1427 = vld [vmem:[%s1405 + $0xf8] sm:$0xff]
      %v1428 = vld [vmem:[%s1405 + $0x108] sm:$0xff]
      %v1429 = vld [vmem:[%s1405 + $0x110] sm:$0xff]
      %v1430 = vld [vmem:[%s1405 + $0x120] sm:$0xff]
      %v1431 = vld [vmem:[%s1405 + $0x128] sm:$0xff]
      %v1432 = vld [vmem:[%s1405 + $0x138] sm:$0xff]
      %v1433 = vld [vmem:[%s1405 + $0x140] sm:$0xff]
      %v1434 = vld [vmem:[%s1405 + $0x150] sm:$0xff]
      %v1435 = vld [vmem:[%s1405 + $0x158] sm:$0xff]
      %v1436 = vld [vmem:[%s1405 + $0x168] sm:$0xff]
      %v1437 = vld [vmem:[%s1405 + $0x170] sm:$0xff]
      %1470 = vrot.lane.b32.xlu0 %v1406, 24
      %v1471 = vpop.permute.xlu0 %1470
      %1472 = vrot.lane.b32.xlu0 %v1407, 24
      %v1473 = vpop.permute.xlu0 %1472
      %1474 = vrot.lane.b32.xlu0 %v1408, 24
      %v1475 = vpop.permute.xlu0 %1474
      %1476 = vrot.lane.b32.xlu0 %v1409, 24
      %v1477 = vpop.permute.xlu0 %1476
      %1478 = vrot.lane.b32.xlu0 %v1410, 24
      %v1479 = vpop.permute.xlu0 %1478
      %1480 = vrot.lane.b32.xlu0 %v1411, 24
      %v1481 = vpop.permute.xlu0 %1480
      %1482 = vrot.lane.b32.xlu0 %v1412, 24
      %v1483 = vpop.permute.xlu0 %1482
      %1484 = vrot.lane.b32.xlu0 %v1413, 24
      %v1485 = vpop.permute.xlu0 %1484
      %1486 = vrot.lane.b32.xlu0 %v1414, 24
      %v1487 = vpop.permute.xlu0 %1486
      %1488 = vrot.lane.b32.xlu0 %v1415, 24
      %v1489 = vpop.permute.xlu0 %1488
      %1490 = vrot.lane.b32.xlu0 %v1416, 24
      %v1491 = vpop.permute.xlu0 %1490
      %1492 = vrot.lane.b32.xlu0 %v1417, 24
      %v1493 = vpop.permute.xlu0 %1492
      %1494 = vrot.lane.b32.xlu0 %v1418, 24
      %v1495 = vpop.permute.xlu0 %1494
      %1496 = vrot.lane.b32.xlu0 %v1419, 24
      %v1497 = vpop.permute.xlu0 %1496
      %1498 = vrot.lane.b32.xlu0 %v1420, 24
      %v1499 = vpop.permute.xlu0 %1498
      %1500 = vrot.lane.b32.xlu0 %v1421, 24
      %v1501 = vpop.permute.xlu0 %1500
      %1502 = vrot.lane.b32.xlu0 %v1422, 24
      %v1503 = vpop.permute.xlu0 %1502
      %1504 = vrot.lane.b32.xlu0 %v1423, 24
      %v1505 = vpop.permute.xlu0 %1504
      %1506 = vrot.lane.b32.xlu0 %v1424, 24
      %v1507 = vpop.permute.xlu0 %1506
      %1508 = vrot.lane.b32.xlu0 %v1425, 24
      %v1509 = vpop.permute.xlu0 %1508
      %1510 = vrot.lane.b32.xlu0 %v1426, 24
      %v1511 = vpop.permute.xlu0 %1510
      %1512 = vrot.lane.b32.xlu0 %v1427, 24
      %v1513 = vpop.permute.xlu0 %1512
      %1514 = vrot.lane.b32.xlu0 %v1428, 24
      %v1515 = vpop.permute.xlu0 %1514
      %1516 = vrot.lane.b32.xlu0 %v1429, 24
      %v1517 = vpop.permute.xlu0 %1516
      %1518 = vrot.lane.b32.xlu0 %v1430, 24
      %v1519 = vpop.permute.xlu0 %1518
      %1520 = vrot.lane.b32.xlu0 %v1431, 24
      %v1521 = vpop.permute.xlu0 %1520
      %1522 = vrot.lane.b32.xlu0 %v1432, 24
      %v1523 = vpop.permute.xlu0 %1522
      %1524 = vrot.lane.b32.xlu0 %v1433, 24
      %v1525 = vpop.permute.xlu0 %1524
      %1526 = vrot.lane.b32.xlu0 %v1434, 24
      %v1527 = vpop.permute.xlu0 %1526
      %1528 = vrot.lane.b32.xlu0 %v1435, 24
      %v1529 = vpop.permute.xlu0 %1528
      %1530 = vrot.lane.b32.xlu0 %v1436, 24
      %v1531 = vpop.permute.xlu0 %1530
      %1532 = vrot.lane.b32.xlu0 %v1437, 24
      %v1533 = vpop.permute.xlu0 %1532
      %vm1566 = vcmask 228544
      %1567 = vst.msk [vmem:[#allocation3] sm:$0xff] %vm1566, %v1471
      %1568 = vst.msk [vmem:[#allocation3 + $0x8] sm:$0xff] %vm1566, %v1473
      %1569 = vst.msk [vmem:[#allocation3 + $0x10] sm:$0xff] %vm1566, %v1475
      %1570 = vst.msk [vmem:[#allocation3 + $0x18] sm:$0xff] %vm1566, %v1477
      %1571 = vst.msk [vmem:[#allocation3 + $0x20] sm:$0xff] %vm1566, %v1479
      %1572 = vst.msk [vmem:[#allocation3 + $0x28] sm:$0xff] %vm1566, %v1481
      %1573 = vst.msk [vmem:[#allocation3 + $0x30] sm:$0xff] %vm1566, %v1483
      %1574 = vst.msk [vmem:[#allocation3 + $0x38] sm:$0xff] %vm1566, %v1485
      %1575 = vst.msk [vmem:[#allocation3 + $0x40] sm:$0xff] %vm1566, %v1487
      %1576 = vst.msk [vmem:[#allocation3 + $0x48] sm:$0xff] %vm1566, %v1489
      %1577 = vst.msk [vmem:[#allocation3 + $0x50] sm:$0xff] %vm1566, %v1491
      %1578 = vst.msk [vmem:[#allocation3 + $0x58] sm:$0xff] %vm1566, %v1493
      %1579 = vst.msk [vmem:[#allocation3 + $0x60] sm:$0xff] %vm1566, %v1495
      %1580 = vst.msk [vmem:[#allocation3 + $0x68] sm:$0xff] %vm1566, %v1497
      %1581 = vst.msk [vmem:[#allocation3 + $0x70] sm:$0xff] %vm1566, %v1499
      %1582 = vst.msk [vmem:[#allocation3 + $0x78] sm:$0xff] %vm1566, %v1501
      %1583 = vst.msk [vmem:[#allocation3 + $0x80] sm:$0xff] %vm1566, %v1503
      %1584 = vst.msk [vmem:[#allocation3 + $0x88] sm:$0xff] %vm1566, %v1505
      %1585 = vst.msk [vmem:[#allocation3 + $0x90] sm:$0xff] %vm1566, %v1507
      %1586 = vst.msk [vmem:[#allocation3 + $0x98] sm:$0xff] %vm1566, %v1509
      %1587 = vst.msk [vmem:[#allocation3 + $0xa0] sm:$0xff] %vm1566, %v1511
      %1588 = vst.msk [vmem:[#allocation3 + $0xa8] sm:$0xff] %vm1566, %v1513
      %1589 = vst.msk [vmem:[#allocation3 + $0xb0] sm:$0xff] %vm1566, %v1515
      %1590 = vst.msk [vmem:[#allocation3 + $0xb8] sm:$0xff] %vm1566, %v1517
      %1591 = vst.msk [vmem:[#allocation3 + $0xc0] sm:$0xff] %vm1566, %v1519
      %1592 = vst.msk [vmem:[#allocation3 + $0xc8] sm:$0xff] %vm1566, %v1521
      %1593 = vst.msk [vmem:[#allocation3 + $0xd0] sm:$0xff] %vm1566, %v1523
      %1594 = vst.msk [vmem:[#allocation3 + $0xd8] sm:$0xff] %vm1566, %v1525
      %1595 = vst.msk [vmem:[#allocation3 + $0xe0] sm:$0xff] %vm1566, %v1527
      %1596 = vst.msk [vmem:[#allocation3 + $0xe8] sm:$0xff] %vm1566, %v1529
      %1597 = vst.msk [vmem:[#allocation3 + $0xf0] sm:$0xff] %vm1566, %v1531
      %1598 = vst.msk [vmem:[#allocation3 + $0xf8] sm:$0xff] %vm1566, %v1533
      %v1599 = vld [vmem:[%s1405 + $0x1] sm:$0xff]
      %v1600 = vld [vmem:[%s1405 + $0x9] sm:$0xff]
      %v1601 = vld [vmem:[%s1405 + $0x19] sm:$0xff]
      %v1602 = vld [vmem:[%s1405 + $0x21] sm:$0xff]
      %v1603 = vld [vmem:[%s1405 + $0x31] sm:$0xff]
      %v1604 = vld [vmem:[%s1405 + $0x39] sm:$0xff]
      %v1605 = vld [vmem:[%s1405 + $0x49] sm:$0xff]
      %v1606 = vld [vmem:[%s1405 + $0x51] sm:$0xff]
      %v1607 = vld [vmem:[%s1405 + $0x61] sm:$0xff]
      %v1608 = vld [vmem:[%s1405 + $0x69] sm:$0xff]
      %v1609 = vld [vmem:[%s1405 + $0x79] sm:$0xff]
      %v1610 = vld [vmem:[%s1405 + $0x81] sm:$0xff]
      %v1611 = vld [vmem:[%s1405 + $0x91] sm:$0xff]
      %v1612 = vld [vmem:[%s1405 + $0x99] sm:$0xff]
      %v1613 = vld [vmem:[%s1405 + $0xa9] sm:$0xff]
      %v1614 = vld [vmem:[%s1405 + $0xb1] sm:$0xff]
      %v1615 = vld [vmem:[%s1405 + $0xc1] sm:$0xff]
      %v1616 = vld [vmem:[%s1405 + $0xc9] sm:$0xff]
      %v1617 = vld [vmem:[%s1405 + $0xd9] sm:$0xff]
      %v1618 = vld [vmem:[%s1405 + $0xe1] sm:$0xff]
      %v1619 = vld [vmem:[%s1405 + $0xf1] sm:$0xff]
      %v1620 = vld [vmem:[%s1405 + $0xf9] sm:$0xff]
      %v1621 = vld [vmem:[%s1405 + $0x109] sm:$0xff]
      %v1622 = vld [vmem:[%s1405 + $0x111] sm:$0xff]
      %v1623 = vld [vmem:[%s1405 + $0x121] sm:$0xff]
      %v1624 = vld [vmem:[%s1405 + $0x129] sm:$0xff]
      %v1625 = vld [vmem:[%s1405 + $0x139] sm:$0xff]
      %v1626 = vld [vmem:[%s1405 + $0x141] sm:$0xff]
      %v1627 = vld [vmem:[%s1405 + $0x151] sm:$0xff]
      %v1628 = vld [vmem:[%s1405 + $0x159] sm:$0xff]
      %v1629 = vld [vmem:[%s1405 + $0x169] sm:$0xff]
      %v1630 = vld [vmem:[%s1405 + $0x171] sm:$0xff]
      %1663 = vrot.lane.b32.xlu0 %v1599, 28
      %v1664 = vpop.permute.xlu0 %1663
      %1665 = vrot.lane.b32.xlu0 %v1600, 28
      %v1666 = vpop.permute.xlu0 %1665
      %1667 = vrot.lane.b32.xlu0 %v1601, 28
      %v1668 = vpop.permute.xlu0 %1667
      %1669 = vrot.lane.b32.xlu0 %v1602, 28
      %v1670 = vpop.permute.xlu0 %1669
      %1671 = vrot.lane.b32.xlu0 %v1603, 28
      %v1672 = vpop.permute.xlu0 %1671
      %1673 = vrot.lane.b32.xlu0 %v1604, 28
      %v1674 = vpop.permute.xlu0 %1673
      %1675 = vrot.lane.b32.xlu0 %v1605, 28
      %v1676 = vpop.permute.xlu0 %1675
      %1677 = vrot.lane.b32.xlu0 %v1606, 28
      %v1678 = vpop.permute.xlu0 %1677
      %1679 = vrot.lane.b32.xlu0 %v1607, 28
      %v1680 = vpop.permute.xlu0 %1679
      %1681 = vrot.lane.b32.xlu0 %v1608, 28
      %v1682 = vpop.permute.xlu0 %1681
      %1683 = vrot.lane.b32.xlu0 %v1609, 28
      %v1684 = vpop.permute.xlu0 %1683
      %1685 = vrot.lane.b32.xlu0 %v1610, 28
      %v1686 = vpop.permute.xlu0 %1685
      %1687 = vrot.lane.b32.xlu0 %v1611, 28
      %v1688 = vpop.permute.xlu0 %1687
      %1689 = vrot.lane.b32.xlu0 %v1612, 28
      %v1690 = vpop.permute.xlu0 %1689
      %1691 = vrot.lane.b32.xlu0 %v1613, 28
      %v1692 = vpop.permute.xlu0 %1691
      %1693 = vrot.lane.b32.xlu0 %v1614, 28
      %v1694 = vpop.permute.xlu0 %1693
      %1695 = vrot.lane.b32.xlu0 %v1615, 28
      %v1696 = vpop.permute.xlu0 %1695
      %1697 = vrot.lane.b32.xlu0 %v1616, 28
      %v1698 = vpop.permute.xlu0 %1697
      %1699 = vrot.lane.b32.xlu0 %v1617, 28
      %v1700 = vpop.permute.xlu0 %1699
      %1701 = vrot.lane.b32.xlu0 %v1618, 28
      %v1702 = vpop.permute.xlu0 %1701
      %1703 = vrot.lane.b32.xlu0 %v1619, 28
      %v1704 = vpop.permute.xlu0 %1703
      %1705 = vrot.lane.b32.xlu0 %v1620, 28
      %v1706 = vpop.permute.xlu0 %1705
      %1707 = vrot.lane.b32.xlu0 %v1621, 28
      %v1708 = vpop.permute.xlu0 %1707
      %1709 = vrot.lane.b32.xlu0 %v1622, 28
      %v1710 = vpop.permute.xlu0 %1709
      %1711 = vrot.lane.b32.xlu0 %v1623, 28
      %v1712 = vpop.permute.xlu0 %1711
      %1713 = vrot.lane.b32.xlu0 %v1624, 28
      %v1714 = vpop.permute.xlu0 %1713
      %1715 = vrot.lane.b32.xlu0 %v1625, 28
      %v1716 = vpop.permute.xlu0 %1715
      %1717 = vrot.lane.b32.xlu0 %v1626, 28
      %v1718 = vpop.permute.xlu0 %1717
      %1719 = vrot.lane.b32.xlu0 %v1627, 28
      %v1720 = vpop.permute.xlu0 %1719
      %1721 = vrot.lane.b32.xlu0 %v1628, 28
      %v1722 = vpop.permute.xlu0 %1721
      %1723 = vrot.lane.b32.xlu0 %v1629, 28
      %v1724 = vpop.permute.xlu0 %1723
      %1725 = vrot.lane.b32.xlu0 %v1630, 28
      %v1726 = vpop.permute.xlu0 %1725
      %vm1759 = vcmask 261344
      %1760 = vst.msk [vmem:[#allocation3] sm:$0xff] %vm1759, %v1664
      %1761 = vst.msk [vmem:[#allocation3 + $0x8] sm:$0xff] %vm1759, %v1666
      %1762 = vst.msk [vmem:[#allocation3 + $0x10] sm:$0xff] %vm1759, %v1668
      %1763 = vst.msk [vmem:[#allocation3 + $0x18] sm:$0xff] %vm1759, %v1670
      %1764 = vst.msk [vmem:[#allocation3 + $0x20] sm:$0xff] %vm1759, %v1672
      %1765 = vst.msk [vmem:[#allocation3 + $0x28] sm:$0xff] %vm1759, %v1674
      %1766 = vst.msk [vmem:[#allocation3 + $0x30] sm:$0xff] %vm1759, %v1676
      %1767 = vst.msk [vmem:[#allocation3 + $0x38] sm:$0xff] %vm1759, %v1678
      %1768 = vst.msk [vmem:[#allocation3 + $0x40] sm:$0xff] %vm1759, %v1680
      %1769 = vst.msk [vmem:[#allocation3 + $0x48] sm:$0xff] %vm1759, %v1682
      %1770 = vst.msk [vmem:[#allocation3 + $0x50] sm:$0xff] %vm1759, %v1684
      %1771 = vst.msk [vmem:[#allocation3 + $0x58] sm:$0xff] %vm1759, %v1686
      %1772 = vst.msk [vmem:[#allocation3 + $0x60] sm:$0xff] %vm1759, %v1688
      %1773 = vst.msk [vmem:[#allocation3 + $0x68] sm:$0xff] %vm1759, %v1690
      %1774 = vst.msk [vmem:[#allocation3 + $0x70] sm:$0xff] %vm1759, %v1692
      %1775 = vst.msk [vmem:[#allocation3 + $0x78] sm:$0xff] %vm1759, %v1694
      %1776 = vst.msk [vmem:[#allocation3 + $0x80] sm:$0xff] %vm1759, %v1696
      %1777 = vst.msk [vmem:[#allocation3 + $0x88] sm:$0xff] %vm1759, %v1698
      %1778 = vst.msk [vmem:[#allocation3 + $0x90] sm:$0xff] %vm1759, %v1700
      %1779 = vst.msk [vmem:[#allocation3 + $0x98] sm:$0xff] %vm1759, %v1702
      %1780 = vst.msk [vmem:[#allocation3 + $0xa0] sm:$0xff] %vm1759, %v1704
      %1781 = vst.msk [vmem:[#allocation3 + $0xa8] sm:$0xff] %vm1759, %v1706
      %1782 = vst.msk [vmem:[#allocation3 + $0xb0] sm:$0xff] %vm1759, %v1708
      %1783 = vst.msk [vmem:[#allocation3 + $0xb8] sm:$0xff] %vm1759, %v1710
      %1784 = vst.msk [vmem:[#allocation3 + $0xc0] sm:$0xff] %vm1759, %v1712
      %1785 = vst.msk [vmem:[#allocation3 + $0xc8] sm:$0xff] %vm1759, %v1714
      %1786 = vst.msk [vmem:[#allocation3 + $0xd0] sm:$0xff] %vm1759, %v1716
      %1787 = vst.msk [vmem:[#allocation3 + $0xd8] sm:$0xff] %vm1759, %v1718
      %1788 = vst.msk [vmem:[#allocation3 + $0xe0] sm:$0xff] %vm1759, %v1720
      %1789 = vst.msk [vmem:[#allocation3 + $0xe8] sm:$0xff] %vm1759, %v1722
      %1790 = vst.msk [vmem:[#allocation3 + $0xf0] sm:$0xff] %vm1759, %v1724
      %1791 = vst.msk [vmem:[#allocation3 + $0xf8] sm:$0xff] %vm1759, %v1726
      %v1792 = vld [vmem:[%s1405 + $0x2] sm:$0xff]
      %v1793 = vld [vmem:[%s1405 + $0xa] sm:$0xff]
      %v1794 = vld [vmem:[%s1405 + $0x1a] sm:$0xff]
      %v1795 = vld [vmem:[%s1405 + $0x22] sm:$0xff]
      %v1796 = vld [vmem:[%s1405 + $0x32] sm:$0xff]
      %v1797 = vld [vmem:[%s1405 + $0x3a] sm:$0xff]
      %v1798 = vld [vmem:[%s1405 + $0x4a] sm:$0xff]
      %v1799 = vld [vmem:[%s1405 + $0x52] sm:$0xff]
      %v1800 = vld [vmem:[%s1405 + $0x62] sm:$0xff]
      %v1801 = vld [vmem:[%s1405 + $0x6a] sm:$0xff]
      %v1802 = vld [vmem:[%s1405 + $0x7a] sm:$0xff]
      %v1803 = vld [vmem:[%s1405 + $0x82] sm:$0xff]
      %v1804 = vld [vmem:[%s1405 + $0x92] sm:$0xff]
      %v1805 = vld [vmem:[%s1405 + $0x9a] sm:$0xff]
      %v1806 = vld [vmem:[%s1405 + $0xaa] sm:$0xff]
      %v1807 = vld [vmem:[%s1405 + $0xb2] sm:$0xff]
      %v1808 = vld [vmem:[%s1405 + $0xc2] sm:$0xff]
      %v1809 = vld [vmem:[%s1405 + $0xca] sm:$0xff]
      %v1810 = vld [vmem:[%s1405 + $0xda] sm:$0xff]
      %v1811 = vld [vmem:[%s1405 + $0xe2] sm:$0xff]
      %v1812 = vld [vmem:[%s1405 + $0xf2] sm:$0xff]
      %v1813 = vld [vmem:[%s1405 + $0xfa] sm:$0xff]
      %v1814 = vld [vmem:[%s1405 + $0x10a] sm:$0xff]
      %v1815 = vld [vmem:[%s1405 + $0x112] sm:$0xff]
      %v1816 = vld [vmem:[%s1405 + $0x122] sm:$0xff]
      %v1817 = vld [vmem:[%s1405 + $0x12a] sm:$0xff]
      %v1818 = vld [vmem:[%s1405 + $0x13a] sm:$0xff]
      %v1819 = vld [vmem:[%s1405 + $0x142] sm:$0xff]
      %v1820 = vld [vmem:[%s1405 + $0x152] sm:$0xff]
      %v1821 = vld [vmem:[%s1405 + $0x15a] sm:$0xff]
      %v1822 = vld [vmem:[%s1405 + $0x16a] sm:$0xff]
      %v1823 = vld [vmem:[%s1405 + $0x172] sm:$0xff]
      %1856 = vrot.lane.b32.xlu0 %v1792, 32
      %v1857 = vpop.permute.xlu0 %1856
      %1858 = vrot.lane.b32.xlu0 %v1793, 32
      %v1859 = vpop.permute.xlu0 %1858
      %1860 = vrot.lane.b32.xlu0 %v1794, 32
      %v1861 = vpop.permute.xlu0 %1860
      %1862 = vrot.lane.b32.xlu0 %v1795, 32
      %v1863 = vpop.permute.xlu0 %1862
      %1864 = vrot.lane.b32.xlu0 %v1796, 32
      %v1865 = vpop.permute.xlu0 %1864
      %1866 = vrot.lane.b32.xlu0 %v1797, 32
      %v1867 = vpop.permute.xlu0 %1866
      %1868 = vrot.lane.b32.xlu0 %v1798, 32
      %v1869 = vpop.permute.xlu0 %1868
      %1870 = vrot.lane.b32.xlu0 %v1799, 32
      %v1871 = vpop.permute.xlu0 %1870
      %1872 = vrot.lane.b32.xlu0 %v1800, 32
      %v1873 = vpop.permute.xlu0 %1872
      %1874 = vrot.lane.b32.xlu0 %v1801, 32
      %v1875 = vpop.permute.xlu0 %1874
      %1876 = vrot.lane.b32.xlu0 %v1802, 32
      %v1877 = vpop.permute.xlu0 %1876
      %1878 = vrot.lane.b32.xlu0 %v1803, 32
      %v1879 = vpop.permute.xlu0 %1878
      %1880 = vrot.lane.b32.xlu0 %v1804, 32
      %v1881 = vpop.permute.xlu0 %1880
      %1882 = vrot.lane.b32.xlu0 %v1805, 32
      %v1883 = vpop.permute.xlu0 %1882
      %1884 = vrot.lane.b32.xlu0 %v1806, 32
      %v1885 = vpop.permute.xlu0 %1884
      %1886 = vrot.lane.b32.xlu0 %v1807, 32
      %v1887 = vpop.permute.xlu0 %1886
      %1888 = vrot.lane.b32.xlu0 %v1808, 32
      %v1889 = vpop.permute.xlu0 %1888
      %1890 = vrot.lane.b32.xlu0 %v1809, 32
      %v1891 = vpop.permute.xlu0 %1890
      %1892 = vrot.lane.b32.xlu0 %v1810, 32
      %v1893 = vpop.permute.xlu0 %1892
      %1894 = vrot.lane.b32.xlu0 %v1811, 32
      %v1895 = vpop.permute.xlu0 %1894
      %1896 = vrot.lane.b32.xlu0 %v1812, 32
      %v1897 = vpop.permute.xlu0 %1896
      %1898 = vrot.lane.b32.xlu0 %v1813, 32
      %v1899 = vpop.permute.xlu0 %1898
      %1900 = vrot.lane.b32.xlu0 %v1814, 32
      %v1901 = vpop.permute.xlu0 %1900
      %1902 = vrot.lane.b32.xlu0 %v1815, 32
      %v1903 = vpop.permute.xlu0 %1902
      %1904 = vrot.lane.b32.xlu0 %v1816, 32
      %v1905 = vpop.permute.xlu0 %1904
      %1906 = vrot.lane.b32.xlu0 %v1817, 32
      %v1907 = vpop.permute.xlu0 %1906
      %1908 = vrot.lane.b32.xlu0 %v1818, 32
      %v1909 = vpop.permute.xlu0 %1908
      %1910 = vrot.lane.b32.xlu0 %v1819, 32
      %v1911 = vpop.permute.xlu0 %1910
      %1912 = vrot.lane.b32.xlu0 %v1820, 32
      %v1913 = vpop.permute.xlu0 %1912
      %1914 = vrot.lane.b32.xlu0 %v1821, 32
      %v1915 = vpop.permute.xlu0 %1914
      %1916 = vrot.lane.b32.xlu0 %v1822, 32
      %v1917 = vpop.permute.xlu0 %1916
      %1918 = vrot.lane.b32.xlu0 %v1823, 32
      %v1919 = vpop.permute.xlu0 %1918
      %vm1952 = vcmask 294144
      %1953 = vst.msk [vmem:[#allocation3] sm:$0xff] %vm1952, %v1857
      %1954 = vst.msk [vmem:[#allocation3 + $0x8] sm:$0xff] %vm1952, %v1859
      %1955 = vst.msk [vmem:[#allocation3 + $0x10] sm:$0xff] %vm1952, %v1861
      %1956 = vst.msk [vmem:[#allocation3 + $0x18] sm:$0xff] %vm1952, %v1863
      %1957 = vst.msk [vmem:[#allocation3 + $0x20] sm:$0xff] %vm1952, %v1865
      %1958 = vst.msk [vmem:[#allocation3 + $0x28] sm:$0xff] %vm1952, %v1867
      %1959 = vst.msk [vmem:[#allocation3 + $0x30] sm:$0xff] %vm1952, %v1869
      %1960 = vst.msk [vmem:[#allocation3 + $0x38] sm:$0xff] %vm1952, %v1871
      %1961 = vst.msk [vmem:[#allocation3 + $0x40] sm:$0xff] %vm1952, %v1873
      %1962 = vst.msk [vmem:[#allocation3 + $0x48] sm:$0xff] %vm1952, %v1875
      %1963 = vst.msk [vmem:[#allocation3 + $0x50] sm:$0xff] %vm1952, %v1877
      %1964 = vst.msk [vmem:[#allocation3 + $0x58] sm:$0xff] %vm1952, %v1879
      %1965 = vst.msk [vmem:[#allocation3 + $0x60] sm:$0xff] %vm1952, %v1881
      %1966 = vst.msk [vmem:[#allocation3 + $0x68] sm:$0xff] %vm1952, %v1883
      %1967 = vst.msk [vmem:[#allocation3 + $0x70] sm:$0xff] %vm1952, %v1885
      %1968 = vst.msk [vmem:[#allocation3 + $0x78] sm:$0xff] %vm1952, %v1887
      %1969 = vst.msk [vmem:[#allocation3 + $0x80] sm:$0xff] %vm1952, %v1889
      %1970 = vst.msk [vmem:[#allocation3 + $0x88] sm:$0xff] %vm1952, %v1891
      %1971 = vst.msk [vmem:[#allocation3 + $0x90] sm:$0xff] %vm1952, %v1893
      %1972 = vst.msk [vmem:[#allocation3 + $0x98] sm:$0xff] %vm1952, %v1895
      %1973 = vst.msk [vmem:[#allocation3 + $0xa0] sm:$0xff] %vm1952, %v1897
      %1974 = vst.msk [vmem:[#allocation3 + $0xa8] sm:$0xff] %vm1952, %v1899
      %1975 = vst.msk [vmem:[#allocation3 + $0xb0] sm:$0xff] %vm1952, %v1901
      %1976 = vst.msk [vmem:[#allocation3 + $0xb8] sm:$0xff] %vm1952, %v1903
      %1977 = vst.msk [vmem:[#allocation3 + $0xc0] sm:$0xff] %vm1952, %v1905
      %1978 = vst.msk [vmem:[#allocation3 + $0xc8] sm:$0xff] %vm1952, %v1907
      %1979 = vst.msk [vmem:[#allocation3 + $0xd0] sm:$0xff] %vm1952, %v1909
      %1980 = vst.msk [vmem:[#allocation3 + $0xd8] sm:$0xff] %vm1952, %v1911
      %1981 = vst.msk [vmem:[#allocation3 + $0xe0] sm:$0xff] %vm1952, %v1913
      %1982 = vst.msk [vmem:[#allocation3 + $0xe8] sm:$0xff] %vm1952, %v1915
      %1983 = vst.msk [vmem:[#allocation3 + $0xf0] sm:$0xff] %vm1952, %v1917
      %1984 = vst.msk [vmem:[#allocation3 + $0xf8] sm:$0xff] %vm1952, %v1919
      %v1985 = vld [vmem:[#allocation3] sm:$0xff]
      %v1986 = vld [vmem:[#allocation3 + $0x8] sm:$0xff]
      %v1987 = vld [vmem:[#allocation3 + $0x10] sm:$0xff]
      %v1988 = vld [vmem:[#allocation3 + $0x18] sm:$0xff]
      %v1989 = vld [vmem:[#allocation3 + $0x20] sm:$0xff]
      %v1990 = vld [vmem:[#allocation3 + $0x28] sm:$0xff]
      %v1991 = vld [vmem:[#allocation3 + $0x30] sm:$0xff]
      %v1992 = vld [vmem:[#allocation3 + $0x38] sm:$0xff]
      %v1993 = vld [vmem:[#allocation3 + $0x40] sm:$0xff]
      %v1994 = vld [vmem:[#allocation3 + $0x48] sm:$0xff]
      %v1995 = vld [vmem:[#allocation3 + $0x50] sm:$0xff]
      %v1996 = vld [vmem:[#allocation3 + $0x58] sm:$0xff]
      %v1997 = vld [vmem:[#allocation3 + $0x60] sm:$0xff]
      %v1998 = vld [vmem:[#allocation3 + $0x68] sm:$0xff]
      %v1999 = vld [vmem:[#allocation3 + $0x70] sm:$0xff]
      %v2000 = vld [vmem:[#allocation3 + $0x78] sm:$0xff]
      %v2001 = vld [vmem:[#allocation3 + $0x80] sm:$0xff]
      %v2002 = vld [vmem:[#allocation3 + $0x88] sm:$0xff]
      %v2003 = vld [vmem:[#allocation3 + $0x90] sm:$0xff]
      %v2004 = vld [vmem:[#allocation3 + $0x98] sm:$0xff]
      %v2005 = vld [vmem:[#allocation3 + $0xa0] sm:$0xff]
      %v2006 = vld [vmem:[#allocation3 + $0xa8] sm:$0xff]
      %v2007 = vld [vmem:[#allocation3 + $0xb0] sm:$0xff]
      %v2008 = vld [vmem:[#allocation3 + $0xb8] sm:$0xff]
      %v2009 = vld [vmem:[#allocation3 + $0xc0] sm:$0xff]
      %v2010 = vld [vmem:[#allocation3 + $0xc8] sm:$0xff]
      %v2011 = vld [vmem:[#allocation3 + $0xd0] sm:$0xff]
      %v2012 = vld [vmem:[#allocation3 + $0xd8] sm:$0xff]
      %v2013 = vld [vmem:[#allocation3 + $0xe0] sm:$0xff]
      %v2014 = vld [vmem:[#allocation3 + $0xe8] sm:$0xff]
      %v2015 = vld [vmem:[#allocation3 + $0xf0] sm:$0xff]
      %v2016 = vld [vmem:[#allocation3 + $0xf8] sm:$0xff]
      %v2017 = vld [vmem:[%s1] sm:$0xff]
      %v2018 = vld [vmem:[%s1 + $0x8] sm:$0xff]
      %v2019 = vld [vmem:[%s1 + $0x10] sm:$0xff]
      %v2020 = vld [vmem:[%s1 + $0x18] sm:$0xff]
      %v2021 = vld [vmem:[%s1 + $0x20] sm:$0xf]
      %vm2022 = vcmask 293888
      %v2024 = vsel %vm2022, %v1985, 0
      %v2027 = vsel %vm2022, %v1986, 0
      %v2030 = vsel %vm2022, %v1987, 0
      %v2033 = vsel %vm2022, %v1988, 0
      %v2036 = vsel %vm2022, %v1989, 0
      %v2039 = vsel %vm2022, %v1990, 0
      %v2042 = vsel %vm2022, %v1991, 0
      %v2045 = vsel %vm2022, %v1992, 0
      %v2048 = vsel %vm2022, %v1993, 0
      %v2051 = vsel %vm2022, %v1994, 0
      %v2054 = vsel %vm2022, %v1995, 0
      %v2057 = vsel %vm2022, %v1996, 0
      %v2060 = vsel %vm2022, %v1997, 0
      %v2063 = vsel %vm2022, %v1998, 0
      %v2066 = vsel %vm2022, %v1999, 0
      %v2069 = vsel %vm2022, %v2000, 0
      %v2072 = vsel %vm2022, %v2001, 0
      %v2075 = vsel %vm2022, %v2002, 0
      %v2078 = vsel %vm2022, %v2003, 0
      %v2081 = vsel %vm2022, %v2004, 0
      %v2084 = vsel %vm2022, %v2005, 0
      %v2087 = vsel %vm2022, %v2006, 0
      %v2090 = vsel %vm2022, %v2007, 0
      %v2093 = vsel %vm2022, %v2008, 0
      %v2096 = vsel %vm2022, %v2009, 0
      %v2099 = vsel %vm2022, %v2010, 0
      %v2102 = vsel %vm2022, %v2011, 0
      %v2105 = vsel %vm2022, %v2012, 0
      %v2108 = vsel %vm2022, %v2013, 0
      %v2111 = vsel %vm2022, %v2014, 0
      %v2114 = vsel %vm2022, %v2015, 0
      %v2117 = vsel %vm2022, %v2016, 0
      %vm2119 = vcmask 1043456
      %v2121 = vsel %vm2119, %v2021, 0
      %2123 = vmatprep.subr.mxu0 0.0
      %2124 = vmatpush1.msra.mxu0 %v2017
      %2125 = vmatprep.subr.mxu0 0.0
      %2126 = vmatpush1.msra.mxu0 %v2018
      %2127 = vmatprep.subr.mxu0 0.0
      %2128 = vmatpush1.msra.mxu0 %v2019
      %2129 = vmatprep.subr.mxu0 0.0
      %2130 = vmatpush1.msra.mxu0 %v2020
      %2131 = vmatprep.subr.mxu0 0.0
      %2132 = vmatpush1.msra.mxu0 %v2121
      %2133 = vmatprep.subr.mxu0 0.0
      %2134 = vmatpush1.msra.mxu0 0.0
      %2135 = vmatprep.subr.mxu0 0.0
      %2136 = vmatpush1.msra.mxu0 0.0
      %2137 = vmatprep.subr.mxu0 0.0
      %2138 = vmatpush1.msra.mxu0 0.0
      %2139 = vmatprep.subr.mxu0 0.0
      %2140 = vmatpush1.msra.mxu0 0.0
      %2141 = vmatprep.subr.mxu0 0.0
      %2142 = vmatpush1.msra.mxu0 0.0
      %2143 = vmatprep.subr.mxu0 0.0
      %2144 = vmatpush1.msra.mxu0 0.0
      %2145 = vmatprep.subr.mxu0 0.0
      %2146 = vmatpush1.msra.mxu0 0.0
      %2147 = vmatprep.subr.mxu0 0.0
      %2148 = vmatpush1.msra.mxu0 0.0
      %2149 = vmatprep.subr.mxu0 0.0
      %2150 = vmatpush1.msra.mxu0 0.0
      %2151 = vmatprep.subr.mxu0 0.0
      %2152 = vmatpush1.msra.mxu0 0.0
      %2153 = vmatprep.subr.mxu0 0.0
      %2154 = vmatpush1.msra.mxu0 0.0
      %2155 = vmatprep.subr.mxu0 0.0
      %2156 = vmatpush1.msra.mxu0 0.0
      %2157 = vmatprep.subr.mxu0 0.0
      %2158 = vmatpush1.msra.mxu0 0.0
      %2159 = vmatprep.subr.mxu0 0.0
      %2160 = vmatpush1.msra.mxu0 0.0
      %2161 = vmatprep.subr.mxu0 0.0
      %2162 = vmatpush1.msra.mxu0 0.0
      %2163 = vmatprep.subr.mxu0 0.0
      %2164 = vmatpush1.msra.mxu0 0.0
      %2165 = vmatprep.subr.mxu0 0.0
      %2166 = vmatpush1.msra.mxu0 0.0
      %2167 = vmatprep.subr.mxu0 0.0
      %2168 = vmatpush1.msra.mxu0 0.0
      %2169 = vmatprep.subr.mxu0 0.0
      %2170 = vmatpush1.msra.mxu0 0.0
      %2171 = vmatprep.subr.mxu0 0.0
      %2172 = vmatpush1.msra.mxu0 0.0
      %2173 = vmatprep.subr.mxu0 0.0
      %2174 = vmatpush1.msra.mxu0 0.0
      %2175 = vmatprep.subr.mxu0 0.0
      %2176 = vmatpush1.msra.mxu0 0.0
      %2177 = vmatprep.subr.mxu0 0.0
      %2178 = vmatpush1.msra.mxu0 0.0
      %2179 = vmatprep.subr.mxu0 0.0
      %2180 = vmatpush1.msra.mxu0 0.0
      %2181 = vmatprep.subr.mxu0 0.0
      %2182 = vmatpush1.msra.mxu0 0.0
      %2183 = vmatprep.subr.mxu0 0.0
      %2184 = vmatpush1.msra.mxu0 0.0
      %2185 = vmatprep.subr.mxu0 0.0
      %2186 = vmatpush1.msra.mxu0 0.0
      %2187 = vmatprep.mubr.f32.mxu0 0.0
      %2188 = vmatmul.mubr.f32.gmra.mrb[0].mxu0 %v2024
      %v2189 = vpop.f32.mrb[0].mxu0
      %v2190 = vadd.f32 0.0, %v2189
      %v2191 = vpop.f32.mrb[0].mxu0
      %2192 = vmatprep.mubr.f32.mxu0 0.0
      %2193 = vmatmul.mubr.f32.gmra.mrb[0].mxu0 %v2027
      %v2194 = vpop.f32.mrb[0].mxu0
      %v2195 = vadd.f32 0.0, %v2194
      %v2196 = vpop.f32.mrb[0].mxu0
      %2197 = vmatprep.mubr.f32.mxu0 0.0
      %2198 = vmatmul.mubr.f32.gmra.mrb[0].mxu0 %v2030
      %v2199 = vpop.f32.mrb[0].mxu0
      %v2200 = vadd.f32 0.0, %v2199
      %v2201 = vpop.f32.mrb[0].mxu0
      %2202 = vmatprep.mubr.f32.mxu0 0.0
      %2203 = vmatmul.mubr.f32.gmra.mrb[0].mxu0 %v2033
      %v2204 = vpop.f32.mrb[0].mxu0
      %v2205 = vadd.f32 0.0, %v2204
      %v2206 = vpop.f32.mrb[0].mxu0
      %2207 = vmatprep.mubr.f32.mxu0 0.0
      %2208 = vmatmul.mubr.f32.gmra.mrb[0].mxu0 %v2036
      %v2209 = vpop.f32.mrb[0].mxu0
      %v2210 = vadd.f32 0.0, %v2209
      %v2211 = vpop.f32.mrb[0].mxu0
      %2212 = vmatprep.mubr.f32.mxu0 0.0
      %2213 = vmatmul.mubr.f32.gmra.mrb[0].mxu0 %v2039
      %v2214 = vpop.f32.mrb[0].mxu0
      %v2215 = vadd.f32 0.0, %v2214
      %v2216 = vpop.f32.mrb[0].mxu0
      %2217 = vmatprep.mubr.f32.mxu0 0.0
      %2218 = vmatmul.mubr.f32.gmra.mrb[0].mxu0 %v2042
      %v2219 = vpop.f32.mrb[0].mxu0
      %v2220 = vadd.f32 0.0, %v2219
      %v2221 = vpop.f32.mrb[0].mxu0
      %2222 = vmatprep.mubr.f32.mxu0 0.0
      %2223 = vmatmul.mubr.f32.gmra.mrb[0].mxu0 %v2045
      %v2224 = vpop.f32.mrb[0].mxu0
      %v2225 = vadd.f32 0.0, %v2224
      %v2226 = vpop.f32.mrb[0].mxu0
      %2227 = vmatprep.mubr.f32.mxu0 0.0
      %2228 = vmatmul.mubr.f32.gmra.mrb[0].mxu0 %v2048
      %v2229 = vpop.f32.mrb[0].mxu0
      %v2230 = vadd.f32 0.0, %v2229
      %v2231 = vpop.f32.mrb[0].mxu0
      %2232 = vmatprep.mubr.f32.mxu0 0.0
      %2233 = vmatmul.mubr.f32.gmra.mrb[0].mxu0 %v2051
      %v2234 = vpop.f32.mrb[0].mxu0
      %v2235 = vadd.f32 0.0, %v2234
      %v2236 = vpop.f32.mrb[0].mxu0
      %2237 = vmatprep.mubr.f32.mxu0 0.0
      %2238 = vmatmul.mubr.f32.gmra.mrb[0].mxu0 %v2054
      %v2239 = vpop.f32.mrb[0].mxu0
      %v2240 = vadd.f32 0.0, %v2239
      %v2241 = vpop.f32.mrb[0].mxu0
      %2242 = vmatprep.mubr.f32.mxu0 0.0
      %2243 = vmatmul.mubr.f32.gmra.mrb[0].mxu0 %v2057
      %v2244 = vpop.f32.mrb[0].mxu0
      %v2245 = vadd.f32 0.0, %v2244
      %v2246 = vpop.f32.mrb[0].mxu0
      %2247 = vmatprep.mubr.f32.mxu0 0.0
      %2248 = vmatmul.mubr.f32.gmra.mrb[0].mxu0 %v2060
      %v2249 = vpop.f32.mrb[0].mxu0
      %v2250 = vadd.f32 0.0, %v2249
      %v2251 = vpop.f32.mrb[0].mxu0
      %2252 = vmatprep.mubr.f32.mxu0 0.0
      %2253 = vmatmul.mubr.f32.gmra.mrb[0].mxu0 %v2063
      %v2254 = vpop.f32.mrb[0].mxu0
      %v2255 = vadd.f32 0.0, %v2254
      %v2256 = vpop.f32.mrb[0].mxu0
      %2257 = vmatprep.mubr.f32.mxu0 0.0
      %2258 = vmatmul.mubr.f32.gmra.mrb[0].mxu0 %v2066
      %v2259 = vpop.f32.mrb[0].mxu0
      %v2260 = vadd.f32 0.0, %v2259
      %v2261 = vpop.f32.mrb[0].mxu0
      %2262 = vmatprep.mubr.f32.mxu0 0.0
      %2263 = vmatmul.mubr.f32.gmra.mrb[0].mxu0 %v2069
      %v2264 = vpop.f32.mrb[0].mxu0
      %v2265 = vadd.f32 0.0, %v2264
      %v2266 = vpop.f32.mrb[0].mxu0
      %2267 = vmatprep.mubr.f32.mxu0 0.0
      %2268 = vmatmul.mubr.f32.gmra.mrb[0].mxu0 %v2072
      %v2269 = vpop.f32.mrb[0].mxu0
      %v2270 = vadd.f32 0.0, %v2269
      %v2271 = vpop.f32.mrb[0].mxu0
      %2272 = vmatprep.mubr.f32.mxu0 0.0
      %2273 = vmatmul.mubr.f32.gmra.mrb[0].mxu0 %v2075
      %v2274 = vpop.f32.mrb[0].mxu0
      %v2275 = vadd.f32 0.0, %v2274
      %v2276 = vpop.f32.mrb[0].mxu0
      %2277 = vmatprep.mubr.f32.mxu0 0.0
      %2278 = vmatmul.mubr.f32.gmra.mrb[0].mxu0 %v2078
      %v2279 = vpop.f32.mrb[0].mxu0
      %v2280 = vadd.f32 0.0, %v2279
      %v2281 = vpop.f32.mrb[0].mxu0
      %2282 = vmatprep.mubr.f32.mxu0 0.0
      %2283 = vmatmul.mubr.f32.gmra.mrb[0].mxu0 %v2081
      %v2284 = vpop.f32.mrb[0].mxu0
      %v2285 = vadd.f32 0.0, %v2284
      %v2286 = vpop.f32.mrb[0].mxu0
      %2287 = vmatprep.mubr.f32.mxu0 0.0
      %2288 = vmatmul.mubr.f32.gmra.mrb[0].mxu0 %v2084
      %v2289 = vpop.f32.mrb[0].mxu0
      %v2290 = vadd.f32 0.0, %v2289
      %v2291 = vpop.f32.mrb[0].mxu0
      %2292 = vmatprep.mubr.f32.mxu0 0.0
      %2293 = vmatmul.mubr.f32.gmra.mrb[0].mxu0 %v2087
      %v2294 = vpop.f32.mrb[0].mxu0
      %v2295 = vadd.f32 0.0, %v2294
      %v2296 = vpop.f32.mrb[0].mxu0
      %2297 = vmatprep.mubr.f32.mxu0 0.0
      %2298 = vmatmul.mubr.f32.gmra.mrb[0].mxu0 %v2090
      %v2299 = vpop.f32.mrb[0].mxu0
      %v2300 = vadd.f32 0.0, %v2299
      %v2301 = vpop.f32.mrb[0].mxu0
      %2302 = vmatprep.mubr.f32.mxu0 0.0
      %2303 = vmatmul.mubr.f32.gmra.mrb[0].mxu0 %v2093
      %v2304 = vpop.f32.mrb[0].mxu0
      %v2305 = vadd.f32 0.0, %v2304
      %v2306 = vpop.f32.mrb[0].mxu0
      %2307 = vmatprep.mubr.f32.mxu0 0.0
      %2308 = vmatmul.mubr.f32.gmra.mrb[0].mxu0 %v2096
      %v2309 = vpop.f32.mrb[0].mxu0
      %v2310 = vadd.f32 0.0, %v2309
      %v2311 = vpop.f32.mrb[0].mxu0
      %2312 = vmatprep.mubr.f32.mxu0 0.0
      %2313 = vmatmul.mubr.f32.gmra.mrb[0].mxu0 %v2099
      %v2314 = vpop.f32.mrb[0].mxu0
      %v2315 = vadd.f32 0.0, %v2314
      %v2316 = vpop.f32.mrb[0].mxu0
      %2317 = vmatprep.mubr.f32.mxu0 0.0
      %2318 = vmatmul.mubr.f32.gmra.mrb[0].mxu0 %v2102
      %v2319 = vpop.f32.mrb[0].mxu0
      %v2320 = vadd.f32 0.0, %v2319
      %v2321 = vpop.f32.mrb[0].mxu0
      %2322 = vmatprep.mubr.f32.mxu0 0.0
      %2323 = vmatmul.mubr.f32.gmra.mrb[0].mxu0 %v2105
      %v2324 = vpop.f32.mrb[0].mxu0
      %v2325 = vadd.f32 0.0, %v2324
      %v2326 = vpop.f32.mrb[0].mxu0
      %2327 = vmatprep.mubr.f32.mxu0 0.0
      %2328 = vmatmul.mubr.f32.gmra.mrb[0].mxu0 %v2108
      %v2329 = vpop.f32.mrb[0].mxu0
      %v2330 = vadd.f32 0.0, %v2329
      %v2331 = vpop.f32.mrb[0].mxu0
      %2332 = vmatprep.mubr.f32.mxu0 0.0
      %2333 = vmatmul.mubr.f32.gmra.mrb[0].mxu0 %v2111
      %v2334 = vpop.f32.mrb[0].mxu0
      %v2335 = vadd.f32 0.0, %v2334
      %v2336 = vpop.f32.mrb[0].mxu0
      %2337 = vmatprep.mubr.f32.mxu0 0.0
      %2338 = vmatmul.mubr.f32.gmra.mrb[0].mxu0 %v2114
      %v2339 = vpop.f32.mrb[0].mxu0
      %v2340 = vadd.f32 0.0, %v2339
      %v2341 = vpop.f32.mrb[0].mxu0
      %2342 = vmatprep.mubr.f32.mxu0 0.0
      %2343 = vmatmul.mubr.f32.gmra.mrb[0].mxu0 %v2117
      %v2344 = vpop.f32.mrb[0].mxu0
      %v2345 = vadd.f32 0.0, %v2344
      %v2346 = vpop.f32.mrb[0].mxu0
      %2347 = vdwg.mxu0
      %2348 = vst.msk [vmem:[%s262] sm:$0xff] %vm302, %v2190
      %2349 = vst.msk [vmem:[%s262 + $0x8] sm:$0xff] %vm302, %v2195
      %2350 = vst.msk [vmem:[%s262 + $0x10] sm:$0xff] %vm302, %v2200
      %2351 = vst.msk [vmem:[%s262 + $0x18] sm:$0xff] %vm302, %v2205
      %2352 = vst.msk [vmem:[%s262 + $0x20] sm:$0xff] %vm302, %v2210
      %2353 = vst.msk [vmem:[%s262 + $0x28] sm:$0xff] %vm302, %v2215
      %2354 = vst.msk [vmem:[%s262 + $0x30] sm:$0xff] %vm302, %v2220
      %2355 = vst.msk [vmem:[%s262 + $0x38] sm:$0xff] %vm302, %v2225
      %2356 = vst.msk [vmem:[%s262 + $0x40] sm:$0xff] %vm302, %v2230
      %2357 = vst.msk [vmem:[%s262 + $0x48] sm:$0xff] %vm302, %v2235
      %2358 = vst.msk [vmem:[%s262 + $0x50] sm:$0xff] %vm302, %v2240
      %2359 = vst.msk [vmem:[%s262 + $0x58] sm:$0xff] %vm302, %v2245
      %2360 = vst.msk [vmem:[%s262 + $0x60] sm:$0xff] %vm302, %v2250
      %2361 = vst.msk [vmem:[%s262 + $0x68] sm:$0xff] %vm302, %v2255
      %2362 = vst.msk [vmem:[%s262 + $0x70] sm:$0xff] %vm302, %v2260
      %2363 = vst.msk [vmem:[%s262 + $0x78] sm:$0xff] %vm302, %v2265
      %2364 = vst.msk [vmem:[%s262 + $0x80] sm:$0xff] %vm302, %v2270
      %2365 = vst.msk [vmem:[%s262 + $0x88] sm:$0xff] %vm302, %v2275
      %2366 = vst.msk [vmem:[%s262 + $0x90] sm:$0xff] %vm302, %v2280
      %2367 = vst.msk [vmem:[%s262 + $0x98] sm:$0xff] %vm302, %v2285
      %2368 = vst.msk [vmem:[%s262 + $0xa0] sm:$0xff] %vm302, %v2290
      %2369 = vst.msk [vmem:[%s262 + $0xa8] sm:$0xff] %vm302, %v2295
      %2370 = vst.msk [vmem:[%s262 + $0xb0] sm:$0xff] %vm302, %v2300
      %2371 = vst.msk [vmem:[%s262 + $0xb8] sm:$0xff] %vm302, %v2305
      %2372 = vst.msk [vmem:[%s262 + $0xc0] sm:$0xff] %vm302, %v2310
      %2373 = vst.msk [vmem:[%s262 + $0xc8] sm:$0xff] %vm302, %v2315
      %2374 = vst.msk [vmem:[%s262 + $0xd0] sm:$0xff] %vm302, %v2320
      %2375 = vst.msk [vmem:[%s262 + $0xd8] sm:$0xff] %vm302, %v2325
      %2376 = vst.msk [vmem:[%s262 + $0xe0] sm:$0xff] %vm302, %v2330
      %2377 = vst.msk [vmem:[%s262 + $0xe8] sm:$0xff] %vm302, %v2335
      %2378 = vst.msk [vmem:[%s262 + $0xf0] sm:$0xff] %vm302, %v2340
      %2379 = vst.msk [vmem:[%s262 + $0xf8] sm:$0xff] %vm302, %v2345
      %v2380 = vsel %vm302, %v2190, 0.0
      %v2381 = vsel %vm302, %v2195, 0.0
      %v2382 = vadd.f32 %v2380, %v2381
      %v2383 = vsel %vm302, %v2200, 0.0
      %v2384 = vadd.f32 %v2382, %v2383
      %v2385 = vsel %vm302, %v2205, 0.0
      %v2386 = vadd.f32 %v2384, %v2385
      %v2387 = vsel %vm302, %v2210, 0.0
      %v2388 = vadd.f32 %v2386, %v2387
      %v2389 = vsel %vm302, %v2215, 0.0
      %v2390 = vadd.f32 %v2388, %v2389
      %v2391 = vsel %vm302, %v2220, 0.0
      %v2392 = vadd.f32 %v2390, %v2391
      %v2393 = vsel %vm302, %v2225, 0.0
      %v2394 = vadd.f32 %v2392, %v2393
      %v2395 = vsel %vm302, %v2230, 0.0
      %v2396 = vadd.f32 %v2394, %v2395
      %v2397 = vsel %vm302, %v2235, 0.0
      %v2398 = vadd.f32 %v2396, %v2397
      %v2399 = vsel %vm302, %v2240, 0.0
      %v2400 = vadd.f32 %v2398, %v2399
      %v2401 = vsel %vm302, %v2245, 0.0
      %v2402 = vadd.f32 %v2400, %v2401
      %v2403 = vsel %vm302, %v2250, 0.0
      %v2404 = vadd.f32 %v2402, %v2403
      %v2405 = vsel %vm302, %v2255, 0.0
      %v2406 = vadd.f32 %v2404, %v2405
      %v2407 = vsel %vm302, %v2260, 0.0
      %v2408 = vadd.f32 %v2406, %v2407
      %v2409 = vsel %vm302, %v2265, 0.0
      %v2410 = vadd.f32 %v2408, %v2409
      %v2411 = vsel %vm302, %v2270, 0.0
      %v2412 = vadd.f32 %v2410, %v2411
      %v2413 = vsel %vm302, %v2275, 0.0
      %v2414 = vadd.f32 %v2412, %v2413
      %v2415 = vsel %vm302, %v2280, 0.0
      %v2416 = vadd.f32 %v2414, %v2415
      %v2417 = vsel %vm302, %v2285, 0.0
      %v2418 = vadd.f32 %v2416, %v2417
      %v2419 = vsel %vm302, %v2290, 0.0
      %v2420 = vadd.f32 %v2418, %v2419
      %v2421 = vsel %vm302, %v2295, 0.0
      %v2422 = vadd.f32 %v2420, %v2421
      %v2423 = vsel %vm302, %v2300, 0.0
      %v2424 = vadd.f32 %v2422, %v2423
      %v2425 = vsel %vm302, %v2305, 0.0
      %v2426 = vadd.f32 %v2424, %v2425
      %v2427 = vsel %vm302, %v2310, 0.0
      %v2428 = vadd.f32 %v2426, %v2427
      %v2429 = vsel %vm302, %v2315, 0.0
      %v2430 = vadd.f32 %v2428, %v2429
      %v2431 = vsel %vm302, %v2320, 0.0
      %v2432 = vadd.f32 %v2430, %v2431
      %v2433 = vsel %vm302, %v2325, 0.0
      %v2434 = vadd.f32 %v2432, %v2433
      %v2435 = vsel %vm302, %v2330, 0.0
      %v2436 = vadd.f32 %v2434, %v2435
      %v2437 = vsel %vm302, %v2335, 0.0
      %v2438 = vadd.f32 %v2436, %v2437
      %v2439 = vsel %vm302, %v2340, 0.0
      %v2440 = vadd.f32 %v2438, %v2439
      %v2441 = vsel %vm302, %v2345, 0.0
      %v2442 = vadd.f32 %v2440, %v2441
      %v2443 = vrot.slane %v2442, 4
      %v2444 = vadd.f32 %v2442, %v2443
      %v2445 = vrot.slane %v2444, 2
      %v2446 = vadd.f32 %v2444, %v2445
      %v2447 = vrot.slane %v2446, 1
      %v2448 = vadd.f32 %v2446, %v2447
      %v2449 = vrcp.pop 256.0
      %v2450 = vmul.f32 %v2448, %v2449
      %v2451 = vsub.f32 %v2190, %v2450
      %v2452 = vsub.f32 %v2195, %v2450
      %v2453 = vsub.f32 %v2200, %v2450
      %v2454 = vsub.f32 %v2205, %v2450
      %v2455 = vsub.f32 %v2210, %v2450
      %v2456 = vsub.f32 %v2215, %v2450
      %v2457 = vsub.f32 %v2220, %v2450
      %v2458 = vsub.f32 %v2225, %v2450
      %v2459 = vsub.f32 %v2230, %v2450
      %v2460 = vsub.f32 %v2235, %v2450
      %v2461 = vsub.f32 %v2240, %v2450
      %v2462 = vsub.f32 %v2245, %v2450
      %v2463 = vsub.f32 %v2250, %v2450
      %v2464 = vsub.f32 %v2255, %v2450
      %v2465 = vsub.f32 %v2260, %v2450
      %v2466 = vsub.f32 %v2265, %v2450
      %v2467 = vsub.f32 %v2270, %v2450
      %v2468 = vsub.f32 %v2275, %v2450
      %v2469 = vsub.f32 %v2280, %v2450
      %v2470 = vsub.f32 %v2285, %v2450
      %v2471 = vsub.f32 %v2290, %v2450
      %v2472 = vsub.f32 %v2295, %v2450
      %v2473 = vsub.f32 %v2300, %v2450
      %v2474 = vsub.f32 %v2305, %v2450
      %v2475 = vsub.f32 %v2310, %v2450
      %v2476 = vsub.f32 %v2315, %v2450
      %v2477 = vsub.f32 %v2320, %v2450
      %v2478 = vsub.f32 %v2325, %v2450
      %v2479 = vsub.f32 %v2330, %v2450
      %v2480 = vsub.f32 %v2335, %v2450
      %v2481 = vsub.f32 %v2340, %v2450
      %v2482 = vsub.f32 %v2345, %v2450
      %2483 = vst.msk [vmem:[%s265] sm:$0x1] %vm343, %v2450
      %v2484 = vmul.f32 %v2451, %v2451
      %v2485 = vmul.f32 %v2452, %v2452
      %v2486 = vmul.f32 %v2453, %v2453
      %v2487 = vmul.f32 %v2454, %v2454
      %v2488 = vmul.f32 %v2455, %v2455
      %v2489 = vmul.f32 %v2456, %v2456
      %v2490 = vmul.f32 %v2457, %v2457
      %v2491 = vmul.f32 %v2458, %v2458
      %v2492 = vmul.f32 %v2459, %v2459
      %v2493 = vmul.f32 %v2460, %v2460
      %v2494 = vmul.f32 %v2461, %v2461
      %v2495 = vmul.f32 %v2462, %v2462
      %v2496 = vmul.f32 %v2463, %v2463
      %v2497 = vmul.f32 %v2464, %v2464
      %v2498 = vmul.f32 %v2465, %v2465
      %v2499 = vmul.f32 %v2466, %v2466
      %v2500 = vmul.f32 %v2467, %v2467
      %v2501 = vmul.f32 %v2468, %v2468
      %v2502 = vmul.f32 %v2469, %v2469
      %v2503 = vmul.f32 %v2470, %v2470
      %v2504 = vmul.f32 %v2471, %v2471
      %v2505 = vmul.f32 %v2472, %v2472
      %v2506 = vmul.f32 %v2473, %v2473
      %v2507 = vmul.f32 %v2474, %v2474
      %v2508 = vmul.f32 %v2475, %v2475
      %v2509 = vmul.f32 %v2476, %v2476
      %v2510 = vmul.f32 %v2477, %v2477
      %v2511 = vmul.f32 %v2478, %v2478
      %v2512 = vmul.f32 %v2479, %v2479
      %v2513 = vmul.f32 %v2480, %v2480
      %v2514 = vmul.f32 %v2481, %v2481
      %v2515 = vmul.f32 %v2482, %v2482
      %v2516 = vsel %vm302, %v2484, 0.0
      %v2517 = vsel %vm302, %v2485, 0.0
      %v2518 = vadd.f32 %v2516, %v2517
      %v2519 = vsel %vm302, %v2486, 0.0
      %v2520 = vadd.f32 %v2518, %v2519
      %v2521 = vsel %vm302, %v2487, 0.0
      %v2522 = vadd.f32 %v2520, %v2521
      %v2523 = vsel %vm302, %v2488, 0.0
      %v2524 = vadd.f32 %v2522, %v2523
      %v2525 = vsel %vm302, %v2489, 0.0
      %v2526 = vadd.f32 %v2524, %v2525
      %v2527 = vsel %vm302, %v2490, 0.0
      %v2528 = vadd.f32 %v2526, %v2527
      %v2529 = vsel %vm302, %v2491, 0.0
      %v2530 = vadd.f32 %v2528, %v2529
      %v2531 = vsel %vm302, %v2492, 0.0
      %v2532 = vadd.f32 %v2530, %v2531
      %v2533 = vsel %vm302, %v2493, 0.0
      %v2534 = vadd.f32 %v2532, %v2533
      %v2535 = vsel %vm302, %v2494, 0.0
      %v2536 = vadd.f32 %v2534, %v2535
      %v2537 = vsel %vm302, %v2495, 0.0
      %v2538 = vadd.f32 %v2536, %v2537
      %v2539 = vsel %vm302, %v2496, 0.0
      %v2540 = vadd.f32 %v2538, %v2539
      %v2541 = vsel %vm302, %v2497, 0.0
      %v2542 = vadd.f32 %v2540, %v2541
      %v2543 = vsel %vm302, %v2498, 0.0
      %v2544 = vadd.f32 %v2542, %v2543
      %v2545 = vsel %vm302, %v2499, 0.0
      %v2546 = vadd.f32 %v2544, %v2545
      %v2547 = vsel %vm302, %v2500, 0.0
      %v2548 = vadd.f32 %v2546, %v2547
      %v2549 = vsel %vm302, %v2501, 0.0
      %v2550 = vadd.f32 %v2548, %v2549
      %v2551 = vsel %vm302, %v2502, 0.0
      %v2552 = vadd.f32 %v2550, %v2551
      %v2553 = vsel %vm302, %v2503, 0.0
      %v2554 = vadd.f32 %v2552, %v2553
      %v2555 = vsel %vm302, %v2504, 0.0
      %v2556 = vadd.f32 %v2554, %v2555
      %v2557 = vsel %vm302, %v2505, 0.0
      %v2558 = vadd.f32 %v2556, %v2557
      %v2559 = vsel %vm302, %v2506, 0.0
      %v2560 = vadd.f32 %v2558, %v2559
      %v2561 = vsel %vm302, %v2507, 0.0
      %v2562 = vadd.f32 %v2560, %v2561
      %v2563 = vsel %vm302, %v2508, 0.0
      %v2564 = vadd.f32 %v2562, %v2563
      %v2565 = vsel %vm302, %v2509, 0.0
      %v2566 = vadd.f32 %v2564, %v2565
      %v2567 = vsel %vm302, %v2510, 0.0
      %v2568 = vadd.f32 %v2566, %v2567
      %v2569 = vsel %vm302, %v2511, 0.0
      %v2570 = vadd.f32 %v2568, %v2569
      %v2571 = vsel %vm302, %v2512, 0.0
      %v2572 = vadd.f32 %v2570, %v2571
      %v2573 = vsel %vm302, %v2513, 0.0
      %v2574 = vadd.f32 %v2572, %v2573
      %v2575 = vsel %vm302, %v2514, 0.0
      %v2576 = vadd.f32 %v2574, %v2575
      %v2577 = vsel %vm302, %v2515, 0.0
      %v2578 = vadd.f32 %v2576, %v2577
      %v2579 = vrot.slane %v2578, 4
      %v2580 = vadd.f32 %v2578, %v2579
      %v2581 = vrot.slane %v2580, 2
      %v2582 = vadd.f32 %v2580, %v2581
      %v2583 = vrot.slane %v2582, 1
      %v2584 = vadd.f32 %v2582, %v2583
      %2585 = vst.msk [vmem:[%s268] sm:$0x1] %vm343, %v2584
      %p2586 = scmp.lt.s32.totalorder %s18, 1
      %s2587 = scalar_select %p2586, %s18, 1
      %s2588 = smul.addr %s2587, 32
      %s2589 = smul.addr %s2588, 8
      %s2590 = scalar_lea.vmem %s4, %s2589
      %p2591 = scmp.lt.s32.totalorder %s18, 1
      %s2592 = scalar_select %p2591, %s18, 1
      %s2593 = scalar_lea.vmem %s5, %s2592
      %p2594 = scmp.lt.s32.totalorder %s18, 1
      %s2595 = scalar_select %p2594, %s18, 1
      %s2596 = scalar_lea.vmem %s6, %s2595
      // Predicated region
      $region37: #{basic_block_forward.3} parent=35 // pred_check
        %p2597 = pneg %p125
      $region38: #{basic_block_forward.3} parent=35 // pred_check_branch
        %2599 = sbr.rel (%p2597) target = $region40
      $region39: #{basic_block_forward.3} parent=35 // pred_region
        _
      $region40: #{basic_block_forward.3} parent=35 // pred_fallthru
        _
      // Predicated region
      $region41: #{basic_block_forward.3} parent=35 // pred_check
        %p2600 = pneg %p151
      $region42: #{basic_block_forward.3} parent=35 // pred_check_branch
        %2602 = sbr.rel (%p2600) target = $region44
      $region43: #{basic_block_forward.3} parent=35 // pred_region
        _
      $region44: #{basic_block_forward.3} parent=35 // pred_fallthru
        _
      // Predicated region
      $region45: #{basic_block_forward.3} parent=35 // pred_check
        %p2603 = pneg %p177
      $region46: #{basic_block_forward.3} parent=35 // pred_check_branch
        %2605 = sbr.rel (%p2603) target = $region48
      $region47: #{basic_block_forward.3} parent=35 // pred_region
        _
      $region48: #{basic_block_forward.3} parent=35 // pred_fallthru
        _
    $region36: #{basic_block_forward.3} parent=5 // pred_fallthru
      _
    %p2606 = scmp.le.s32.totalorder 2, %s13
    // Predicated region
    $region49: #{basic_block_forward.3} parent=5 // pred_check
      %p2607 = pneg %p2606
    $region50: #{basic_block_forward.3} parent=5 // pred_check_branch
      %2609 = sbr.rel (%p2607) target = $region52
    $region51: #{basic_block_forward.3} parent=5 // pred_region
      %s2610 = ssub.s32 %s13, 2
      // Predicated region
      $region53: #{basic_block_forward.3} parent=51 // pred_check
        %p2611 = pneg %p131
      $region54: #{basic_block_forward.3} parent=51 // pred_check_branch
        %2613 = sbr.rel (%p2611) target = $region56
      $region55: #{basic_block_forward.3} parent=51 // pred_region
        %p2614 = scmp.lt.s32.totalorder %s19, 1
        %s2615 = scalar_select %p2614, %s19, 1
        %s2616 = smul.addr %s2615, 32
        %s2617 = smul.addr %s2616, 8
        %s2618 = scalar_lea.vmem %s4, %s2617
      $region56: #{basic_block_forward.3} parent=51 // pred_fallthru
        _
      // Predicated region
      $region57: #{basic_block_forward.3} parent=51 // pred_check
        %p2619 = pneg %p157
      $region58: #{basic_block_forward.3} parent=51 // pred_check_branch
        %2621 = sbr.rel (%p2619) target = $region60
      $region59: #{basic_block_forward.3} parent=51 // pred_region
        %p2622 = scmp.lt.s32.totalorder %s19, 1
        %s2623 = scalar_select %p2622, %s19, 1
        %s2624 = scalar_lea.vmem %s5, %s2623
      $region60: #{basic_block_forward.3} parent=51 // pred_fallthru
        _
      // Predicated region
      $region61: #{basic_block_forward.3} parent=51 // pred_check
        %p2625 = pneg %p183
      $region62: #{basic_block_forward.3} parent=51 // pred_check_branch
        %2627 = sbr.rel (%p2625) target = $region64
      $region63: #{basic_block_forward.3} parent=51 // pred_region
        %p2628 = scmp.lt.s32.totalorder %s19, 1
        %s2629 = scalar_select %p2628, %s19, 1
        %s2630 = scalar_lea.vmem %s6, %s2629
      $region64: #{basic_block_forward.3} parent=51 // pred_fallthru
        _
    $region52: #{basic_block_forward.3} parent=5 // pred_fallthru
      _
  $region6: #{basic_block_forward.3} parent=0 // loop_footer
    %s17 = sadd.s32 1, %s13
  $region7: #{basic_block_forward.3} parent=0 // loop_footer_branch
    %12 = sbr.rel target = $region3
  $region8: #{basic_block_forward.3} parent=0 // loop_exit
    _

// kernel: basic_block_forward.4
$region0: #{basic_block_forward.4}
  #allocation0 [shape = 'u32[]', space=smem, size = 0x4, offset = 0x4, fixed_abs, tag = 'smem constant byte address 0x4 - core index']
  #allocation1 [shape = 'u32[144,128]{1,0:T(1,128)}', space=vmem, size = 0x12000, scoped, tag = 'internal scratch']
  #allocation2 [shape = 'f32[1,18,18,4]{3,2,1,0:T(8,128)}', space=vmem, size = 0x36000, scoped, tag = 'scratch operand']
  #allocation3 [shape = 'f32[1,16,16,36]{3,2,1,0:T(8,128)}', space=vmem, size = 0x20000, scoped, tag = 'scratch operand']
  %s0 = inlined_call_operand.vmem [shape: f32[2,16,16,4], index: 0, kind: input, shape index: {}]
  %s1 = inlined_call_operand.vmem [shape: f32[36,4], index: 1, kind: input, shape index: {}]
  %s2 = inlined_call_operand.vmem [shape: f32[1,4], index: 2, kind: input, shape index: {}]
  %s3 = inlined_call_operand.vmem [shape: f32[1,4], index: 3, kind: input, shape index: {}]
  %s4 = inlined_call_operand.vmem [shape: f32[2,16,16,4], index: 4, kind: output, shape index: {0}]
  %s5 = inlined_call_operand.vmem [shape: f32[2,1,4], index: 5, kind: output, shape index: {1}]
  %s6 = inlined_call_operand.vmem [shape: f32[2,1,4], index: 6, kind: output, shape index: {2}]
  %7 = xla_tuple %s4, %s5, %s6
  %s8 = sld [smem:[#allocation0]]
  $region65: #{basic_block_forward.4} parent=0
    _
  %s10 = ssub.s32 1, %s8
  %s11 = scalar_select 0, %s10, %s8
  loop: start=0, step=1, limit=4
  $region2: #{basic_block_forward.4} parent=0 // loop_pre_header
    _
  $region3: #{basic_block_forward.4} parent=0 // loop_header
    %s13 = sphi 0, %s17
    %p14 = scmp.ge.s32.totalorder %s13, 4
    %s23 = sphi 0, %s25
    %s26 = sphi 0, %s23
    %s27 = sphi 0, %s26
    %s43 = sphi 0, %s27
    %s47 = sphi 0, %s47
    %s49 = sphi 0, %s47
    %s50 = sphi 0, %s49
    %s64 = sphi 0, %s50
    %s68 = sphi 0, %s68
    %s70 = sphi 0, %s68
    %s71 = sphi 0, %s70
    %s85 = sphi 0, %s71
    %s89 = sphi 0, %s89
    %s91 = sphi 0, %s89
    %s92 = sphi 0, %s91
    %s106 = sphi 0, %s92
    %s112 = sphi 0, %s114
    %s115 = sphi 0, %s112
    %s116 = sphi 0, %s115
    %s132 = sphi 0, %s116
    %s138 = sphi 0, %s140
    %s141 = sphi 0, %s138
    %s142 = sphi 0, %s141
    %s158 = sphi 0, %s142
    %s164 = sphi 0, %s166
    %s167 = sphi 0, %s164
    %s168 = sphi 0, %s167
    %s184 = sphi 0, %s168
  $region4: #{basic_block_forward.4} parent=0 // loop_header_branch
    %16 = sbr.rel (%p14) target = $region8
  $region5: #{basic_block_forward.4} parent=0 // loop_body
    %s18 = ssub.s32 %s13, 1
    %s19 = ssub.s32 %s13, 2
    %s20 = sadd.s32 %s13, 1
    %s21 = ssub.s32 %s13, %s20
    %p22 = scmp.eq.s32.totalorder %s21, 0
    %s24 = sadd.s32 %s23, 1
    %s25 = scalar_select %p22, %s23, %s24
    %p28 = pneg %p22
    %p29 = scmp.eq.s32.totalorder %s13, 1
    %p30 = por %p28, %p29
    %p31 = scmp.ne.s32.totalorder %s23, %s26
    %p32 = scmp.eq.s32.totalorder %s13, 0
    %p33 = por %p31, %p32
    %p34 = scmp.ne.s32.totalorder %s23, %s26
    %p35 = scmp.eq.s32.totalorder %s18, 1
    %p36 = por %p34, %p35
    %p37 = scmp.ne.s32.totalorder %s26, %s27
    %p38 = scmp.eq.s32.totalorder %s18, 0
    %p39 = por %p37, %p38
    %p40 = scmp.ne.s32.totalorder %s26, %s27
    %p41 = scmp.eq.s32.totalorder %s19, 1
    %p42 = por %p40, %p41
    %p44 = scmp.ne.s32.totalorder %s27, %s43
    %p45 = scmp.eq.s32.totalorder %s19, 0
    %p46 = por %p44, %p45
    %s48 = sadd.s32 %s47, 1
    %p51 = scmp.eq.s32.totalorder %s13, 1
    %p52 = scmp.ne.s32.totalorder %s47, %s49
    %p53 = scmp.eq.s32.totalorder %s13, 0
    %p54 = por %p52, %p53
    %p55 = scmp.ne.s32.totalorder %s47, %s49
    %p56 = scmp.eq.s32.totalorder %s18, 1
    %p57 = por %p55, %p56
    %p58 = scmp.ne.s32.totalorder %s49, %s50
    %p59 = scmp.eq.s32.totalorder %s18, 0
    %p60 = por %p58, %p59
    %p61 = scmp.ne.s32.totalorder %s49, %s50
    %p62 = scmp.eq.s32.totalorder %s19, 1
    %p63 = por %p61, %p62
    %p65 = scmp.ne.s32.totalorder %s50, %s64
    %p66 = scmp.eq.s32.totalorder %s19, 0
    %p67 = por %p65, %p66
    %s69 = sadd.s32 %s68, 1
    %p72 = scmp.eq.s32.totalorder %s13, 1
    %p73 = scmp.ne.s32.totalorder %s68, %s70
    %p74 = scmp.eq.s32.totalorder %s13, 0
    %p75 = por %p73, %p74
    %p76 = scmp.ne.s32.totalorder %s68, %s70
    %p77 = scmp.eq.s32.totalorder %s18, 1
    %p78 = por %p76, %p77
    %p79 = scmp.ne.s32.totalorder %s70, %s71
    %p80 = scmp.eq.s32.totalorder %s18, 0
    %p81 = por %p79, %p80
    %p82 = scmp.ne.s32.totalorder %s70, %s71
    %p83 = scmp.eq.s32.totalorder %s19, 1
    %p84 = por %p82, %p83
    %p86 = scmp.ne.s32.totalorder %s71, %s85
    %p87 = scmp.eq.s32.totalorder %s19, 0
    %p88 = por %p86, %p87
    %s90 = sadd.s32 %s89, 1
    %p93 = scmp.eq.s32.totalorder %s13, 1
    %p94 = scmp.ne.s32.totalorder %s89, %s91
    %p95 = scmp.eq.s32.totalorder %s13, 0
    %p96 = por %p94, %p95
    %p97 = scmp.ne.s32.totalorder %s89, %s91
    %p98 = scmp.eq.s32.totalorder %s18, 1
    %p99 = por %p97, %p98
    %p100 = scmp.ne.s32.totalorder %s91, %s92
    %p101 = scmp.eq.s32.totalorder %s18, 0
    %p102 = por %p100, %p101
    %p103 = scmp.ne.s32.totalorder %s91, %s92
    %p104 = scmp.eq.s32.totalorder %s19, 1
    %p105 = por %p103, %p104
    %p107 = scmp.ne.s32.totalorder %s92, %s106
    %p108 = scmp.eq.s32.totalorder %s19, 0
    %p109 = por %p107, %p108
    %s110 = ssub.s32 %s13, %s20
    %p111 = scmp.eq.s32.totalorder %s110, 0
    %s113 = sadd.s32 %s112, 1
    %s114 = scalar_select %p111, %s112, %s113
    %p117 = pneg %p111
    %p118 = scmp.eq.s32.totalorder %s13, 1
    %p119 = por %p117, %p118
    %p120 = scmp.ne.s32.totalorder %s112, %s115
    %p121 = scmp.eq.s32.totalorder %s13, 0
    %p122 = por %p120, %p121
    %p123 = scmp.ne.s32.totalorder %s112, %s115
    %p124 = scmp.eq.s32.totalorder %s18, 1
    %p125 = por %p123, %p124
    %p126 = scmp.ne.s32.totalorder %s115, %s116
    %p127 = scmp.eq.s32.totalorder %s18, 0
    %p128 = por %p126, %p127
    %p129 = scmp.ne.s32.totalorder %s115, %s116
    %p130 = scmp.eq.s32.totalorder %s19, 1
    %p131 = por %p129, %p130
    %p133 = scmp.ne.s32.totalorder %s116, %s132
    %p134 = scmp.eq.s32.totalorder %s19, 0
    %p135 = por %p133, %p134
    %s136 = ssub.s32 %s13, %s20
    %p137 = scmp.eq.s32.totalorder %s136, 0
    %s139 = sadd.s32 %s138, 1
    %s140 = scalar_select %p137, %s138, %s139
    %p143 = pneg %p137
    %p144 = scmp.eq.s32.totalorder %s13, 1
    %p145 = por %p143, %p144
    %p146 = scmp.ne.s32.totalorder %s138, %s141
    %p147 = scmp.eq.s32.totalorder %s13, 0
    %p148 = por %p146, %p147
    %p149 = scmp.ne.s32.totalorder %s138, %s141
    %p150 = scmp.eq.s32.totalorder %s18, 1
    %p151 = por %p149, %p150
    %p152 = scmp.ne.s32.totalorder %s141, %s142
    %p153 = scmp.eq.s32.totalorder %s18, 0
    %p154 = por %p152, %p153
    %p155 = scmp.ne.s32.totalorder %s141, %s142
    %p156 = scmp.eq.s32.totalorder %s19, 1
    %p157 = por %p155, %p156
    %p159 = scmp.ne.s32.totalorder %s142, %s158
    %p160 = scmp.eq.s32.totalorder %s19, 0
    %p161 = por %p159, %p160
    %s162 = ssub.s32 %s13, %s20
    %p163 = scmp.eq.s32.totalorder %s162, 0
    %s165 = sadd.s32 %s164, 1
    %s166 = scalar_select %p163, %s164, %s165
    %p169 = pneg %p163
    %p170 = scmp.eq.s32.totalorder %s13, 1
    %p171 = por %p169, %p170
    %p172 = scmp.ne.s32.totalorder %s164, %s167
    %p173 = scmp.eq.s32.totalorder %s13, 0
    %p174 = por %p172, %p173
    %p175 = scmp.ne.s32.totalorder %s164, %s167
    %p176 = scmp.eq.s32.totalorder %s18, 1
    %p177 = por %p175, %p176
    %p178 = scmp.ne.s32.totalorder %s167, %s168
    %p179 = scmp.eq.s32.totalorder %s18, 0
    %p180 = por %p178, %p179
    %p181 = scmp.ne.s32.totalorder %s167, %s168
    %p182 = scmp.eq.s32.totalorder %s19, 1
    %p183 = por %p181, %p182
    %p185 = scmp.ne.s32.totalorder %s168, %s184
    %p186 = scmp.eq.s32.totalorder %s19, 0
    %p187 = por %p185, %p186
    %p188 = scmp.le.s32.totalorder 1, %s13
    %p189 = scmp.lt.s32.totalorder %s13, 3
    %p190 = pnand %p188, %p189
    %p191 = pneg %p190
    // Predicated region
    $region9: #{basic_block_forward.4} parent=5 // pred_check
      _
    $region10: #{basic_block_forward.4} parent=5 // pred_check_branch
      %193 = sbr.rel (%p190) target = $region12
    $region11: #{basic_block_forward.4} parent=5 // pred_region
      %s194 = ssub.s32 %s13, 1
      // Predicated region
      $region13: #{basic_block_forward.4} parent=11 // pred_check
        %p195 = pneg %p60
      $region14: #{basic_block_forward.4} parent=11 // pred_check_branch
        %197 = sbr.rel (%p195) target = $region16
      $region15: #{basic_block_forward.4} parent=11 // pred_region
        _
      $region16: #{basic_block_forward.4} parent=11 // pred_fallthru
        _
      // Predicated region
      $region17: #{basic_block_forward.4} parent=11 // pred_check
        %p198 = pneg %p81
      $region18: #{basic_block_forward.4} parent=11 // pred_check_branch
        %200 = sbr.rel (%p198) target = $region20
      $region19: #{basic_block_forward.4} parent=11 // pred_region
        _
      $region20: #{basic_block_forward.4} parent=11 // pred_fallthru
        _
      // Predicated region
      $region21: #{basic_block_forward.4} parent=11 // pred_check
        %p201 = pneg %p102
      $region22: #{basic_block_forward.4} parent=11 // pred_check_branch
        %203 = sbr.rel (%p201) target = $region24
      $region23: #{basic_block_forward.4} parent=11 // pred_region
        _
      $region24: #{basic_block_forward.4} parent=11 // pred_fallthru
        _
    $region12: #{basic_block_forward.4} parent=5 // pred_fallthru
      _
    %p204 = scmp.lt.s32.totalorder %s13, 2
    // Predicated region
    $region25: #{basic_block_forward.4} parent=5 // pred_check
      %p205 = pneg %p204
    $region26: #{basic_block_forward.4} parent=5 // pred_check_branch
      %207 = sbr.rel (%p205) target = $region28
    $region27: #{basic_block_forward.4} parent=5 // pred_region
      // Predicated region
      $region29: #{basic_block_forward.4} parent=27 // pred_check
        %p208 = pneg %p33
      $region30: #{basic_block_forward.4} parent=27 // pred_check_branch
        %210 = sbr.rel (%p208) target = $region32
      $region31: #{basic_block_forward.4} parent=27 // pred_region
        %p211 = scmp.lt.s32.totalorder %s13, 1
        %s212 = scalar_select %p211, %s13, 1
        %s213 = smul.addr %s212, 32
        %s214 = smul.addr %s213, 8
        %s215 = scalar_lea.vmem %s0, %s214
      $region32: #{basic_block_forward.4} parent=27 // pred_fallthru
        _
    $region28: #{basic_block_forward.4} parent=5 // pred_fallthru
      _
    %p216 = scmp.le.s32.totalorder 1, %s13
    %p217 = scmp.lt.s32.totalorder %s13, 3
    %p218 = pnand %p216, %p217
    %p219 = pneg %p218
    // Predicated region
    $region33: #{basic_block_forward.4} parent=5 // pred_check
      _
    $region34: #{basic_block_forward.4} parent=5 // pred_check_branch
      %221 = sbr.rel (%p218) target = $region36
    $region35: #{basic_block_forward.4} parent=5 // pred_region
      %s222 = ssub.s32 %s13, 1
      %p223 = scmp.lt.s32.totalorder %s18, 1
      %s224 = scalar_select %p223, %s18, 1
      %s225 = smul.addr %s224, 32
      %s226 = smul.addr %s225, 8
      %s227 = scalar_lea.vmem %s0, %s226
      %p228 = pneg %p39
      %p229 = pneg %p36
      %p230 = pneg %p60
      %p231 = pneg %p57
      %p232 = pneg %p81
      %p233 = pneg %p78
      %p234 = pneg %p102
      %p235 = pneg %p99
      %p236 = pneg %p128
      %p237 = pneg %p125
      %p238 = scmp.lt.s32.totalorder %s18, 1
      %s239 = scalar_select %p238, %s18, 1
      %s240 = smul.addr %s239, 32
      %s241 = smul.addr %s240, 8
      %s242 = scalar_lea.vmem %s4, %s241
      %p243 = pneg %p154
      %p244 = pneg %p151
      %p245 = scmp.lt.s32.totalorder %s18, 1
      %s246 = scalar_select %p245, %s18, 1
      %s247 = scalar_lea.vmem %s5, %s246
      %p248 = pneg %p180
      %p249 = pneg %p177
      %p250 = scmp.lt.s32.totalorder %s18, 1
      %s251 = scalar_select %p250, %s18, 1
      %s252 = scalar_lea.vmem %s6, %s251
      %p253 = scmp.lt.s32.totalorder %s18, 1
      %s254 = scalar_select %p253, %s18, 1
      %s255 = smul.addr %s254, 32
      %s256 = smul.addr %s255, 8
      %s257 = scalar_lea.vmem %s0, %s256
      %p258 = scmp.lt.s32.totalorder %s18, 1
      %s259 = scalar_select %p258, %s18, 1
      %s260 = smul.addr %s259, 32
      %s261 = smul.addr %s260, 8
      %s262 = scalar_lea.vmem %s4, %s261
      %p263 = scmp.lt.s32.totalorder %s18, 1
      %s264 = scalar_select %p263, %s18, 1
      %s265 = scalar_lea.vmem %s5, %s264
      %p266 = scmp.lt.s32.totalorder %s18, 1
      %s267 = scalar_select %p266, %s18, 1
      %s268 = scalar_lea.vmem %s6, %s267
      %v269 = vld [vmem:[%s257] sm:$0xff]
      %v270 = vld [vmem:[%s257 + $0x8] sm:$0xff]
      %v271 = vld [vmem:[%s257 + $0x10] sm:$0xff]
      %v272 = vld [vmem:[%s257 + $0x18] sm:$0xff]
      %v273 = vld [vmem:[%s257 + $0x20] sm:$0xff]
      %v274 = vld [vmem:[%s257 + $0x28] sm:$0xff]
      %v275 = vld [vmem:[%s257 + $0x30] sm:$0xff]
      %v276 = vld [vmem:[%s257 + $0x38] sm:$0xff]
      %v277 = vld [vmem:[%s257 + $0x40] sm:$0xff]
      %v278 = vld [vmem:[%s257 + $0x48] sm:$0xff]
      %v279 = vld [vmem:[%s257 + $0x50] sm:$0xff]
      %v280 = vld [vmem:[%s257 + $0x58] sm:$0xff]
      %v281 = vld [vmem:[%s257 + $0x60] sm:$0xff]
      %v282 = vld [vmem:[%s257 + $0x68] sm:$0xff]
      %v283 = vld [vmem:[%s257 + $0x70] sm:$0xff]
      %v284 = vld [vmem:[%s257 + $0x78] sm:$0xff]
      %v285 = vld [vmem:[%s257 + $0x80] sm:$0xff]
      %v286 = vld [vmem:[%s257 + $0x88] sm:$0xff]
      %v287 = vld [vmem:[%s257 + $0x90] sm:$0xff]
      %v288 = vld [vmem:[%s257 + $0x98] sm:$0xff]
      %v289 = vld [vmem:[%s257 + $0xa0] sm:$0xff]
      %v290 = vld [vmem:[%s257 + $0xa8] sm:$0xff]
      %v291 = vld [vmem:[%s257 + $0xb0] sm:$0xff]
      %v292 = vld [vmem:[%s257 + $0xb8] sm:$0xff]
      %v293 = vld [vmem:[%s257 + $0xc0] sm:$0xff]
      %v294 = vld [vmem:[%s257 + $0xc8] sm:$0xff]
      %v295 = vld [vmem:[%s257 + $0xd0] sm:$0xff]
      %v296 = vld [vmem:[%s257 + $0xd8] sm:$0xff]
      %v297 = vld [vmem:[%s257 + $0xe0] sm:$0xff]
      %v298 = vld [vmem:[%s257 + $0xe8] sm:$0xff]
      %v299 = vld [vmem:[%s257 + $0xf0] sm:$0xff]
      %v300 = vld [vmem:[%s257 + $0xf8] sm:$0xff]
      %v301 = vld [vmem:[%s2] sm:$0x1]
      %v303 = vlaneseq
      %v304 = vshrl.u32 %v303, 7
      %v305 = vsub.s32 0, %v304
      %v306 = vrot.slane %v301, %v305
      %v308 = vmul.f32 %v269, %v306
      %v309 = vmul.f32 %v270, %v306
      %v310 = vmul.f32 %v271, %v306
      %v311 = vmul.f32 %v272, %v306
      %v312 = vmul.f32 %v273, %v306
      %v313 = vmul.f32 %v274, %v306
      %v314 = vmul.f32 %v275, %v306
      %v315 = vmul.f32 %v276, %v306
      %v316 = vmul.f32 %v277, %v306
      %v317 = vmul.f32 %v278, %v306
      %v318 = vmul.f32 %v279, %v306
      %v319 = vmul.f32 %v280, %v306
      %v320 = vmul.f32 %v281, %v306
      %v321 = vmul.f32 %v282, %v306
      %v322 = vmul.f32 %v283, %v306
      %v323 = vmul.f32 %v284, %v306
      %v324 = vmul.f32 %v285, %v306
      %v325 = vmul.f32 %v286, %v306
      %v326 = vmul.f32 %v287, %v306
      %v327 = vmul.f32 %v288, %v306
      %v328 = vmul.f32 %v289, %v306
      %v329 = vmul.f32 %v290, %v306
      %v330 = vmul.f32 %v291, %v306
      %v331 = vmul.f32 %v292, %v306
      %v332 = vmul.f32 %v293, %v306
      %v333 = vmul.f32 %v294, %v306
      %v334 = vmul.f32 %v295, %v306
      %v335 = vmul.f32 %v296, %v306
      %v336 = vmul.f32 %v297, %v306
      %v337 = vmul.f32 %v298, %v306
      %v338 = vmul.f32 %v299, %v306
      %v339 = vmul.f32 %v300, %v306
      %v340 = vld [vmem:[%s3] sm:$0x1]
      %v342 = vlaneseq
      %v343 = vshrl.u32 %v342, 7
      %v344 = vsub.s32 0, %v343
      %v345 = vrot.slane %v340, %v344
      %v347 = vadd.f32 %v308, %v345
      %v348 = vadd.f32 %v309, %v345
      %v349 = vadd.f32 %v310, %v345
      %v350 = vadd.f32 %v311, %v345
      %v351 = vadd.f32 %v312, %v345
      %v352 = vadd.f32 %v313, %v345
      %v353 = vadd.f32 %v314, %v345
      %v354 = vadd.f32 %v315, %v345
      %v355 = vadd.f32 %v316, %v345
      %v356 = vadd.f32 %v317, %v345
      %v357 = vadd.f32 %v318, %v345
      %v358 = vadd.f32 %v319, %v345
      %v359 = vadd.f32 %v320, %v345
      %v360 = vadd.f32 %v321, %v345
      %v361 = vadd.f32 %v322, %v345
      %v362 = vadd.f32 %v323, %v345
      %v363 = vadd.f32 %v324, %v345
      %v364 = vadd.f32 %v325, %v345
      %v365 = vadd.f32 %v326, %v345
      %v366 = vadd.f32 %v327, %v345
      %v367 = vadd.f32 %v328, %v345
      %v368 = vadd.f32 %v329, %v345
      %v369 = vadd.f32 %v330, %v345
      %v370 = vadd.f32 %v331, %v345
      %v371 = vadd.f32 %v332, %v345
      %v372 = vadd.f32 %v333, %v345
      %v373 = vadd.f32 %v334, %v345
      %v374 = vadd.f32 %v335, %v345
      %v375 = vadd.f32 %v336, %v345
      %v376 = vadd.f32 %v337, %v345
      %v377 = vadd.f32 %v338, %v345
      %v378 = vadd.f32 %v339, %v345
      %v379 = vmax.f32 %v347, 0.0
      %v380 = vmax.f32 %v348, 0.0
      %v381 = vmax.f32 %v349, 0.0
      %v382 = vmax.f32 %v350, 0.0
      %v383 = vmax.f32 %v351, 0.0
      %v384 = vmax.f32 %v352, 0.0
      %v385 = vmax.f32 %v353, 0.0
      %v386 = vmax.f32 %v354, 0.0
      %v387 = vmax.f32 %v355, 0.0
      %v388 = vmax.f32 %v356, 0.0
      %v389 = vmax.f32 %v357, 0.0
      %v390 = vmax.f32 %v358, 0.0
      %v391 = vmax.f32 %v359, 0.0
      %v392 = vmax.f32 %v360, 0.0
      %v393 = vmax.f32 %v361, 0.0
      %v394 = vmax.f32 %v362, 0.0
      %v395 = vmax.f32 %v363, 0.0
      %v396 = vmax.f32 %v364, 0.0
      %v397 = vmax.f32 %v365, 0.0
      %v398 = vmax.f32 %v366, 0.0
      %v399 = vmax.f32 %v367, 0.0
      %v400 = vmax.f32 %v368, 0.0
      %v401 = vmax.f32 %v369, 0.0
      %v402 = vmax.f32 %v370, 0.0
      %v403 = vmax.f32 %v371, 0.0
      %v404 = vmax.f32 %v372, 0.0
      %v405 = vmax.f32 %v373, 0.0
      %v406 = vmax.f32 %v374, 0.0
      %v407 = vmax.f32 %v375, 0.0
      %v408 = vmax.f32 %v376, 0.0
      %v409 = vmax.f32 %v377, 0.0
      %v410 = vmax.f32 %v378, 0.0
      %s411 = scalar_lea.vmem [#allocation2], 24
      %vm412 = vcmask 31744
      %413 = vst.msk [vmem:[%s411 + $0x1] sm:$0xff] %vm412, %v379
      %414 = vst.msk [vmem:[%s411 + $0x9] sm:$0xff] %vm412, %v380
      %415 = vst.msk [vmem:[%s411 + $0x19] sm:$0xff] %vm412, %v381
      %416 = vst.msk [vmem:[%s411 + $0x21] sm:$0xff] %vm412, %v382
      %417 = vst.msk [vmem:[%s411 + $0x31] sm:$0xff] %vm412, %v383
      %418 = vst.msk [vmem:[%s411 + $0x39] sm:$0xff] %vm412, %v384
      %419 = vst.msk [vmem:[%s411 + $0x49] sm:$0xff] %vm412, %v385
      %420 = vst.msk [vmem:[%s411 + $0x51] sm:$0xff] %vm412, %v386
      %421 = vst.msk [vmem:[%s411 + $0x61] sm:$0xff] %vm412, %v387
      %422 = vst.msk [vmem:[%s411 + $0x69] sm:$0xff] %vm412, %v388
      %423 = vst.msk [vmem:[%s411 + $0x79] sm:$0xff] %vm412, %v389
      %424 = vst.msk [vmem:[%s411 + $0x81] sm:$0xff] %vm412, %v390
      %425 = vst.msk [vmem:[%s411 + $0x91] sm:$0xff] %vm412, %v391
      %426 = vst.msk [vmem:[%s411 + $0x99] sm:$0xff] %vm412, %v392
      %427 = vst.msk [vmem:[%s411 + $0xa9] sm:$0xff] %vm412, %v393
      %428 = vst.msk [vmem:[%s411 + $0xb1] sm:$0xff] %vm412, %v394
      %429 = vst.msk [vmem:[%s411 + $0xc1] sm:$0xff] %vm412, %v395
      %430 = vst.msk [vmem:[%s411 + $0xc9] sm:$0xff] %vm412, %v396
      %431 = vst.msk [vmem:[%s411 + $0xd9] sm:$0xff] %vm412, %v397
      %432 = vst.msk [vmem:[%s411 + $0xe1] sm:$0xff] %vm412, %v398
      %433 = vst.msk [vmem:[%s411 + $0xf1] sm:$0xff] %vm412, %v399
      %434 = vst.msk [vmem:[%s411 + $0xf9] sm:$0xff] %vm412, %v400
      %435 = vst.msk [vmem:[%s411 + $0x109] sm:$0xff] %vm412, %v401
      %436 = vst.msk [vmem:[%s411 + $0x111] sm:$0xff] %vm412, %v402
      %437 = vst.msk [vmem:[%s411 + $0x121] sm:$0xff] %vm412, %v403
      %438 = vst.msk [vmem:[%s411 + $0x129] sm:$0xff] %vm412, %v404
      %439 = vst.msk [vmem:[%s411 + $0x139] sm:$0xff] %vm412, %v405
      %440 = vst.msk [vmem:[%s411 + $0x141] sm:$0xff] %vm412, %v406
      %441 = vst.msk [vmem:[%s411 + $0x151] sm:$0xff] %vm412, %v407
      %442 = vst.msk [vmem:[%s411 + $0x159] sm:$0xff] %vm412, %v408
      %443 = vst.msk [vmem:[%s411 + $0x169] sm:$0xff] %vm412, %v409
      %444 = vst.msk [vmem:[%s411 + $0x171] sm:$0xff] %vm412, %v410
      %445 = vst.msk [vmem:[#allocation2] sm:$0xff] %vm412, 0.0
      %446 = vst.msk [vmem:[#allocation2 + $0x8] sm:$0xff] %vm412, 0.0
      %vm447 = vcmask 25600
      %448 = vst.msk [vmem:[#allocation2 + $0x10] sm:$0x3] %vm447, 0.0
      %s449 = scalar_lea.vmem [#allocation2], 408
      %450 = vst.msk [vmem:[%s449] sm:$0xff] %vm412, 0.0
      %451 = vst.msk [vmem:[%s449 + $0x8] sm:$0xff] %vm412, 0.0
      %452 = vst.msk [vmem:[%s449 + $0x10] sm:$0x3] %vm447, 0.0
      %vm453 = vcmask 24576
      %454 = vst.msk [vmem:[%s411] sm:$0x1] %vm453, 0.0
      %455 = vst.msk [vmem:[%s411 + $0x18] sm:$0x1] %vm453, 0.0
      %456 = vst.msk [vmem:[%s411 + $0x30] sm:$0x1] %vm453, 0.0
      %457 = vst.msk [vmem:[%s411 + $0x48] sm:$0x1] %vm453, 0.0
      %458 = vst.msk [vmem:[%s411 + $0x60] sm:$0x1] %vm453, 0.0
      %459 = vst.msk [vmem:[%s411 + $0x78] sm:$0x1] %vm453, 0.0
      %460 = vst.msk [vmem:[%s411 + $0x90] sm:$0x1] %vm453, 0.0
      %461 = vst.msk [vmem:[%s411 + $0xa8] sm:$0x1] %vm453, 0.0
      %462 = vst.msk [vmem:[%s411 + $0xc0] sm:$0x1] %vm453, 0.0
      %463 = vst.msk [vmem:[%s411 + $0xd8] sm:$0x1] %vm453, 0.0
      %464 = vst.msk [vmem:[%s411 + $0xf0] sm:$0x1] %vm453, 0.0
      %465 = vst.msk [vmem:[%s411 + $0x108] sm:$0x1] %vm453, 0.0
      %466 = vst.msk [vmem:[%s411 + $0x120] sm:$0x1] %vm453, 0.0
      %467 = vst.msk [vmem:[%s411 + $0x138] sm:$0x1] %vm453, 0.0
      %468 = vst.msk [vmem:[%s411 + $0x150] sm:$0x1] %vm453, 0.0
      %469 = vst.msk [vmem:[%s411 + $0x168] sm:$0x1] %vm453, 0.0
      %470 = vst.msk [vmem:[%s411 + $0x11] sm:$0x1] %vm453, 0.0
      %471 = vst.msk [vmem:[%s411 + $0x29] sm:$0x1] %vm453, 0.0
      %472 = vst.msk [vmem:[%s411 + $0x41] sm:$0x1] %vm453, 0.0
      %473 = vst.msk [vmem:[%s411 + $0x59] sm:$0x1] %vm453, 0.0
      %474 = vst.msk [vmem:[%s411 + $0x71] sm:$0x1] %vm453, 0.0
      %475 = vst.msk [vmem:[%s411 + $0x89] sm:$0x1] %vm453, 0.0
      %476 = vst.msk [vmem:[%s411 + $0xa1] sm:$0x1] %vm453, 0.0
      %477 = vst.msk [vmem:[%s411 + $0xb9] sm:$0x1] %vm453, 0.0
      %478 = vst.msk [vmem:[%s411 + $0xd1] sm:$0x1] %vm453, 0.0
      %479 = vst.msk [vmem:[%s411 + $0xe9] sm:$0x1] %vm453, 0.0
      %480 = vst.msk [vmem:[%s411 + $0x101] sm:$0x1] %vm453, 0.0
      %481 = vst.msk [vmem:[%s411 + $0x119] sm:$0x1] %vm453, 0.0
      %482 = vst.msk [vmem:[%s411 + $0x131] sm:$0x1] %vm453, 0.0
      %483 = vst.msk [vmem:[%s411 + $0x149] sm:$0x1] %vm453, 0.0
      %484 = vst.msk [vmem:[%s411 + $0x161] sm:$0x1] %vm453, 0.0
      %485 = vst.msk [vmem:[%s411 + $0x179] sm:$0x1] %vm453, 0.0
      %v486 = vld [vmem:[#allocation2] sm:$0xff]
      %v487 = vld [vmem:[#allocation2 + $0x8] sm:$0xff]
      %v488 = vld [vmem:[#allocation2 + $0x18] sm:$0xff]
      %v489 = vld [vmem:[#allocation2 + $0x20] sm:$0xff]
      %v490 = vld [vmem:[#allocation2 + $0x30] sm:$0xff]
      %v491 = vld [vmem:[#allocation2 + $0x38] sm:$0xff]
      %v492 = vld [vmem:[#allocation2 + $0x48] sm:$0xff]
      %v493 = vld [vmem:[#allocation2 + $0x50] sm:$0xff]
      %v494 = vld [vmem:[#allocation2 + $0x60] sm:$0xff]
      %v495 = vld [vmem:[#allocation2 + $0x68] sm:$0xff]
      %v496 = vld [vmem:[#allocation2 + $0x78] sm:$0xff]
      %v497 = vld [vmem:[#allocation2 + $0x80] sm:$0xff]
      %v498 = vld [vmem:[#allocation2 + $0x90] sm:$0xff]
      %v499 = vld [vmem:[#allocation2 + $0x98] sm:$0xff]
      %v500 = vld [vmem:[#allocation2 + $0xa8] sm:$0xff]
      %v501 = vld [vmem:[#allocation2 + $0xb0] sm:$0xff]
      %v502 = vld [vmem:[#allocation2 + $0xc0] sm:$0xff]
      %v503 = vld [vmem:[#allocation2 + $0xc8] sm:$0xff]
      %v504 = vld [vmem:[#allocation2 + $0xd8] sm:$0xff]
      %v505 = vld [vmem:[#allocation2 + $0xe0] sm:$0xff]
      %v506 = vld [vmem:[#allocation2 + $0xf0] sm:$0xff]
      %v507 = vld [vmem:[#allocation2 + $0xf8] sm:$0xff]
      %v508 = vld [vmem:[#allocation2 + $0x108] sm:$0xff]
      %v509 = vld [vmem:[#allocation2 + $0x110] sm:$0xff]
      %v510 = vld [vmem:[#allocation2 + $0x120] sm:$0xff]
      %v511 = vld [vmem:[#allocation2 + $0x128] sm:$0xff]
      %v512 = vld [vmem:[#allocation2 + $0x138] sm:$0xff]
      %v513 = vld [vmem:[#allocation2 + $0x140] sm:$0xff]
      %v514 = vld [vmem:[#allocation2 + $0x150] sm:$0xff]
      %v515 = vld [vmem:[#allocation2 + $0x158] sm:$0xff]
      %v516 = vld [vmem:[#allocation2 + $0x168] sm:$0xff]
      %v517 = vld [vmem:[#allocation2 + $0x170] sm:$0xff]
      %518 = vst.msk [vmem:[#allocation3] sm:$0xff] %vm412, %v486
      %519 = vst.msk [vmem:[#allocation3 + $0x8] sm:$0xff] %vm412, %v487
      %520 = vst.msk [vmem:[#allocation3 + $0x10] sm:$0xff] %vm412, %v488
      %521 = vst.msk [vmem:[#allocation3 + $0x18] sm:$0xff] %vm412, %v489
      %522 = vst.msk [vmem:[#allocation3 + $0x20] sm:$0xff] %vm412, %v490
      %523 = vst.msk [vmem:[#allocation3 + $0x28] sm:$0xff] %vm412, %v491
      %524 = vst.msk [vmem:[#allocation3 + $0x30] sm:$0xff] %vm412, %v492
      %525 = vst.msk [vmem:[#allocation3 + $0x38] sm:$0xff] %vm412, %v493
      %526 = vst.msk [vmem:[#allocation3 + $0x40] sm:$0xff] %vm412, %v494
      %527 = vst.msk [vmem:[#allocation3 + $0x48] sm:$0xff] %vm412, %v495
      %528 = vst.msk [vmem:[#allocation3 + $0x50] sm:$0xff] %vm412, %v496
      %529 = vst.msk [vmem:[#allocation3 + $0x58] sm:$0xff] %vm412, %v497
      %530 = vst.msk [vmem:[#allocation3 + $0x60] sm:$0xff] %vm412, %v498
      %531 = vst.msk [vmem:[#allocation3 + $0x68] sm:$0xff] %vm412, %v499
      %532 = vst.msk [vmem:[#allocation3 + $0x70] sm:$0xff] %vm412, %v500
      %533 = vst.msk [vmem:[#allocation3 + $0x78] sm:$0xff] %vm412, %v501
      %534 = vst.msk [vmem:[#allocation3 + $0x80] sm:$0xff] %vm412, %v502
      %535 = vst.msk [vmem:[#allocation3 + $0x88] sm:$0xff] %vm412, %v503
      %536 = vst.msk [vmem:[#allocation3 + $0x90] sm:$0xff] %vm412, %v504
      %537 = vst.msk [vmem:[#allocation3 + $0x98] sm:$0xff] %vm412, %v505
      %538 = vst.msk [vmem:[#allocation3 + $0xa0] sm:$0xff] %vm412, %v506
      %539 = vst.msk [vmem:[#allocation3 + $0xa8] sm:$0xff] %vm412, %v507
      %540 = vst.msk [vmem:[#allocation3 + $0xb0] sm:$0xff] %vm412, %v508
      %541 = vst.msk [vmem:[#allocation3 + $0xb8] sm:$0xff] %vm412, %v509
      %542 = vst.msk [vmem:[#allocation3 + $0xc0] sm:$0xff] %vm412, %v510
      %543 = vst.msk [vmem:[#allocation3 + $0xc8] sm:$0xff] %vm412, %v511
      %544 = vst.msk [vmem:[#allocation3 + $0xd0] sm:$0xff] %vm412, %v512
      %545 = vst.msk [vmem:[#allocation3 + $0xd8] sm:$0xff] %vm412, %v513
      %546 = vst.msk [vmem:[#allocation3 + $0xe0] sm:$0xff] %vm412, %v514
      %547 = vst.msk [vmem:[#allocation3 + $0xe8] sm:$0xff] %vm412, %v515
      %548 = vst.msk [vmem:[#allocation3 + $0xf0] sm:$0xff] %vm412, %v516
      %549 = vst.msk [vmem:[#allocation3 + $0xf8] sm:$0xff] %vm412, %v517
      %v550 = vld [vmem:[#allocation2 + $0x1] sm:$0xff]
      %v551 = vld [vmem:[#allocation2 + $0x9] sm:$0xff]
      %v552 = vld [vmem:[#allocation2 + $0x19] sm:$0xff]
      %v553 = vld [vmem:[#allocation2 + $0x21] sm:$0xff]
      %v554 = vld [vmem:[#allocation2 + $0x31] sm:$0xff]
      %v555 = vld [vmem:[#allocation2 + $0x39] sm:$0xff]
      %v556 = vld [vmem:[#allocation2 + $0x49] sm:$0xff]
      %v557 = vld [vmem:[#allocation2 + $0x51] sm:$0xff]
      %v558 = vld [vmem:[#allocation2 + $0x61] sm:$0xff]
      %v559 = vld [vmem:[#allocation2 + $0x69] sm:$0xff]
      %v560 = vld [vmem:[#allocation2 + $0x79] sm:$0xff]
      %v561 = vld [vmem:[#allocation2 + $0x81] sm:$0xff]
      %v562 = vld [vmem:[#allocation2 + $0x91] sm:$0xff]
      %v563 = vld [vmem:[#allocation2 + $0x99] sm:$0xff]
      %v564 = vld [vmem:[#allocation2 + $0xa9] sm:$0xff]
      %v565 = vld [vmem:[#allocation2 + $0xb1] sm:$0xff]
      %v566 = vld [vmem:[#allocation2 + $0xc1] sm:$0xff]
      %v567 = vld [vmem:[#allocation2 + $0xc9] sm:$0xff]
      %v568 = vld [vmem:[#allocation2 + $0xd9] sm:$0xff]
      %v569 = vld [vmem:[#allocation2 + $0xe1] sm:$0xff]
      %v570 = vld [vmem:[#allocation2 + $0xf1] sm:$0xff]
      %v571 = vld [vmem:[#allocation2 + $0xf9] sm:$0xff]
      %v572 = vld [vmem:[#allocation2 + $0x109] sm:$0xff]
      %v573 = vld [vmem:[#allocation2 + $0x111] sm:$0xff]
      %v574 = vld [vmem:[#allocation2 + $0x121] sm:$0xff]
      %v575 = vld [vmem:[#allocation2 + $0x129] sm:$0xff]
      %v576 = vld [vmem:[#allocation2 + $0x139] sm:$0xff]
      %v577 = vld [vmem:[#allocation2 + $0x141] sm:$0xff]
      %v578 = vld [vmem:[#allocation2 + $0x151] sm:$0xff]
      %v579 = vld [vmem:[#allocation2 + $0x159] sm:$0xff]
      %v580 = vld [vmem:[#allocation2 + $0x169] sm:$0xff]
      %v581 = vld [vmem:[#allocation2 + $0x171] sm:$0xff]
      %614 = vrot.lane.b32.xlu0 %v550, 4
      %v615 = vpop.permute.xlu0 %614
      %616 = vrot.lane.b32.xlu0 %v551, 4
      %v617 = vpop.permute.xlu0 %616
      %618 = vrot.lane.b32.xlu0 %v552, 4
      %v619 = vpop.permute.xlu0 %618
      %620 = vrot.lane.b32.xlu0 %v553, 4
      %v621 = vpop.permute.xlu0 %620
      %622 = vrot.lane.b32.xlu0 %v554, 4
      %v623 = vpop.permute.xlu0 %622
      %624 = vrot.lane.b32.xlu0 %v555, 4
      %v625 = vpop.permute.xlu0 %624
      %626 = vrot.lane.b32.xlu0 %v556, 4
      %v627 = vpop.permute.xlu0 %626
      %628 = vrot.lane.b32.xlu0 %v557, 4
      %v629 = vpop.permute.xlu0 %628
      %630 = vrot.lane.b32.xlu0 %v558, 4
      %v631 = vpop.permute.xlu0 %630
      %632 = vrot.lane.b32.xlu0 %v559, 4
      %v633 = vpop.permute.xlu0 %632
      %634 = vrot.lane.b32.xlu0 %v560, 4
      %v635 = vpop.permute.xlu0 %634
      %636 = vrot.lane.b32.xlu0 %v561, 4
      %v637 = vpop.permute.xlu0 %636
      %638 = vrot.lane.b32.xlu0 %v562, 4
      %v639 = vpop.permute.xlu0 %638
      %640 = vrot.lane.b32.xlu0 %v563, 4
      %v641 = vpop.permute.xlu0 %640
      %642 = vrot.lane.b32.xlu0 %v564, 4
      %v643 = vpop.permute.xlu0 %642
      %644 = vrot.lane.b32.xlu0 %v565, 4
      %v645 = vpop.permute.xlu0 %644
      %646 = vrot.lane.b32.xlu0 %v566, 4
      %v647 = vpop.permute.xlu0 %646
      %648 = vrot.lane.b32.xlu0 %v567, 4
      %v649 = vpop.permute.xlu0 %648
      %650 = vrot.lane.b32.xlu0 %v568, 4
      %v651 = vpop.permute.xlu0 %650
      %652 = vrot.lane.b32.xlu0 %v569, 4
      %v653 = vpop.permute.xlu0 %652
      %654 = vrot.lane.b32.xlu0 %v570, 4
      %v655 = vpop.permute.xlu0 %654
      %656 = vrot.lane.b32.xlu0 %v571, 4
      %v657 = vpop.permute.xlu0 %656
      %658 = vrot.lane.b32.xlu0 %v572, 4
      %v659 = vpop.permute.xlu0 %658
      %660 = vrot.lane.b32.xlu0 %v573, 4
      %v661 = vpop.permute.xlu0 %660
      %662 = vrot.lane.b32.xlu0 %v574, 4
      %v663 = vpop.permute.xlu0 %662
      %664 = vrot.lane.b32.xlu0 %v575, 4
      %v665 = vpop.permute.xlu0 %664
      %666 = vrot.lane.b32.xlu0 %v576, 4
      %v667 = vpop.permute.xlu0 %666
      %668 = vrot.lane.b32.xlu0 %v577, 4
      %v669 = vpop.permute.xlu0 %668
      %670 = vrot.lane.b32.xlu0 %v578, 4
      %v671 = vpop.permute.xlu0 %670
      %672 = vrot.lane.b32.xlu0 %v579, 4
      %v673 = vpop.permute.xlu0 %672
      %674 = vrot.lane.b32.xlu0 %v580, 4
      %v675 = vpop.permute.xlu0 %674
      %676 = vrot.lane.b32.xlu0 %v581, 4
      %v677 = vpop.permute.xlu0 %676
      %vm710 = vcmask 64544
      %711 = vst.msk [vmem:[#allocation3] sm:$0xff] %vm710, %v615
      %712 = vst.msk [vmem:[#allocation3 + $0x8] sm:$0xff] %vm710, %v617
      %713 = vst.msk [vmem:[#allocation3 + $0x10] sm:$0xff] %vm710, %v619
      %714 = vst.msk [vmem:[#allocation3 + $0x18] sm:$0xff] %vm710, %v621
      %715 = vst.msk [vmem:[#allocation3 + $0x20] sm:$0xff] %vm710, %v623
      %716 = vst.msk [vmem:[#allocation3 + $0x28] sm:$0xff] %vm710, %v625
      %717 = vst.msk [vmem:[#allocation3 + $0x30] sm:$0xff] %vm710, %v627
      %718 = vst.msk [vmem:[#allocation3 + $0x38] sm:$0xff] %vm710, %v629
      %719 = vst.msk [vmem:[#allocation3 + $0x40] sm:$0xff] %vm710, %v631
      %720 = vst.msk [vmem:[#allocation3 + $0x48] sm:$0xff] %vm710, %v633
      %721 = vst.msk [vmem:[#allocation3 + $0x50] sm:$0xff] %vm710, %v635
      %722 = vst.msk [vmem:[#allocation3 + $0x58] sm:$0xff] %vm710, %v637
      %723 = vst.msk [vmem:[#allocation3 + $0x60] sm:$0xff] %vm710, %v639
      %724 = vst.msk [vmem:[#allocation3 + $0x68] sm:$0xff] %vm710, %v641
      %725 = vst.msk [vmem:[#allocation3 + $0x70] sm:$0xff] %vm710, %v643
      %726 = vst.msk [vmem:[#allocation3 + $0x78] sm:$0xff] %vm710, %v645
      %727 = vst.msk [vmem:[#allocation3 + $0x80] sm:$0xff] %vm710, %v647
      %728 = vst.msk [vmem:[#allocation3 + $0x88] sm:$0xff] %vm710, %v649
      %729 = vst.msk [vmem:[#allocation3 + $0x90] sm:$0xff] %vm710, %v651
      %730 = vst.msk [vmem:[#allocation3 + $0x98] sm:$0xff] %vm710, %v653
      %731 = vst.msk [vmem:[#allocation3 + $0xa0] sm:$0xff] %vm710, %v655
      %732 = vst.msk [vmem:[#allocation3 + $0xa8] sm:$0xff] %vm710, %v657
      %733 = vst.msk [vmem:[#allocation3 + $0xb0] sm:$0xff] %vm710, %v659
      %734 = vst.msk [vmem:[#allocation3 + $0xb8] sm:$0xff] %vm710, %v661
      %735 = vst.msk [vmem:[#allocation3 + $0xc0] sm:$0xff] %vm710, %v663
      %736 = vst.msk [vmem:[#allocation3 + $0xc8] sm:$0xff] %vm710, %v665
      %737 = vst.msk [vmem:[#allocation3 + $0xd0] sm:$0xff] %vm710, %v667
      %738 = vst.msk [vmem:[#allocation3 + $0xd8] sm:$0xff] %vm710, %v669
      %739 = vst.msk [vmem:[#allocation3 + $0xe0] sm:$0xff] %vm710, %v671
      %740 = vst.msk [vmem:[#allocation3 + $0xe8] sm:$0xff] %vm710, %v673
      %741 = vst.msk [vmem:[#allocation3 + $0xf0] sm:$0xff] %vm710, %v675
      %742 = vst.msk [vmem:[#allocation3 + $0xf8] sm:$0xff] %vm710, %v677
      %v743 = vld [vmem:[#allocation2 + $0x2] sm:$0xff]
      %v744 = vld [vmem:[#allocation2 + $0xa] sm:$0xff]
      %v745 = vld [vmem:[#allocation2 + $0x1a] sm:$0xff]
      %v746 = vld [vmem:[#allocation2 + $0x22] sm:$0xff]
      %v747 = vld [vmem:[#allocation2 + $0x32] sm:$0xff]
      %v748 = vld [vmem:[#allocation2 + $0x3a] sm:$0xff]
      %v749 = vld [vmem:[#allocation2 + $0x4a] sm:$0xff]
      %v750 = vld [vmem:[#allocation2 + $0x52] sm:$0xff]
      %v751 = vld [vmem:[#allocation2 + $0x62] sm:$0xff]
      %v752 = vld [vmem:[#allocation2 + $0x6a] sm:$0xff]
      %v753 = vld [vmem:[#allocation2 + $0x7a] sm:$0xff]
      %v754 = vld [vmem:[#allocation2 + $0x82] sm:$0xff]
      %v755 = vld [vmem:[#allocation2 + $0x92] sm:$0xff]
      %v756 = vld [vmem:[#allocation2 + $0x9a] sm:$0xff]
      %v757 = vld [vmem:[#allocation2 + $0xaa] sm:$0xff]
      %v758 = vld [vmem:[#allocation2 + $0xb2] sm:$0xff]
      %v759 = vld [vmem:[#allocation2 + $0xc2] sm:$0xff]
      %v760 = vld [vmem:[#allocation2 + $0xca] sm:$0xff]
      %v761 = vld [vmem:[#allocation2 + $0xda] sm:$0xff]
      %v762 = vld [vmem:[#allocation2 + $0xe2] sm:$0xff]
      %v763 = vld [vmem:[#allocation2 + $0xf2] sm:$0xff]
      %v764 = vld [vmem:[#allocation2 + $0xfa] sm:$0xff]
      %v765 = vld [vmem:[#allocation2 + $0x10a] sm:$0xff]
      %v766 = vld [vmem:[#allocation2 + $0x112] sm:$0xff]
      %v767 = vld [vmem:[#allocation2 + $0x122] sm:$0xff]
      %v768 = vld [vmem:[#allocation2 + $0x12a] sm:$0xff]
      %v769 = vld [vmem:[#allocation2 + $0x13a] sm:$0xff]
      %v770 = vld [vmem:[#allocation2 + $0x142] sm:$0xff]
      %v771 = vld [vmem:[#allocation2 + $0x152] sm:$0xff]
      %v772 = vld [vmem:[#allocation2 + $0x15a] sm:$0xff]
      %v773 = vld [vmem:[#allocation2 + $0x16a] sm:$0xff]
      %v774 = vld [vmem:[#allocation2 + $0x172] sm:$0xff]
      %807 = vrot.lane.b32.xlu0 %v743, 8
      %v808 = vpop.permute.xlu0 %807
      %809 = vrot.lane.b32.xlu0 %v744, 8
      %v810 = vpop.permute.xlu0 %809
      %811 = vrot.lane.b32.xlu0 %v745, 8
      %v812 = vpop.permute.xlu0 %811
      %813 = vrot.lane.b32.xlu0 %v746, 8
      %v814 = vpop.permute.xlu0 %813
      %815 = vrot.lane.b32.xlu0 %v747, 8
      %v816 = vpop.permute.xlu0 %815
      %817 = vrot.lane.b32.xlu0 %v748, 8
      %v818 = vpop.permute.xlu0 %817
      %819 = vrot.lane.b32.xlu0 %v749, 8
      %v820 = vpop.permute.xlu0 %819
      %821 = vrot.lane.b32.xlu0 %v750, 8
      %v822 = vpop.permute.xlu0 %821
      %823 = vrot.lane.b32.xlu0 %v751, 8
      %v824 = vpop.permute.xlu0 %823
      %825 = vrot.lane.b32.xlu0 %v752, 8
      %v826 = vpop.permute.xlu0 %825
      %827 = vrot.lane.b32.xlu0 %v753, 8
      %v828 = vpop.permute.xlu0 %827
      %829 = vrot.lane.b32.xlu0 %v754, 8
      %v830 = vpop.permute.xlu0 %829
      %831 = vrot.lane.b32.xlu0 %v755, 8
      %v832 = vpop.permute.xlu0 %831
      %833 = vrot.lane.b32.xlu0 %v756, 8
      %v834 = vpop.permute.xlu0 %833
      %835 = vrot.lane.b32.xlu0 %v757, 8
      %v836 = vpop.permute.xlu0 %835
      %837 = vrot.lane.b32.xlu0 %v758, 8
      %v838 = vpop.permute.xlu0 %837
      %839 = vrot.lane.b32.xlu0 %v759, 8
      %v840 = vpop.permute.xlu0 %839
      %841 = vrot.lane.b32.xlu0 %v760, 8
      %v842 = vpop.permute.xlu0 %841
      %843 = vrot.lane.b32.xlu0 %v761, 8
      %v844 = vpop.permute.xlu0 %843
      %845 = vrot.lane.b32.xlu0 %v762, 8
      %v846 = vpop.permute.xlu0 %845
      %847 = vrot.lane.b32.xlu0 %v763, 8
      %v848 = vpop.permute.xlu0 %847
      %849 = vrot.lane.b32.xlu0 %v764, 8
      %v850 = vpop.permute.xlu0 %849
      %851 = vrot.lane.b32.xlu0 %v765, 8
      %v852 = vpop.permute.xlu0 %851
      %853 = vrot.lane.b32.xlu0 %v766, 8
      %v854 = vpop.permute.xlu0 %853
      %855 = vrot.lane.b32.xlu0 %v767, 8
      %v856 = vpop.permute.xlu0 %855
      %857 = vrot.lane.b32.xlu0 %v768, 8
      %v858 = vpop.permute.xlu0 %857
      %859 = vrot.lane.b32.xlu0 %v769, 8
      %v860 = vpop.permute.xlu0 %859
      %861 = vrot.lane.b32.xlu0 %v770, 8
      %v862 = vpop.permute.xlu0 %861
      %863 = vrot.lane.b32.xlu0 %v771, 8
      %v864 = vpop.permute.xlu0 %863
      %865 = vrot.lane.b32.xlu0 %v772, 8
      %v866 = vpop.permute.xlu0 %865
      %867 = vrot.lane.b32.xlu0 %v773, 8
      %v868 = vpop.permute.xlu0 %867
      %869 = vrot.lane.b32.xlu0 %v774, 8
      %v870 = vpop.permute.xlu0 %869
      %vm903 = vcmask 97344
      %904 = vst.msk [vmem:[#allocation3] sm:$0xff] %vm903, %v808
      %905 = vst.msk [vmem:[#allocation3 + $0x8] sm:$0xff] %vm903, %v810
      %906 = vst.msk [vmem:[#allocation3 + $0x10] sm:$0xff] %vm903, %v812
      %907 = vst.msk [vmem:[#allocation3 + $0x18] sm:$0xff] %vm903, %v814
      %908 = vst.msk [vmem:[#allocation3 + $0x20] sm:$0xff] %vm903, %v816
      %909 = vst.msk [vmem:[#allocation3 + $0x28] sm:$0xff] %vm903, %v818
      %910 = vst.msk [vmem:[#allocation3 + $0x30] sm:$0xff] %vm903, %v820
      %911 = vst.msk [vmem:[#allocation3 + $0x38] sm:$0xff] %vm903, %v822
      %912 = vst.msk [vmem:[#allocation3 + $0x40] sm:$0xff] %vm903, %v824
      %913 = vst.msk [vmem:[#allocation3 + $0x48] sm:$0xff] %vm903, %v826
      %914 = vst.msk [vmem:[#allocation3 + $0x50] sm:$0xff] %vm903, %v828
      %915 = vst.msk [vmem:[#allocation3 + $0x58] sm:$0xff] %vm903, %v830
      %916 = vst.msk [vmem:[#allocation3 + $0x60] sm:$0xff] %vm903, %v832
      %917 = vst.msk [vmem:[#allocation3 + $0x68] sm:$0xff] %vm903, %v834
      %918 = vst.msk [vmem:[#allocation3 + $0x70] sm:$0xff] %vm903, %v836
      %919 = vst.msk [vmem:[#allocation3 + $0x78] sm:$0xff] %vm903, %v838
      %920 = vst.msk [vmem:[#allocation3 + $0x80] sm:$0xff] %vm903, %v840
      %921 = vst.msk [vmem:[#allocation3 + $0x88] sm:$0xff] %vm903, %v842
      %922 = vst.msk [vmem:[#allocation3 + $0x90] sm:$0xff] %vm903, %v844
      %923 = vst.msk [vmem:[#allocation3 + $0x98] sm:$0xff] %vm903, %v846
      %924 = vst.msk [vmem:[#allocation3 + $0xa0] sm:$0xff] %vm903, %v848
      %925 = vst.msk [vmem:[#allocation3 + $0xa8] sm:$0xff] %vm903, %v850
      %926 = vst.msk [vmem:[#allocation3 + $0xb0] sm:$0xff] %vm903, %v852
      %927 = vst.msk [vmem:[#allocation3 + $0xb8] sm:$0xff] %vm903, %v854
      %928 = vst.msk [vmem:[#allocation3 + $0xc0] sm:$0xff] %vm903, %v856
      %929 = vst.msk [vmem:[#allocation3 + $0xc8] sm:$0xff] %vm903, %v858
      %930 = vst.msk [vmem:[#allocation3 + $0xd0] sm:$0xff] %vm903, %v860
      %931 = vst.msk [vmem:[#allocation3 + $0xd8] sm:$0xff] %vm903, %v862
      %932 = vst.msk [vmem:[#allocation3 + $0xe0] sm:$0xff] %vm903, %v864
      %933 = vst.msk [vmem:[#allocation3 + $0xe8] sm:$0xff] %vm903, %v866
      %934 = vst.msk [vmem:[#allocation3 + $0xf0] sm:$0xff] %vm903, %v868
      %935 = vst.msk [vmem:[#allocation3 + $0xf8] sm:$0xff] %vm903, %v870
      %v936 = vld [vmem:[%s411] sm:$0xff]
      %v937 = vld [vmem:[%s411 + $0x8] sm:$0xff]
      %v938 = vld [vmem:[%s411 + $0x18] sm:$0xff]
      %v939 = vld [vmem:[%s411 + $0x20] sm:$0xff]
      %v940 = vld [vmem:[%s411 + $0x30] sm:$0xff]
      %v941 = vld [vmem:[%s411 + $0x38] sm:$0xff]
      %v942 = vld [vmem:[%s411 + $0x48] sm:$0xff]
      %v943 = vld [vmem:[%s411 + $0x50] sm:$0xff]
      %v944 = vld [vmem:[%s411 + $0x60] sm:$0xff]
      %v945 = vld [vmem:[%s411 + $0x68] sm:$0xff]
      %v946 = vld [vmem:[%s411 + $0x78] sm:$0xff]
      %v947 = vld [vmem:[%s411 + $0x80] sm:$0xff]
      %v948 = vld [vmem:[%s411 + $0x90] sm:$0xff]
      %v949 = vld [vmem:[%s411 + $0x98] sm:$0xff]
      %v950 = vld [vmem:[%s411 + $0xa8] sm:$0xff]
      %v951 = vld [vmem:[%s411 + $0xb0] sm:$0xff]
      %v952 = vld [vmem:[%s411 + $0xc0] sm:$0xff]
      %v953 = vld [vmem:[%s411 + $0xc8] sm:$0xff]
      %v954 = vld [vmem:[%s411 + $0xd8] sm:$0xff]
      %v955 = vld [vmem:[%s411 + $0xe0] sm:$0xff]
      %v956 = vld [vmem:[%s411 + $0xf0] sm:$0xff]
      %v957 = vld [vmem:[%s411 + $0xf8] sm:$0xff]
      %v958 = vld [vmem:[%s411 + $0x108] sm:$0xff]
      %v959 = vld [vmem:[%s411 + $0x110] sm:$0xff]
      %v960 = vld [vmem:[%s411 + $0x120] sm:$0xff]
      %v961 = vld [vmem:[%s411 + $0x128] sm:$0xff]
      %v962 = vld [vmem:[%s411 + $0x138] sm:$0xff]
      %v963 = vld [vmem:[%s411 + $0x140] sm:$0xff]
      %v964 = vld [vmem:[%s411 + $0x150] sm:$0xff]
      %v965 = vld [vmem:[%s411 + $0x158] sm:$0xff]
      %v966 = vld [vmem:[%s411 + $0x168] sm:$0xff]
      %v967 = vld [vmem:[%s411 + $0x170] sm:$0xff]
      %1000 = vrot.lane.b32.xlu0 %v936, 12
      %v1001 = vpop.permute.xlu0 %1000
      %1002 = vrot.lane.b32.xlu0 %v937, 12
      %v1003 = vpop.permute.xlu0 %1002
      %1004 = vrot.lane.b32.xlu0 %v938, 12
      %v1005 = vpop.permute.xlu0 %1004
      %1006 = vrot.lane.b32.xlu0 %v939, 12
      %v1007 = vpop.permute.xlu0 %1006
      %1008 = vrot.lane.b32.xlu0 %v940, 12
      %v1009 = vpop.permute.xlu0 %1008
      %1010 = vrot.lane.b32.xlu0 %v941, 12
      %v1011 = vpop.permute.xlu0 %1010
      %1012 = vrot.lane.b32.xlu0 %v942, 12
      %v1013 = vpop.permute.xlu0 %1012
      %1014 = vrot.lane.b32.xlu0 %v943, 12
      %v1015 = vpop.permute.xlu0 %1014
      %1016 = vrot.lane.b32.xlu0 %v944, 12
      %v1017 = vpop.permute.xlu0 %1016
      %1018 = vrot.lane.b32.xlu0 %v945, 12
      %v1019 = vpop.permute.xlu0 %1018
      %1020 = vrot.lane.b32.xlu0 %v946, 12
      %v1021 = vpop.permute.xlu0 %1020
      %1022 = vrot.lane.b32.xlu0 %v947, 12
      %v1023 = vpop.permute.xlu0 %1022
      %1024 = vrot.lane.b32.xlu0 %v948, 12
      %v1025 = vpop.permute.xlu0 %1024
      %1026 = vrot.lane.b32.xlu0 %v949, 12
      %v1027 = vpop.permute.xlu0 %1026
      %1028 = vrot.lane.b32.xlu0 %v950, 12
      %v1029 = vpop.permute.xlu0 %1028
      %1030 = vrot.lane.b32.xlu0 %v951, 12
      %v1031 = vpop.permute.xlu0 %1030
      %1032 = vrot.lane.b32.xlu0 %v952, 12
      %v1033 = vpop.permute.xlu0 %1032
      %1034 = vrot.lane.b32.xlu0 %v953, 12
      %v1035 = vpop.permute.xlu0 %1034
      %1036 = vrot.lane.b32.xlu0 %v954, 12
      %v1037 = vpop.permute.xlu0 %1036
      %1038 = vrot.lane.b32.xlu0 %v955, 12
      %v1039 = vpop.permute.xlu0 %1038
      %1040 = vrot.lane.b32.xlu0 %v956, 12
      %v1041 = vpop.permute.xlu0 %1040
      %1042 = vrot.lane.b32.xlu0 %v957, 12
      %v1043 = vpop.permute.xlu0 %1042
      %1044 = vrot.lane.b32.xlu0 %v958, 12
      %v1045 = vpop.permute.xlu0 %1044
      %1046 = vrot.lane.b32.xlu0 %v959, 12
      %v1047 = vpop.permute.xlu0 %1046
      %1048 = vrot.lane.b32.xlu0 %v960, 12
      %v1049 = vpop.permute.xlu0 %1048
      %1050 = vrot.lane.b32.xlu0 %v961, 12
      %v1051 = vpop.permute.xlu0 %1050
      %1052 = vrot.lane.b32.xlu0 %v962, 12
      %v1053 = vpop.permute.xlu0 %1052
      %1054 = vrot.lane.b32.xlu0 %v963, 12
      %v1055 = vpop.permute.xlu0 %1054
      %1056 = vrot.lane.b32.xlu0 %v964, 12
      %v1057 = vpop.permute.xlu0 %1056
      %1058 = vrot.lane.b32.xlu0 %v965, 12
      %v1059 = vpop.permute.xlu0 %1058
      %1060 = vrot.lane.b32.xlu0 %v966, 12
      %v1061 = vpop.permute.xlu0 %1060
      %1062 = vrot.lane.b32.xlu0 %v967, 12
      %v1063 = vpop.permute.xlu0 %1062
      %vm1096 = vcmask 130144
      %1097 = vst.msk [vmem:[#allocation3] sm:$0xff] %vm1096, %v1001
      %1098 = vst.msk [vmem:[#allocation3 + $0x8] sm:$0xff] %vm1096, %v1003
      %1099 = vst.msk [vmem:[#allocation3 + $0x10] sm:$0xff] %vm1096, %v1005
      %1100 = vst.msk [vmem:[#allocation3 + $0x18] sm:$0xff] %vm1096, %v1007
      %1101 = vst.msk [vmem:[#allocation3 + $0x20] sm:$0xff] %vm1096, %v1009
      %1102 = vst.msk [vmem:[#allocation3 + $0x28] sm:$0xff] %vm1096, %v1011
      %1103 = vst.msk [vmem:[#allocation3 + $0x30] sm:$0xff] %vm1096, %v1013
      %1104 = vst.msk [vmem:[#allocation3 + $0x38] sm:$0xff] %vm1096, %v1015
      %1105 = vst.msk [vmem:[#allocation3 + $0x40] sm:$0xff] %vm1096, %v1017
      %1106 = vst.msk [vmem:[#allocation3 + $0x48] sm:$0xff] %vm1096, %v1019
      %1107 = vst.msk [vmem:[#allocation3 + $0x50] sm:$0xff] %vm1096, %v1021
      %1108 = vst.msk [vmem:[#allocation3 + $0x58] sm:$0xff] %vm1096, %v1023
      %1109 = vst.msk [vmem:[#allocation3 + $0x60] sm:$0xff] %vm1096, %v1025
      %1110 = vst.msk [vmem:[#allocation3 + $0x68] sm:$0xff] %vm1096, %v1027
      %1111 = vst.msk [vmem:[#allocation3 + $0x70] sm:$0xff] %vm1096, %v1029
      %1112 = vst.msk [vmem:[#allocation3 + $0x78] sm:$0xff] %vm1096, %v1031
      %1113 = vst.msk [vmem:[#allocation3 + $0x80] sm:$0xff] %vm1096, %v1033
      %1114 = vst.msk [vmem:[#allocation3 + $0x88] sm:$0xff] %vm1096, %v1035
      %1115 = vst.msk [vmem:[#allocation3 + $0x90] sm:$0xff] %vm1096, %v1037
      %1116 = vst.msk [vmem:[#allocation3 + $0x98] sm:$0xff] %vm1096, %v1039
      %1117 = vst.msk [vmem:[#allocation3 + $0xa0] sm:$0xff] %vm1096, %v1041
      %1118 = vst.msk [vmem:[#allocation3 + $0xa8] sm:$0xff] %vm1096, %v1043
      %1119 = vst.msk [vmem:[#allocation3 + $0xb0] sm:$0xff] %vm1096, %v1045
      %1120 = vst.msk [vmem:[#allocation3 + $0xb8] sm:$0xff] %vm1096, %v1047
      %1121 = vst.msk [vmem:[#allocation3 + $0xc0] sm:$0xff] %vm1096, %v1049
      %1122 = vst.msk [vmem:[#allocation3 + $0xc8] sm:$0xff] %vm1096, %v1051
      %1123 = vst.msk [vmem:[#allocation3 + $0xd0] sm:$0xff] %vm1096, %v1053
      %1124 = vst.msk [vmem:[#allocation3 + $0xd8] sm:$0xff] %vm1096, %v1055
      %1125 = vst.msk [vmem:[#allocation3 + $0xe0] sm:$0xff] %vm1096, %v1057
      %1126 = vst.msk [vmem:[#allocation3 + $0xe8] sm:$0xff] %vm1096, %v1059
      %1127 = vst.msk [vmem:[#allocation3 + $0xf0] sm:$0xff] %vm1096, %v1061
      %1128 = vst.msk [vmem:[#allocation3 + $0xf8] sm:$0xff] %vm1096, %v1063
      %v1129 = vld [vmem:[%s411 + $0x1] sm:$0xff]
      %v1130 = vld [vmem:[%s411 + $0x9] sm:$0xff]
      %v1131 = vld [vmem:[%s411 + $0x19] sm:$0xff]
      %v1132 = vld [vmem:[%s411 + $0x21] sm:$0xff]
      %v1133 = vld [vmem:[%s411 + $0x31] sm:$0xff]
      %v1134 = vld [vmem:[%s411 + $0x39] sm:$0xff]
      %v1135 = vld [vmem:[%s411 + $0x49] sm:$0xff]
      %v1136 = vld [vmem:[%s411 + $0x51] sm:$0xff]
      %v1137 = vld [vmem:[%s411 + $0x61] sm:$0xff]
      %v1138 = vld [vmem:[%s411 + $0x69] sm:$0xff]
      %v1139 = vld [vmem:[%s411 + $0x79] sm:$0xff]
      %v1140 = vld [vmem:[%s411 + $0x81] sm:$0xff]
      %v1141 = vld [vmem:[%s411 + $0x91] sm:$0xff]
      %v1142 = vld [vmem:[%s411 + $0x99] sm:$0xff]
      %v1143 = vld [vmem:[%s411 + $0xa9] sm:$0xff]
      %v1144 = vld [vmem:[%s411 + $0xb1] sm:$0xff]
      %v1145 = vld [vmem:[%s411 + $0xc1] sm:$0xff]
      %v1146 = vld [vmem:[%s411 + $0xc9] sm:$0xff]
      %v1147 = vld [vmem:[%s411 + $0xd9] sm:$0xff]
      %v1148 = vld [vmem:[%s411 + $0xe1] sm:$0xff]
      %v1149 = vld [vmem:[%s411 + $0xf1] sm:$0xff]
      %v1150 = vld [vmem:[%s411 + $0xf9] sm:$0xff]
      %v1151 = vld [vmem:[%s411 + $0x109] sm:$0xff]
      %v1152 = vld [vmem:[%s411 + $0x111] sm:$0xff]
      %v1153 = vld [vmem:[%s411 + $0x121] sm:$0xff]
      %v1154 = vld [vmem:[%s411 + $0x129] sm:$0xff]
      %v1155 = vld [vmem:[%s411 + $0x139] sm:$0xff]
      %v1156 = vld [vmem:[%s411 + $0x141] sm:$0xff]
      %v1157 = vld [vmem:[%s411 + $0x151] sm:$0xff]
      %v1158 = vld [vmem:[%s411 + $0x159] sm:$0xff]
      %v1159 = vld [vmem:[%s411 + $0x169] sm:$0xff]
      %v1160 = vld [vmem:[%s411 + $0x171] sm:$0xff]
      %1193 = vrot.lane.b32.xlu0 %v1129, 16
      %v1194 = vpop.permute.xlu0 %1193
      %1195 = vrot.lane.b32.xlu0 %v1130, 16
      %v1196 = vpop.permute.xlu0 %1195
      %1197 = vrot.lane.b32.xlu0 %v1131, 16
      %v1198 = vpop.permute.xlu0 %1197
      %1199 = vrot.lane.b32.xlu0 %v1132, 16
      %v1200 = vpop.permute.xlu0 %1199
      %1201 = vrot.lane.b32.xlu0 %v1133, 16
      %v1202 = vpop.permute.xlu0 %1201
      %1203 = vrot.lane.b32.xlu0 %v1134, 16
      %v1204 = vpop.permute.xlu0 %1203
      %1205 = vrot.lane.b32.xlu0 %v1135, 16
      %v1206 = vpop.permute.xlu0 %1205
      %1207 = vrot.lane.b32.xlu0 %v1136, 16
      %v1208 = vpop.permute.xlu0 %1207
      %1209 = vrot.lane.b32.xlu0 %v1137, 16
      %v1210 = vpop.permute.xlu0 %1209
      %1211 = vrot.lane.b32.xlu0 %v1138, 16
      %v1212 = vpop.permute.xlu0 %1211
      %1213 = vrot.lane.b32.xlu0 %v1139, 16
      %v1214 = vpop.permute.xlu0 %1213
      %1215 = vrot.lane.b32.xlu0 %v1140, 16
      %v1216 = vpop.permute.xlu0 %1215
      %1217 = vrot.lane.b32.xlu0 %v1141, 16
      %v1218 = vpop.permute.xlu0 %1217
      %1219 = vrot.lane.b32.xlu0 %v1142, 16
      %v1220 = vpop.permute.xlu0 %1219
      %1221 = vrot.lane.b32.xlu0 %v1143, 16
      %v1222 = vpop.permute.xlu0 %1221
      %1223 = vrot.lane.b32.xlu0 %v1144, 16
      %v1224 = vpop.permute.xlu0 %1223
      %1225 = vrot.lane.b32.xlu0 %v1145, 16
      %v1226 = vpop.permute.xlu0 %1225
      %1227 = vrot.lane.b32.xlu0 %v1146, 16
      %v1228 = vpop.permute.xlu0 %1227
      %1229 = vrot.lane.b32.xlu0 %v1147, 16
      %v1230 = vpop.permute.xlu0 %1229
      %1231 = vrot.lane.b32.xlu0 %v1148, 16
      %v1232 = vpop.permute.xlu0 %1231
      %1233 = vrot.lane.b32.xlu0 %v1149, 16
      %v1234 = vpop.permute.xlu0 %1233
      %1235 = vrot.lane.b32.xlu0 %v1150, 16
      %v1236 = vpop.permute.xlu0 %1235
      %1237 = vrot.lane.b32.xlu0 %v1151, 16
      %v1238 = vpop.permute.xlu0 %1237
      %1239 = vrot.lane.b32.xlu0 %v1152, 16
      %v1240 = vpop.permute.xlu0 %1239
      %1241 = vrot.lane.b32.xlu0 %v1153, 16
      %v1242 = vpop.permute.xlu0 %1241
      %1243 = vrot.lane.b32.xlu0 %v1154, 16
      %v1244 = vpop.permute.xlu0 %1243
      %1245 = vrot.lane.b32.xlu0 %v1155, 16
      %v1246 = vpop.permute.xlu0 %1245
      %1247 = vrot.lane.b32.xlu0 %v1156, 16
      %v1248 = vpop.permute.xlu0 %1247
      %1249 = vrot.lane.b32.xlu0 %v1157, 16
      %v1250 = vpop.permute.xlu0 %1249
      %1251 = vrot.lane.b32.xlu0 %v1158, 16
      %v1252 = vpop.permute.xlu0 %1251
      %1253 = vrot.lane.b32.xlu0 %v1159, 16
      %v1254 = vpop.permute.xlu0 %1253
      %1255 = vrot.lane.b32.xlu0 %v1160, 16
      %v1256 = vpop.permute.xlu0 %1255
      %vm1289 = vcmask 162944
      %1290 = vst.msk [vmem:[#allocation3] sm:$0xff] %vm1289, %v1194
      %1291 = vst.msk [vmem:[#allocation3 + $0x8] sm:$0xff] %vm1289, %v1196
      %1292 = vst.msk [vmem:[#allocation3 + $0x10] sm:$0xff] %vm1289, %v1198
      %1293 = vst.msk [vmem:[#allocation3 + $0x18] sm:$0xff] %vm1289, %v1200
      %1294 = vst.msk [vmem:[#allocation3 + $0x20] sm:$0xff] %vm1289, %v1202
      %1295 = vst.msk [vmem:[#allocation3 + $0x28] sm:$0xff] %vm1289, %v1204
      %1296 = vst.msk [vmem:[#allocation3 + $0x30] sm:$0xff] %vm1289, %v1206
      %1297 = vst.msk [vmem:[#allocation3 + $0x38] sm:$0xff] %vm1289, %v1208
      %1298 = vst.msk [vmem:[#allocation3 + $0x40] sm:$0xff] %vm1289, %v1210
      %1299 = vst.msk [vmem:[#allocation3 + $0x48] sm:$0xff] %vm1289, %v1212
      %1300 = vst.msk [vmem:[#allocation3 + $0x50] sm:$0xff] %vm1289, %v1214
      %1301 = vst.msk [vmem:[#allocation3 + $0x58] sm:$0xff] %vm1289, %v1216
      %1302 = vst.msk [vmem:[#allocation3 + $0x60] sm:$0xff] %vm1289, %v1218
      %1303 = vst.msk [vmem:[#allocation3 + $0x68] sm:$0xff] %vm1289, %v1220
      %1304 = vst.msk [vmem:[#allocation3 + $0x70] sm:$0xff] %vm1289, %v1222
      %1305 = vst.msk [vmem:[#allocation3 + $0x78] sm:$0xff] %vm1289, %v1224
      %1306 = vst.msk [vmem:[#allocation3 + $0x80] sm:$0xff] %vm1289, %v1226
      %1307 = vst.msk [vmem:[#allocation3 + $0x88] sm:$0xff] %vm1289, %v1228
      %1308 = vst.msk [vmem:[#allocation3 + $0x90] sm:$0xff] %vm1289, %v1230
      %1309 = vst.msk [vmem:[#allocation3 + $0x98] sm:$0xff] %vm1289, %v1232
      %1310 = vst.msk [vmem:[#allocation3 + $0xa0] sm:$0xff] %vm1289, %v1234
      %1311 = vst.msk [vmem:[#allocation3 + $0xa8] sm:$0xff] %vm1289, %v1236
      %1312 = vst.msk [vmem:[#allocation3 + $0xb0] sm:$0xff] %vm1289, %v1238
      %1313 = vst.msk [vmem:[#allocation3 + $0xb8] sm:$0xff] %vm1289, %v1240
      %1314 = vst.msk [vmem:[#allocation3 + $0xc0] sm:$0xff] %vm1289, %v1242
      %1315 = vst.msk [vmem:[#allocation3 + $0xc8] sm:$0xff] %vm1289, %v1244
      %1316 = vst.msk [vmem:[#allocation3 + $0xd0] sm:$0xff] %vm1289, %v1246
      %1317 = vst.msk [vmem:[#allocation3 + $0xd8] sm:$0xff] %vm1289, %v1248
      %1318 = vst.msk [vmem:[#allocation3 + $0xe0] sm:$0xff] %vm1289, %v1250
      %1319 = vst.msk [vmem:[#allocation3 + $0xe8] sm:$0xff] %vm1289, %v1252
      %1320 = vst.msk [vmem:[#allocation3 + $0xf0] sm:$0xff] %vm1289, %v1254
      %1321 = vst.msk [vmem:[#allocation3 + $0xf8] sm:$0xff] %vm1289, %v1256
      %v1322 = vld [vmem:[%s411 + $0x2] sm:$0xff]
      %v1323 = vld [vmem:[%s411 + $0xa] sm:$0xff]
      %v1324 = vld [vmem:[%s411 + $0x1a] sm:$0xff]
      %v1325 = vld [vmem:[%s411 + $0x22] sm:$0xff]
      %v1326 = vld [vmem:[%s411 + $0x32] sm:$0xff]
      %v1327 = vld [vmem:[%s411 + $0x3a] sm:$0xff]
      %v1328 = vld [vmem:[%s411 + $0x4a] sm:$0xff]
      %v1329 = vld [vmem:[%s411 + $0x52] sm:$0xff]
      %v1330 = vld [vmem:[%s411 + $0x62] sm:$0xff]
      %v1331 = vld [vmem:[%s411 + $0x6a] sm:$0xff]
      %v1332 = vld [vmem:[%s411 + $0x7a] sm:$0xff]
      %v1333 = vld [vmem:[%s411 + $0x82] sm:$0xff]
      %v1334 = vld [vmem:[%s411 + $0x92] sm:$0xff]
      %v1335 = vld [vmem:[%s411 + $0x9a] sm:$0xff]
      %v1336 = vld [vmem:[%s411 + $0xaa] sm:$0xff]
      %v1337 = vld [vmem:[%s411 + $0xb2] sm:$0xff]
      %v1338 = vld [vmem:[%s411 + $0xc2] sm:$0xff]
      %v1339 = vld [vmem:[%s411 + $0xca] sm:$0xff]
      %v1340 = vld [vmem:[%s411 + $0xda] sm:$0xff]
      %v1341 = vld [vmem:[%s411 + $0xe2] sm:$0xff]
      %v1342 = vld [vmem:[%s411 + $0xf2] sm:$0xff]
      %v1343 = vld [vmem:[%s411 + $0xfa] sm:$0xff]
      %v1344 = vld [vmem:[%s411 + $0x10a] sm:$0xff]
      %v1345 = vld [vmem:[%s411 + $0x112] sm:$0xff]
      %v1346 = vld [vmem:[%s411 + $0x122] sm:$0xff]
      %v1347 = vld [vmem:[%s411 + $0x12a] sm:$0xff]
      %v1348 = vld [vmem:[%s411 + $0x13a] sm:$0xff]
      %v1349 = vld [vmem:[%s411 + $0x142] sm:$0xff]
      %v1350 = vld [vmem:[%s411 + $0x152] sm:$0xff]
      %v1351 = vld [vmem:[%s411 + $0x15a] sm:$0xff]
      %v1352 = vld [vmem:[%s411 + $0x16a] sm:$0xff]
      %v1353 = vld [vmem:[%s411 + $0x172] sm:$0xff]
      %1386 = vrot.lane.b32.xlu0 %v1322, 20
      %v1387 = vpop.permute.xlu0 %1386
      %1388 = vrot.lane.b32.xlu0 %v1323, 20
      %v1389 = vpop.permute.xlu0 %1388
      %1390 = vrot.lane.b32.xlu0 %v1324, 20
      %v1391 = vpop.permute.xlu0 %1390
      %1392 = vrot.lane.b32.xlu0 %v1325, 20
      %v1393 = vpop.permute.xlu0 %1392
      %1394 = vrot.lane.b32.xlu0 %v1326, 20
      %v1395 = vpop.permute.xlu0 %1394
      %1396 = vrot.lane.b32.xlu0 %v1327, 20
      %v1397 = vpop.permute.xlu0 %1396
      %1398 = vrot.lane.b32.xlu0 %v1328, 20
      %v1399 = vpop.permute.xlu0 %1398
      %1400 = vrot.lane.b32.xlu0 %v1329, 20
      %v1401 = vpop.permute.xlu0 %1400
      %1402 = vrot.lane.b32.xlu0 %v1330, 20
      %v1403 = vpop.permute.xlu0 %1402
      %1404 = vrot.lane.b32.xlu0 %v1331, 20
      %v1405 = vpop.permute.xlu0 %1404
      %1406 = vrot.lane.b32.xlu0 %v1332, 20
      %v1407 = vpop.permute.xlu0 %1406
      %1408 = vrot.lane.b32.xlu0 %v1333, 20
      %v1409 = vpop.permute.xlu0 %1408
      %1410 = vrot.lane.b32.xlu0 %v1334, 20
      %v1411 = vpop.permute.xlu0 %1410
      %1412 = vrot.lane.b32.xlu0 %v1335, 20
      %v1413 = vpop.permute.xlu0 %1412
      %1414 = vrot.lane.b32.xlu0 %v1336, 20
      %v1415 = vpop.permute.xlu0 %1414
      %1416 = vrot.lane.b32.xlu0 %v1337, 20
      %v1417 = vpop.permute.xlu0 %1416
      %1418 = vrot.lane.b32.xlu0 %v1338, 20
      %v1419 = vpop.permute.xlu0 %1418
      %1420 = vrot.lane.b32.xlu0 %v1339, 20
      %v1421 = vpop.permute.xlu0 %1420
      %1422 = vrot.lane.b32.xlu0 %v1340, 20
      %v1423 = vpop.permute.xlu0 %1422
      %1424 = vrot.lane.b32.xlu0 %v1341, 20
      %v1425 = vpop.permute.xlu0 %1424
      %1426 = vrot.lane.b32.xlu0 %v1342, 20
      %v1427 = vpop.permute.xlu0 %1426
      %1428 = vrot.lane.b32.xlu0 %v1343, 20
      %v1429 = vpop.permute.xlu0 %1428
      %1430 = vrot.lane.b32.xlu0 %v1344, 20
      %v1431 = vpop.permute.xlu0 %1430
      %1432 = vrot.lane.b32.xlu0 %v1345, 20
      %v1433 = vpop.permute.xlu0 %1432
      %1434 = vrot.lane.b32.xlu0 %v1346, 20
      %v1435 = vpop.permute.xlu0 %1434
      %1436 = vrot.lane.b32.xlu0 %v1347, 20
      %v1437 = vpop.permute.xlu0 %1436
      %1438 = vrot.lane.b32.xlu0 %v1348, 20
      %v1439 = vpop.permute.xlu0 %1438
      %1440 = vrot.lane.b32.xlu0 %v1349, 20
      %v1441 = vpop.permute.xlu0 %1440
      %1442 = vrot.lane.b32.xlu0 %v1350, 20
      %v1443 = vpop.permute.xlu0 %1442
      %1444 = vrot.lane.b32.xlu0 %v1351, 20
      %v1445 = vpop.permute.xlu0 %1444
      %1446 = vrot.lane.b32.xlu0 %v1352, 20
      %v1447 = vpop.permute.xlu0 %1446
      %1448 = vrot.lane.b32.xlu0 %v1353, 20
      %v1449 = vpop.permute.xlu0 %1448
      %vm1482 = vcmask 195744
      %1483 = vst.msk [vmem:[#allocation3] sm:$0xff] %vm1482, %v1387
      %1484 = vst.msk [vmem:[#allocation3 + $0x8] sm:$0xff] %vm1482, %v1389
      %1485 = vst.msk [vmem:[#allocation3 + $0x10] sm:$0xff] %vm1482, %v1391
      %1486 = vst.msk [vmem:[#allocation3 + $0x18] sm:$0xff] %vm1482, %v1393
      %1487 = vst.msk [vmem:[#allocation3 + $0x20] sm:$0xff] %vm1482, %v1395
      %1488 = vst.msk [vmem:[#allocation3 + $0x28] sm:$0xff] %vm1482, %v1397
      %1489 = vst.msk [vmem:[#allocation3 + $0x30] sm:$0xff] %vm1482, %v1399
      %1490 = vst.msk [vmem:[#allocation3 + $0x38] sm:$0xff] %vm1482, %v1401
      %1491 = vst.msk [vmem:[#allocation3 + $0x40] sm:$0xff] %vm1482, %v1403
      %1492 = vst.msk [vmem:[#allocation3 + $0x48] sm:$0xff] %vm1482, %v1405
      %1493 = vst.msk [vmem:[#allocation3 + $0x50] sm:$0xff] %vm1482, %v1407
      %1494 = vst.msk [vmem:[#allocation3 + $0x58] sm:$0xff] %vm1482, %v1409
      %1495 = vst.msk [vmem:[#allocation3 + $0x60] sm:$0xff] %vm1482, %v1411
      %1496 = vst.msk [vmem:[#allocation3 + $0x68] sm:$0xff] %vm1482, %v1413
      %1497 = vst.msk [vmem:[#allocation3 + $0x70] sm:$0xff] %vm1482, %v1415
      %1498 = vst.msk [vmem:[#allocation3 + $0x78] sm:$0xff] %vm1482, %v1417
      %1499 = vst.msk [vmem:[#allocation3 + $0x80] sm:$0xff] %vm1482, %v1419
      %1500 = vst.msk [vmem:[#allocation3 + $0x88] sm:$0xff] %vm1482, %v1421
      %1501 = vst.msk [vmem:[#allocation3 + $0x90] sm:$0xff] %vm1482, %v1423
      %1502 = vst.msk [vmem:[#allocation3 + $0x98] sm:$0xff] %vm1482, %v1425
      %1503 = vst.msk [vmem:[#allocation3 + $0xa0] sm:$0xff] %vm1482, %v1427
      %1504 = vst.msk [vmem:[#allocation3 + $0xa8] sm:$0xff] %vm1482, %v1429
      %1505 = vst.msk [vmem:[#allocation3 + $0xb0] sm:$0xff] %vm1482, %v1431
      %1506 = vst.msk [vmem:[#allocation3 + $0xb8] sm:$0xff] %vm1482, %v1433
      %1507 = vst.msk [vmem:[#allocation3 + $0xc0] sm:$0xff] %vm1482, %v1435
      %1508 = vst.msk [vmem:[#allocation3 + $0xc8] sm:$0xff] %vm1482, %v1437
      %1509 = vst.msk [vmem:[#allocation3 + $0xd0] sm:$0xff] %vm1482, %v1439
      %1510 = vst.msk [vmem:[#allocation3 + $0xd8] sm:$0xff] %vm1482, %v1441
      %1511 = vst.msk [vmem:[#allocation3 + $0xe0] sm:$0xff] %vm1482, %v1443
      %1512 = vst.msk [vmem:[#allocation3 + $0xe8] sm:$0xff] %vm1482, %v1445
      %1513 = vst.msk [vmem:[#allocation3 + $0xf0] sm:$0xff] %vm1482, %v1447
      %1514 = vst.msk [vmem:[#allocation3 + $0xf8] sm:$0xff] %vm1482, %v1449
      %s1515 = scalar_lea.vmem [#allocation2], 48
      %v1516 = vld [vmem:[%s1515] sm:$0xff]
      %v1517 = vld [vmem:[%s1515 + $0x8] sm:$0xff]
      %v1518 = vld [vmem:[%s1515 + $0x18] sm:$0xff]
      %v1519 = vld [vmem:[%s1515 + $0x20] sm:$0xff]
      %v1520 = vld [vmem:[%s1515 + $0x30] sm:$0xff]
      %v1521 = vld [vmem:[%s1515 + $0x38] sm:$0xff]
      %v1522 = vld [vmem:[%s1515 + $0x48] sm:$0xff]
      %v1523 = vld [vmem:[%s1515 + $0x50] sm:$0xff]
      %v1524 = vld [vmem:[%s1515 + $0x60] sm:$0xff]
      %v1525 = vld [vmem:[%s1515 + $0x68] sm:$0xff]
      %v1526 = vld [vmem:[%s1515 + $0x78] sm:$0xff]
      %v1527 = vld [vmem:[%s1515 + $0x80] sm:$0xff]
      %v1528 = vld [vmem:[%s1515 + $0x90] sm:$0xff]
      %v1529 = vld [vmem:[%s1515 + $0x98] sm:$0xff]
      %v1530 = vld [vmem:[%s1515 + $0xa8] sm:$0xff]
      %v1531 = vld [vmem:[%s1515 + $0xb0] sm:$0xff]
      %v1532 = vld [vmem:[%s1515 + $0xc0] sm:$0xff]
      %v1533 = vld [vmem:[%s1515 + $0xc8] sm:$0xff]
      %v1534 = vld [vmem:[%s1515 + $0xd8] sm:$0xff]
      %v1535 = vld [vmem:[%s1515 + $0xe0] sm:$0xff]
      %v1536 = vld [vmem:[%s1515 + $0xf0] sm:$0xff]
      %v1537 = vld [vmem:[%s1515 + $0xf8] sm:$0xff]
      %v1538 = vld [vmem:[%s1515 + $0x108] sm:$0xff]
      %v1539 = vld [vmem:[%s1515 + $0x110] sm:$0xff]
      %v1540 = vld [vmem:[%s1515 + $0x120] sm:$0xff]
      %v1541 = vld [vmem:[%s1515 + $0x128] sm:$0xff]
      %v1542 = vld [vmem:[%s1515 + $0x138] sm:$0xff]
      %v1543 = vld [vmem:[%s1515 + $0x140] sm:$0xff]
      %v1544 = vld [vmem:[%s1515 + $0x150] sm:$0xff]
      %v1545 = vld [vmem:[%s1515 + $0x158] sm:$0xff]
      %v1546 = vld [vmem:[%s1515 + $0x168] sm:$0xff]
      %v1547 = vld [vmem:[%s1515 + $0x170] sm:$0xff]
      %1580 = vrot.lane.b32.xlu0 %v1516, 24
      %v1581 = vpop.permute.xlu0 %1580
      %1582 = vrot.lane.b32.xlu0 %v1517, 24
      %v1583 = vpop.permute.xlu0 %1582
      %1584 = vrot.lane.b32.xlu0 %v1518, 24
      %v1585 = vpop.permute.xlu0 %1584
      %1586 = vrot.lane.b32.xlu0 %v1519, 24
      %v1587 = vpop.permute.xlu0 %1586
      %1588 = vrot.lane.b32.xlu0 %v1520, 24
      %v1589 = vpop.permute.xlu0 %1588
      %1590 = vrot.lane.b32.xlu0 %v1521, 24
      %v1591 = vpop.permute.xlu0 %1590
      %1592 = vrot.lane.b32.xlu0 %v1522, 24
      %v1593 = vpop.permute.xlu0 %1592
      %1594 = vrot.lane.b32.xlu0 %v1523, 24
      %v1595 = vpop.permute.xlu0 %1594
      %1596 = vrot.lane.b32.xlu0 %v1524, 24
      %v1597 = vpop.permute.xlu0 %1596
      %1598 = vrot.lane.b32.xlu0 %v1525, 24
      %v1599 = vpop.permute.xlu0 %1598
      %1600 = vrot.lane.b32.xlu0 %v1526, 24
      %v1601 = vpop.permute.xlu0 %1600
      %1602 = vrot.lane.b32.xlu0 %v1527, 24
      %v1603 = vpop.permute.xlu0 %1602
      %1604 = vrot.lane.b32.xlu0 %v1528, 24
      %v1605 = vpop.permute.xlu0 %1604
      %1606 = vrot.lane.b32.xlu0 %v1529, 24
      %v1607 = vpop.permute.xlu0 %1606
      %1608 = vrot.lane.b32.xlu0 %v1530, 24
      %v1609 = vpop.permute.xlu0 %1608
      %1610 = vrot.lane.b32.xlu0 %v1531, 24
      %v1611 = vpop.permute.xlu0 %1610
      %1612 = vrot.lane.b32.xlu0 %v1532, 24
      %v1613 = vpop.permute.xlu0 %1612
      %1614 = vrot.lane.b32.xlu0 %v1533, 24
      %v1615 = vpop.permute.xlu0 %1614
      %1616 = vrot.lane.b32.xlu0 %v1534, 24
      %v1617 = vpop.permute.xlu0 %1616
      %1618 = vrot.lane.b32.xlu0 %v1535, 24
      %v1619 = vpop.permute.xlu0 %1618
      %1620 = vrot.lane.b32.xlu0 %v1536, 24
      %v1621 = vpop.permute.xlu0 %1620
      %1622 = vrot.lane.b32.xlu0 %v1537, 24
      %v1623 = vpop.permute.xlu0 %1622
      %1624 = vrot.lane.b32.xlu0 %v1538, 24
      %v1625 = vpop.permute.xlu0 %1624
      %1626 = vrot.lane.b32.xlu0 %v1539, 24
      %v1627 = vpop.permute.xlu0 %1626
      %1628 = vrot.lane.b32.xlu0 %v1540, 24
      %v1629 = vpop.permute.xlu0 %1628
      %1630 = vrot.lane.b32.xlu0 %v1541, 24
      %v1631 = vpop.permute.xlu0 %1630
      %1632 = vrot.lane.b32.xlu0 %v1542, 24
      %v1633 = vpop.permute.xlu0 %1632
      %1634 = vrot.lane.b32.xlu0 %v1543, 24
      %v1635 = vpop.permute.xlu0 %1634
      %1636 = vrot.lane.b32.xlu0 %v1544, 24
      %v1637 = vpop.permute.xlu0 %1636
      %1638 = vrot.lane.b32.xlu0 %v1545, 24
      %v1639 = vpop.permute.xlu0 %1638
      %1640 = vrot.lane.b32.xlu0 %v1546, 24
      %v1641 = vpop.permute.xlu0 %1640
      %1642 = vrot.lane.b32.xlu0 %v1547, 24
      %v1643 = vpop.permute.xlu0 %1642
      %vm1676 = vcmask 228544
      %1677 = vst.msk [vmem:[#allocation3] sm:$0xff] %vm1676, %v1581
      %1678 = vst.msk [vmem:[#allocation3 + $0x8] sm:$0xff] %vm1676, %v1583
      %1679 = vst.msk [vmem:[#allocation3 + $0x10] sm:$0xff] %vm1676, %v1585
      %1680 = vst.msk [vmem:[#allocation3 + $0x18] sm:$0xff] %vm1676, %v1587
      %1681 = vst.msk [vmem:[#allocation3 + $0x20] sm:$0xff] %vm1676, %v1589
      %1682 = vst.msk [vmem:[#allocation3 + $0x28] sm:$0xff] %vm1676, %v1591
      %1683 = vst.msk [vmem:[#allocation3 + $0x30] sm:$0xff] %vm1676, %v1593
      %1684 = vst.msk [vmem:[#allocation3 + $0x38] sm:$0xff] %vm1676, %v1595
      %1685 = vst.msk [vmem:[#allocation3 + $0x40] sm:$0xff] %vm1676, %v1597
      %1686 = vst.msk [vmem:[#allocation3 + $0x48] sm:$0xff] %vm1676, %v1599
      %1687 = vst.msk [vmem:[#allocation3 + $0x50] sm:$0xff] %vm1676, %v1601
      %1688 = vst.msk [vmem:[#allocation3 + $0x58] sm:$0xff] %vm1676, %v1603
      %1689 = vst.msk [vmem:[#allocation3 + $0x60] sm:$0xff] %vm1676, %v1605
      %1690 = vst.msk [vmem:[#allocation3 + $0x68] sm:$0xff] %vm1676, %v1607
      %1691 = vst.msk [vmem:[#allocation3 + $0x70] sm:$0xff] %vm1676, %v1609
      %1692 = vst.msk [vmem:[#allocation3 + $0x78] sm:$0xff] %vm1676, %v1611
      %1693 = vst.msk [vmem:[#allocation3 + $0x80] sm:$0xff] %vm1676, %v1613
      %1694 = vst.msk [vmem:[#allocation3 + $0x88] sm:$0xff] %vm1676, %v1615
      %1695 = vst.msk [vmem:[#allocation3 + $0x90] sm:$0xff] %vm1676, %v1617
      %1696 = vst.msk [vmem:[#allocation3 + $0x98] sm:$0xff] %vm1676, %v1619
      %1697 = vst.msk [vmem:[#allocation3 + $0xa0] sm:$0xff] %vm1676, %v1621
      %1698 = vst.msk [vmem:[#allocation3 + $0xa8] sm:$0xff] %vm1676, %v1623
      %1699 = vst.msk [vmem:[#allocation3 + $0xb0] sm:$0xff] %vm1676, %v1625
      %1700 = vst.msk [vmem:[#allocation3 + $0xb8] sm:$0xff] %vm1676, %v1627
      %1701 = vst.msk [vmem:[#allocation3 + $0xc0] sm:$0xff] %vm1676, %v1629
      %1702 = vst.msk [vmem:[#allocation3 + $0xc8] sm:$0xff] %vm1676, %v1631
      %1703 = vst.msk [vmem:[#allocation3 + $0xd0] sm:$0xff] %vm1676, %v1633
      %1704 = vst.msk [vmem:[#allocation3 + $0xd8] sm:$0xff] %vm1676, %v1635
      %1705 = vst.msk [vmem:[#allocation3 + $0xe0] sm:$0xff] %vm1676, %v1637
      %1706 = vst.msk [vmem:[#allocation3 + $0xe8] sm:$0xff] %vm1676, %v1639
      %1707 = vst.msk [vmem:[#allocation3 + $0xf0] sm:$0xff] %vm1676, %v1641
      %1708 = vst.msk [vmem:[#allocation3 + $0xf8] sm:$0xff] %vm1676, %v1643
      %v1709 = vld [vmem:[%s1515 + $0x1] sm:$0xff]
      %v1710 = vld [vmem:[%s1515 + $0x9] sm:$0xff]
      %v1711 = vld [vmem:[%s1515 + $0x19] sm:$0xff]
      %v1712 = vld [vmem:[%s1515 + $0x21] sm:$0xff]
      %v1713 = vld [vmem:[%s1515 + $0x31] sm:$0xff]
      %v1714 = vld [vmem:[%s1515 + $0x39] sm:$0xff]
      %v1715 = vld [vmem:[%s1515 + $0x49] sm:$0xff]
      %v1716 = vld [vmem:[%s1515 + $0x51] sm:$0xff]
      %v1717 = vld [vmem:[%s1515 + $0x61] sm:$0xff]
      %v1718 = vld [vmem:[%s1515 + $0x69] sm:$0xff]
      %v1719 = vld [vmem:[%s1515 + $0x79] sm:$0xff]
      %v1720 = vld [vmem:[%s1515 + $0x81] sm:$0xff]
      %v1721 = vld [vmem:[%s1515 + $0x91] sm:$0xff]
      %v1722 = vld [vmem:[%s1515 + $0x99] sm:$0xff]
      %v1723 = vld [vmem:[%s1515 + $0xa9] sm:$0xff]
      %v1724 = vld [vmem:[%s1515 + $0xb1] sm:$0xff]
      %v1725 = vld [vmem:[%s1515 + $0xc1] sm:$0xff]
      %v1726 = vld [vmem:[%s1515 + $0xc9] sm:$0xff]
      %v1727 = vld [vmem:[%s1515 + $0xd9] sm:$0xff]
      %v1728 = vld [vmem:[%s1515 + $0xe1] sm:$0xff]
      %v1729 = vld [vmem:[%s1515 + $0xf1] sm:$0xff]
      %v1730 = vld [vmem:[%s1515 + $0xf9] sm:$0xff]
      %v1731 = vld [vmem:[%s1515 + $0x109] sm:$0xff]
      %v1732 = vld [vmem:[%s1515 + $0x111] sm:$0xff]
      %v1733 = vld [vmem:[%s1515 + $0x121] sm:$0xff]
      %v1734 = vld [vmem:[%s1515 + $0x129] sm:$0xff]
      %v1735 = vld [vmem:[%s1515 + $0x139] sm:$0xff]
      %v1736 = vld [vmem:[%s1515 + $0x141] sm:$0xff]
      %v1737 = vld [vmem:[%s1515 + $0x151] sm:$0xff]
      %v1738 = vld [vmem:[%s1515 + $0x159] sm:$0xff]
      %v1739 = vld [vmem:[%s1515 + $0x169] sm:$0xff]
      %v1740 = vld [vmem:[%s1515 + $0x171] sm:$0xff]
      %1773 = vrot.lane.b32.xlu0 %v1709, 28
      %v1774 = vpop.permute.xlu0 %1773
      %1775 = vrot.lane.b32.xlu0 %v1710, 28
      %v1776 = vpop.permute.xlu0 %1775
      %1777 = vrot.lane.b32.xlu0 %v1711, 28
      %v1778 = vpop.permute.xlu0 %1777
      %1779 = vrot.lane.b32.xlu0 %v1712, 28
      %v1780 = vpop.permute.xlu0 %1779
      %1781 = vrot.lane.b32.xlu0 %v1713, 28
      %v1782 = vpop.permute.xlu0 %1781
      %1783 = vrot.lane.b32.xlu0 %v1714, 28
      %v1784 = vpop.permute.xlu0 %1783
      %1785 = vrot.lane.b32.xlu0 %v1715, 28
      %v1786 = vpop.permute.xlu0 %1785
      %1787 = vrot.lane.b32.xlu0 %v1716, 28
      %v1788 = vpop.permute.xlu0 %1787
      %1789 = vrot.lane.b32.xlu0 %v1717, 28
      %v1790 = vpop.permute.xlu0 %1789
      %1791 = vrot.lane.b32.xlu0 %v1718, 28
      %v1792 = vpop.permute.xlu0 %1791
      %1793 = vrot.lane.b32.xlu0 %v1719, 28
      %v1794 = vpop.permute.xlu0 %1793
      %1795 = vrot.lane.b32.xlu0 %v1720, 28
      %v1796 = vpop.permute.xlu0 %1795
      %1797 = vrot.lane.b32.xlu0 %v1721, 28
      %v1798 = vpop.permute.xlu0 %1797
      %1799 = vrot.lane.b32.xlu0 %v1722, 28
      %v1800 = vpop.permute.xlu0 %1799
      %1801 = vrot.lane.b32.xlu0 %v1723, 28
      %v1802 = vpop.permute.xlu0 %1801
      %1803 = vrot.lane.b32.xlu0 %v1724, 28
      %v1804 = vpop.permute.xlu0 %1803
      %1805 = vrot.lane.b32.xlu0 %v1725, 28
      %v1806 = vpop.permute.xlu0 %1805
      %1807 = vrot.lane.b32.xlu0 %v1726, 28
      %v1808 = vpop.permute.xlu0 %1807
      %1809 = vrot.lane.b32.xlu0 %v1727, 28
      %v1810 = vpop.permute.xlu0 %1809
      %1811 = vrot.lane.b32.xlu0 %v1728, 28
      %v1812 = vpop.permute.xlu0 %1811
      %1813 = vrot.lane.b32.xlu0 %v1729, 28
      %v1814 = vpop.permute.xlu0 %1813
      %1815 = vrot.lane.b32.xlu0 %v1730, 28
      %v1816 = vpop.permute.xlu0 %1815
      %1817 = vrot.lane.b32.xlu0 %v1731, 28
      %v1818 = vpop.permute.xlu0 %1817
      %1819 = vrot.lane.b32.xlu0 %v1732, 28
      %v1820 = vpop.permute.xlu0 %1819
      %1821 = vrot.lane.b32.xlu0 %v1733, 28
      %v1822 = vpop.permute.xlu0 %1821
      %1823 = vrot.lane.b32.xlu0 %v1734, 28
      %v1824 = vpop.permute.xlu0 %1823
      %1825 = vrot.lane.b32.xlu0 %v1735, 28
      %v1826 = vpop.permute.xlu0 %1825
      %1827 = vrot.lane.b32.xlu0 %v1736, 28
      %v1828 = vpop.permute.xlu0 %1827
      %1829 = vrot.lane.b32.xlu0 %v1737, 28
      %v1830 = vpop.permute.xlu0 %1829
      %1831 = vrot.lane.b32.xlu0 %v1738, 28
      %v1832 = vpop.permute.xlu0 %1831
      %1833 = vrot.lane.b32.xlu0 %v1739, 28
      %v1834 = vpop.permute.xlu0 %1833
      %1835 = vrot.lane.b32.xlu0 %v1740, 28
      %v1836 = vpop.permute.xlu0 %1835
      %vm1869 = vcmask 261344
      %1870 = vst.msk [vmem:[#allocation3] sm:$0xff] %vm1869, %v1774
      %1871 = vst.msk [vmem:[#allocation3 + $0x8] sm:$0xff] %vm1869, %v1776
      %1872 = vst.msk [vmem:[#allocation3 + $0x10] sm:$0xff] %vm1869, %v1778
      %1873 = vst.msk [vmem:[#allocation3 + $0x18] sm:$0xff] %vm1869, %v1780
      %1874 = vst.msk [vmem:[#allocation3 + $0x20] sm:$0xff] %vm1869, %v1782
      %1875 = vst.msk [vmem:[#allocation3 + $0x28] sm:$0xff] %vm1869, %v1784
      %1876 = vst.msk [vmem:[#allocation3 + $0x30] sm:$0xff] %vm1869, %v1786
      %1877 = vst.msk [vmem:[#allocation3 + $0x38] sm:$0xff] %vm1869, %v1788
      %1878 = vst.msk [vmem:[#allocation3 + $0x40] sm:$0xff] %vm1869, %v1790
      %1879 = vst.msk [vmem:[#allocation3 + $0x48] sm:$0xff] %vm1869, %v1792
      %1880 = vst.msk [vmem:[#allocation3 + $0x50] sm:$0xff] %vm1869, %v1794
      %1881 = vst.msk [vmem:[#allocation3 + $0x58] sm:$0xff] %vm1869, %v1796
      %1882 = vst.msk [vmem:[#allocation3 + $0x60] sm:$0xff] %vm1869, %v1798
      %1883 = vst.msk [vmem:[#allocation3 + $0x68] sm:$0xff] %vm1869, %v1800
      %1884 = vst.msk [vmem:[#allocation3 + $0x70] sm:$0xff] %vm1869, %v1802
      %1885 = vst.msk [vmem:[#allocation3 + $0x78] sm:$0xff] %vm1869, %v1804
      %1886 = vst.msk [vmem:[#allocation3 + $0x80] sm:$0xff] %vm1869, %v1806
      %1887 = vst.msk [vmem:[#allocation3 + $0x88] sm:$0xff] %vm1869, %v1808
      %1888 = vst.msk [vmem:[#allocation3 + $0x90] sm:$0xff] %vm1869, %v1810
      %1889 = vst.msk [vmem:[#allocation3 + $0x98] sm:$0xff] %vm1869, %v1812
      %1890 = vst.msk [vmem:[#allocation3 + $0xa0] sm:$0xff] %vm1869, %v1814
      %1891 = vst.msk [vmem:[#allocation3 + $0xa8] sm:$0xff] %vm1869, %v1816
      %1892 = vst.msk [vmem:[#allocation3 + $0xb0] sm:$0xff] %vm1869, %v1818
      %1893 = vst.msk [vmem:[#allocation3 + $0xb8] sm:$0xff] %vm1869, %v1820
      %1894 = vst.msk [vmem:[#allocation3 + $0xc0] sm:$0xff] %vm1869, %v1822
      %1895 = vst.msk [vmem:[#allocation3 + $0xc8] sm:$0xff] %vm1869, %v1824
      %1896 = vst.msk [vmem:[#allocation3 + $0xd0] sm:$0xff] %vm1869, %v1826
      %1897 = vst.msk [vmem:[#allocation3 + $0xd8] sm:$0xff] %vm1869, %v1828
      %1898 = vst.msk [vmem:[#allocation3 + $0xe0] sm:$0xff] %vm1869, %v1830
      %1899 = vst.msk [vmem:[#allocation3 + $0xe8] sm:$0xff] %vm1869, %v1832
      %1900 = vst.msk [vmem:[#allocation3 + $0xf0] sm:$0xff] %vm1869, %v1834
      %1901 = vst.msk [vmem:[#allocation3 + $0xf8] sm:$0xff] %vm1869, %v1836
      %v1902 = vld [vmem:[%s1515 + $0x2] sm:$0xff]
      %v1903 = vld [vmem:[%s1515 + $0xa] sm:$0xff]
      %v1904 = vld [vmem:[%s1515 + $0x1a] sm:$0xff]
      %v1905 = vld [vmem:[%s1515 + $0x22] sm:$0xff]
      %v1906 = vld [vmem:[%s1515 + $0x32] sm:$0xff]
      %v1907 = vld [vmem:[%s1515 + $0x3a] sm:$0xff]
      %v1908 = vld [vmem:[%s1515 + $0x4a] sm:$0xff]
      %v1909 = vld [vmem:[%s1515 + $0x52] sm:$0xff]
      %v1910 = vld [vmem:[%s1515 + $0x62] sm:$0xff]
      %v1911 = vld [vmem:[%s1515 + $0x6a] sm:$0xff]
      %v1912 = vld [vmem:[%s1515 + $0x7a] sm:$0xff]
      %v1913 = vld [vmem:[%s1515 + $0x82] sm:$0xff]
      %v1914 = vld [vmem:[%s1515 + $0x92] sm:$0xff]
      %v1915 = vld [vmem:[%s1515 + $0x9a] sm:$0xff]
      %v1916 = vld [vmem:[%s1515 + $0xaa] sm:$0xff]
      %v1917 = vld [vmem:[%s1515 + $0xb2] sm:$0xff]
      %v1918 = vld [vmem:[%s1515 + $0xc2] sm:$0xff]
      %v1919 = vld [vmem:[%s1515 + $0xca] sm:$0xff]
      %v1920 = vld [vmem:[%s1515 + $0xda] sm:$0xff]
      %v1921 = vld [vmem:[%s1515 + $0xe2] sm:$0xff]
      %v1922 = vld [vmem:[%s1515 + $0xf2] sm:$0xff]
      %v1923 = vld [vmem:[%s1515 + $0xfa] sm:$0xff]
      %v1924 = vld [vmem:[%s1515 + $0x10a] sm:$0xff]
      %v1925 = vld [vmem:[%s1515 + $0x112] sm:$0xff]
      %v1926 = vld [vmem:[%s1515 + $0x122] sm:$0xff]
      %v1927 = vld [vmem:[%s1515 + $0x12a] sm:$0xff]
      %v1928 = vld [vmem:[%s1515 + $0x13a] sm:$0xff]
      %v1929 = vld [vmem:[%s1515 + $0x142] sm:$0xff]
      %v1930 = vld [vmem:[%s1515 + $0x152] sm:$0xff]
      %v1931 = vld [vmem:[%s1515 + $0x15a] sm:$0xff]
      %v1932 = vld [vmem:[%s1515 + $0x16a] sm:$0xff]
      %v1933 = vld [vmem:[%s1515 + $0x172] sm:$0xff]
      %1966 = vrot.lane.b32.xlu0 %v1902, 32
      %v1967 = vpop.permute.xlu0 %1966
      %1968 = vrot.lane.b32.xlu0 %v1903, 32
      %v1969 = vpop.permute.xlu0 %1968
      %1970 = vrot.lane.b32.xlu0 %v1904, 32
      %v1971 = vpop.permute.xlu0 %1970
      %1972 = vrot.lane.b32.xlu0 %v1905, 32
      %v1973 = vpop.permute.xlu0 %1972
      %1974 = vrot.lane.b32.xlu0 %v1906, 32
      %v1975 = vpop.permute.xlu0 %1974
      %1976 = vrot.lane.b32.xlu0 %v1907, 32
      %v1977 = vpop.permute.xlu0 %1976
      %1978 = vrot.lane.b32.xlu0 %v1908, 32
      %v1979 = vpop.permute.xlu0 %1978
      %1980 = vrot.lane.b32.xlu0 %v1909, 32
      %v1981 = vpop.permute.xlu0 %1980
      %1982 = vrot.lane.b32.xlu0 %v1910, 32
      %v1983 = vpop.permute.xlu0 %1982
      %1984 = vrot.lane.b32.xlu0 %v1911, 32
      %v1985 = vpop.permute.xlu0 %1984
      %1986 = vrot.lane.b32.xlu0 %v1912, 32
      %v1987 = vpop.permute.xlu0 %1986
      %1988 = vrot.lane.b32.xlu0 %v1913, 32
      %v1989 = vpop.permute.xlu0 %1988
      %1990 = vrot.lane.b32.xlu0 %v1914, 32
      %v1991 = vpop.permute.xlu0 %1990
      %1992 = vrot.lane.b32.xlu0 %v1915, 32
      %v1993 = vpop.permute.xlu0 %1992
      %1994 = vrot.lane.b32.xlu0 %v1916, 32
      %v1995 = vpop.permute.xlu0 %1994
      %1996 = vrot.lane.b32.xlu0 %v1917, 32
      %v1997 = vpop.permute.xlu0 %1996
      %1998 = vrot.lane.b32.xlu0 %v1918, 32
      %v1999 = vpop.permute.xlu0 %1998
      %2000 = vrot.lane.b32.xlu0 %v1919, 32
      %v2001 = vpop.permute.xlu0 %2000
      %2002 = vrot.lane.b32.xlu0 %v1920, 32
      %v2003 = vpop.permute.xlu0 %2002
      %2004 = vrot.lane.b32.xlu0 %v1921, 32
      %v2005 = vpop.permute.xlu0 %2004
      %2006 = vrot.lane.b32.xlu0 %v1922, 32
      %v2007 = vpop.permute.xlu0 %2006
      %2008 = vrot.lane.b32.xlu0 %v1923, 32
      %v2009 = vpop.permute.xlu0 %2008
      %2010 = vrot.lane.b32.xlu0 %v1924, 32
      %v2011 = vpop.permute.xlu0 %2010
      %2012 = vrot.lane.b32.xlu0 %v1925, 32
      %v2013 = vpop.permute.xlu0 %2012
      %2014 = vrot.lane.b32.xlu0 %v1926, 32
      %v2015 = vpop.permute.xlu0 %2014
      %2016 = vrot.lane.b32.xlu0 %v1927, 32
      %v2017 = vpop.permute.xlu0 %2016
      %2018 = vrot.lane.b32.xlu0 %v1928, 32
      %v2019 = vpop.permute.xlu0 %2018
      %2020 = vrot.lane.b32.xlu0 %v1929, 32
      %v2021 = vpop.permute.xlu0 %2020
      %2022 = vrot.lane.b32.xlu0 %v1930, 32
      %v2023 = vpop.permute.xlu0 %2022
      %2024 = vrot.lane.b32.xlu0 %v1931, 32
      %v2025 = vpop.permute.xlu0 %2024
      %2026 = vrot.lane.b32.xlu0 %v1932, 32
      %v2027 = vpop.permute.xlu0 %2026
      %2028 = vrot.lane.b32.xlu0 %v1933, 32
      %v2029 = vpop.permute.xlu0 %2028
      %vm2062 = vcmask 294144
      %2063 = vst.msk [vmem:[#allocation3] sm:$0xff] %vm2062, %v1967
      %2064 = vst.msk [vmem:[#allocation3 + $0x8] sm:$0xff] %vm2062, %v1969
      %2065 = vst.msk [vmem:[#allocation3 + $0x10] sm:$0xff] %vm2062, %v1971
      %2066 = vst.msk [vmem:[#allocation3 + $0x18] sm:$0xff] %vm2062, %v1973
      %2067 = vst.msk [vmem:[#allocation3 + $0x20] sm:$0xff] %vm2062, %v1975
      %2068 = vst.msk [vmem:[#allocation3 + $0x28] sm:$0xff] %vm2062, %v1977
      %2069 = vst.msk [vmem:[#allocation3 + $0x30] sm:$0xff] %vm2062, %v1979
      %2070 = vst.msk [vmem:[#allocation3 + $0x38] sm:$0xff] %vm2062, %v1981
      %2071 = vst.msk [vmem:[#allocation3 + $0x40] sm:$0xff] %vm2062, %v1983
      %2072 = vst.msk [vmem:[#allocation3 + $0x48] sm:$0xff] %vm2062, %v1985
      %2073 = vst.msk [vmem:[#allocation3 + $0x50] sm:$0xff] %vm2062, %v1987
      %2074 = vst.msk [vmem:[#allocation3 + $0x58] sm:$0xff] %vm2062, %v1989
      %2075 = vst.msk [vmem:[#allocation3 + $0x60] sm:$0xff] %vm2062, %v1991
      %2076 = vst.msk [vmem:[#allocation3 + $0x68] sm:$0xff] %vm2062, %v1993
      %2077 = vst.msk [vmem:[#allocation3 + $0x70] sm:$0xff] %vm2062, %v1995
      %2078 = vst.msk [vmem:[#allocation3 + $0x78] sm:$0xff] %vm2062, %v1997
      %2079 = vst.msk [vmem:[#allocation3 + $0x80] sm:$0xff] %vm2062, %v1999
      %2080 = vst.msk [vmem:[#allocation3 + $0x88] sm:$0xff] %vm2062, %v2001
      %2081 = vst.msk [vmem:[#allocation3 + $0x90] sm:$0xff] %vm2062, %v2003
      %2082 = vst.msk [vmem:[#allocation3 + $0x98] sm:$0xff] %vm2062, %v2005
      %2083 = vst.msk [vmem:[#allocation3 + $0xa0] sm:$0xff] %vm2062, %v2007
      %2084 = vst.msk [vmem:[#allocation3 + $0xa8] sm:$0xff] %vm2062, %v2009
      %2085 = vst.msk [vmem:[#allocation3 + $0xb0] sm:$0xff] %vm2062, %v2011
      %2086 = vst.msk [vmem:[#allocation3 + $0xb8] sm:$0xff] %vm2062, %v2013
      %2087 = vst.msk [vmem:[#allocation3 + $0xc0] sm:$0xff] %vm2062, %v2015
      %2088 = vst.msk [vmem:[#allocation3 + $0xc8] sm:$0xff] %vm2062, %v2017
      %2089 = vst.msk [vmem:[#allocation3 + $0xd0] sm:$0xff] %vm2062, %v2019
      %2090 = vst.msk [vmem:[#allocation3 + $0xd8] sm:$0xff] %vm2062, %v2021
      %2091 = vst.msk [vmem:[#allocation3 + $0xe0] sm:$0xff] %vm2062, %v2023
      %2092 = vst.msk [vmem:[#allocation3 + $0xe8] sm:$0xff] %vm2062, %v2025
      %2093 = vst.msk [vmem:[#allocation3 + $0xf0] sm:$0xff] %vm2062, %v2027
      %2094 = vst.msk [vmem:[#allocation3 + $0xf8] sm:$0xff] %vm2062, %v2029
      %v2095 = vld [vmem:[#allocation3] sm:$0xff]
      %v2096 = vld [vmem:[#allocation3 + $0x8] sm:$0xff]
      %v2097 = vld [vmem:[#allocation3 + $0x10] sm:$0xff]
      %v2098 = vld [vmem:[#allocation3 + $0x18] sm:$0xff]
      %v2099 = vld [vmem:[#allocation3 + $0x20] sm:$0xff]
      %v2100 = vld [vmem:[#allocation3 + $0x28] sm:$0xff]
      %v2101 = vld [vmem:[#allocation3 + $0x30] sm:$0xff]
      %v2102 = vld [vmem:[#allocation3 + $0x38] sm:$0xff]
      %v2103 = vld [vmem:[#allocation3 + $0x40] sm:$0xff]
      %v2104 = vld [vmem:[#allocation3 + $0x48] sm:$0xff]
      %v2105 = vld [vmem:[#allocation3 + $0x50] sm:$0xff]
      %v2106 = vld [vmem:[#allocation3 + $0x58] sm:$0xff]
      %v2107 = vld [vmem:[#allocation3 + $0x60] sm:$0xff]
      %v2108 = vld [vmem:[#allocation3 + $0x68] sm:$0xff]
      %v2109 = vld [vmem:[#allocation3 + $0x70] sm:$0xff]
      %v2110 = vld [vmem:[#allocation3 + $0x78] sm:$0xff]
      %v2111 = vld [vmem:[#allocation3 + $0x80] sm:$0xff]
      %v2112 = vld [vmem:[#allocation3 + $0x88] sm:$0xff]
      %v2113 = vld [vmem:[#allocation3 + $0x90] sm:$0xff]
      %v2114 = vld [vmem:[#allocation3 + $0x98] sm:$0xff]
      %v2115 = vld [vmem:[#allocation3 + $0xa0] sm:$0xff]
      %v2116 = vld [vmem:[#allocation3 + $0xa8] sm:$0xff]
      %v2117 = vld [vmem:[#allocation3 + $0xb0] sm:$0xff]
      %v2118 = vld [vmem:[#allocation3 + $0xb8] sm:$0xff]
      %v2119 = vld [vmem:[#allocation3 + $0xc0] sm:$0xff]
      %v2120 = vld [vmem:[#allocation3 + $0xc8] sm:$0xff]
      %v2121 = vld [vmem:[#allocation3 + $0xd0] sm:$0xff]
      %v2122 = vld [vmem:[#allocation3 + $0xd8] sm:$0xff]
      %v2123 = vld [vmem:[#allocation3 + $0xe0] sm:$0xff]
      %v2124 = vld [vmem:[#allocation3 + $0xe8] sm:$0xff]
      %v2125 = vld [vmem:[#allocation3 + $0xf0] sm:$0xff]
      %v2126 = vld [vmem:[#allocation3 + $0xf8] sm:$0xff]
      %v2127 = vld [vmem:[%s1] sm:$0xff]
      %v2128 = vld [vmem:[%s1 + $0x8] sm:$0xff]
      %v2129 = vld [vmem:[%s1 + $0x10] sm:$0xff]
      %v2130 = vld [vmem:[%s1 + $0x18] sm:$0xff]
      %v2131 = vld [vmem:[%s1 + $0x20] sm:$0xf]
      %vm2132 = vcmask 293888
      %v2134 = vsel %vm2132, %v2095, 0
      %v2137 = vsel %vm2132, %v2096, 0
      %v2140 = vsel %vm2132, %v2097, 0
      %v2143 = vsel %vm2132, %v2098, 0
      %v2146 = vsel %vm2132, %v2099, 0
      %v2149 = vsel %vm2132, %v2100, 0
      %v2152 = vsel %vm2132, %v2101, 0
      %v2155 = vsel %vm2132, %v2102, 0
      %v2158 = vsel %vm2132, %v2103, 0
      %v2161 = vsel %vm2132, %v2104, 0
      %v2164 = vsel %vm2132, %v2105, 0
      %v2167 = vsel %vm2132, %v2106, 0
      %v2170 = vsel %vm2132, %v2107, 0
      %v2173 = vsel %vm2132, %v2108, 0
      %v2176 = vsel %vm2132, %v2109, 0
      %v2179 = vsel %vm2132, %v2110, 0
      %v2182 = vsel %vm2132, %v2111, 0
      %v2185 = vsel %vm2132, %v2112, 0
      %v2188 = vsel %vm2132, %v2113, 0
      %v2191 = vsel %vm2132, %v2114, 0
      %v2194 = vsel %vm2132, %v2115, 0
      %v2197 = vsel %vm2132, %v2116, 0
      %v2200 = vsel %vm2132, %v2117, 0
      %v2203 = vsel %vm2132, %v2118, 0
      %v2206 = vsel %vm2132, %v2119, 0
      %v2209 = vsel %vm2132, %v2120, 0
      %v2212 = vsel %vm2132, %v2121, 0
      %v2215 = vsel %vm2132, %v2122, 0
      %v2218 = vsel %vm2132, %v2123, 0
      %v2221 = vsel %vm2132, %v2124, 0
      %v2224 = vsel %vm2132, %v2125, 0
      %v2227 = vsel %vm2132, %v2126, 0
      %vm2229 = vcmask 1043456
      %v2231 = vsel %vm2229, %v2131, 0
      %2233 = vmatprep.subr.mxu0 0.0
      %2234 = vmatpush1.msra.mxu0 %v2127
      %2235 = vmatprep.subr.mxu0 0.0
      %2236 = vmatpush1.msra.mxu0 %v2128
      %2237 = vmatprep.subr.mxu0 0.0
      %2238 = vmatpush1.msra.mxu0 %v2129
      %2239 = vmatprep.subr.mxu0 0.0
      %2240 = vmatpush1.msra.mxu0 %v2130
      %2241 = vmatprep.subr.mxu0 0.0
      %2242 = vmatpush1.msra.mxu0 %v2231
      %2243 = vmatprep.subr.mxu0 0.0
      %2244 = vmatpush1.msra.mxu0 0.0
      %2245 = vmatprep.subr.mxu0 0.0
      %2246 = vmatpush1.msra.mxu0 0.0
      %2247 = vmatprep.subr.mxu0 0.0
      %2248 = vmatpush1.msra.mxu0 0.0
      %2249 = vmatprep.subr.mxu0 0.0
      %2250 = vmatpush1.msra.mxu0 0.0
      %2251 = vmatprep.subr.mxu0 0.0
      %2252 = vmatpush1.msra.mxu0 0.0
      %2253 = vmatprep.subr.mxu0 0.0
      %2254 = vmatpush1.msra.mxu0 0.0
      %2255 = vmatprep.subr.mxu0 0.0
      %2256 = vmatpush1.msra.mxu0 0.0
      %2257 = vmatprep.subr.mxu0 0.0
      %2258 = vmatpush1.msra.mxu0 0.0
      %2259 = vmatprep.subr.mxu0 0.0
      %2260 = vmatpush1.msra.mxu0 0.0
      %2261 = vmatprep.subr.mxu0 0.0
      %2262 = vmatpush1.msra.mxu0 0.0
      %2263 = vmatprep.subr.mxu0 0.0
      %2264 = vmatpush1.msra.mxu0 0.0
      %2265 = vmatprep.subr.mxu0 0.0
      %2266 = vmatpush1.msra.mxu0 0.0
      %2267 = vmatprep.subr.mxu0 0.0
      %2268 = vmatpush1.msra.mxu0 0.0
      %2269 = vmatprep.subr.mxu0 0.0
      %2270 = vmatpush1.msra.mxu0 0.0
      %2271 = vmatprep.subr.mxu0 0.0
      %2272 = vmatpush1.msra.mxu0 0.0
      %2273 = vmatprep.subr.mxu0 0.0
      %2274 = vmatpush1.msra.mxu0 0.0
      %2275 = vmatprep.subr.mxu0 0.0
      %2276 = vmatpush1.msra.mxu0 0.0
      %2277 = vmatprep.subr.mxu0 0.0
      %2278 = vmatpush1.msra.mxu0 0.0
      %2279 = vmatprep.subr.mxu0 0.0
      %2280 = vmatpush1.msra.mxu0 0.0
      %2281 = vmatprep.subr.mxu0 0.0
      %2282 = vmatpush1.msra.mxu0 0.0
      %2283 = vmatprep.subr.mxu0 0.0
      %2284 = vmatpush1.msra.mxu0 0.0
      %2285 = vmatprep.subr.mxu0 0.0
      %2286 = vmatpush1.msra.mxu0 0.0
      %2287 = vmatprep.subr.mxu0 0.0
      %2288 = vmatpush1.msra.mxu0 0.0
      %2289 = vmatprep.subr.mxu0 0.0
      %2290 = vmatpush1.msra.mxu0 0.0
      %2291 = vmatprep.subr.mxu0 0.0
      %2292 = vmatpush1.msra.mxu0 0.0
      %2293 = vmatprep.subr.mxu0 0.0
      %2294 = vmatpush1.msra.mxu0 0.0
      %2295 = vmatprep.subr.mxu0 0.0
      %2296 = vmatpush1.msra.mxu0 0.0
      %2297 = vmatprep.mubr.f32.mxu0 0.0
      %2298 = vmatmul.mubr.f32.gmra.mrb[0].mxu0 %v2134
      %v2299 = vpop.f32.mrb[0].mxu0
      %v2300 = vadd.f32 0.0, %v2299
      %v2301 = vpop.f32.mrb[0].mxu0
      %2302 = vmatprep.mubr.f32.mxu0 0.0
      %2303 = vmatmul.mubr.f32.gmra.mrb[0].mxu0 %v2137
      %v2304 = vpop.f32.mrb[0].mxu0
      %v2305 = vadd.f32 0.0, %v2304
      %v2306 = vpop.f32.mrb[0].mxu0
      %2307 = vmatprep.mubr.f32.mxu0 0.0
      %2308 = vmatmul.mubr.f32.gmra.mrb[0].mxu0 %v2140
      %v2309 = vpop.f32.mrb[0].mxu0
      %v2310 = vadd.f32 0.0, %v2309
      %v2311 = vpop.f32.mrb[0].mxu0
      %2312 = vmatprep.mubr.f32.mxu0 0.0
      %2313 = vmatmul.mubr.f32.gmra.mrb[0].mxu0 %v2143
      %v2314 = vpop.f32.mrb[0].mxu0
      %v2315 = vadd.f32 0.0, %v2314
      %v2316 = vpop.f32.mrb[0].mxu0
      %2317 = vmatprep.mubr.f32.mxu0 0.0
      %2318 = vmatmul.mubr.f32.gmra.mrb[0].mxu0 %v2146
      %v2319 = vpop.f32.mrb[0].mxu0
      %v2320 = vadd.f32 0.0, %v2319
      %v2321 = vpop.f32.mrb[0].mxu0
      %2322 = vmatprep.mubr.f32.mxu0 0.0
      %2323 = vmatmul.mubr.f32.gmra.mrb[0].mxu0 %v2149
      %v2324 = vpop.f32.mrb[0].mxu0
      %v2325 = vadd.f32 0.0, %v2324
      %v2326 = vpop.f32.mrb[0].mxu0
      %2327 = vmatprep.mubr.f32.mxu0 0.0
      %2328 = vmatmul.mubr.f32.gmra.mrb[0].mxu0 %v2152
      %v2329 = vpop.f32.mrb[0].mxu0
      %v2330 = vadd.f32 0.0, %v2329
      %v2331 = vpop.f32.mrb[0].mxu0
      %2332 = vmatprep.mubr.f32.mxu0 0.0
      %2333 = vmatmul.mubr.f32.gmra.mrb[0].mxu0 %v2155
      %v2334 = vpop.f32.mrb[0].mxu0
      %v2335 = vadd.f32 0.0, %v2334
      %v2336 = vpop.f32.mrb[0].mxu0
      %2337 = vmatprep.mubr.f32.mxu0 0.0
      %2338 = vmatmul.mubr.f32.gmra.mrb[0].mxu0 %v2158
      %v2339 = vpop.f32.mrb[0].mxu0
      %v2340 = vadd.f32 0.0, %v2339
      %v2341 = vpop.f32.mrb[0].mxu0
      %2342 = vmatprep.mubr.f32.mxu0 0.0
      %2343 = vmatmul.mubr.f32.gmra.mrb[0].mxu0 %v2161
      %v2344 = vpop.f32.mrb[0].mxu0
      %v2345 = vadd.f32 0.0, %v2344
      %v2346 = vpop.f32.mrb[0].mxu0
      %2347 = vmatprep.mubr.f32.mxu0 0.0
      %2348 = vmatmul.mubr.f32.gmra.mrb[0].mxu0 %v2164
      %v2349 = vpop.f32.mrb[0].mxu0
      %v2350 = vadd.f32 0.0, %v2349
      %v2351 = vpop.f32.mrb[0].mxu0
      %2352 = vmatprep.mubr.f32.mxu0 0.0
      %2353 = vmatmul.mubr.f32.gmra.mrb[0].mxu0 %v2167
      %v2354 = vpop.f32.mrb[0].mxu0
      %v2355 = vadd.f32 0.0, %v2354
      %v2356 = vpop.f32.mrb[0].mxu0
      %2357 = vmatprep.mubr.f32.mxu0 0.0
      %2358 = vmatmul.mubr.f32.gmra.mrb[0].mxu0 %v2170
      %v2359 = vpop.f32.mrb[0].mxu0
      %v2360 = vadd.f32 0.0, %v2359
      %v2361 = vpop.f32.mrb[0].mxu0
      %2362 = vmatprep.mubr.f32.mxu0 0.0
      %2363 = vmatmul.mubr.f32.gmra.mrb[0].mxu0 %v2173
      %v2364 = vpop.f32.mrb[0].mxu0
      %v2365 = vadd.f32 0.0, %v2364
      %v2366 = vpop.f32.mrb[0].mxu0
      %2367 = vmatprep.mubr.f32.mxu0 0.0
      %2368 = vmatmul.mubr.f32.gmra.mrb[0].mxu0 %v2176
      %v2369 = vpop.f32.mrb[0].mxu0
      %v2370 = vadd.f32 0.0, %v2369
      %v2371 = vpop.f32.mrb[0].mxu0
      %2372 = vmatprep.mubr.f32.mxu0 0.0
      %2373 = vmatmul.mubr.f32.gmra.mrb[0].mxu0 %v2179
      %v2374 = vpop.f32.mrb[0].mxu0
      %v2375 = vadd.f32 0.0, %v2374
      %v2376 = vpop.f32.mrb[0].mxu0
      %2377 = vmatprep.mubr.f32.mxu0 0.0
      %2378 = vmatmul.mubr.f32.gmra.mrb[0].mxu0 %v2182
      %v2379 = vpop.f32.mrb[0].mxu0
      %v2380 = vadd.f32 0.0, %v2379
      %v2381 = vpop.f32.mrb[0].mxu0
      %2382 = vmatprep.mubr.f32.mxu0 0.0
      %2383 = vmatmul.mubr.f32.gmra.mrb[0].mxu0 %v2185
      %v2384 = vpop.f32.mrb[0].mxu0
      %v2385 = vadd.f32 0.0, %v2384
      %v2386 = vpop.f32.mrb[0].mxu0
      %2387 = vmatprep.mubr.f32.mxu0 0.0
      %2388 = vmatmul.mubr.f32.gmra.mrb[0].mxu0 %v2188
      %v2389 = vpop.f32.mrb[0].mxu0
      %v2390 = vadd.f32 0.0, %v2389
      %v2391 = vpop.f32.mrb[0].mxu0
      %2392 = vmatprep.mubr.f32.mxu0 0.0
      %2393 = vmatmul.mubr.f32.gmra.mrb[0].mxu0 %v2191
      %v2394 = vpop.f32.mrb[0].mxu0
      %v2395 = vadd.f32 0.0, %v2394
      %v2396 = vpop.f32.mrb[0].mxu0
      %2397 = vmatprep.mubr.f32.mxu0 0.0
      %2398 = vmatmul.mubr.f32.gmra.mrb[0].mxu0 %v2194
      %v2399 = vpop.f32.mrb[0].mxu0
      %v2400 = vadd.f32 0.0, %v2399
      %v2401 = vpop.f32.mrb[0].mxu0
      %2402 = vmatprep.mubr.f32.mxu0 0.0
      %2403 = vmatmul.mubr.f32.gmra.mrb[0].mxu0 %v2197
      %v2404 = vpop.f32.mrb[0].mxu0
      %v2405 = vadd.f32 0.0, %v2404
      %v2406 = vpop.f32.mrb[0].mxu0
      %2407 = vmatprep.mubr.f32.mxu0 0.0
      %2408 = vmatmul.mubr.f32.gmra.mrb[0].mxu0 %v2200
      %v2409 = vpop.f32.mrb[0].mxu0
      %v2410 = vadd.f32 0.0, %v2409
      %v2411 = vpop.f32.mrb[0].mxu0
      %2412 = vmatprep.mubr.f32.mxu0 0.0
      %2413 = vmatmul.mubr.f32.gmra.mrb[0].mxu0 %v2203
      %v2414 = vpop.f32.mrb[0].mxu0
      %v2415 = vadd.f32 0.0, %v2414
      %v2416 = vpop.f32.mrb[0].mxu0
      %2417 = vmatprep.mubr.f32.mxu0 0.0
      %2418 = vmatmul.mubr.f32.gmra.mrb[0].mxu0 %v2206
      %v2419 = vpop.f32.mrb[0].mxu0
      %v2420 = vadd.f32 0.0, %v2419
      %v2421 = vpop.f32.mrb[0].mxu0
      %2422 = vmatprep.mubr.f32.mxu0 0.0
      %2423 = vmatmul.mubr.f32.gmra.mrb[0].mxu0 %v2209
      %v2424 = vpop.f32.mrb[0].mxu0
      %v2425 = vadd.f32 0.0, %v2424
      %v2426 = vpop.f32.mrb[0].mxu0
      %2427 = vmatprep.mubr.f32.mxu0 0.0
      %2428 = vmatmul.mubr.f32.gmra.mrb[0].mxu0 %v2212
      %v2429 = vpop.f32.mrb[0].mxu0
      %v2430 = vadd.f32 0.0, %v2429
      %v2431 = vpop.f32.mrb[0].mxu0
      %2432 = vmatprep.mubr.f32.mxu0 0.0
      %2433 = vmatmul.mubr.f32.gmra.mrb[0].mxu0 %v2215
      %v2434 = vpop.f32.mrb[0].mxu0
      %v2435 = vadd.f32 0.0, %v2434
      %v2436 = vpop.f32.mrb[0].mxu0
      %2437 = vmatprep.mubr.f32.mxu0 0.0
      %2438 = vmatmul.mubr.f32.gmra.mrb[0].mxu0 %v2218
      %v2439 = vpop.f32.mrb[0].mxu0
      %v2440 = vadd.f32 0.0, %v2439
      %v2441 = vpop.f32.mrb[0].mxu0
      %2442 = vmatprep.mubr.f32.mxu0 0.0
      %2443 = vmatmul.mubr.f32.gmra.mrb[0].mxu0 %v2221
      %v2444 = vpop.f32.mrb[0].mxu0
      %v2445 = vadd.f32 0.0, %v2444
      %v2446 = vpop.f32.mrb[0].mxu0
      %2447 = vmatprep.mubr.f32.mxu0 0.0
      %2448 = vmatmul.mubr.f32.gmra.mrb[0].mxu0 %v2224
      %v2449 = vpop.f32.mrb[0].mxu0
      %v2450 = vadd.f32 0.0, %v2449
      %v2451 = vpop.f32.mrb[0].mxu0
      %2452 = vmatprep.mubr.f32.mxu0 0.0
      %2453 = vmatmul.mubr.f32.gmra.mrb[0].mxu0 %v2227
      %v2454 = vpop.f32.mrb[0].mxu0
      %v2455 = vadd.f32 0.0, %v2454
      %v2456 = vpop.f32.mrb[0].mxu0
      %2457 = vdwg.mxu0
      %2458 = vst.msk [vmem:[%s262] sm:$0xff] %vm412, %v2300
      %2459 = vst.msk [vmem:[%s262 + $0x8] sm:$0xff] %vm412, %v2305
      %2460 = vst.msk [vmem:[%s262 + $0x10] sm:$0xff] %vm412, %v2310
      %2461 = vst.msk [vmem:[%s262 + $0x18] sm:$0xff] %vm412, %v2315
      %2462 = vst.msk [vmem:[%s262 + $0x20] sm:$0xff] %vm412, %v2320
      %2463 = vst.msk [vmem:[%s262 + $0x28] sm:$0xff] %vm412, %v2325
      %2464 = vst.msk [vmem:[%s262 + $0x30] sm:$0xff] %vm412, %v2330
      %2465 = vst.msk [vmem:[%s262 + $0x38] sm:$0xff] %vm412, %v2335
      %2466 = vst.msk [vmem:[%s262 + $0x40] sm:$0xff] %vm412, %v2340
      %2467 = vst.msk [vmem:[%s262 + $0x48] sm:$0xff] %vm412, %v2345
      %2468 = vst.msk [vmem:[%s262 + $0x50] sm:$0xff] %vm412, %v2350
      %2469 = vst.msk [vmem:[%s262 + $0x58] sm:$0xff] %vm412, %v2355
      %2470 = vst.msk [vmem:[%s262 + $0x60] sm:$0xff] %vm412, %v2360
      %2471 = vst.msk [vmem:[%s262 + $0x68] sm:$0xff] %vm412, %v2365
      %2472 = vst.msk [vmem:[%s262 + $0x70] sm:$0xff] %vm412, %v2370
      %2473 = vst.msk [vmem:[%s262 + $0x78] sm:$0xff] %vm412, %v2375
      %2474 = vst.msk [vmem:[%s262 + $0x80] sm:$0xff] %vm412, %v2380
      %2475 = vst.msk [vmem:[%s262 + $0x88] sm:$0xff] %vm412, %v2385
      %2476 = vst.msk [vmem:[%s262 + $0x90] sm:$0xff] %vm412, %v2390
      %2477 = vst.msk [vmem:[%s262 + $0x98] sm:$0xff] %vm412, %v2395
      %2478 = vst.msk [vmem:[%s262 + $0xa0] sm:$0xff] %vm412, %v2400
      %2479 = vst.msk [vmem:[%s262 + $0xa8] sm:$0xff] %vm412, %v2405
      %2480 = vst.msk [vmem:[%s262 + $0xb0] sm:$0xff] %vm412, %v2410
      %2481 = vst.msk [vmem:[%s262 + $0xb8] sm:$0xff] %vm412, %v2415
      %2482 = vst.msk [vmem:[%s262 + $0xc0] sm:$0xff] %vm412, %v2420
      %2483 = vst.msk [vmem:[%s262 + $0xc8] sm:$0xff] %vm412, %v2425
      %2484 = vst.msk [vmem:[%s262 + $0xd0] sm:$0xff] %vm412, %v2430
      %2485 = vst.msk [vmem:[%s262 + $0xd8] sm:$0xff] %vm412, %v2435
      %2486 = vst.msk [vmem:[%s262 + $0xe0] sm:$0xff] %vm412, %v2440
      %2487 = vst.msk [vmem:[%s262 + $0xe8] sm:$0xff] %vm412, %v2445
      %2488 = vst.msk [vmem:[%s262 + $0xf0] sm:$0xff] %vm412, %v2450
      %2489 = vst.msk [vmem:[%s262 + $0xf8] sm:$0xff] %vm412, %v2455
      %v2490 = vsel %vm412, %v2300, 0.0
      %v2491 = vsel %vm412, %v2305, 0.0
      %v2492 = vadd.f32 %v2490, %v2491
      %v2493 = vsel %vm412, %v2310, 0.0
      %v2494 = vadd.f32 %v2492, %v2493
      %v2495 = vsel %vm412, %v2315, 0.0
      %v2496 = vadd.f32 %v2494, %v2495
      %v2497 = vsel %vm412, %v2320, 0.0
      %v2498 = vadd.f32 %v2496, %v2497
      %v2499 = vsel %vm412, %v2325, 0.0
      %v2500 = vadd.f32 %v2498, %v2499
      %v2501 = vsel %vm412, %v2330, 0.0
      %v2502 = vadd.f32 %v2500, %v2501
      %v2503 = vsel %vm412, %v2335, 0.0
      %v2504 = vadd.f32 %v2502, %v2503
      %v2505 = vsel %vm412, %v2340, 0.0
      %v2506 = vadd.f32 %v2504, %v2505
      %v2507 = vsel %vm412, %v2345, 0.0
      %v2508 = vadd.f32 %v2506, %v2507
      %v2509 = vsel %vm412, %v2350, 0.0
      %v2510 = vadd.f32 %v2508, %v2509
      %v2511 = vsel %vm412, %v2355, 0.0
      %v2512 = vadd.f32 %v2510, %v2511
      %v2513 = vsel %vm412, %v2360, 0.0
      %v2514 = vadd.f32 %v2512, %v2513
      %v2515 = vsel %vm412, %v2365, 0.0
      %v2516 = vadd.f32 %v2514, %v2515
      %v2517 = vsel %vm412, %v2370, 0.0
      %v2518 = vadd.f32 %v2516, %v2517
      %v2519 = vsel %vm412, %v2375, 0.0
      %v2520 = vadd.f32 %v2518, %v2519
      %v2521 = vsel %vm412, %v2380, 0.0
      %v2522 = vadd.f32 %v2520, %v2521
      %v2523 = vsel %vm412, %v2385, 0.0
      %v2524 = vadd.f32 %v2522, %v2523
      %v2525 = vsel %vm412, %v2390, 0.0
      %v2526 = vadd.f32 %v2524, %v2525
      %v2527 = vsel %vm412, %v2395, 0.0
      %v2528 = vadd.f32 %v2526, %v2527
      %v2529 = vsel %vm412, %v2400, 0.0
      %v2530 = vadd.f32 %v2528, %v2529
      %v2531 = vsel %vm412, %v2405, 0.0
      %v2532 = vadd.f32 %v2530, %v2531
      %v2533 = vsel %vm412, %v2410, 0.0
      %v2534 = vadd.f32 %v2532, %v2533
      %v2535 = vsel %vm412, %v2415, 0.0
      %v2536 = vadd.f32 %v2534, %v2535
      %v2537 = vsel %vm412, %v2420, 0.0
      %v2538 = vadd.f32 %v2536, %v2537
      %v2539 = vsel %vm412, %v2425, 0.0
      %v2540 = vadd.f32 %v2538, %v2539
      %v2541 = vsel %vm412, %v2430, 0.0
      %v2542 = vadd.f32 %v2540, %v2541
      %v2543 = vsel %vm412, %v2435, 0.0
      %v2544 = vadd.f32 %v2542, %v2543
      %v2545 = vsel %vm412, %v2440, 0.0
      %v2546 = vadd.f32 %v2544, %v2545
      %v2547 = vsel %vm412, %v2445, 0.0
      %v2548 = vadd.f32 %v2546, %v2547
      %v2549 = vsel %vm412, %v2450, 0.0
      %v2550 = vadd.f32 %v2548, %v2549
      %v2551 = vsel %vm412, %v2455, 0.0
      %v2552 = vadd.f32 %v2550, %v2551
      %v2553 = vrot.slane %v2552, 4
      %v2554 = vadd.f32 %v2552, %v2553
      %v2555 = vrot.slane %v2554, 2
      %v2556 = vadd.f32 %v2554, %v2555
      %v2557 = vrot.slane %v2556, 1
      %v2558 = vadd.f32 %v2556, %v2557
      %v2559 = vrcp.pop 256.0
      %v2560 = vmul.f32 %v2558, %v2559
      %v2561 = vsub.f32 %v2300, %v2560
      %v2562 = vsub.f32 %v2305, %v2560
      %v2563 = vsub.f32 %v2310, %v2560
      %v2564 = vsub.f32 %v2315, %v2560
      %v2565 = vsub.f32 %v2320, %v2560
      %v2566 = vsub.f32 %v2325, %v2560
      %v2567 = vsub.f32 %v2330, %v2560
      %v2568 = vsub.f32 %v2335, %v2560
      %v2569 = vsub.f32 %v2340, %v2560
      %v2570 = vsub.f32 %v2345, %v2560
      %v2571 = vsub.f32 %v2350, %v2560
      %v2572 = vsub.f32 %v2355, %v2560
      %v2573 = vsub.f32 %v2360, %v2560
      %v2574 = vsub.f32 %v2365, %v2560
      %v2575 = vsub.f32 %v2370, %v2560
      %v2576 = vsub.f32 %v2375, %v2560
      %v2577 = vsub.f32 %v2380, %v2560
      %v2578 = vsub.f32 %v2385, %v2560
      %v2579 = vsub.f32 %v2390, %v2560
      %v2580 = vsub.f32 %v2395, %v2560
      %v2581 = vsub.f32 %v2400, %v2560
      %v2582 = vsub.f32 %v2405, %v2560
      %v2583 = vsub.f32 %v2410, %v2560
      %v2584 = vsub.f32 %v2415, %v2560
      %v2585 = vsub.f32 %v2420, %v2560
      %v2586 = vsub.f32 %v2425, %v2560
      %v2587 = vsub.f32 %v2430, %v2560
      %v2588 = vsub.f32 %v2435, %v2560
      %v2589 = vsub.f32 %v2440, %v2560
      %v2590 = vsub.f32 %v2445, %v2560
      %v2591 = vsub.f32 %v2450, %v2560
      %v2592 = vsub.f32 %v2455, %v2560
      %2593 = vst.msk [vmem:[%s265] sm:$0x1] %vm453, %v2560
      %v2594 = vmul.f32 %v2561, %v2561
      %v2595 = vmul.f32 %v2562, %v2562
      %v2596 = vmul.f32 %v2563, %v2563
      %v2597 = vmul.f32 %v2564, %v2564
      %v2598 = vmul.f32 %v2565, %v2565
      %v2599 = vmul.f32 %v2566, %v2566
      %v2600 = vmul.f32 %v2567, %v2567
      %v2601 = vmul.f32 %v2568, %v2568
      %v2602 = vmul.f32 %v2569, %v2569
      %v2603 = vmul.f32 %v2570, %v2570
      %v2604 = vmul.f32 %v2571, %v2571
      %v2605 = vmul.f32 %v2572, %v2572
      %v2606 = vmul.f32 %v2573, %v2573
      %v2607 = vmul.f32 %v2574, %v2574
      %v2608 = vmul.f32 %v2575, %v2575
      %v2609 = vmul.f32 %v2576, %v2576
      %v2610 = vmul.f32 %v2577, %v2577
      %v2611 = vmul.f32 %v2578, %v2578
      %v2612 = vmul.f32 %v2579, %v2579
      %v2613 = vmul.f32 %v2580, %v2580
      %v2614 = vmul.f32 %v2581, %v2581
      %v2615 = vmul.f32 %v2582, %v2582
      %v2616 = vmul.f32 %v2583, %v2583
      %v2617 = vmul.f32 %v2584, %v2584
      %v2618 = vmul.f32 %v2585, %v2585
      %v2619 = vmul.f32 %v2586, %v2586
      %v2620 = vmul.f32 %v2587, %v2587
      %v2621 = vmul.f32 %v2588, %v2588
      %v2622 = vmul.f32 %v2589, %v2589
      %v2623 = vmul.f32 %v2590, %v2590
      %v2624 = vmul.f32 %v2591, %v2591
      %v2625 = vmul.f32 %v2592, %v2592
      %v2626 = vsel %vm412, %v2594, 0.0
      %v2627 = vsel %vm412, %v2595, 0.0
      %v2628 = vadd.f32 %v2626, %v2627
      %v2629 = vsel %vm412, %v2596, 0.0
      %v2630 = vadd.f32 %v2628, %v2629
      %v2631 = vsel %vm412, %v2597, 0.0
      %v2632 = vadd.f32 %v2630, %v2631
      %v2633 = vsel %vm412, %v2598, 0.0
      %v2634 = vadd.f32 %v2632, %v2633
      %v2635 = vsel %vm412, %v2599, 0.0
      %v2636 = vadd.f32 %v2634, %v2635
      %v2637 = vsel %vm412, %v2600, 0.0
      %v2638 = vadd.f32 %v2636, %v2637
      %v2639 = vsel %vm412, %v2601, 0.0
      %v2640 = vadd.f32 %v2638, %v2639
      %v2641 = vsel %vm412, %v2602, 0.0
      %v2642 = vadd.f32 %v2640, %v2641
      %v2643 = vsel %vm412, %v2603, 0.0
      %v2644 = vadd.f32 %v2642, %v2643
      %v2645 = vsel %vm412, %v2604, 0.0
      %v2646 = vadd.f32 %v2644, %v2645
      %v2647 = vsel %vm412, %v2605, 0.0
      %v2648 = vadd.f32 %v2646, %v2647
      %v2649 = vsel %vm412, %v2606, 0.0
      %v2650 = vadd.f32 %v2648, %v2649
      %v2651 = vsel %vm412, %v2607, 0.0
      %v2652 = vadd.f32 %v2650, %v2651
      %v2653 = vsel %vm412, %v2608, 0.0
      %v2654 = vadd.f32 %v2652, %v2653
      %v2655 = vsel %vm412, %v2609, 0.0
      %v2656 = vadd.f32 %v2654, %v2655
      %v2657 = vsel %vm412, %v2610, 0.0
      %v2658 = vadd.f32 %v2656, %v2657
      %v2659 = vsel %vm412, %v2611, 0.0
      %v2660 = vadd.f32 %v2658, %v2659
      %v2661 = vsel %vm412, %v2612, 0.0
      %v2662 = vadd.f32 %v2660, %v2661
      %v2663 = vsel %vm412, %v2613, 0.0
      %v2664 = vadd.f32 %v2662, %v2663
      %v2665 = vsel %vm412, %v2614, 0.0
      %v2666 = vadd.f32 %v2664, %v2665
      %v2667 = vsel %vm412, %v2615, 0.0
      %v2668 = vadd.f32 %v2666, %v2667
      %v2669 = vsel %vm412, %v2616, 0.0
      %v2670 = vadd.f32 %v2668, %v2669
      %v2671 = vsel %vm412, %v2617, 0.0
      %v2672 = vadd.f32 %v2670, %v2671
      %v2673 = vsel %vm412, %v2618, 0.0
      %v2674 = vadd.f32 %v2672, %v2673
      %v2675 = vsel %vm412, %v2619, 0.0
      %v2676 = vadd.f32 %v2674, %v2675
      %v2677 = vsel %vm412, %v2620, 0.0
      %v2678 = vadd.f32 %v2676, %v2677
      %v2679 = vsel %vm412, %v2621, 0.0
      %v2680 = vadd.f32 %v2678, %v2679
      %v2681 = vsel %vm412, %v2622, 0.0
      %v2682 = vadd.f32 %v2680, %v2681
      %v2683 = vsel %vm412, %v2623, 0.0
      %v2684 = vadd.f32 %v2682, %v2683
      %v2685 = vsel %vm412, %v2624, 0.0
      %v2686 = vadd.f32 %v2684, %v2685
      %v2687 = vsel %vm412, %v2625, 0.0
      %v2688 = vadd.f32 %v2686, %v2687
      %v2689 = vrot.slane %v2688, 4
      %v2690 = vadd.f32 %v2688, %v2689
      %v2691 = vrot.slane %v2690, 2
      %v2692 = vadd.f32 %v2690, %v2691
      %v2693 = vrot.slane %v2692, 1
      %v2694 = vadd.f32 %v2692, %v2693
      %2695 = vst.msk [vmem:[%s268] sm:$0x1] %vm453, %v2694
      %p2696 = scmp.lt.s32.totalorder %s18, 1
      %s2697 = scalar_select %p2696, %s18, 1
      %s2698 = smul.addr %s2697, 32
      %s2699 = smul.addr %s2698, 8
      %s2700 = scalar_lea.vmem %s4, %s2699
      %p2701 = scmp.lt.s32.totalorder %s18, 1
      %s2702 = scalar_select %p2701, %s18, 1
      %s2703 = scalar_lea.vmem %s5, %s2702
      %p2704 = scmp.lt.s32.totalorder %s18, 1
      %s2705 = scalar_select %p2704, %s18, 1
      %s2706 = scalar_lea.vmem %s6, %s2705
      // Predicated region
      $region37: #{basic_block_forward.4} parent=35 // pred_check
        %p2707 = pneg %p125
      $region38: #{basic_block_forward.4} parent=35 // pred_check_branch
        %2709 = sbr.rel (%p2707) target = $region40
      $region39: #{basic_block_forward.4} parent=35 // pred_region
        _
      $region40: #{basic_block_forward.4} parent=35 // pred_fallthru
        _
      // Predicated region
      $region41: #{basic_block_forward.4} parent=35 // pred_check
        %p2710 = pneg %p151
      $region42: #{basic_block_forward.4} parent=35 // pred_check_branch
        %2712 = sbr.rel (%p2710) target = $region44
      $region43: #{basic_block_forward.4} parent=35 // pred_region
        _
      $region44: #{basic_block_forward.4} parent=35 // pred_fallthru
        _
      // Predicated region
      $region45: #{basic_block_forward.4} parent=35 // pred_check
        %p2713 = pneg %p177
      $region46: #{basic_block_forward.4} parent=35 // pred_check_branch
        %2715 = sbr.rel (%p2713) target = $region48
      $region47: #{basic_block_forward.4} parent=35 // pred_region
        _
      $region48: #{basic_block_forward.4} parent=35 // pred_fallthru
        _
    $region36: #{basic_block_forward.4} parent=5 // pred_fallthru
      _
    %p2716 = scmp.le.s32.totalorder 2, %s13
    // Predicated region
    $region49: #{basic_block_forward.4} parent=5 // pred_check
      %p2717 = pneg %p2716
    $region50: #{basic_block_forward.4} parent=5 // pred_check_branch
      %2719 = sbr.rel (%p2717) target = $region52
    $region51: #{basic_block_forward.4} parent=5 // pred_region
      %s2720 = ssub.s32 %s13, 2
      // Predicated region
      $region53: #{basic_block_forward.4} parent=51 // pred_check
        %p2721 = pneg %p131
      $region54: #{basic_block_forward.4} parent=51 // pred_check_branch
        %2723 = sbr.rel (%p2721) target = $region56
      $region55: #{basic_block_forward.4} parent=51 // pred_region
        %p2724 = scmp.lt.s32.totalorder %s19, 1
        %s2725 = scalar_select %p2724, %s19, 1
        %s2726 = smul.addr %s2725, 32
        %s2727 = smul.addr %s2726, 8
        %s2728 = scalar_lea.vmem %s4, %s2727
      $region56: #{basic_block_forward.4} parent=51 // pred_fallthru
        _
      // Predicated region
      $region57: #{basic_block_forward.4} parent=51 // pred_check
        %p2729 = pneg %p157
      $region58: #{basic_block_forward.4} parent=51 // pred_check_branch
        %2731 = sbr.rel (%p2729) target = $region60
      $region59: #{basic_block_forward.4} parent=51 // pred_region
        %p2732 = scmp.lt.s32.totalorder %s19, 1
        %s2733 = scalar_select %p2732, %s19, 1
        %s2734 = scalar_lea.vmem %s5, %s2733
      $region60: #{basic_block_forward.4} parent=51 // pred_fallthru
        _
      // Predicated region
      $region61: #{basic_block_forward.4} parent=51 // pred_check
        %p2735 = pneg %p183
      $region62: #{basic_block_forward.4} parent=51 // pred_check_branch
        %2737 = sbr.rel (%p2735) target = $region64
      $region63: #{basic_block_forward.4} parent=51 // pred_region
        %p2738 = scmp.lt.s32.totalorder %s19, 1
        %s2739 = scalar_select %p2738, %s19, 1
        %s2740 = scalar_lea.vmem %s6, %s2739
      $region64: #{basic_block_forward.4} parent=51 // pred_fallthru
        _
    $region52: #{basic_block_forward.4} parent=5 // pred_fallthru
      _
  $region6: #{basic_block_forward.4} parent=0 // loop_footer
    %s17 = sadd.s32 1, %s13
  $region7: #{basic_block_forward.4} parent=0 // loop_footer_branch
    %12 = sbr.rel target = $region3
  $region8: #{basic_block_forward.4} parent=0 // loop_exit
    _

</llo_original>
